<compile_context>
chip_gen: v6e
topology: v6e:2x2x1
jax: 0.10.0
libtpu: 0.0.40
codegen_flags: <defaults>
</compile_context>

<pallas_src>
import functools

import numpy as np
import jax
import jax.numpy as jnp
from jax.experimental import pallas as pl
from jax.experimental.pallas import tpu as pltpu

EPS = 1e-5            # torch.nn.BatchNorm2d default eps
N_BATCH = 2           # kernel is specialized (unrolled) for this batch size

# Static shapes implied by fc.in_features == 1600 (=> 32x32 inputs)
OH1 = 18              # conv1: k2 s2 p2 on 32 -> 18
OH2 = 17              # conv2: k3 s2 p2 on 32 -> 17
OH3 = 10              # conv3: k3 s2 p2 on 17 -> 10
ADA = 18              # AdaptiveAvgPool2d(18)
PH = 10               # maxpool k2 s2 p1 on 18 -> 10
C1, C2, C3 = 16, 8, 16
NUM_CLASSES = 3
S1 = OH1 * OH1        # 324
S2 = OH2 * OH2        # 289
S3 = OH3 * OH3        # 100
SA = ADA * ADA        # 324
SP = PH * PH          # 100


# ---------------------------------------------------------------------------
# Shape-derived constants (selection / pooling matrices), built once in numpy.
# ---------------------------------------------------------------------------
def _adaptive_pool_1d(in_size, out_size):
    m = np.zeros((out_size, in_size), np.float32)
    for o in range(out_size):
        s = (o * in_size) // out_size
        e = -((-(o + 1) * in_size) // out_size)          # ceil
        m[o, s:e] = 1.0 / (e - s)
    return m


@functools.lru_cache(None)
def _constants():
    # conv3 (k=3, s=2, p=2): per-tap 0/1 window-selection matrices (9, 289, 100)
    S = np.zeros((9, S2, S3), np.float32)
    for ki in range(3):
        for kj in range(3):
            t = ki * 3 + kj
            for oh in range(OH3):
                ih = 2 * oh + ki - 2
                if not (0 <= ih < OH2):
                    continue
                for ow in range(OH3):
                    iw = 2 * ow + kj - 2
                    if not (0 <= iw < OH2):
                        continue
                    S[t, ih * OH2 + iw, oh * OH3 + ow] = 1.0

    # AdaptiveAvgPool2d 10x10 -> 18x18 as one combined spatial matrix (100, 324)
    # (pool windows have 1 or 2 elements => weights 1.0/0.5/0.25, bf16-exact,
    #  but we keep this one in f32)
    ph = _adaptive_pool_1d(OH3, ADA)
    pw = _adaptive_pool_1d(OH3, ADA)
    P = np.zeros((S3, SA), np.float32)
    for oh in range(ADA):
        for ow in range(ADA):
            P[:, oh * ADA + ow] = np.outer(ph[oh], pw[ow]).reshape(-1)

    # MaxPool2d k=2 s=2 p=1 on 18x18 -> 10x10: 4 shifted-window 0/1 selections
    M = np.zeros((4, SA, SP), np.float32)
    for di in range(2):
        for dj in range(2):
            k = di * 2 + dj
            for p in range(PH):
                ih = 2 * p - 1 + di
                if not (0 <= ih < ADA):
                    continue
                for q in range(PH):
                    iw = 2 * q - 1 + dj
                    if not (0 <= iw < ADA):
                        continue
                    M[k, ih * ADA + iw, p * PH + q] = 1.0
    return S, P, M


# ---------------------------------------------------------------------------
# The single fused kernel
# ---------------------------------------------------------------------------
def _two_inputs_kernel(p1_ref, p2_ref, w1_ref, g1_ref, b1_ref,
                       w2_ref, g2_ref, b2_ref,
                       w3_ref, c3_ref,
                       sel_hbm, ada_hbm, mp_hbm,
                       wfc_ref, gimg_ref, bfc_ref,
                       out_ref,
                       sel_vmem, ada_vmem, mp_vmem, sem):
    f32 = jnp.float32
    bf16 = jnp.bfloat16
    dot = lambda a, b: jnp.dot(a, b, preferred_element_type=f32)

    # Kick off the constant-matrix DMAs so they overlap conv1/conv2/BN compute.
    cp_sel = pltpu.make_async_copy(sel_hbm, sel_vmem, sem.at[0])
    cp_ada = pltpu.make_async_copy(ada_hbm, ada_vmem, sem.at[1])
    cp_mp = pltpu.make_async_copy(mp_hbm, mp_vmem, sem.at[2])
    cp_sel.start()
    cp_ada.start()
    cp_mp.start()

    # conv1 / conv2: single dots over the lane-concatenated batch,
    # channel-major layout (C rows, N*OH*OW lanes).
    a1 = dot(w1_ref[...], p1_ref[...])                              # (16, 648)
    a2 = dot(w2_ref[...], p2_ref[...])                              # (8, 578)
    # conv2's bias is intentionally omitted: a per-channel constant added
    # before training-mode BatchNorm is cancelled exactly by the mean.

    # training-mode BatchNorm: biased batch stats over N*H*W (one lane reduce)
    def bn(x, gamma, beta):
        inv_cnt = 1.0 / float(x.shape[1])
        mean = jnp.sum(x, axis=1, keepdims=True) * inv_cnt
        var = jnp.sum((x - mean) ** 2, axis=1, keepdims=True) * inv_cnt
        return (x - mean) * (jax.lax.rsqrt(var + EPS) * gamma) + beta

    h1 = bn(a1, g1_ref[...], b1_ref[...])                           # (16, 648)
    h2 = bn(a2, g2_ref[...], b2_ref[...])                           # (8, 578)

    # Stack the two images along the sublane axis so every downstream dot
    # shares its RHS (selection / pooling matrix) across the batch.
    h1s = jnp.concatenate([h1[:, :S1], h1[:, S1:2 * S1]], axis=0)   # (32, 324)
    h2s = jnp.concatenate([h2[:, :S2], h2[:, S2:2 * S2]], axis=0)   # (16, 289)
    h2b = h2s.astype(bf16)

    # conv3 (k3 s2 p2): 9 taps, each = 0/1 window-selection matmul (RHS shared
    # by both images) + block-diagonal channel-mix matmul; consecutive dots.
    cp_sel.wait()
    acc = dot(w3_ref[0], dot(h2b, sel_vmem[0]))
    for t in range(1, 9):
        acc = acc + dot(w3_ref[t], dot(h2b, sel_vmem[t]))           # (32, 100)
    acc = acc + c3_ref[...]

    # AdaptiveAvgPool2d(18): one combined spatial pooling matmul.
    cp_ada.wait()
    x = dot(acc, ada_vmem[...])                                     # (32, 324)

    # branch merge: add + ReLU
    x = jnp.maximum(h1s + x, 0.0)

    # maxpool 2x2 s2 p1: max of 4 shifted 0/1 window selections.  Post-ReLU
    # values are >= 0 and every 2x2 window on the padded 18x18 map contains a
    # valid element, so 0-padding matches torch's -inf padding for these
    # exact shapes.
    cp_mp.wait()
    xb = x.astype(bf16)
    m = dot(xb, mp_vmem[0])
    for k in range(1, 4):
        m = jnp.maximum(m, dot(xb, mp_vmem[k]))                     # (32, 100)

    # fc on NCHW-flattened features, channel-major / batch-stacked:
    # out[img, k] = sum_{c,s} Wfc[k, c*100+s] * m[img*16+c, s] + bfc[k]
    cols = []
    for k in range(NUM_CLASSES):
        prod = wfc_ref[k] * m                                       # (32, 100)
        cols.append(jnp.sum(prod, axis=1, keepdims=True))           # (32, 1)
    lane = jnp.concatenate(cols, axis=1)                            # (32, 3)
    out_ref[...] = dot(gimg_ref[...], lane) + bfc_ref[...]          # (2, 3)


# ---------------------------------------------------------------------------
# Host-side glue (input prep only) + pallas_call wrapper
# ---------------------------------------------------------------------------
def _full_spec(shape):
    ndim = len(shape)

    def index_map(i):
        return (0,) * ndim

    return pl.BlockSpec(shape, index_map)


def _im2col_nchw(x, kh, kw, stride, pad, oh, ow):
    """(N,C,H,W) -> (N, C*kh*kw, oh*ow); rows ordered (c, ki, kj) to match
    torch's Conv2d weight.reshape(OC, -1)."""
    n, c, _, _ = x.shape
    xp = jnp.pad(x.astype(jnp.float32),
                 ((0, 0), (0, 0), (pad, pad), (pad, pad)))
    taps = []
    for ki in range(kh):
        for kj in range(kw):
            taps.append(xp[:, :, ki:ki + stride * (oh - 1) + 1:stride,
                              kj:kj + stride * (ow - 1) + 1:stride])
    t = jnp.stack(taps, axis=2)                    # (N, C, kh*kw, oh, ow)
    return t.reshape(n, c * kh * kw, oh * ow)


def two_inputs_forward(params, x0_nchw, x1_nchw):
    n = x0_nchw.shape[0]
    assert n == N_BATCH, "kernel is specialized for the demo batch size"
    f32 = jnp.float32
    S_np, P_np, M_np = _constants()
    sel = jnp.asarray(S_np, jnp.bfloat16)           # (9, 289, 100)  0/1 exact
    ada = jnp.asarray(P_np, f32)                    # (100, 324)
    mp = jnp.asarray(M_np, jnp.bfloat16)            # (4, 324, 100)  0/1 exact

    # im2col of the raw inputs, lane-concatenated over the batch
    p1 = _im2col_nchw(x0_nchw, 2, 2, 2, 2, OH1, OH1)            # (N, 12, 324)
    p2 = _im2col_nchw(x1_nchw, 3, 3, 2, 2, OH2, OH2)            # (N, 27, 289)
    p1c = jnp.transpose(p1, (1, 0, 2)).reshape(12, n * S1)      # (12, 648)
    p2c = jnp.transpose(p2, (1, 0, 2)).reshape(27, n * S2)      # (27, 578)

    col = lambda v: v.astype(f32).reshape(-1, 1)

    # block-diagonal per-tap conv3 weight: rows = 2*16 outputs (image-major),
    # cols = 2*8 inputs (image-major)
    w3_taps = jnp.transpose(params["w3"].astype(f32),
                            (2, 3, 0, 1)).reshape(9, C3, C2)    # (9, 16, 8)
    zer = jnp.zeros_like(w3_taps)
    w3_bd = jnp.concatenate(
        [jnp.concatenate([w3_taps, zer], axis=2),
         jnp.concatenate([zer, w3_taps], axis=2)], axis=1)      # (9, 32, 16)
    c3 = jnp.concatenate([params["bias3"], params["bias3"]]
                         ).astype(f32).reshape(n * C3, 1)       # (32, 1)

    wfc3 = params["wfc"].astype(f32).reshape(NUM_CLASSES, C3, SP)
    wfc_s = jnp.concatenate([wfc3, wfc3], axis=1)               # (3, 32, 100)
    gimg = jnp.asarray(np.kron(np.eye(N_BATCH, dtype=np.float32),
                               np.ones((1, C3), np.float32)))   # (2, 32)
    bfc = params["bfc"].astype(f32).reshape(1, NUM_CLASSES)     # (1, 3)

    args = (
        p1c, p2c,
        params["w1"].astype(f32).reshape(C1, 12),
        col(params["g1"]), col(params["b1"]),
        params["w2"].astype(f32).reshape(C2, 27),
        col(params["g2"]), col(params["b2"]),
        w3_bd, c3,
        sel, ada, mp,
        wfc_s, gimg, bfc,
    )
    hbm_idx = {10, 11, 12}     # sel, ada, mp: manual async DMA inside kernel
    in_specs = [pl.BlockSpec(memory_space=pl.ANY) if i in hbm_idx
                else _full_spec(tuple(a.shape)) for i, a in enumerate(args)]

    out = pl.pallas_call(
        _two_inputs_kernel,
        grid=(1,),
        in_specs=in_specs,
        out_specs=_full_spec((n, NUM_CLASSES)),
        out_shape=jax.ShapeDtypeStruct((n, NUM_CLASSES), f32),
        scratch_shapes=[
            pltpu.VMEM((9, S2, S3), jnp.bfloat16),   # conv3 selection
            pltpu.VMEM((S3, SA), f32),               # adaptive-avg-pool
            pltpu.VMEM((4, SA, SP), jnp.bfloat16),   # maxpool selection
            pltpu.SemaphoreType.DMA((3,)),
        ],
        compiler_params=pltpu.CompilerParams(
            dimension_semantics=("arbitrary",)),
    )(*args)
    return out                                      # (N, num_classes)


# ---------------------------------------------------------------------------
# Pure-JAX reference (for a numerical sanity check)
# ---------------------------------------------------------------------------
def _reference_forward(params, x0, x1):
    hi = jax.lax.Precision.HIGHEST
    dn = ("NCHW", "OIHW", "NCHW")

    def conv(x, w, b, stride, pad):
        y = jax.lax.conv_general_dilated(x, w, (stride, stride),
                                         [(pad, pad), (pad, pad)],
                                         dimension_numbers=dn, precision=hi)
        return y if b is None else y + b.reshape(1, -1, 1, 1)

    def bn(x, g, b):
        mean = x.mean(axis=(0, 2, 3), keepdims=True)
        var = ((x - mean) ** 2).mean(axis=(0, 2, 3), keepdims=True)
        return ((x - mean) * jax.lax.rsqrt(var + EPS) * g.reshape(1, -1, 1, 1)
                + b.reshape(1, -1, 1, 1))

    def ada(x, out):
        _, _, h, w = x.shape
        ph = jnp.asarray(_adaptive_pool_1d(h, out))
        pw = jnp.asarray(_adaptive_pool_1d(w, out))
        return jnp.einsum("nchw,oh,pw->ncop", x, ph, pw, precision=hi)

    def maxpool(x):
        xp = jnp.pad(x, ((0, 0), (0, 0), (1, 1), (1, 1)),
                     constant_values=-jnp.inf)
        cands = [xp[:, :, di:di + 19:2, dj:dj + 19:2]
                 for di in range(2) for dj in range(2)]
        return jnp.stack(cands).max(axis=0)

    h1 = bn(conv(x0, params["w1"], None, 2, 2), params["g1"], params["b1"])
    h2 = bn(conv(x1, params["w2"], params["bias2"], 2, 2), params["g2"], params["b2"])
    h2 = conv(h2, params["w3"], params["bias3"], 2, 2)
    h2 = ada(h2, ADA)
    x = jnp.maximum(h1 + h2, 0.0)
    x = maxpool(x)
    x = x.reshape(x.shape[0], -1)
    return jnp.dot(x, params["wfc"].T, precision=hi) + params["bfc"]


# ---------------------------------------------------------------------------
# Params + demo
# ---------------------------------------------------------------------------
def init_params(key):
    ks = jax.random.split(key, 7)

    def u(k, shape, fan_in):
        bound = 1.0 / (fan_in ** 0.5)
        return jax.random.uniform(k, shape, jnp.float32, -bound, bound)

    return {
        "w1": u(ks[0], (16, 3, 2, 2), 3 * 2 * 2),
        "g1": jnp.ones((16,), jnp.float32),
        "b1": jnp.zeros((16,), jnp.float32),
        "w2": u(ks[1], (8, 3, 3, 3), 3 * 3 * 3),
        "bias2": u(ks[2], (8,), 3 * 3 * 3),
        "g2": jnp.ones((8,), jnp.float32),
        "b2": jnp.zeros((8,), jnp.float32),
        "w3": u(ks[3], (16, 8, 3, 3), 8 * 3 * 3),
        "bias3": u(ks[4], (16,), 8 * 3 * 3),
        "wfc": u(ks[5], (NUM_CLASSES, 1600), 1600),
        "bfc": u(ks[6], (NUM_CLASSES,), 1600),
    }


if __name__ == "__main__":
    key = jax.random.PRNGKey(0)
    kp, k0, k1 = jax.random.split(key, 3)
    params = init_params(kp)
    # spatial 32 is forced by fc.in_features == 1600 (16*10*10 after maxpool)
    x0 = jax.random.normal(k0, (N_BATCH, 3, 32, 32), jnp.float32)
    x1 = jax.random.normal(k1, (N_BATCH, 3, 32, 32), jnp.float32)

    out = jax.jit(two_inputs_forward)(params, x0, x1)
    jax.block_until_ready(out)
    assert out.shape == (N_BATCH, NUM_CLASSES)

    ref = jax.jit(_reference_forward)(params, x0, x1)
    # bf16 activation casts in the 0/1 selection matmuls bound the error well
    # below 5e-3 on these O(0.3) outputs.
    assert jnp.allclose(out, ref, atol=5e-3, rtol=5e-3), (out, ref)

    print("KERNEL_OK")
</pallas_src>

<mosaic_0001>
module attributes {stable_mosaic.version = 11 : i64} {
  func.func @_two_inputs_kernel(%arg0: i32, %arg1: memref<12x648xf32, #tpu.memory_space<vmem>>, %arg2: memref<27x578xf32, #tpu.memory_space<vmem>>, %arg3: memref<16x12xf32, #tpu.memory_space<vmem>>, %arg4: memref<16x1xf32, #tpu.memory_space<vmem>>, %arg5: memref<16x1xf32, #tpu.memory_space<vmem>>, %arg6: memref<8x27xf32, #tpu.memory_space<vmem>>, %arg7: memref<8x1xf32, #tpu.memory_space<vmem>>, %arg8: memref<8x1xf32, #tpu.memory_space<vmem>>, %arg9: memref<9x32x16xf32, #tpu.memory_space<vmem>>, %arg10: memref<32x1xf32, #tpu.memory_space<vmem>>, %arg11: memref<9x289x100xbf16, #tpu.memory_space<any>>, %arg12: memref<100x324xf32, #tpu.memory_space<any>>, %arg13: memref<4x324x100xbf16, #tpu.memory_space<any>>, %arg14: memref<3x32x100xf32, #tpu.memory_space<vmem>>, %arg15: memref<2x32xf32, #tpu.memory_space<vmem>>, %arg16: memref<1x3xf32, #tpu.memory_space<vmem>>, %arg17: memref<2x3xf32, #tpu.memory_space<vmem>>, %arg18: memref<9x289x100xbf16, #tpu.memory_space<vmem>>, %arg19: memref<100x324xf32, #tpu.memory_space<vmem>>, %arg20: memref<4x324x100xbf16, #tpu.memory_space<vmem>>, %arg21: memref<3x!tpu.dma_semaphore, #tpu.memory_space<semaphore_mem>>) attributes {dimension_semantics = [#tpu.dimension_semantics<arbitrary>], iteration_bounds = array<i64: 1>, scalar_prefetch = 0 : i64, scratch_operands = 4 : i64, tpu.core_type = #tpu.core_type<tc>, window_params = [{pipeline_mode = #tpu.pipeline_mode<synchronous>, transform_indices = @transform_0, window_bounds = array<i64: 12, 648>}, {pipeline_mode = #tpu.pipeline_mode<synchronous>, transform_indices = @transform_1, window_bounds = array<i64: 27, 578>}, {pipeline_mode = #tpu.pipeline_mode<synchronous>, transform_indices = @transform_2, window_bounds = array<i64: 16, 12>}, {pipeline_mode = #tpu.pipeline_mode<synchronous>, transform_indices = @transform_3, window_bounds = array<i64: 16, 1>}, {pipeline_mode = #tpu.pipeline_mode<synchronous>, transform_indices = @transform_4, window_bounds = array<i64: 16, 1>}, {pipeline_mode = #tpu.pipeline_mode<synchronous>, transform_indices = @transform_5, window_bounds = array<i64: 8, 27>}, {pipeline_mode = #tpu.pipeline_mode<synchronous>, transform_indices = @transform_6, window_bounds = array<i64: 8, 1>}, {pipeline_mode = #tpu.pipeline_mode<synchronous>, transform_indices = @transform_7, window_bounds = array<i64: 8, 1>}, {pipeline_mode = #tpu.pipeline_mode<synchronous>, transform_indices = @transform_8, window_bounds = array<i64: 9, 32, 16>}, {pipeline_mode = #tpu.pipeline_mode<synchronous>, transform_indices = @transform_9, window_bounds = array<i64: 32, 1>}, {}, {}, {}, {pipeline_mode = #tpu.pipeline_mode<synchronous>, transform_indices = @transform_13, window_bounds = array<i64: 3, 32, 100>}, {pipeline_mode = #tpu.pipeline_mode<synchronous>, transform_indices = @transform_14, window_bounds = array<i64: 2, 32>}, {pipeline_mode = #tpu.pipeline_mode<synchronous>, transform_indices = @transform_15, window_bounds = array<i64: 1, 3>}, {pipeline_mode = #tpu.pipeline_mode<synchronous>, transform_indices = @transform_16, window_bounds = array<i64: 2, 3>}]} {
    %c0_i32 = arith.constant 0 : i32
    %0 = tpu.memref_slice %arg21[%c0_i32] : memref<3x!tpu.dma_semaphore, #tpu.memory_space<semaphore_mem>> -> memref<1x!tpu.dma_semaphore, #tpu.memory_space<semaphore_mem>>
    %1 = tpu.memref_squeeze %0 : memref<1x!tpu.dma_semaphore, #tpu.memory_space<semaphore_mem>> -> memref<!tpu.dma_semaphore, #tpu.memory_space<semaphore_mem>>
    tpu.enqueue_dma source(%arg11 : memref<9x289x100xbf16, #tpu.memory_space<any>>) target(%arg18 : memref<9x289x100xbf16, #tpu.memory_space<vmem>>) target_semaphore(%1 : memref<!tpu.dma_semaphore, #tpu.memory_space<semaphore_mem>>)
    %c1_i32 = arith.constant 1 : i32
    %2 = tpu.memref_slice %arg21[%c1_i32] : memref<3x!tpu.dma_semaphore, #tpu.memory_space<semaphore_mem>> -> memref<1x!tpu.dma_semaphore, #tpu.memory_space<semaphore_mem>>
    %3 = tpu.memref_squeeze %2 : memref<1x!tpu.dma_semaphore, #tpu.memory_space<semaphore_mem>> -> memref<!tpu.dma_semaphore, #tpu.memory_space<semaphore_mem>>
    tpu.enqueue_dma source(%arg12 : memref<100x324xf32, #tpu.memory_space<any>>) target(%arg19 : memref<100x324xf32, #tpu.memory_space<vmem>>) target_semaphore(%3 : memref<!tpu.dma_semaphore, #tpu.memory_space<semaphore_mem>>)
    %c2_i32 = arith.constant 2 : i32
    %4 = tpu.memref_slice %arg21[%c2_i32] : memref<3x!tpu.dma_semaphore, #tpu.memory_space<semaphore_mem>> -> memref<1x!tpu.dma_semaphore, #tpu.memory_space<semaphore_mem>>
    %5 = tpu.memref_squeeze %4 : memref<1x!tpu.dma_semaphore, #tpu.memory_space<semaphore_mem>> -> memref<!tpu.dma_semaphore, #tpu.memory_space<semaphore_mem>>
    tpu.enqueue_dma source(%arg13 : memref<4x324x100xbf16, #tpu.memory_space<any>>) target(%arg20 : memref<4x324x100xbf16, #tpu.memory_space<vmem>>) target_semaphore(%5 : memref<!tpu.dma_semaphore, #tpu.memory_space<semaphore_mem>>)
    %c0 = arith.constant 0 : index
    %c0_0 = arith.constant 0 : index
    %6 = vector.load %arg3[%c0, %c0_0] : memref<16x12xf32, #tpu.memory_space<vmem>>, vector<16x12xf32>
    %c0_1 = arith.constant 0 : index
    %c0_2 = arith.constant 0 : index
    %7 = vector.load %arg1[%c0_1, %c0_2] : memref<12x648xf32, #tpu.memory_space<vmem>>, vector<12x648xf32>
    %cst = arith.constant dense<0.000000e+00> : vector<16x648xf32>
    %8 = tpu.matmul %6, %7, %cst {dimension_numbers = #tpu.dot_dimension_numbers<[1], [0], [0], [1], [0, 0, 1, 1], [], []>} : vector<16x12xf32>, vector<12x648xf32>, vector<16x648xf32> -> vector<16x648xf32>
    %c0_3 = arith.constant 0 : index
    %c0_4 = arith.constant 0 : index
    %9 = vector.load %arg6[%c0_3, %c0_4] : memref<8x27xf32, #tpu.memory_space<vmem>>, vector<8x27xf32>
    %c0_5 = arith.constant 0 : index
    %c0_6 = arith.constant 0 : index
    %10 = vector.load %arg2[%c0_5, %c0_6] : memref<27x578xf32, #tpu.memory_space<vmem>>, vector<27x578xf32>
    %cst_7 = arith.constant dense<0.000000e+00> : vector<8x578xf32>
    %11 = tpu.matmul %9, %10, %cst_7 {dimension_numbers = #tpu.dot_dimension_numbers<[1], [0], [0], [1], [0, 0, 1, 1], [], []>} : vector<8x27xf32>, vector<27x578xf32>, vector<8x578xf32> -> vector<8x578xf32>
    %c0_8 = arith.constant 0 : index
    %c0_9 = arith.constant 0 : index
    %12 = vector.load %arg4[%c0_8, %c0_9] : memref<16x1xf32, #tpu.memory_space<vmem>>, vector<16x1xf32>
    %c0_10 = arith.constant 0 : index
    %c0_11 = arith.constant 0 : index
    %13 = vector.load %arg5[%c0_10, %c0_11] : memref<16x1xf32, #tpu.memory_space<vmem>>, vector<16x1xf32>
    %cst_12 = arith.constant dense<0.000000e+00> : vector<16xf32>
    %14 = vector.multi_reduction <add>, %8, %cst_12 [1] : vector<16x648xf32> to vector<16xf32>
    %15 = vector.shape_cast %14 : vector<16xf32> to vector<16x1xf32>
    %cst_13 = arith.constant 0.00154320989 : f32
    %16 = vector.broadcast %cst_13 : f32 to vector<16x1xf32>
    %17 = arith.mulf %15, %16 : vector<16x1xf32>
    %18 = vector.broadcast %17 : vector<16x1xf32> to vector<16x648xf32>
    %19 = arith.subf %8, %18 : vector<16x648xf32>
    %20 = arith.mulf %19, %19 : vector<16x648xf32>
    %cst_14 = arith.constant dense<0.000000e+00> : vector<16xf32>
    %21 = vector.multi_reduction <add>, %20, %cst_14 [1] : vector<16x648xf32> to vector<16xf32>
    %22 = vector.shape_cast %21 : vector<16xf32> to vector<16x1xf32>
    %cst_15 = arith.constant 0.00154320989 : f32
    %23 = vector.broadcast %cst_15 : f32 to vector<16x1xf32>
    %24 = arith.mulf %22, %23 : vector<16x1xf32>
    %25 = vector.broadcast %17 : vector<16x1xf32> to vector<16x648xf32>
    %26 = arith.subf %8, %25 : vector<16x648xf32>
    %cst_16 = arith.constant 9.99999974E-6 : f32
    %27 = vector.broadcast %cst_16 : f32 to vector<16x1xf32>
    %28 = arith.addf %24, %27 : vector<16x1xf32>
    %29 = math.rsqrt %28 : vector<16x1xf32>
    %30 = arith.mulf %29, %12 : vector<16x1xf32>
    %31 = vector.broadcast %30 : vector<16x1xf32> to vector<16x648xf32>
    %32 = arith.mulf %26, %31 : vector<16x648xf32>
    %33 = vector.broadcast %13 : vector<16x1xf32> to vector<16x648xf32>
    %34 = arith.addf %32, %33 : vector<16x648xf32>
    %c0_17 = arith.constant 0 : index
    %c0_18 = arith.constant 0 : index
    %35 = vector.load %arg7[%c0_17, %c0_18] : memref<8x1xf32, #tpu.memory_space<vmem>>, vector<8x1xf32>
    %c0_19 = arith.constant 0 : index
    %c0_20 = arith.constant 0 : index
    %36 = vector.load %arg8[%c0_19, %c0_20] : memref<8x1xf32, #tpu.memory_space<vmem>>, vector<8x1xf32>
    %cst_21 = arith.constant dense<0.000000e+00> : vector<8xf32>
    %37 = vector.multi_reduction <add>, %11, %cst_21 [1] : vector<8x578xf32> to vector<8xf32>
    %38 = vector.shape_cast %37 : vector<8xf32> to vector<8x1xf32>
    %cst_22 = arith.constant 0.00173010386 : f32
    %39 = vector.broadcast %cst_22 : f32 to vector<8x1xf32>
    %40 = arith.mulf %38, %39 : vector<8x1xf32>
    %41 = vector.broadcast %40 : vector<8x1xf32> to vector<8x578xf32>
    %42 = arith.subf %11, %41 : vector<8x578xf32>
    %43 = arith.mulf %42, %42 : vector<8x578xf32>
    %cst_23 = arith.constant dense<0.000000e+00> : vector<8xf32>
    %44 = vector.multi_reduction <add>, %43, %cst_23 [1] : vector<8x578xf32> to vector<8xf32>
    %45 = vector.shape_cast %44 : vector<8xf32> to vector<8x1xf32>
    %cst_24 = arith.constant 0.00173010386 : f32
    %46 = vector.broadcast %cst_24 : f32 to vector<8x1xf32>
    %47 = arith.mulf %45, %46 : vector<8x1xf32>
    %48 = vector.broadcast %40 : vector<8x1xf32> to vector<8x578xf32>
    %49 = arith.subf %11, %48 : vector<8x578xf32>
    %cst_25 = arith.constant 9.99999974E-6 : f32
    %50 = vector.broadcast %cst_25 : f32 to vector<8x1xf32>
    %51 = arith.addf %47, %50 : vector<8x1xf32>
    %52 = math.rsqrt %51 : vector<8x1xf32>
    %53 = arith.mulf %52, %35 : vector<8x1xf32>
    %54 = vector.broadcast %53 : vector<8x1xf32> to vector<8x578xf32>
    %55 = arith.mulf %49, %54 : vector<8x578xf32>
    %56 = vector.broadcast %36 : vector<8x1xf32> to vector<8x578xf32>
    %57 = arith.addf %55, %56 : vector<8x578xf32>
    %58 = vector.extract_strided_slice %34 {offsets = [0, 0], sizes = [16, 324], strides = [1, 1]} : vector<16x648xf32> to vector<16x324xf32>
    %59 = vector.extract_strided_slice %34 {offsets = [0, 324], sizes = [16, 324], strides = [1, 1]} : vector<16x648xf32> to vector<16x324xf32>
    %60 = tpu.concatenate %58, %59 in 0 : vector<16x324xf32>, vector<16x324xf32> -> vector<32x324xf32>
    %61 = vector.extract_strided_slice %57 {offsets = [0, 0], sizes = [8, 289], strides = [1, 1]} : vector<8x578xf32> to vector<8x289xf32>
    %62 = vector.extract_strided_slice %57 {offsets = [0, 289], sizes = [8, 289], strides = [1, 1]} : vector<8x578xf32> to vector<8x289xf32>
    %63 = tpu.concatenate %61, %62 in 0 : vector<8x289xf32>, vector<8x289xf32> -> vector<16x289xf32>
    %64 = arith.truncf %63 : vector<16x289xf32> to vector<16x289xbf16>
    %c0_i32_26 = arith.constant 0 : i32
    %65 = tpu.memref_slice %arg21[%c0_i32_26] : memref<3x!tpu.dma_semaphore, #tpu.memory_space<semaphore_mem>> -> memref<1x!tpu.dma_semaphore, #tpu.memory_space<semaphore_mem>>
    %66 = tpu.memref_squeeze %65 : memref<1x!tpu.dma_semaphore, #tpu.memory_space<semaphore_mem>> -> memref<!tpu.dma_semaphore, #tpu.memory_space<semaphore_mem>>
    tpu.wait_dma2 semaphore(%66 : memref<!tpu.dma_semaphore, #tpu.memory_space<semaphore_mem>>) src(%arg11 : memref<9x289x100xbf16, #tpu.memory_space<any>>) dst(%arg18 : memref<9x289x100xbf16, #tpu.memory_space<vmem>>)
    %c0_27 = arith.constant 0 : index
    %c0_28 = arith.constant 0 : index
    %c0_29 = arith.constant 0 : index
    %67 = vector.load %arg9[%c0_27, %c0_28, %c0_29] : memref<9x32x16xf32, #tpu.memory_space<vmem>>, vector<1x32x16xf32>
    %68 = vector.shape_cast %67 : vector<1x32x16xf32> to vector<32x16xf32>
    %c0_30 = arith.constant 0 : index
    %c0_31 = arith.constant 0 : index
    %c0_32 = arith.constant 0 : index
    %69 = vector.load %arg18[%c0_30, %c0_31, %c0_32] : memref<9x289x100xbf16, #tpu.memory_space<vmem>>, vector<1x289x100xbf16>
    %70 = vector.shape_cast %69 : vector<1x289x100xbf16> to vector<289x100xbf16>
    %cst_33 = arith.constant dense<0.000000e+00> : vector<16x100xf32>
    %71 = tpu.matmul %64, %70, %cst_33 {dimension_numbers = #tpu.dot_dimension_numbers<[1], [0], [0], [1], [0, 0, 1, 1], [], []>} : vector<16x289xbf16>, vector<289x100xbf16>, vector<16x100xf32> -> vector<16x100xf32>
    %cst_34 = arith.constant dense<0.000000e+00> : vector<32x100xf32>
    %72 = tpu.matmul %68, %71, %cst_34 {dimension_numbers = #tpu.dot_dimension_numbers<[1], [0], [0], [1], [0, 0, 1, 1], [], []>} : vector<32x16xf32>, vector<16x100xf32>, vector<32x100xf32> -> vector<32x100xf32>
    %c1 = arith.constant 1 : index
    %c0_35 = arith.constant 0 : index
    %c0_36 = arith.constant 0 : index
    %73 = vector.load %arg9[%c1, %c0_35, %c0_36] : memref<9x32x16xf32, #tpu.memory_space<vmem>>, vector<1x32x16xf32>
    %74 = vector.shape_cast %73 : vector<1x32x16xf32> to vector<32x16xf32>
    %c1_37 = arith.constant 1 : index
    %c0_38 = arith.constant 0 : index
    %c0_39 = arith.constant 0 : index
    %75 = vector.load %arg18[%c1_37, %c0_38, %c0_39] : memref<9x289x100xbf16, #tpu.memory_space<vmem>>, vector<1x289x100xbf16>
    %76 = vector.shape_cast %75 : vector<1x289x100xbf16> to vector<289x100xbf16>
    %cst_40 = arith.constant dense<0.000000e+00> : vector<16x100xf32>
    %77 = tpu.matmul %64, %76, %cst_40 {dimension_numbers = #tpu.dot_dimension_numbers<[1], [0], [0], [1], [0, 0, 1, 1], [], []>} : vector<16x289xbf16>, vector<289x100xbf16>, vector<16x100xf32> -> vector<16x100xf32>
    %cst_41 = arith.constant dense<0.000000e+00> : vector<32x100xf32>
    %78 = tpu.matmul %74, %77, %cst_41 {dimension_numbers = #tpu.dot_dimension_numbers<[1], [0], [0], [1], [0, 0, 1, 1], [], []>} : vector<32x16xf32>, vector<16x100xf32>, vector<32x100xf32> -> vector<32x100xf32>
    %79 = arith.addf %72, %78 : vector<32x100xf32>
    %c2 = arith.constant 2 : index
    %c0_42 = arith.constant 0 : index
    %c0_43 = arith.constant 0 : index
    %80 = vector.load %arg9[%c2, %c0_42, %c0_43] : memref<9x32x16xf32, #tpu.memory_space<vmem>>, vector<1x32x16xf32>
    %81 = vector.shape_cast %80 : vector<1x32x16xf32> to vector<32x16xf32>
    %c2_44 = arith.constant 2 : index
    %c0_45 = arith.constant 0 : index
    %c0_46 = arith.constant 0 : index
    %82 = vector.load %arg18[%c2_44, %c0_45, %c0_46] : memref<9x289x100xbf16, #tpu.memory_space<vmem>>, vector<1x289x100xbf16>
    %83 = vector.shape_cast %82 : vector<1x289x100xbf16> to vector<289x100xbf16>
    %cst_47 = arith.constant dense<0.000000e+00> : vector<16x100xf32>
    %84 = tpu.matmul %64, %83, %cst_47 {dimension_numbers = #tpu.dot_dimension_numbers<[1], [0], [0], [1], [0, 0, 1, 1], [], []>} : vector<16x289xbf16>, vector<289x100xbf16>, vector<16x100xf32> -> vector<16x100xf32>
    %cst_48 = arith.constant dense<0.000000e+00> : vector<32x100xf32>
    %85 = tpu.matmul %81, %84, %cst_48 {dimension_numbers = #tpu.dot_dimension_numbers<[1], [0], [0], [1], [0, 0, 1, 1], [], []>} : vector<32x16xf32>, vector<16x100xf32>, vector<32x100xf32> -> vector<32x100xf32>
    %86 = arith.addf %79, %85 : vector<32x100xf32>
    %c3 = arith.constant 3 : index
    %c0_49 = arith.constant 0 : index
    %c0_50 = arith.constant 0 : index
    %87 = vector.load %arg9[%c3, %c0_49, %c0_50] : memref<9x32x16xf32, #tpu.memory_space<vmem>>, vector<1x32x16xf32>
    %88 = vector.shape_cast %87 : vector<1x32x16xf32> to vector<32x16xf32>
    %c3_51 = arith.constant 3 : index
    %c0_52 = arith.constant 0 : index
    %c0_53 = arith.constant 0 : index
    %89 = vector.load %arg18[%c3_51, %c0_52, %c0_53] : memref<9x289x100xbf16, #tpu.memory_space<vmem>>, vector<1x289x100xbf16>
    %90 = vector.shape_cast %89 : vector<1x289x100xbf16> to vector<289x100xbf16>
    %cst_54 = arith.constant dense<0.000000e+00> : vector<16x100xf32>
    %91 = tpu.matmul %64, %90, %cst_54 {dimension_numbers = #tpu.dot_dimension_numbers<[1], [0], [0], [1], [0, 0, 1, 1], [], []>} : vector<16x289xbf16>, vector<289x100xbf16>, vector<16x100xf32> -> vector<16x100xf32>
    %cst_55 = arith.constant dense<0.000000e+00> : vector<32x100xf32>
    %92 = tpu.matmul %88, %91, %cst_55 {dimension_numbers = #tpu.dot_dimension_numbers<[1], [0], [0], [1], [0, 0, 1, 1], [], []>} : vector<32x16xf32>, vector<16x100xf32>, vector<32x100xf32> -> vector<32x100xf32>
    %93 = arith.addf %86, %92 : vector<32x100xf32>
    %c4 = arith.constant 4 : index
    %c0_56 = arith.constant 0 : index
    %c0_57 = arith.constant 0 : index
    %94 = vector.load %arg9[%c4, %c0_56, %c0_57] : memref<9x32x16xf32, #tpu.memory_space<vmem>>, vector<1x32x16xf32>
    %95 = vector.shape_cast %94 : vector<1x32x16xf32> to vector<32x16xf32>
    %c4_58 = arith.constant 4 : index
    %c0_59 = arith.constant 0 : index
    %c0_60 = arith.constant 0 : index
    %96 = vector.load %arg18[%c4_58, %c0_59, %c0_60] : memref<9x289x100xbf16, #tpu.memory_space<vmem>>, vector<1x289x100xbf16>
    %97 = vector.shape_cast %96 : vector<1x289x100xbf16> to vector<289x100xbf16>
    %cst_61 = arith.constant dense<0.000000e+00> : vector<16x100xf32>
    %98 = tpu.matmul %64, %97, %cst_61 {dimension_numbers = #tpu.dot_dimension_numbers<[1], [0], [0], [1], [0, 0, 1, 1], [], []>} : vector<16x289xbf16>, vector<289x100xbf16>, vector<16x100xf32> -> vector<16x100xf32>
    %cst_62 = arith.constant dense<0.000000e+00> : vector<32x100xf32>
    %99 = tpu.matmul %95, %98, %cst_62 {dimension_numbers = #tpu.dot_dimension_numbers<[1], [0], [0], [1], [0, 0, 1, 1], [], []>} : vector<32x16xf32>, vector<16x100xf32>, vector<32x100xf32> -> vector<32x100xf32>
    %100 = arith.addf %93, %99 : vector<32x100xf32>
    %c5 = arith.constant 5 : index
    %c0_63 = arith.constant 0 : index
    %c0_64 = arith.constant 0 : index
    %101 = vector.load %arg9[%c5, %c0_63, %c0_64] : memref<9x32x16xf32, #tpu.memory_space<vmem>>, vector<1x32x16xf32>
    %102 = vector.shape_cast %101 : vector<1x32x16xf32> to vector<32x16xf32>
    %c5_65 = arith.constant 5 : index
    %c0_66 = arith.constant 0 : index
    %c0_67 = arith.constant 0 : index
    %103 = vector.load %arg18[%c5_65, %c0_66, %c0_67] : memref<9x289x100xbf16, #tpu.memory_space<vmem>>, vector<1x289x100xbf16>
    %104 = vector.shape_cast %103 : vector<1x289x100xbf16> to vector<289x100xbf16>
    %cst_68 = arith.constant dense<0.000000e+00> : vector<16x100xf32>
    %105 = tpu.matmul %64, %104, %cst_68 {dimension_numbers = #tpu.dot_dimension_numbers<[1], [0], [0], [1], [0, 0, 1, 1], [], []>} : vector<16x289xbf16>, vector<289x100xbf16>, vector<16x100xf32> -> vector<16x100xf32>
    %cst_69 = arith.constant dense<0.000000e+00> : vector<32x100xf32>
    %106 = tpu.matmul %102, %105, %cst_69 {dimension_numbers = #tpu.dot_dimension_numbers<[1], [0], [0], [1], [0, 0, 1, 1], [], []>} : vector<32x16xf32>, vector<16x100xf32>, vector<32x100xf32> -> vector<32x100xf32>
    %107 = arith.addf %100, %106 : vector<32x100xf32>
    %c6 = arith.constant 6 : index
    %c0_70 = arith.constant 0 : index
    %c0_71 = arith.constant 0 : index
    %108 = vector.load %arg9[%c6, %c0_70, %c0_71] : memref<9x32x16xf32, #tpu.memory_space<vmem>>, vector<1x32x16xf32>
    %109 = vector.shape_cast %108 : vector<1x32x16xf32> to vector<32x16xf32>
    %c6_72 = arith.constant 6 : index
    %c0_73 = arith.constant 0 : index
    %c0_74 = arith.constant 0 : index
    %110 = vector.load %arg18[%c6_72, %c0_73, %c0_74] : memref<9x289x100xbf16, #tpu.memory_space<vmem>>, vector<1x289x100xbf16>
    %111 = vector.shape_cast %110 : vector<1x289x100xbf16> to vector<289x100xbf16>
    %cst_75 = arith.constant dense<0.000000e+00> : vector<16x100xf32>
    %112 = tpu.matmul %64, %111, %cst_75 {dimension_numbers = #tpu.dot_dimension_numbers<[1], [0], [0], [1], [0, 0, 1, 1], [], []>} : vector<16x289xbf16>, vector<289x100xbf16>, vector<16x100xf32> -> vector<16x100xf32>
    %cst_76 = arith.constant dense<0.000000e+00> : vector<32x100xf32>
    %113 = tpu.matmul %109, %112, %cst_76 {dimension_numbers = #tpu.dot_dimension_numbers<[1], [0], [0], [1], [0, 0, 1, 1], [], []>} : vector<32x16xf32>, vector<16x100xf32>, vector<32x100xf32> -> vector<32x100xf32>
    %114 = arith.addf %107, %113 : vector<32x100xf32>
    %c7 = arith.constant 7 : index
    %c0_77 = arith.constant 0 : index
    %c0_78 = arith.constant 0 : index
    %115 = vector.load %arg9[%c7, %c0_77, %c0_78] : memref<9x32x16xf32, #tpu.memory_space<vmem>>, vector<1x32x16xf32>
    %116 = vector.shape_cast %115 : vector<1x32x16xf32> to vector<32x16xf32>
    %c7_79 = arith.constant 7 : index
    %c0_80 = arith.constant 0 : index
    %c0_81 = arith.constant 0 : index
    %117 = vector.load %arg18[%c7_79, %c0_80, %c0_81] : memref<9x289x100xbf16, #tpu.memory_space<vmem>>, vector<1x289x100xbf16>
    %118 = vector.shape_cast %117 : vector<1x289x100xbf16> to vector<289x100xbf16>
    %cst_82 = arith.constant dense<0.000000e+00> : vector<16x100xf32>
    %119 = tpu.matmul %64, %118, %cst_82 {dimension_numbers = #tpu.dot_dimension_numbers<[1], [0], [0], [1], [0, 0, 1, 1], [], []>} : vector<16x289xbf16>, vector<289x100xbf16>, vector<16x100xf32> -> vector<16x100xf32>
    %cst_83 = arith.constant dense<0.000000e+00> : vector<32x100xf32>
    %120 = tpu.matmul %116, %119, %cst_83 {dimension_numbers = #tpu.dot_dimension_numbers<[1], [0], [0], [1], [0, 0, 1, 1], [], []>} : vector<32x16xf32>, vector<16x100xf32>, vector<32x100xf32> -> vector<32x100xf32>
    %121 = arith.addf %114, %120 : vector<32x100xf32>
    %c8 = arith.constant 8 : index
    %c0_84 = arith.constant 0 : index
    %c0_85 = arith.constant 0 : index
    %122 = vector.load %arg9[%c8, %c0_84, %c0_85] : memref<9x32x16xf32, #tpu.memory_space<vmem>>, vector<1x32x16xf32>
    %123 = vector.shape_cast %122 : vector<1x32x16xf32> to vector<32x16xf32>
    %c8_86 = arith.constant 8 : index
    %c0_87 = arith.constant 0 : index
    %c0_88 = arith.constant 0 : index
    %124 = vector.load %arg18[%c8_86, %c0_87, %c0_88] : memref<9x289x100xbf16, #tpu.memory_space<vmem>>, vector<1x289x100xbf16>
    %125 = vector.shape_cast %124 : vector<1x289x100xbf16> to vector<289x100xbf16>
    %cst_89 = arith.constant dense<0.000000e+00> : vector<16x100xf32>
    %126 = tpu.matmul %64, %125, %cst_89 {dimension_numbers = #tpu.dot_dimension_numbers<[1], [0], [0], [1], [0, 0, 1, 1], [], []>} : vector<16x289xbf16>, vector<289x100xbf16>, vector<16x100xf32> -> vector<16x100xf32>
    %cst_90 = arith.constant dense<0.000000e+00> : vector<32x100xf32>
    %127 = tpu.matmul %123, %126, %cst_90 {dimension_numbers = #tpu.dot_dimension_numbers<[1], [0], [0], [1], [0, 0, 1, 1], [], []>} : vector<32x16xf32>, vector<16x100xf32>, vector<32x100xf32> -> vector<32x100xf32>
    %128 = arith.addf %121, %127 : vector<32x100xf32>
    %c0_91 = arith.constant 0 : index
    %c0_92 = arith.constant 0 : index
    %129 = vector.load %arg10[%c0_91, %c0_92] : memref<32x1xf32, #tpu.memory_space<vmem>>, vector<32x1xf32>
    %130 = vector.broadcast %129 : vector<32x1xf32> to vector<32x100xf32>
    %131 = arith.addf %128, %130 : vector<32x100xf32>
    %c1_i32_93 = arith.constant 1 : i32
    %132 = tpu.memref_slice %arg21[%c1_i32_93] : memref<3x!tpu.dma_semaphore, #tpu.memory_space<semaphore_mem>> -> memref<1x!tpu.dma_semaphore, #tpu.memory_space<semaphore_mem>>
    %133 = tpu.memref_squeeze %132 : memref<1x!tpu.dma_semaphore, #tpu.memory_space<semaphore_mem>> -> memref<!tpu.dma_semaphore, #tpu.memory_space<semaphore_mem>>
    tpu.wait_dma2 semaphore(%133 : memref<!tpu.dma_semaphore, #tpu.memory_space<semaphore_mem>>) src(%arg12 : memref<100x324xf32, #tpu.memory_space<any>>) dst(%arg19 : memref<100x324xf32, #tpu.memory_space<vmem>>)
    %c0_94 = arith.constant 0 : index
    %c0_95 = arith.constant 0 : index
    %134 = vector.load %arg19[%c0_94, %c0_95] : memref<100x324xf32, #tpu.memory_space<vmem>>, vector<100x324xf32>
    %cst_96 = arith.constant dense<0.000000e+00> : vector<32x324xf32>
    %135 = tpu.matmul %131, %134, %cst_96 {dimension_numbers = #tpu.dot_dimension_numbers<[1], [0], [0], [1], [0, 0, 1, 1], [], []>} : vector<32x100xf32>, vector<100x324xf32>, vector<32x324xf32> -> vector<32x324xf32>
    %136 = arith.addf %60, %135 : vector<32x324xf32>
    %cst_97 = arith.constant 0.000000e+00 : f32
    %137 = vector.broadcast %cst_97 : f32 to vector<32x324xf32>
    %138 = arith.maximumf %136, %137 : vector<32x324xf32>
    %c2_i32_98 = arith.constant 2 : i32
    %139 = tpu.memref_slice %arg21[%c2_i32_98] : memref<3x!tpu.dma_semaphore, #tpu.memory_space<semaphore_mem>> -> memref<1x!tpu.dma_semaphore, #tpu.memory_space<semaphore_mem>>
    %140 = tpu.memref_squeeze %139 : memref<1x!tpu.dma_semaphore, #tpu.memory_space<semaphore_mem>> -> memref<!tpu.dma_semaphore, #tpu.memory_space<semaphore_mem>>
    tpu.wait_dma2 semaphore(%140 : memref<!tpu.dma_semaphore, #tpu.memory_space<semaphore_mem>>) src(%arg13 : memref<4x324x100xbf16, #tpu.memory_space<any>>) dst(%arg20 : memref<4x324x100xbf16, #tpu.memory_space<vmem>>)
    %141 = arith.truncf %138 : vector<32x324xf32> to vector<32x324xbf16>
    %c0_99 = arith.constant 0 : index
    %c0_100 = arith.constant 0 : index
    %c0_101 = arith.constant 0 : index
    %142 = vector.load %arg20[%c0_99, %c0_100, %c0_101] : memref<4x324x100xbf16, #tpu.memory_space<vmem>>, vector<1x324x100xbf16>
    %143 = vector.shape_cast %142 : vector<1x324x100xbf16> to vector<324x100xbf16>
    %cst_102 = arith.constant dense<0.000000e+00> : vector<32x100xf32>
    %144 = tpu.matmul %141, %143, %cst_102 {dimension_numbers = #tpu.dot_dimension_numbers<[1], [0], [0], [1], [0, 0, 1, 1], [], []>} : vector<32x324xbf16>, vector<324x100xbf16>, vector<32x100xf32> -> vector<32x100xf32>
    %c1_103 = arith.constant 1 : index
    %c0_104 = arith.constant 0 : index
    %c0_105 = arith.constant 0 : index
    %145 = vector.load %arg20[%c1_103, %c0_104, %c0_105] : memref<4x324x100xbf16, #tpu.memory_space<vmem>>, vector<1x324x100xbf16>
    %146 = vector.shape_cast %145 : vector<1x324x100xbf16> to vector<324x100xbf16>
    %cst_106 = arith.constant dense<0.000000e+00> : vector<32x100xf32>
    %147 = tpu.matmul %141, %146, %cst_106 {dimension_numbers = #tpu.dot_dimension_numbers<[1], [0], [0], [1], [0, 0, 1, 1], [], []>} : vector<32x324xbf16>, vector<324x100xbf16>, vector<32x100xf32> -> vector<32x100xf32>
    %148 = arith.maximumf %144, %147 : vector<32x100xf32>
    %c2_107 = arith.constant 2 : index
    %c0_108 = arith.constant 0 : index
    %c0_109 = arith.constant 0 : index
    %149 = vector.load %arg20[%c2_107, %c0_108, %c0_109] : memref<4x324x100xbf16, #tpu.memory_space<vmem>>, vector<1x324x100xbf16>
    %150 = vector.shape_cast %149 : vector<1x324x100xbf16> to vector<324x100xbf16>
    %cst_110 = arith.constant dense<0.000000e+00> : vector<32x100xf32>
    %151 = tpu.matmul %141, %150, %cst_110 {dimension_numbers = #tpu.dot_dimension_numbers<[1], [0], [0], [1], [0, 0, 1, 1], [], []>} : vector<32x324xbf16>, vector<324x100xbf16>, vector<32x100xf32> -> vector<32x100xf32>
    %152 = arith.maximumf %148, %151 : vector<32x100xf32>
    %c3_111 = arith.constant 3 : index
    %c0_112 = arith.constant 0 : index
    %c0_113 = arith.constant 0 : index
    %153 = vector.load %arg20[%c3_111, %c0_112, %c0_113] : memref<4x324x100xbf16, #tpu.memory_space<vmem>>, vector<1x324x100xbf16>
    %154 = vector.shape_cast %153 : vector<1x324x100xbf16> to vector<324x100xbf16>
    %cst_114 = arith.constant dense<0.000000e+00> : vector<32x100xf32>
    %155 = tpu.matmul %141, %154, %cst_114 {dimension_numbers = #tpu.dot_dimension_numbers<[1], [0], [0], [1], [0, 0, 1, 1], [], []>} : vector<32x324xbf16>, vector<324x100xbf16>, vector<32x100xf32> -> vector<32x100xf32>
    %156 = arith.maximumf %152, %155 : vector<32x100xf32>
    %c0_115 = arith.constant 0 : index
    %c0_116 = arith.constant 0 : index
    %c0_117 = arith.constant 0 : index
    %157 = vector.load %arg14[%c0_115, %c0_116, %c0_117] : memref<3x32x100xf32, #tpu.memory_space<vmem>>, vector<1x32x100xf32>
    %158 = vector.shape_cast %157 : vector<1x32x100xf32> to vector<32x100xf32>
    %159 = arith.mulf %158, %156 : vector<32x100xf32>
    %cst_118 = arith.constant dense<0.000000e+00> : vector<32xf32>
    %160 = vector.multi_reduction <add>, %159, %cst_118 [1] : vector<32x100xf32> to vector<32xf32>
    %161 = vector.shape_cast %160 : vector<32xf32> to vector<32x1xf32>
    %c1_119 = arith.constant 1 : index
    %c0_120 = arith.constant 0 : index
    %c0_121 = arith.constant 0 : index
    %162 = vector.load %arg14[%c1_119, %c0_120, %c0_121] : memref<3x32x100xf32, #tpu.memory_space<vmem>>, vector<1x32x100xf32>
    %163 = vector.shape_cast %162 : vector<1x32x100xf32> to vector<32x100xf32>
    %164 = arith.mulf %163, %156 : vector<32x100xf32>
    %cst_122 = arith.constant dense<0.000000e+00> : vector<32xf32>
    %165 = vector.multi_reduction <add>, %164, %cst_122 [1] : vector<32x100xf32> to vector<32xf32>
    %166 = vector.shape_cast %165 : vector<32xf32> to vector<32x1xf32>
    %c2_123 = arith.constant 2 : index
    %c0_124 = arith.constant 0 : index
    %c0_125 = arith.constant 0 : index
    %167 = vector.load %arg14[%c2_123, %c0_124, %c0_125] : memref<3x32x100xf32, #tpu.memory_space<vmem>>, vector<1x32x100xf32>
    %168 = vector.shape_cast %167 : vector<1x32x100xf32> to vector<32x100xf32>
    %169 = arith.mulf %168, %156 : vector<32x100xf32>
    %cst_126 = arith.constant dense<0.000000e+00> : vector<32xf32>
    %170 = vector.multi_reduction <add>, %169, %cst_126 [1] : vector<32x100xf32> to vector<32xf32>
    %171 = vector.shape_cast %170 : vector<32xf32> to vector<32x1xf32>
    %172 = tpu.concatenate %161, %166, %171 in 1 : vector<32x1xf32>, vector<32x1xf32>, vector<32x1xf32> -> vector<32x3xf32>
    %c0_127 = arith.constant 0 : index
    %c0_128 = arith.constant 0 : index
    %173 = vector.load %arg15[%c0_127, %c0_128] : memref<2x32xf32, #tpu.memory_space<vmem>>, vector<2x32xf32>
    %cst_129 = arith.constant dense<0.000000e+00> : vector<2x3xf32>
    %174 = tpu.matmul %173, %172, %cst_129 {dimension_numbers = #tpu.dot_dimension_numbers<[1], [0], [0], [1], [0, 0, 1, 1], [], []>} : vector<2x32xf32>, vector<32x3xf32>, vector<2x3xf32> -> vector<2x3xf32>
    %c0_130 = arith.constant 0 : index
    %c0_131 = arith.constant 0 : index
    %175 = vector.load %arg16[%c0_130, %c0_131] : memref<1x3xf32, #tpu.memory_space<vmem>>, vector<1x3xf32>
    %176 = vector.broadcast %175 : vector<1x3xf32> to vector<2x3xf32>
    %177 = arith.addf %174, %176 : vector<2x3xf32>
    %c0_132 = arith.constant 0 : index
    %c0_133 = arith.constant 0 : index
    %178 = vector.load %arg17[%c0_132, %c0_133] : memref<2x3xf32, #tpu.memory_space<vmem>>, vector<2x3xf32>
    tpu.vector_store %arg17[%c0_132, %c0_133], %177 {strides = array<i32>} : memref<2x3xf32, #tpu.memory_space<vmem>>, vector<2x3xf32>,
    return
  }
  func.func @transform_0(%arg0: i32) -> (i32, i32) {
    %c0_i32 = arith.constant 0 : i32
    %c0_i32_0 = arith.constant 0 : i32
    %c0_i32_1 = arith.constant 0 : i32
    return %c0_i32, %c0_i32_0 : i32, i32
  }
  func.func @transform_1(%arg0: i32) -> (i32, i32) {
    %c0_i32 = arith.constant 0 : i32
    %c0_i32_0 = arith.constant 0 : i32
    %c0_i32_1 = arith.constant 0 : i32
    return %c0_i32, %c0_i32_0 : i32, i32
  }
  func.func @transform_2(%arg0: i32) -> (i32, i32) {
    %c0_i32 = arith.constant 0 : i32
    %c0_i32_0 = arith.constant 0 : i32
    %c0_i32_1 = arith.constant 0 : i32
    return %c0_i32, %c0_i32_0 : i32, i32
  }
  func.func @transform_3(%arg0: i32) -> (i32, i32) {
    %c0_i32 = arith.constant 0 : i32
    %c0_i32_0 = arith.constant 0 : i32
    %c0_i32_1 = arith.constant 0 : i32
    return %c0_i32, %c0_i32_0 : i32, i32
  }
  func.func @transform_4(%arg0: i32) -> (i32, i32) {
    %c0_i32 = arith.constant 0 : i32
    %c0_i32_0 = arith.constant 0 : i32
    %c0_i32_1 = arith.constant 0 : i32
    return %c0_i32, %c0_i32_0 : i32, i32
  }
  func.func @transform_5(%arg0: i32) -> (i32, i32) {
    %c0_i32 = arith.constant 0 : i32
    %c0_i32_0 = arith.constant 0 : i32
    %c0_i32_1 = arith.constant 0 : i32
    return %c0_i32, %c0_i32_0 : i32, i32
  }
  func.func @transform_6(%arg0: i32) -> (i32, i32) {
    %c0_i32 = arith.constant 0 : i32
    %c0_i32_0 = arith.constant 0 : i32
    %c0_i32_1 = arith.constant 0 : i32
    return %c0_i32, %c0_i32_0 : i32, i32
  }
  func.func @transform_7(%arg0: i32) -> (i32, i32) {
    %c0_i32 = arith.constant 0 : i32
    %c0_i32_0 = arith.constant 0 : i32
    %c0_i32_1 = arith.constant 0 : i32
    return %c0_i32, %c0_i32_0 : i32, i32
  }
  func.func @transform_8(%arg0: i32) -> (i32, i32, i32) {
    %c0_i32 = arith.constant 0 : i32
    %c0_i32_0 = arith.constant 0 : i32
    %c0_i32_1 = arith.constant 0 : i32
    %c0_i32_2 = arith.constant 0 : i32
    return %c0_i32, %c0_i32_0, %c0_i32_1 : i32, i32, i32
  }
  func.func @transform_9(%arg0: i32) -> (i32, i32) {
    %c0_i32 = arith.constant 0 : i32
    %c0_i32_0 = arith.constant 0 : i32
    %c0_i32_1 = arith.constant 0 : i32
    return %c0_i32, %c0_i32_0 : i32, i32
  }
  func.func @transform_13(%arg0: i32) -> (i32, i32, i32) {
    %c0_i32 = arith.constant 0 : i32
    %c0_i32_0 = arith.constant 0 : i32
    %c0_i32_1 = arith.constant 0 : i32
    %c0_i32_2 = arith.constant 0 : i32
    return %c0_i32, %c0_i32_0, %c0_i32_1 : i32, i32, i32
  }
  func.func @transform_14(%arg0: i32) -> (i32, i32) {
    %c0_i32 = arith.constant 0 : i32
    %c0_i32_0 = arith.constant 0 : i32
    %c0_i32_1 = arith.constant 0 : i32
    return %c0_i32, %c0_i32_0 : i32, i32
  }
  func.func @transform_15(%arg0: i32) -> (i32, i32) {
    %c0_i32 = arith.constant 0 : i32
    %c0_i32_0 = arith.constant 0 : i32
    %c0_i32_1 = arith.constant 0 : i32
    return %c0_i32, %c0_i32_0 : i32, i32
  }
  func.func @transform_16(%arg0: i32) -> (i32, i32) {
    %c0_i32 = arith.constant 0 : i32
    %c0_i32_0 = arith.constant 0 : i32
    %c0_i32_1 = arith.constant 0 : i32
    return %c0_i32, %c0_i32_0 : i32, i32
  }
}

</mosaic_0001>

<llo_original>
// kernel: two_inputs_forward.1
$region0: #{two_inputs_forward.1}
  #allocation0 [shape = 'u32[]', space=smem, size = 0x4, offset = 0x4, fixed_abs, tag = 'smem constant byte address 0x4 - core index']
  #allocation1 [shape = 'u32[144,128]{1,0:T(1,128)}', space=vmem, size = 0x12000, scoped, tag = 'internal scratch']
  #allocation2 [shape = 'bf16[9,289,100]{2,1,0:T(8,128)(2,1)}', space=vmem, size = 0xa6800, scoped, tag = 'scratch operand']
  #allocation3 [shape = 'f32[100,324]{1,0:T(8,128)}', space=vmem, size = 0x27000, scoped, tag = 'scratch operand']
  #allocation4 [shape = 'bf16[4,324,100]{2,1,0:T(8,128)(2,1)}', space=vmem, size = 0x52000, scoped, tag = 'scratch operand']
  #allocation5 [shape = 's32[3]{0}', space=sflag, size = 0xc, scoped, tag = 'scratch operand']
  #allocation8 [shape = 's32[]', space=sflag, size = 0x4, offset = 0, fixed_abs, tag = 'sflag constant byte address 0x0 - dummy sync flag']
  #allocation9 [shape = 's32[]', space=sflag, size = 0x4, offset = 0, fixed_abs, tag = 'sflag constant byte address 0x0 - dummy sync flag']
  #allocation10 [shape = 's32[]', space=sflag, size = 0x4, offset = 0, fixed_abs, tag = 'sflag constant byte address 0x0 - dummy sync flag']
  %s0 = inlined_call_operand.vmem [shape: f32[12,648], index: 0, kind: input, shape index: {}]
  %s1 = inlined_call_operand.vmem [shape: f32[27,578], index: 1, kind: input, shape index: {}]
  %s2 = inlined_call_operand.vmem [shape: f32[16,12], index: 2, kind: input, shape index: {}]
  %s3 = inlined_call_operand.vmem [shape: f32[16,1], index: 3, kind: input, shape index: {}]
  %s4 = inlined_call_operand.vmem [shape: f32[16,1], index: 4, kind: input, shape index: {}]
  %s5 = inlined_call_operand.vmem [shape: f32[8,27], index: 5, kind: input, shape index: {}]
  %s6 = inlined_call_operand.vmem [shape: f32[8,1], index: 6, kind: input, shape index: {}]
  %s7 = inlined_call_operand.vmem [shape: f32[8,1], index: 7, kind: input, shape index: {}]
  %s8 = inlined_call_operand.vmem [shape: f32[9,32,16], index: 8, kind: input, shape index: {}]
  %s9 = inlined_call_operand.vmem [shape: f32[32,1], index: 9, kind: input, shape index: {}]
  %s10 = inlined_call_operand.vmem [shape: bf16[9,289,100], index: 10, kind: input, shape index: {}]
  %s11 = inlined_call_operand.vmem [shape: f32[100,324], index: 11, kind: input, shape index: {}]
  %s12 = inlined_call_operand.vmem [shape: bf16[4,324,100], index: 12, kind: input, shape index: {}]
  %s13 = inlined_call_operand.vmem [shape: f32[3,32,100], index: 13, kind: input, shape index: {}]
  %s14 = inlined_call_operand.vmem [shape: f32[2,32], index: 14, kind: input, shape index: {}]
  %s15 = inlined_call_operand.vmem [shape: f32[1,3], index: 15, kind: input, shape index: {}]
  %s16 = inlined_call_operand.hbm [shape: f32[2,3], index: 16, kind: output, shape index: {}]
  %s17 = sld [smem:[#allocation0]]
  $region167: #{two_inputs_forward.1} parent=0
    _
  %s19 = ssub.s32 1, %s17
  %s20 = scalar_select 0, %s19, %s17
  $region1: #{two_inputs_forward.1} parent=0
    #allocation6 [shape = 'u8[1024]{0}', space=vmem, size = 0x400, scoped, tag = 'output window, operand 0, single buffered']
    #allocation7 [shape = 's32[1]{0}', space=sflag, size = 0x4, scoped, tag = 'scoped memory for two_inputs_forward.1']
    %21 = vsyncpa [#allocation7], 0
    // Predicated region
    $region2: #{two_inputs_forward.1} parent=1 // pred_check
      _
    $region3: #{two_inputs_forward.1} parent=1 // pred_check_branch
      %23 = sbr.rel (0) target = $region5
    $region4: #{two_inputs_forward.1} parent=1 // pred_region
      _
    $region5: #{two_inputs_forward.1} parent=1 // pred_fallthru
      _
    // Predicated region
    $region6: #{two_inputs_forward.1} parent=1 // pred_check
      _
    $region7: #{two_inputs_forward.1} parent=1 // pred_check_branch
      %25 = sbr.rel (0) target = $region9
    $region8: #{two_inputs_forward.1} parent=1 // pred_region
      _
    $region9: #{two_inputs_forward.1} parent=1 // pred_fallthru
      _
    // Predicated region
    $region10: #{two_inputs_forward.1} parent=1 // pred_check
      _
    $region11: #{two_inputs_forward.1} parent=1 // pred_check_branch
      %27 = sbr.rel (0) target = $region13
    $region12: #{two_inputs_forward.1} parent=1 // pred_region
      _
    $region13: #{two_inputs_forward.1} parent=1 // pred_fallthru
      _
    // Predicated region
    $region14: #{two_inputs_forward.1} parent=1 // pred_check
      _
    $region15: #{two_inputs_forward.1} parent=1 // pred_check_branch
      %29 = sbr.rel (0) target = $region17
    $region16: #{two_inputs_forward.1} parent=1 // pred_region
      _
    $region17: #{two_inputs_forward.1} parent=1 // pred_fallthru
      _
    // Predicated region
    $region18: #{two_inputs_forward.1} parent=1 // pred_check
      _
    $region19: #{two_inputs_forward.1} parent=1 // pred_check_branch
      %31 = sbr.rel (0) target = $region21
    $region20: #{two_inputs_forward.1} parent=1 // pred_region
      _
    $region21: #{two_inputs_forward.1} parent=1 // pred_fallthru
      _
    // Predicated region
    $region22: #{two_inputs_forward.1} parent=1 // pred_check
      _
    $region23: #{two_inputs_forward.1} parent=1 // pred_check_branch
      %33 = sbr.rel (0) target = $region25
    $region24: #{two_inputs_forward.1} parent=1 // pred_region
      _
    $region25: #{two_inputs_forward.1} parent=1 // pred_fallthru
      _
    // Predicated region
    $region26: #{two_inputs_forward.1} parent=1 // pred_check
      _
    $region27: #{two_inputs_forward.1} parent=1 // pred_check_branch
      %35 = sbr.rel (0) target = $region29
    $region28: #{two_inputs_forward.1} parent=1 // pred_region
      _
    $region29: #{two_inputs_forward.1} parent=1 // pred_fallthru
      _
    // Predicated region
    $region30: #{two_inputs_forward.1} parent=1 // pred_check
      _
    $region31: #{two_inputs_forward.1} parent=1 // pred_check_branch
      %37 = sbr.rel (0) target = $region33
    $region32: #{two_inputs_forward.1} parent=1 // pred_region
      _
    $region33: #{two_inputs_forward.1} parent=1 // pred_fallthru
      _
    // Predicated region
    $region34: #{two_inputs_forward.1} parent=1 // pred_check
      _
    $region35: #{two_inputs_forward.1} parent=1 // pred_check_branch
      %39 = sbr.rel (0) target = $region37
    $region36: #{two_inputs_forward.1} parent=1 // pred_region
      _
    $region37: #{two_inputs_forward.1} parent=1 // pred_fallthru
      _
    // Predicated region
    $region38: #{two_inputs_forward.1} parent=1 // pred_check
      _
    $region39: #{two_inputs_forward.1} parent=1 // pred_check_branch
      %41 = sbr.rel (0) target = $region41
    $region40: #{two_inputs_forward.1} parent=1 // pred_region
      _
    $region41: #{two_inputs_forward.1} parent=1 // pred_fallthru
      _
    // Predicated region
    $region42: #{two_inputs_forward.1} parent=1 // pred_check
      _
    $region43: #{two_inputs_forward.1} parent=1 // pred_check_branch
      %43 = sbr.rel (0) target = $region45
    $region44: #{two_inputs_forward.1} parent=1 // pred_region
      _
    $region45: #{two_inputs_forward.1} parent=1 // pred_fallthru
      _
    // Predicated region
    $region46: #{two_inputs_forward.1} parent=1 // pred_check
      _
    $region47: #{two_inputs_forward.1} parent=1 // pred_check_branch
      %45 = sbr.rel (0) target = $region49
    $region48: #{two_inputs_forward.1} parent=1 // pred_region
      _
    $region49: #{two_inputs_forward.1} parent=1 // pred_fallthru
      _
    // Predicated region
    $region50: #{two_inputs_forward.1} parent=1 // pred_check
      _
    $region51: #{two_inputs_forward.1} parent=1 // pred_check_branch
      %47 = sbr.rel (0) target = $region53
    $region52: #{two_inputs_forward.1} parent=1 // pred_region
      _
    $region53: #{two_inputs_forward.1} parent=1 // pred_fallthru
      _
    %p50 = scmp.lt.u32.totalorder 1332, 8
    %p51 = pneg %p50
    // Predicated region
    $region54: #{two_inputs_forward.1} parent=1 // pred_check
      _
    $region55: #{two_inputs_forward.1} parent=1 // pred_check_branch
      %53 = sbr.rel (%p50) target = $region57
    $region56: #{two_inputs_forward.1} parent=1 // pred_region
      %s69 = sand.u32 1332, 7
      %p70 = scmp.eq.s32.totalorder %s69, 0
      %p71 = pneg %p70
      // Predicated region
      $region69: #{two_inputs_forward.1} parent=56 // pred_check
        _
      $region70: #{two_inputs_forward.1} parent=56 // pred_check_branch
        %73 = sbr.rel (%p70) target = $region72
      $region71: #{two_inputs_forward.1} parent=56 // pred_region
        %s74 = sand.u32 1332, 7
        %s75 = ssub.s32 1332, %s74
        %s76 = scalar_lea.vmem %s10, %s75
        %s77 = ssub.s32 1332, %s74
        %s78 = scalar_lea.vmem [#allocation2], %s77
        loop: start=0, step=1, limit=1
        $region73: #{two_inputs_forward.1} parent=71 // loop_pre_header
          _
        $region74: #{two_inputs_forward.1} parent=71 // loop_header
          %s80 = sphi 0, %s84
          %p81 = scmp.ge.s32.totalorder %s80, 1
          %s85 = sphi %s10, %s10
          %s86 = sphi [#allocation2], [#allocation2]
        $region75: #{two_inputs_forward.1} parent=71 // loop_header_branch
          %83 = sbr.rel (%p81) target = $region79
        $region76: #{two_inputs_forward.1} parent=71 // loop_body
          %v87 = vld [vmem:[%s85] sm:$0xff]
          %88 = vst [vmem:[%s86] sm:$0xff] %v87
          %v89 = vld [vmem:[%s85 + $0x8] sm:$0xff]
          %90 = vst [vmem:[%s86 + $0x8] sm:$0xff] %v89
          %v91 = vld [vmem:[%s85 + $0x10] sm:$0xff]
          %92 = vst [vmem:[%s86 + $0x10] sm:$0xff] %v91
          %v93 = vld [vmem:[%s85 + $0x18] sm:$0xff]
          %94 = vst [vmem:[%s86 + $0x18] sm:$0xff] %v93
          %v95 = vld [vmem:[%s85 + $0x20] sm:$0xff]
          %96 = vst [vmem:[%s86 + $0x20] sm:$0xff] %v95
          %v97 = vld [vmem:[%s85 + $0x28] sm:$0xff]
          %98 = vst [vmem:[%s86 + $0x28] sm:$0xff] %v97
          %v99 = vld [vmem:[%s85 + $0x30] sm:$0xff]
          %100 = vst [vmem:[%s86 + $0x30] sm:$0xff] %v99
          %v101 = vld [vmem:[%s85 + $0x38] sm:$0xff]
          %102 = vst [vmem:[%s86 + $0x38] sm:$0xff] %v101
          %v103 = vld [vmem:[%s85 + $0x40] sm:$0xff]
          %104 = vst [vmem:[%s86 + $0x40] sm:$0xff] %v103
          %v105 = vld [vmem:[%s85 + $0x48] sm:$0xff]
          %106 = vst [vmem:[%s86 + $0x48] sm:$0xff] %v105
          %v107 = vld [vmem:[%s85 + $0x50] sm:$0xff]
          %108 = vst [vmem:[%s86 + $0x50] sm:$0xff] %v107
          %v109 = vld [vmem:[%s85 + $0x58] sm:$0xff]
          %110 = vst [vmem:[%s86 + $0x58] sm:$0xff] %v109
          %v111 = vld [vmem:[%s85 + $0x60] sm:$0xff]
          %112 = vst [vmem:[%s86 + $0x60] sm:$0xff] %v111
          %v113 = vld [vmem:[%s85 + $0x68] sm:$0xff]
          %114 = vst [vmem:[%s86 + $0x68] sm:$0xff] %v113
          %v115 = vld [vmem:[%s85 + $0x70] sm:$0xff]
          %116 = vst [vmem:[%s86 + $0x70] sm:$0xff] %v115
          %v117 = vld [vmem:[%s85 + $0x78] sm:$0xff]
          %118 = vst [vmem:[%s86 + $0x78] sm:$0xff] %v117
          %v119 = vld [vmem:[%s85 + $0x80] sm:$0xff]
          %120 = vst [vmem:[%s86 + $0x80] sm:$0xff] %v119
          %v121 = vld [vmem:[%s85 + $0x88] sm:$0xff]
          %122 = vst [vmem:[%s86 + $0x88] sm:$0xff] %v121
          %v123 = vld [vmem:[%s85 + $0x90] sm:$0xff]
          %124 = vst [vmem:[%s86 + $0x90] sm:$0xff] %v123
          %v125 = vld [vmem:[%s85 + $0x98] sm:$0xff]
          %126 = vst [vmem:[%s86 + $0x98] sm:$0xff] %v125
          %v127 = vld [vmem:[%s85 + $0xa0] sm:$0xff]
          %128 = vst [vmem:[%s86 + $0xa0] sm:$0xff] %v127
          %v129 = vld [vmem:[%s85 + $0xa8] sm:$0xff]
          %130 = vst [vmem:[%s86 + $0xa8] sm:$0xff] %v129
          %v131 = vld [vmem:[%s85 + $0xb0] sm:$0xff]
          %132 = vst [vmem:[%s86 + $0xb0] sm:$0xff] %v131
          %v133 = vld [vmem:[%s85 + $0xb8] sm:$0xff]
          %134 = vst [vmem:[%s86 + $0xb8] sm:$0xff] %v133
          %v135 = vld [vmem:[%s85 + $0xc0] sm:$0xff]
          %136 = vst [vmem:[%s86 + $0xc0] sm:$0xff] %v135
          %v137 = vld [vmem:[%s85 + $0xc8] sm:$0xff]
          %138 = vst [vmem:[%s86 + $0xc8] sm:$0xff] %v137
          %v139 = vld [vmem:[%s85 + $0xd0] sm:$0xff]
          %140 = vst [vmem:[%s86 + $0xd0] sm:$0xff] %v139
          %v141 = vld [vmem:[%s85 + $0xd8] sm:$0xff]
          %142 = vst [vmem:[%s86 + $0xd8] sm:$0xff] %v141
          %v143 = vld [vmem:[%s85 + $0xe0] sm:$0xff]
          %144 = vst [vmem:[%s86 + $0xe0] sm:$0xff] %v143
          %v145 = vld [vmem:[%s85 + $0xe8] sm:$0xff]
          %146 = vst [vmem:[%s86 + $0xe8] sm:$0xff] %v145
          %v147 = vld [vmem:[%s85 + $0xf0] sm:$0xff]
          %148 = vst [vmem:[%s86 + $0xf0] sm:$0xff] %v147
          %v149 = vld [vmem:[%s85 + $0xf8] sm:$0xff]
          %150 = vst [vmem:[%s86 + $0xf8] sm:$0xff] %v149
          %v151 = vld [vmem:[%s85 + $0x100] sm:$0xff]
          %152 = vst [vmem:[%s86 + $0x100] sm:$0xff] %v151
          %v153 = vld [vmem:[%s85 + $0x108] sm:$0xff]
          %154 = vst [vmem:[%s86 + $0x108] sm:$0xff] %v153
          %v155 = vld [vmem:[%s85 + $0x110] sm:$0xff]
          %156 = vst [vmem:[%s86 + $0x110] sm:$0xff] %v155
          %v157 = vld [vmem:[%s85 + $0x118] sm:$0xff]
          %158 = vst [vmem:[%s86 + $0x118] sm:$0xff] %v157
          %v159 = vld [vmem:[%s85 + $0x120] sm:$0xff]
          %160 = vst [vmem:[%s86 + $0x120] sm:$0xff] %v159
          %v161 = vld [vmem:[%s85 + $0x128] sm:$0xff]
          %162 = vst [vmem:[%s86 + $0x128] sm:$0xff] %v161
          %v163 = vld [vmem:[%s85 + $0x130] sm:$0xff]
          %164 = vst [vmem:[%s86 + $0x130] sm:$0xff] %v163
          %v165 = vld [vmem:[%s85 + $0x138] sm:$0xff]
          %166 = vst [vmem:[%s86 + $0x138] sm:$0xff] %v165
          %v167 = vld [vmem:[%s85 + $0x140] sm:$0xff]
          %168 = vst [vmem:[%s86 + $0x140] sm:$0xff] %v167
          %v169 = vld [vmem:[%s85 + $0x148] sm:$0xff]
          %170 = vst [vmem:[%s86 + $0x148] sm:$0xff] %v169
          %v171 = vld [vmem:[%s85 + $0x150] sm:$0xff]
          %172 = vst [vmem:[%s86 + $0x150] sm:$0xff] %v171
          %v173 = vld [vmem:[%s85 + $0x158] sm:$0xff]
          %174 = vst [vmem:[%s86 + $0x158] sm:$0xff] %v173
          %v175 = vld [vmem:[%s85 + $0x160] sm:$0xff]
          %176 = vst [vmem:[%s86 + $0x160] sm:$0xff] %v175
          %v177 = vld [vmem:[%s85 + $0x168] sm:$0xff]
          %178 = vst [vmem:[%s86 + $0x168] sm:$0xff] %v177
          %v179 = vld [vmem:[%s85 + $0x170] sm:$0xff]
          %180 = vst [vmem:[%s86 + $0x170] sm:$0xff] %v179
          %v181 = vld [vmem:[%s85 + $0x178] sm:$0xff]
          %182 = vst [vmem:[%s86 + $0x178] sm:$0xff] %v181
          %v183 = vld [vmem:[%s85 + $0x180] sm:$0xff]
          %184 = vst [vmem:[%s86 + $0x180] sm:$0xff] %v183
          %v185 = vld [vmem:[%s85 + $0x188] sm:$0xff]
          %186 = vst [vmem:[%s86 + $0x188] sm:$0xff] %v185
          %v187 = vld [vmem:[%s85 + $0x190] sm:$0xff]
          %188 = vst [vmem:[%s86 + $0x190] sm:$0xff] %v187
          %v189 = vld [vmem:[%s85 + $0x198] sm:$0xff]
          %190 = vst [vmem:[%s86 + $0x198] sm:$0xff] %v189
          %v191 = vld [vmem:[%s85 + $0x1a0] sm:$0xff]
          %192 = vst [vmem:[%s86 + $0x1a0] sm:$0xff] %v191
          %v193 = vld [vmem:[%s85 + $0x1a8] sm:$0xff]
          %194 = vst [vmem:[%s86 + $0x1a8] sm:$0xff] %v193
          %v195 = vld [vmem:[%s85 + $0x1b0] sm:$0xff]
          %196 = vst [vmem:[%s86 + $0x1b0] sm:$0xff] %v195
          %v197 = vld [vmem:[%s85 + $0x1b8] sm:$0xff]
          %198 = vst [vmem:[%s86 + $0x1b8] sm:$0xff] %v197
          %v199 = vld [vmem:[%s85 + $0x1c0] sm:$0xff]
          %200 = vst [vmem:[%s86 + $0x1c0] sm:$0xff] %v199
          %v201 = vld [vmem:[%s85 + $0x1c8] sm:$0xff]
          %202 = vst [vmem:[%s86 + $0x1c8] sm:$0xff] %v201
          %v203 = vld [vmem:[%s85 + $0x1d0] sm:$0xff]
          %204 = vst [vmem:[%s86 + $0x1d0] sm:$0xff] %v203
          %v205 = vld [vmem:[%s85 + $0x1d8] sm:$0xff]
          %206 = vst [vmem:[%s86 + $0x1d8] sm:$0xff] %v205
          %v207 = vld [vmem:[%s85 + $0x1e0] sm:$0xff]
          %208 = vst [vmem:[%s86 + $0x1e0] sm:$0xff] %v207
          %v209 = vld [vmem:[%s85 + $0x1e8] sm:$0xff]
          %210 = vst [vmem:[%s86 + $0x1e8] sm:$0xff] %v209
          %v211 = vld [vmem:[%s85 + $0x1f0] sm:$0xff]
          %212 = vst [vmem:[%s86 + $0x1f0] sm:$0xff] %v211
          %v213 = vld [vmem:[%s85 + $0x1f8] sm:$0xff]
          %214 = vst [vmem:[%s86 + $0x1f8] sm:$0xff] %v213
          %v215 = vld [vmem:[%s85 + $0x200] sm:$0xff]
          %216 = vst [vmem:[%s86 + $0x200] sm:$0xff] %v215
          %v217 = vld [vmem:[%s85 + $0x208] sm:$0xff]
          %218 = vst [vmem:[%s86 + $0x208] sm:$0xff] %v217
          %v219 = vld [vmem:[%s85 + $0x210] sm:$0xff]
          %220 = vst [vmem:[%s86 + $0x210] sm:$0xff] %v219
          %v221 = vld [vmem:[%s85 + $0x218] sm:$0xff]
          %222 = vst [vmem:[%s86 + $0x218] sm:$0xff] %v221
          %v223 = vld [vmem:[%s85 + $0x220] sm:$0xff]
          %224 = vst [vmem:[%s86 + $0x220] sm:$0xff] %v223
          %v225 = vld [vmem:[%s85 + $0x228] sm:$0xff]
          %226 = vst [vmem:[%s86 + $0x228] sm:$0xff] %v225
          %v227 = vld [vmem:[%s85 + $0x230] sm:$0xff]
          %228 = vst [vmem:[%s86 + $0x230] sm:$0xff] %v227
          %v229 = vld [vmem:[%s85 + $0x238] sm:$0xff]
          %230 = vst [vmem:[%s86 + $0x238] sm:$0xff] %v229
          %v231 = vld [vmem:[%s85 + $0x240] sm:$0xff]
          %232 = vst [vmem:[%s86 + $0x240] sm:$0xff] %v231
          %v233 = vld [vmem:[%s85 + $0x248] sm:$0xff]
          %234 = vst [vmem:[%s86 + $0x248] sm:$0xff] %v233
          %v235 = vld [vmem:[%s85 + $0x250] sm:$0xff]
          %236 = vst [vmem:[%s86 + $0x250] sm:$0xff] %v235
          %v237 = vld [vmem:[%s85 + $0x258] sm:$0xff]
          %238 = vst [vmem:[%s86 + $0x258] sm:$0xff] %v237
          %v239 = vld [vmem:[%s85 + $0x260] sm:$0xff]
          %240 = vst [vmem:[%s86 + $0x260] sm:$0xff] %v239
          %v241 = vld [vmem:[%s85 + $0x268] sm:$0xff]
          %242 = vst [vmem:[%s86 + $0x268] sm:$0xff] %v241
          %v243 = vld [vmem:[%s85 + $0x270] sm:$0xff]
          %244 = vst [vmem:[%s86 + $0x270] sm:$0xff] %v243
          %v245 = vld [vmem:[%s85 + $0x278] sm:$0xff]
          %246 = vst [vmem:[%s86 + $0x278] sm:$0xff] %v245
          %v247 = vld [vmem:[%s85 + $0x280] sm:$0xff]
          %248 = vst [vmem:[%s86 + $0x280] sm:$0xff] %v247
          %v249 = vld [vmem:[%s85 + $0x288] sm:$0xff]
          %250 = vst [vmem:[%s86 + $0x288] sm:$0xff] %v249
          %v251 = vld [vmem:[%s85 + $0x290] sm:$0xff]
          %252 = vst [vmem:[%s86 + $0x290] sm:$0xff] %v251
          %v253 = vld [vmem:[%s85 + $0x298] sm:$0xff]
          %254 = vst [vmem:[%s86 + $0x298] sm:$0xff] %v253
          %v255 = vld [vmem:[%s85 + $0x2a0] sm:$0xff]
          %256 = vst [vmem:[%s86 + $0x2a0] sm:$0xff] %v255
          %v257 = vld [vmem:[%s85 + $0x2a8] sm:$0xff]
          %258 = vst [vmem:[%s86 + $0x2a8] sm:$0xff] %v257
          %v259 = vld [vmem:[%s85 + $0x2b0] sm:$0xff]
          %260 = vst [vmem:[%s86 + $0x2b0] sm:$0xff] %v259
          %v261 = vld [vmem:[%s85 + $0x2b8] sm:$0xff]
          %262 = vst [vmem:[%s86 + $0x2b8] sm:$0xff] %v261
          %v263 = vld [vmem:[%s85 + $0x2c0] sm:$0xff]
          %264 = vst [vmem:[%s86 + $0x2c0] sm:$0xff] %v263
          %v265 = vld [vmem:[%s85 + $0x2c8] sm:$0xff]
          %266 = vst [vmem:[%s86 + $0x2c8] sm:$0xff] %v265
          %v267 = vld [vmem:[%s85 + $0x2d0] sm:$0xff]
          %268 = vst [vmem:[%s86 + $0x2d0] sm:$0xff] %v267
          %v269 = vld [vmem:[%s85 + $0x2d8] sm:$0xff]
          %270 = vst [vmem:[%s86 + $0x2d8] sm:$0xff] %v269
          %v271 = vld [vmem:[%s85 + $0x2e0] sm:$0xff]
          %272 = vst [vmem:[%s86 + $0x2e0] sm:$0xff] %v271
          %v273 = vld [vmem:[%s85 + $0x2e8] sm:$0xff]
          %274 = vst [vmem:[%s86 + $0x2e8] sm:$0xff] %v273
          %v275 = vld [vmem:[%s85 + $0x2f0] sm:$0xff]
          %276 = vst [vmem:[%s86 + $0x2f0] sm:$0xff] %v275
          %v277 = vld [vmem:[%s85 + $0x2f8] sm:$0xff]
          %278 = vst [vmem:[%s86 + $0x2f8] sm:$0xff] %v277
          %v279 = vld [vmem:[%s85 + $0x300] sm:$0xff]
          %280 = vst [vmem:[%s86 + $0x300] sm:$0xff] %v279
          %v281 = vld [vmem:[%s85 + $0x308] sm:$0xff]
          %282 = vst [vmem:[%s86 + $0x308] sm:$0xff] %v281
          %v283 = vld [vmem:[%s85 + $0x310] sm:$0xff]
          %284 = vst [vmem:[%s86 + $0x310] sm:$0xff] %v283
          %v285 = vld [vmem:[%s85 + $0x318] sm:$0xff]
          %286 = vst [vmem:[%s86 + $0x318] sm:$0xff] %v285
          %v287 = vld [vmem:[%s85 + $0x320] sm:$0xff]
          %288 = vst [vmem:[%s86 + $0x320] sm:$0xff] %v287
          %v289 = vld [vmem:[%s85 + $0x328] sm:$0xff]
          %290 = vst [vmem:[%s86 + $0x328] sm:$0xff] %v289
          %v291 = vld [vmem:[%s85 + $0x330] sm:$0xff]
          %292 = vst [vmem:[%s86 + $0x330] sm:$0xff] %v291
          %v293 = vld [vmem:[%s85 + $0x338] sm:$0xff]
          %294 = vst [vmem:[%s86 + $0x338] sm:$0xff] %v293
          %v295 = vld [vmem:[%s85 + $0x340] sm:$0xff]
          %296 = vst [vmem:[%s86 + $0x340] sm:$0xff] %v295
          %v297 = vld [vmem:[%s85 + $0x348] sm:$0xff]
          %298 = vst [vmem:[%s86 + $0x348] sm:$0xff] %v297
          %v299 = vld [vmem:[%s85 + $0x350] sm:$0xff]
          %300 = vst [vmem:[%s86 + $0x350] sm:$0xff] %v299
          %v301 = vld [vmem:[%s85 + $0x358] sm:$0xff]
          %302 = vst [vmem:[%s86 + $0x358] sm:$0xff] %v301
          %v303 = vld [vmem:[%s85 + $0x360] sm:$0xff]
          %304 = vst [vmem:[%s86 + $0x360] sm:$0xff] %v303
          %v305 = vld [vmem:[%s85 + $0x368] sm:$0xff]
          %306 = vst [vmem:[%s86 + $0x368] sm:$0xff] %v305
          %v307 = vld [vmem:[%s85 + $0x370] sm:$0xff]
          %308 = vst [vmem:[%s86 + $0x370] sm:$0xff] %v307
          %v309 = vld [vmem:[%s85 + $0x378] sm:$0xff]
          %310 = vst [vmem:[%s86 + $0x378] sm:$0xff] %v309
          %v311 = vld [vmem:[%s85 + $0x380] sm:$0xff]
          %312 = vst [vmem:[%s86 + $0x380] sm:$0xff] %v311
          %v313 = vld [vmem:[%s85 + $0x388] sm:$0xff]
          %314 = vst [vmem:[%s86 + $0x388] sm:$0xff] %v313
          %v315 = vld [vmem:[%s85 + $0x390] sm:$0xff]
          %316 = vst [vmem:[%s86 + $0x390] sm:$0xff] %v315
          %v317 = vld [vmem:[%s85 + $0x398] sm:$0xff]
          %318 = vst [vmem:[%s86 + $0x398] sm:$0xff] %v317
          %v319 = vld [vmem:[%s85 + $0x3a0] sm:$0xff]
          %320 = vst [vmem:[%s86 + $0x3a0] sm:$0xff] %v319
          %v321 = vld [vmem:[%s85 + $0x3a8] sm:$0xff]
          %322 = vst [vmem:[%s86 + $0x3a8] sm:$0xff] %v321
          %v323 = vld [vmem:[%s85 + $0x3b0] sm:$0xff]
          %324 = vst [vmem:[%s86 + $0x3b0] sm:$0xff] %v323
          %v325 = vld [vmem:[%s85 + $0x3b8] sm:$0xff]
          %326 = vst [vmem:[%s86 + $0x3b8] sm:$0xff] %v325
          %v327 = vld [vmem:[%s85 + $0x3c0] sm:$0xff]
          %328 = vst [vmem:[%s86 + $0x3c0] sm:$0xff] %v327
          %v329 = vld [vmem:[%s85 + $0x3c8] sm:$0xff]
          %330 = vst [vmem:[%s86 + $0x3c8] sm:$0xff] %v329
          %v331 = vld [vmem:[%s85 + $0x3d0] sm:$0xff]
          %332 = vst [vmem:[%s86 + $0x3d0] sm:$0xff] %v331
          %v333 = vld [vmem:[%s85 + $0x3d8] sm:$0xff]
          %334 = vst [vmem:[%s86 + $0x3d8] sm:$0xff] %v333
          %v335 = vld [vmem:[%s85 + $0x3e0] sm:$0xff]
          %336 = vst [vmem:[%s86 + $0x3e0] sm:$0xff] %v335
          %v337 = vld [vmem:[%s85 + $0x3e8] sm:$0xff]
          %338 = vst [vmem:[%s86 + $0x3e8] sm:$0xff] %v337
          %v339 = vld [vmem:[%s85 + $0x3f0] sm:$0xff]
          %340 = vst [vmem:[%s86 + $0x3f0] sm:$0xff] %v339
          %v341 = vld [vmem:[%s85 + $0x3f8] sm:$0xff]
          %342 = vst [vmem:[%s86 + $0x3f8] sm:$0xff] %v341
          %v343 = vld [vmem:[%s85 + $0x400] sm:$0xff]
          %344 = vst [vmem:[%s86 + $0x400] sm:$0xff] %v343
          %v345 = vld [vmem:[%s85 + $0x408] sm:$0xff]
          %346 = vst [vmem:[%s86 + $0x408] sm:$0xff] %v345
          %v347 = vld [vmem:[%s85 + $0x410] sm:$0xff]
          %348 = vst [vmem:[%s86 + $0x410] sm:$0xff] %v347
          %v349 = vld [vmem:[%s85 + $0x418] sm:$0xff]
          %350 = vst [vmem:[%s86 + $0x418] sm:$0xff] %v349
          %v351 = vld [vmem:[%s85 + $0x420] sm:$0xff]
          %352 = vst [vmem:[%s86 + $0x420] sm:$0xff] %v351
          %v353 = vld [vmem:[%s85 + $0x428] sm:$0xff]
          %354 = vst [vmem:[%s86 + $0x428] sm:$0xff] %v353
          %v355 = vld [vmem:[%s85 + $0x430] sm:$0xff]
          %356 = vst [vmem:[%s86 + $0x430] sm:$0xff] %v355
          %v357 = vld [vmem:[%s85 + $0x438] sm:$0xff]
          %358 = vst [vmem:[%s86 + $0x438] sm:$0xff] %v357
          %v359 = vld [vmem:[%s85 + $0x440] sm:$0xff]
          %360 = vst [vmem:[%s86 + $0x440] sm:$0xff] %v359
          %v361 = vld [vmem:[%s85 + $0x448] sm:$0xff]
          %362 = vst [vmem:[%s86 + $0x448] sm:$0xff] %v361
          %v363 = vld [vmem:[%s85 + $0x450] sm:$0xff]
          %364 = vst [vmem:[%s86 + $0x450] sm:$0xff] %v363
          %v365 = vld [vmem:[%s85 + $0x458] sm:$0xff]
          %366 = vst [vmem:[%s86 + $0x458] sm:$0xff] %v365
          %v367 = vld [vmem:[%s85 + $0x460] sm:$0xff]
          %368 = vst [vmem:[%s86 + $0x460] sm:$0xff] %v367
          %v369 = vld [vmem:[%s85 + $0x468] sm:$0xff]
          %370 = vst [vmem:[%s86 + $0x468] sm:$0xff] %v369
          %v371 = vld [vmem:[%s85 + $0x470] sm:$0xff]
          %372 = vst [vmem:[%s86 + $0x470] sm:$0xff] %v371
          %v373 = vld [vmem:[%s85 + $0x478] sm:$0xff]
          %374 = vst [vmem:[%s86 + $0x478] sm:$0xff] %v373
          %v375 = vld [vmem:[%s85 + $0x480] sm:$0xff]
          %376 = vst [vmem:[%s86 + $0x480] sm:$0xff] %v375
          %v377 = vld [vmem:[%s85 + $0x488] sm:$0xff]
          %378 = vst [vmem:[%s86 + $0x488] sm:$0xff] %v377
          %v379 = vld [vmem:[%s85 + $0x490] sm:$0xff]
          %380 = vst [vmem:[%s86 + $0x490] sm:$0xff] %v379
          %v381 = vld [vmem:[%s85 + $0x498] sm:$0xff]
          %382 = vst [vmem:[%s86 + $0x498] sm:$0xff] %v381
          %v383 = vld [vmem:[%s85 + $0x4a0] sm:$0xff]
          %384 = vst [vmem:[%s86 + $0x4a0] sm:$0xff] %v383
          %v385 = vld [vmem:[%s85 + $0x4a8] sm:$0xff]
          %386 = vst [vmem:[%s86 + $0x4a8] sm:$0xff] %v385
          %v387 = vld [vmem:[%s85 + $0x4b0] sm:$0xff]
          %388 = vst [vmem:[%s86 + $0x4b0] sm:$0xff] %v387
          %v389 = vld [vmem:[%s85 + $0x4b8] sm:$0xff]
          %390 = vst [vmem:[%s86 + $0x4b8] sm:$0xff] %v389
          %v391 = vld [vmem:[%s85 + $0x4c0] sm:$0xff]
          %392 = vst [vmem:[%s86 + $0x4c0] sm:$0xff] %v391
          %v393 = vld [vmem:[%s85 + $0x4c8] sm:$0xff]
          %394 = vst [vmem:[%s86 + $0x4c8] sm:$0xff] %v393
          %v395 = vld [vmem:[%s85 + $0x4d0] sm:$0xff]
          %396 = vst [vmem:[%s86 + $0x4d0] sm:$0xff] %v395
          %v397 = vld [vmem:[%s85 + $0x4d8] sm:$0xff]
          %398 = vst [vmem:[%s86 + $0x4d8] sm:$0xff] %v397
          %v399 = vld [vmem:[%s85 + $0x4e0] sm:$0xff]
          %400 = vst [vmem:[%s86 + $0x4e0] sm:$0xff] %v399
          %v401 = vld [vmem:[%s85 + $0x4e8] sm:$0xff]
          %402 = vst [vmem:[%s86 + $0x4e8] sm:$0xff] %v401
          %v403 = vld [vmem:[%s85 + $0x4f0] sm:$0xff]
          %404 = vst [vmem:[%s86 + $0x4f0] sm:$0xff] %v403
          %v405 = vld [vmem:[%s85 + $0x4f8] sm:$0xff]
          %406 = vst [vmem:[%s86 + $0x4f8] sm:$0xff] %v405
          %v407 = vld [vmem:[%s85 + $0x500] sm:$0xff]
          %408 = vst [vmem:[%s86 + $0x500] sm:$0xff] %v407
          %v409 = vld [vmem:[%s85 + $0x508] sm:$0xff]
          %410 = vst [vmem:[%s86 + $0x508] sm:$0xff] %v409
          %v411 = vld [vmem:[%s85 + $0x510] sm:$0xff]
          %412 = vst [vmem:[%s86 + $0x510] sm:$0xff] %v411
          %v413 = vld [vmem:[%s85 + $0x518] sm:$0xff]
          %414 = vst [vmem:[%s86 + $0x518] sm:$0xff] %v413
          %v415 = vld [vmem:[%s85 + $0x520] sm:$0xff]
          %416 = vst [vmem:[%s86 + $0x520] sm:$0xff] %v415
          %v417 = vld [vmem:[%s85 + $0x528] sm:$0xff]
          %418 = vst [vmem:[%s86 + $0x528] sm:$0xff] %v417
        $region77: #{two_inputs_forward.1} parent=71 // loop_footer
          %s84 = sadd.s32 1, %s80
        $region78: #{two_inputs_forward.1} parent=71 // loop_footer_branch
          %79 = sbr.rel target = $region74
        $region79: #{two_inputs_forward.1} parent=71 // loop_exit
          _
        %s419 = sshll.u32 1, %s74
        %s420 = ssub.s32 %s419, 1
        loop: start=0, step=1, limit=1
        $region80: #{two_inputs_forward.1} parent=71 // loop_pre_header
          _
        $region81: #{two_inputs_forward.1} parent=71 // loop_header
          %s422 = sphi 0, %s426
          %p423 = scmp.ge.s32.totalorder %s422, 1
          %s427 = sphi %s76, %s76
          %s428 = sphi %s78, %s78
        $region82: #{two_inputs_forward.1} parent=71 // loop_header_branch
          %425 = sbr.rel (%p423) target = $region86
        $region83: #{two_inputs_forward.1} parent=71 // loop_body
          %v429 = vld [vmem:[%s427] sm:%s420]
          %430 = vst [vmem:[%s428] sm:%s420] %v429
        $region84: #{two_inputs_forward.1} parent=71 // loop_footer
          %s426 = sadd.s32 1, %s422
        $region85: #{two_inputs_forward.1} parent=71 // loop_footer_branch
          %421 = sbr.rel target = $region81
        $region86: #{two_inputs_forward.1} parent=71 // loop_exit
          _
      $region72: #{two_inputs_forward.1} parent=56 // pred_fallthru
        _
    $region57: #{two_inputs_forward.1} parent=1 // pred_fallthru
      _
    // Predicated region
    $region58: #{two_inputs_forward.1} parent=1 // pred_check
      %p54 = pneg %p50
    $region59: #{two_inputs_forward.1} parent=1 // pred_check_branch
      %56 = sbr.rel (%p54) target = $region61
    $region60: #{two_inputs_forward.1} parent=1 // pred_region
      %s57 = sshll.u32 1, 1332
      %s58 = ssub.s32 %s57, 1
      loop: start=0, step=1, limit=1
      $region62: #{two_inputs_forward.1} parent=60 // loop_pre_header
        _
      $region63: #{two_inputs_forward.1} parent=60 // loop_header
        %s60 = sphi 0, %s64
        %p61 = scmp.ge.s32.totalorder %s60, 1
        %s65 = sphi %s10, %s10
        %s66 = sphi [#allocation2], [#allocation2]
      $region64: #{two_inputs_forward.1} parent=60 // loop_header_branch
        %63 = sbr.rel (%p61) target = $region68
      $region65: #{two_inputs_forward.1} parent=60 // loop_body
        %v67 = vld [vmem:[%s65] sm:%s58]
        %68 = vst [vmem:[%s66] sm:%s58] %v67
      $region66: #{two_inputs_forward.1} parent=60 // loop_footer
        %s64 = sadd.s32 1, %s60
      $region67: #{two_inputs_forward.1} parent=60 // loop_footer_branch
        %59 = sbr.rel target = $region63
      $region68: #{two_inputs_forward.1} parent=60 // loop_exit
        _
    $region61: #{two_inputs_forward.1} parent=1 // pred_fallthru
      _
    // Predicated region
    $region87: #{two_inputs_forward.1} parent=1 // pred_check
      _
    $region88: #{two_inputs_forward.1} parent=1 // pred_check_branch
      %433 = sbr.rel (0) target = $region90
    $region89: #{two_inputs_forward.1} parent=1 // pred_region
      %434 = vsyncadd [#allocation5], 21312
    $region90: #{two_inputs_forward.1} parent=1 // pred_fallthru
      _
    %s435 = scalar_lea.sflag [#allocation5], 1
    %p437 = scmp.lt.u32.totalorder 312, 8
    %p438 = pneg %p437
    // Predicated region
    $region91: #{two_inputs_forward.1} parent=1 // pred_check
      _
    $region92: #{two_inputs_forward.1} parent=1 // pred_check_branch
      %440 = sbr.rel (%p437) target = $region94
    $region93: #{two_inputs_forward.1} parent=1 // pred_region
      %s456 = sand.u32 312, 7
      %p457 = scmp.eq.s32.totalorder %s456, 0
      // Predicated region
      $region106: #{two_inputs_forward.1} parent=93 // pred_check
        %p458 = pneg %p457
      $region107: #{two_inputs_forward.1} parent=93 // pred_check_branch
        %460 = sbr.rel (%p458) target = $region109
      $region108: #{two_inputs_forward.1} parent=93 // pred_region
        loop: start=0, step=1, limit=1
        $region110: #{two_inputs_forward.1} parent=108 // loop_pre_header
          _
        $region111: #{two_inputs_forward.1} parent=108 // loop_header
          %s462 = sphi 0, %s466
          %p463 = scmp.ge.s32.totalorder %s462, 1
          %s467 = sphi %s11, %s11
          %s468 = sphi [#allocation3], [#allocation3]
        $region112: #{two_inputs_forward.1} parent=108 // loop_header_branch
          %465 = sbr.rel (%p463) target = $region116
        $region113: #{two_inputs_forward.1} parent=108 // loop_body
          %v469 = vld [vmem:[%s467] sm:$0xff]
          %470 = vst [vmem:[%s468] sm:$0xff] %v469
          %v471 = vld [vmem:[%s467 + $0x8] sm:$0xff]
          %472 = vst [vmem:[%s468 + $0x8] sm:$0xff] %v471
          %v473 = vld [vmem:[%s467 + $0x10] sm:$0xff]
          %474 = vst [vmem:[%s468 + $0x10] sm:$0xff] %v473
          %v475 = vld [vmem:[%s467 + $0x18] sm:$0xff]
          %476 = vst [vmem:[%s468 + $0x18] sm:$0xff] %v475
          %v477 = vld [vmem:[%s467 + $0x20] sm:$0xff]
          %478 = vst [vmem:[%s468 + $0x20] sm:$0xff] %v477
          %v479 = vld [vmem:[%s467 + $0x28] sm:$0xff]
          %480 = vst [vmem:[%s468 + $0x28] sm:$0xff] %v479
          %v481 = vld [vmem:[%s467 + $0x30] sm:$0xff]
          %482 = vst [vmem:[%s468 + $0x30] sm:$0xff] %v481
          %v483 = vld [vmem:[%s467 + $0x38] sm:$0xff]
          %484 = vst [vmem:[%s468 + $0x38] sm:$0xff] %v483
          %v485 = vld [vmem:[%s467 + $0x40] sm:$0xff]
          %486 = vst [vmem:[%s468 + $0x40] sm:$0xff] %v485
          %v487 = vld [vmem:[%s467 + $0x48] sm:$0xff]
          %488 = vst [vmem:[%s468 + $0x48] sm:$0xff] %v487
          %v489 = vld [vmem:[%s467 + $0x50] sm:$0xff]
          %490 = vst [vmem:[%s468 + $0x50] sm:$0xff] %v489
          %v491 = vld [vmem:[%s467 + $0x58] sm:$0xff]
          %492 = vst [vmem:[%s468 + $0x58] sm:$0xff] %v491
          %v493 = vld [vmem:[%s467 + $0x60] sm:$0xff]
          %494 = vst [vmem:[%s468 + $0x60] sm:$0xff] %v493
          %v495 = vld [vmem:[%s467 + $0x68] sm:$0xff]
          %496 = vst [vmem:[%s468 + $0x68] sm:$0xff] %v495
          %v497 = vld [vmem:[%s467 + $0x70] sm:$0xff]
          %498 = vst [vmem:[%s468 + $0x70] sm:$0xff] %v497
          %v499 = vld [vmem:[%s467 + $0x78] sm:$0xff]
          %500 = vst [vmem:[%s468 + $0x78] sm:$0xff] %v499
          %v501 = vld [vmem:[%s467 + $0x80] sm:$0xff]
          %502 = vst [vmem:[%s468 + $0x80] sm:$0xff] %v501
          %v503 = vld [vmem:[%s467 + $0x88] sm:$0xff]
          %504 = vst [vmem:[%s468 + $0x88] sm:$0xff] %v503
          %v505 = vld [vmem:[%s467 + $0x90] sm:$0xff]
          %506 = vst [vmem:[%s468 + $0x90] sm:$0xff] %v505
          %v507 = vld [vmem:[%s467 + $0x98] sm:$0xff]
          %508 = vst [vmem:[%s468 + $0x98] sm:$0xff] %v507
          %v509 = vld [vmem:[%s467 + $0xa0] sm:$0xff]
          %510 = vst [vmem:[%s468 + $0xa0] sm:$0xff] %v509
          %v511 = vld [vmem:[%s467 + $0xa8] sm:$0xff]
          %512 = vst [vmem:[%s468 + $0xa8] sm:$0xff] %v511
          %v513 = vld [vmem:[%s467 + $0xb0] sm:$0xff]
          %514 = vst [vmem:[%s468 + $0xb0] sm:$0xff] %v513
          %v515 = vld [vmem:[%s467 + $0xb8] sm:$0xff]
          %516 = vst [vmem:[%s468 + $0xb8] sm:$0xff] %v515
          %v517 = vld [vmem:[%s467 + $0xc0] sm:$0xff]
          %518 = vst [vmem:[%s468 + $0xc0] sm:$0xff] %v517
          %v519 = vld [vmem:[%s467 + $0xc8] sm:$0xff]
          %520 = vst [vmem:[%s468 + $0xc8] sm:$0xff] %v519
          %v521 = vld [vmem:[%s467 + $0xd0] sm:$0xff]
          %522 = vst [vmem:[%s468 + $0xd0] sm:$0xff] %v521
          %v523 = vld [vmem:[%s467 + $0xd8] sm:$0xff]
          %524 = vst [vmem:[%s468 + $0xd8] sm:$0xff] %v523
          %v525 = vld [vmem:[%s467 + $0xe0] sm:$0xff]
          %526 = vst [vmem:[%s468 + $0xe0] sm:$0xff] %v525
          %v527 = vld [vmem:[%s467 + $0xe8] sm:$0xff]
          %528 = vst [vmem:[%s468 + $0xe8] sm:$0xff] %v527
          %v529 = vld [vmem:[%s467 + $0xf0] sm:$0xff]
          %530 = vst [vmem:[%s468 + $0xf0] sm:$0xff] %v529
          %v531 = vld [vmem:[%s467 + $0xf8] sm:$0xff]
          %532 = vst [vmem:[%s468 + $0xf8] sm:$0xff] %v531
          %v533 = vld [vmem:[%s467 + $0x100] sm:$0xff]
          %534 = vst [vmem:[%s468 + $0x100] sm:$0xff] %v533
          %v535 = vld [vmem:[%s467 + $0x108] sm:$0xff]
          %536 = vst [vmem:[%s468 + $0x108] sm:$0xff] %v535
          %v537 = vld [vmem:[%s467 + $0x110] sm:$0xff]
          %538 = vst [vmem:[%s468 + $0x110] sm:$0xff] %v537
          %v539 = vld [vmem:[%s467 + $0x118] sm:$0xff]
          %540 = vst [vmem:[%s468 + $0x118] sm:$0xff] %v539
          %v541 = vld [vmem:[%s467 + $0x120] sm:$0xff]
          %542 = vst [vmem:[%s468 + $0x120] sm:$0xff] %v541
          %v543 = vld [vmem:[%s467 + $0x128] sm:$0xff]
          %544 = vst [vmem:[%s468 + $0x128] sm:$0xff] %v543
          %v545 = vld [vmem:[%s467 + $0x130] sm:$0xff]
          %546 = vst [vmem:[%s468 + $0x130] sm:$0xff] %v545
        $region114: #{two_inputs_forward.1} parent=108 // loop_footer
          %s466 = sadd.s32 1, %s462
        $region115: #{two_inputs_forward.1} parent=108 // loop_footer_branch
          %461 = sbr.rel target = $region111
        $region116: #{two_inputs_forward.1} parent=108 // loop_exit
          _
      $region109: #{two_inputs_forward.1} parent=93 // pred_fallthru
        _
      %p547 = pneg %p457
      // Predicated region
      $region117: #{two_inputs_forward.1} parent=93 // pred_check
        _
      $region118: #{two_inputs_forward.1} parent=93 // pred_check_branch
        %549 = sbr.rel (%p457) target = $region120
      $region119: #{two_inputs_forward.1} parent=93 // pred_region
        %s550 = sand.u32 312, 7
      $region120: #{two_inputs_forward.1} parent=93 // pred_fallthru
        _
    $region94: #{two_inputs_forward.1} parent=1 // pred_fallthru
      _
    // Predicated region
    $region95: #{two_inputs_forward.1} parent=1 // pred_check
      %p441 = pneg %p437
    $region96: #{two_inputs_forward.1} parent=1 // pred_check_branch
      %443 = sbr.rel (%p441) target = $region98
    $region97: #{two_inputs_forward.1} parent=1 // pred_region
      %s444 = sshll.u32 1, 312
      %s445 = ssub.s32 %s444, 1
      loop: start=0, step=1, limit=1
      $region99: #{two_inputs_forward.1} parent=97 // loop_pre_header
        _
      $region100: #{two_inputs_forward.1} parent=97 // loop_header
        %s447 = sphi 0, %s451
        %p448 = scmp.ge.s32.totalorder %s447, 1
        %s452 = sphi %s11, %s11
        %s453 = sphi [#allocation3], [#allocation3]
      $region101: #{two_inputs_forward.1} parent=97 // loop_header_branch
        %450 = sbr.rel (%p448) target = $region105
      $region102: #{two_inputs_forward.1} parent=97 // loop_body
        %v454 = vld [vmem:[%s452] sm:%s445]
        %455 = vst [vmem:[%s453] sm:%s445] %v454
      $region103: #{two_inputs_forward.1} parent=97 // loop_footer
        %s451 = sadd.s32 1, %s447
      $region104: #{two_inputs_forward.1} parent=97 // loop_footer_branch
        %446 = sbr.rel target = $region100
      $region105: #{two_inputs_forward.1} parent=97 // loop_exit
        _
    $region98: #{two_inputs_forward.1} parent=1 // pred_fallthru
      _
    // Predicated region
    $region121: #{two_inputs_forward.1} parent=1 // pred_check
      _
    $region122: #{two_inputs_forward.1} parent=1 // pred_check_branch
      %553 = sbr.rel (0) target = $region124
    $region123: #{two_inputs_forward.1} parent=1 // pred_region
      %554 = vsyncadd %s435, 4992
    $region124: #{two_inputs_forward.1} parent=1 // pred_fallthru
      _
    %s555 = scalar_lea.sflag [#allocation5], 2
    %p557 = scmp.lt.u32.totalorder 656, 8
    %p558 = pneg %p557
    // Predicated region
    $region125: #{two_inputs_forward.1} parent=1 // pred_check
      _
    $region126: #{two_inputs_forward.1} parent=1 // pred_check_branch
      %560 = sbr.rel (%p557) target = $region128
    $region127: #{two_inputs_forward.1} parent=1 // pred_region
      %s576 = sand.u32 656, 7
      %p577 = scmp.eq.s32.totalorder %s576, 0
      // Predicated region
      $region140: #{two_inputs_forward.1} parent=127 // pred_check
        %p578 = pneg %p577
      $region141: #{two_inputs_forward.1} parent=127 // pred_check_branch
        %580 = sbr.rel (%p578) target = $region143
      $region142: #{two_inputs_forward.1} parent=127 // pred_region
        loop: start=0, step=1, limit=1
        $region144: #{two_inputs_forward.1} parent=142 // loop_pre_header
          _
        $region145: #{two_inputs_forward.1} parent=142 // loop_header
          %s582 = sphi 0, %s586
          %p583 = scmp.ge.s32.totalorder %s582, 1
          %s587 = sphi %s12, %s12
          %s588 = sphi [#allocation4], [#allocation4]
        $region146: #{two_inputs_forward.1} parent=142 // loop_header_branch
          %585 = sbr.rel (%p583) target = $region150
        $region147: #{two_inputs_forward.1} parent=142 // loop_body
          %v589 = vld [vmem:[%s587] sm:$0xff]
          %590 = vst [vmem:[%s588] sm:$0xff] %v589
          %v591 = vld [vmem:[%s587 + $0x8] sm:$0xff]
          %592 = vst [vmem:[%s588 + $0x8] sm:$0xff] %v591
          %v593 = vld [vmem:[%s587 + $0x10] sm:$0xff]
          %594 = vst [vmem:[%s588 + $0x10] sm:$0xff] %v593
          %v595 = vld [vmem:[%s587 + $0x18] sm:$0xff]
          %596 = vst [vmem:[%s588 + $0x18] sm:$0xff] %v595
          %v597 = vld [vmem:[%s587 + $0x20] sm:$0xff]
          %598 = vst [vmem:[%s588 + $0x20] sm:$0xff] %v597
          %v599 = vld [vmem:[%s587 + $0x28] sm:$0xff]
          %600 = vst [vmem:[%s588 + $0x28] sm:$0xff] %v599
          %v601 = vld [vmem:[%s587 + $0x30] sm:$0xff]
          %602 = vst [vmem:[%s588 + $0x30] sm:$0xff] %v601
          %v603 = vld [vmem:[%s587 + $0x38] sm:$0xff]
          %604 = vst [vmem:[%s588 + $0x38] sm:$0xff] %v603
          %v605 = vld [vmem:[%s587 + $0x40] sm:$0xff]
          %606 = vst [vmem:[%s588 + $0x40] sm:$0xff] %v605
          %v607 = vld [vmem:[%s587 + $0x48] sm:$0xff]
          %608 = vst [vmem:[%s588 + $0x48] sm:$0xff] %v607
          %v609 = vld [vmem:[%s587 + $0x50] sm:$0xff]
          %610 = vst [vmem:[%s588 + $0x50] sm:$0xff] %v609
          %v611 = vld [vmem:[%s587 + $0x58] sm:$0xff]
          %612 = vst [vmem:[%s588 + $0x58] sm:$0xff] %v611
          %v613 = vld [vmem:[%s587 + $0x60] sm:$0xff]
          %614 = vst [vmem:[%s588 + $0x60] sm:$0xff] %v613
          %v615 = vld [vmem:[%s587 + $0x68] sm:$0xff]
          %616 = vst [vmem:[%s588 + $0x68] sm:$0xff] %v615
          %v617 = vld [vmem:[%s587 + $0x70] sm:$0xff]
          %618 = vst [vmem:[%s588 + $0x70] sm:$0xff] %v617
          %v619 = vld [vmem:[%s587 + $0x78] sm:$0xff]
          %620 = vst [vmem:[%s588 + $0x78] sm:$0xff] %v619
          %v621 = vld [vmem:[%s587 + $0x80] sm:$0xff]
          %622 = vst [vmem:[%s588 + $0x80] sm:$0xff] %v621
          %v623 = vld [vmem:[%s587 + $0x88] sm:$0xff]
          %624 = vst [vmem:[%s588 + $0x88] sm:$0xff] %v623
          %v625 = vld [vmem:[%s587 + $0x90] sm:$0xff]
          %626 = vst [vmem:[%s588 + $0x90] sm:$0xff] %v625
          %v627 = vld [vmem:[%s587 + $0x98] sm:$0xff]
          %628 = vst [vmem:[%s588 + $0x98] sm:$0xff] %v627
          %v629 = vld [vmem:[%s587 + $0xa0] sm:$0xff]
          %630 = vst [vmem:[%s588 + $0xa0] sm:$0xff] %v629
          %v631 = vld [vmem:[%s587 + $0xa8] sm:$0xff]
          %632 = vst [vmem:[%s588 + $0xa8] sm:$0xff] %v631
          %v633 = vld [vmem:[%s587 + $0xb0] sm:$0xff]
          %634 = vst [vmem:[%s588 + $0xb0] sm:$0xff] %v633
          %v635 = vld [vmem:[%s587 + $0xb8] sm:$0xff]
          %636 = vst [vmem:[%s588 + $0xb8] sm:$0xff] %v635
          %v637 = vld [vmem:[%s587 + $0xc0] sm:$0xff]
          %638 = vst [vmem:[%s588 + $0xc0] sm:$0xff] %v637
          %v639 = vld [vmem:[%s587 + $0xc8] sm:$0xff]
          %640 = vst [vmem:[%s588 + $0xc8] sm:$0xff] %v639
          %v641 = vld [vmem:[%s587 + $0xd0] sm:$0xff]
          %642 = vst [vmem:[%s588 + $0xd0] sm:$0xff] %v641
          %v643 = vld [vmem:[%s587 + $0xd8] sm:$0xff]
          %644 = vst [vmem:[%s588 + $0xd8] sm:$0xff] %v643
          %v645 = vld [vmem:[%s587 + $0xe0] sm:$0xff]
          %646 = vst [vmem:[%s588 + $0xe0] sm:$0xff] %v645
          %v647 = vld [vmem:[%s587 + $0xe8] sm:$0xff]
          %648 = vst [vmem:[%s588 + $0xe8] sm:$0xff] %v647
          %v649 = vld [vmem:[%s587 + $0xf0] sm:$0xff]
          %650 = vst [vmem:[%s588 + $0xf0] sm:$0xff] %v649
          %v651 = vld [vmem:[%s587 + $0xf8] sm:$0xff]
          %652 = vst [vmem:[%s588 + $0xf8] sm:$0xff] %v651
          %v653 = vld [vmem:[%s587 + $0x100] sm:$0xff]
          %654 = vst [vmem:[%s588 + $0x100] sm:$0xff] %v653
          %v655 = vld [vmem:[%s587 + $0x108] sm:$0xff]
          %656 = vst [vmem:[%s588 + $0x108] sm:$0xff] %v655
          %v657 = vld [vmem:[%s587 + $0x110] sm:$0xff]
          %658 = vst [vmem:[%s588 + $0x110] sm:$0xff] %v657
          %v659 = vld [vmem:[%s587 + $0x118] sm:$0xff]
          %660 = vst [vmem:[%s588 + $0x118] sm:$0xff] %v659
          %v661 = vld [vmem:[%s587 + $0x120] sm:$0xff]
          %662 = vst [vmem:[%s588 + $0x120] sm:$0xff] %v661
          %v663 = vld [vmem:[%s587 + $0x128] sm:$0xff]
          %664 = vst [vmem:[%s588 + $0x128] sm:$0xff] %v663
          %v665 = vld [vmem:[%s587 + $0x130] sm:$0xff]
          %666 = vst [vmem:[%s588 + $0x130] sm:$0xff] %v665
          %v667 = vld [vmem:[%s587 + $0x138] sm:$0xff]
          %668 = vst [vmem:[%s588 + $0x138] sm:$0xff] %v667
          %v669 = vld [vmem:[%s587 + $0x140] sm:$0xff]
          %670 = vst [vmem:[%s588 + $0x140] sm:$0xff] %v669
          %v671 = vld [vmem:[%s587 + $0x148] sm:$0xff]
          %672 = vst [vmem:[%s588 + $0x148] sm:$0xff] %v671
          %v673 = vld [vmem:[%s587 + $0x150] sm:$0xff]
          %674 = vst [vmem:[%s588 + $0x150] sm:$0xff] %v673
          %v675 = vld [vmem:[%s587 + $0x158] sm:$0xff]
          %676 = vst [vmem:[%s588 + $0x158] sm:$0xff] %v675
          %v677 = vld [vmem:[%s587 + $0x160] sm:$0xff]
          %678 = vst [vmem:[%s588 + $0x160] sm:$0xff] %v677
          %v679 = vld [vmem:[%s587 + $0x168] sm:$0xff]
          %680 = vst [vmem:[%s588 + $0x168] sm:$0xff] %v679
          %v681 = vld [vmem:[%s587 + $0x170] sm:$0xff]
          %682 = vst [vmem:[%s588 + $0x170] sm:$0xff] %v681
          %v683 = vld [vmem:[%s587 + $0x178] sm:$0xff]
          %684 = vst [vmem:[%s588 + $0x178] sm:$0xff] %v683
          %v685 = vld [vmem:[%s587 + $0x180] sm:$0xff]
          %686 = vst [vmem:[%s588 + $0x180] sm:$0xff] %v685
          %v687 = vld [vmem:[%s587 + $0x188] sm:$0xff]
          %688 = vst [vmem:[%s588 + $0x188] sm:$0xff] %v687
          %v689 = vld [vmem:[%s587 + $0x190] sm:$0xff]
          %690 = vst [vmem:[%s588 + $0x190] sm:$0xff] %v689
          %v691 = vld [vmem:[%s587 + $0x198] sm:$0xff]
          %692 = vst [vmem:[%s588 + $0x198] sm:$0xff] %v691
          %v693 = vld [vmem:[%s587 + $0x1a0] sm:$0xff]
          %694 = vst [vmem:[%s588 + $0x1a0] sm:$0xff] %v693
          %v695 = vld [vmem:[%s587 + $0x1a8] sm:$0xff]
          %696 = vst [vmem:[%s588 + $0x1a8] sm:$0xff] %v695
          %v697 = vld [vmem:[%s587 + $0x1b0] sm:$0xff]
          %698 = vst [vmem:[%s588 + $0x1b0] sm:$0xff] %v697
          %v699 = vld [vmem:[%s587 + $0x1b8] sm:$0xff]
          %700 = vst [vmem:[%s588 + $0x1b8] sm:$0xff] %v699
          %v701 = vld [vmem:[%s587 + $0x1c0] sm:$0xff]
          %702 = vst [vmem:[%s588 + $0x1c0] sm:$0xff] %v701
          %v703 = vld [vmem:[%s587 + $0x1c8] sm:$0xff]
          %704 = vst [vmem:[%s588 + $0x1c8] sm:$0xff] %v703
          %v705 = vld [vmem:[%s587 + $0x1d0] sm:$0xff]
          %706 = vst [vmem:[%s588 + $0x1d0] sm:$0xff] %v705
          %v707 = vld [vmem:[%s587 + $0x1d8] sm:$0xff]
          %708 = vst [vmem:[%s588 + $0x1d8] sm:$0xff] %v707
          %v709 = vld [vmem:[%s587 + $0x1e0] sm:$0xff]
          %710 = vst [vmem:[%s588 + $0x1e0] sm:$0xff] %v709
          %v711 = vld [vmem:[%s587 + $0x1e8] sm:$0xff]
          %712 = vst [vmem:[%s588 + $0x1e8] sm:$0xff] %v711
          %v713 = vld [vmem:[%s587 + $0x1f0] sm:$0xff]
          %714 = vst [vmem:[%s588 + $0x1f0] sm:$0xff] %v713
          %v715 = vld [vmem:[%s587 + $0x1f8] sm:$0xff]
          %716 = vst [vmem:[%s588 + $0x1f8] sm:$0xff] %v715
          %v717 = vld [vmem:[%s587 + $0x200] sm:$0xff]
          %718 = vst [vmem:[%s588 + $0x200] sm:$0xff] %v717
          %v719 = vld [vmem:[%s587 + $0x208] sm:$0xff]
          %720 = vst [vmem:[%s588 + $0x208] sm:$0xff] %v719
          %v721 = vld [vmem:[%s587 + $0x210] sm:$0xff]
          %722 = vst [vmem:[%s588 + $0x210] sm:$0xff] %v721
          %v723 = vld [vmem:[%s587 + $0x218] sm:$0xff]
          %724 = vst [vmem:[%s588 + $0x218] sm:$0xff] %v723
          %v725 = vld [vmem:[%s587 + $0x220] sm:$0xff]
          %726 = vst [vmem:[%s588 + $0x220] sm:$0xff] %v725
          %v727 = vld [vmem:[%s587 + $0x228] sm:$0xff]
          %728 = vst [vmem:[%s588 + $0x228] sm:$0xff] %v727
          %v729 = vld [vmem:[%s587 + $0x230] sm:$0xff]
          %730 = vst [vmem:[%s588 + $0x230] sm:$0xff] %v729
          %v731 = vld [vmem:[%s587 + $0x238] sm:$0xff]
          %732 = vst [vmem:[%s588 + $0x238] sm:$0xff] %v731
          %v733 = vld [vmem:[%s587 + $0x240] sm:$0xff]
          %734 = vst [vmem:[%s588 + $0x240] sm:$0xff] %v733
          %v735 = vld [vmem:[%s587 + $0x248] sm:$0xff]
          %736 = vst [vmem:[%s588 + $0x248] sm:$0xff] %v735
          %v737 = vld [vmem:[%s587 + $0x250] sm:$0xff]
          %738 = vst [vmem:[%s588 + $0x250] sm:$0xff] %v737
          %v739 = vld [vmem:[%s587 + $0x258] sm:$0xff]
          %740 = vst [vmem:[%s588 + $0x258] sm:$0xff] %v739
          %v741 = vld [vmem:[%s587 + $0x260] sm:$0xff]
          %742 = vst [vmem:[%s588 + $0x260] sm:$0xff] %v741
          %v743 = vld [vmem:[%s587 + $0x268] sm:$0xff]
          %744 = vst [vmem:[%s588 + $0x268] sm:$0xff] %v743
          %v745 = vld [vmem:[%s587 + $0x270] sm:$0xff]
          %746 = vst [vmem:[%s588 + $0x270] sm:$0xff] %v745
          %v747 = vld [vmem:[%s587 + $0x278] sm:$0xff]
          %748 = vst [vmem:[%s588 + $0x278] sm:$0xff] %v747
          %v749 = vld [vmem:[%s587 + $0x280] sm:$0xff]
          %750 = vst [vmem:[%s588 + $0x280] sm:$0xff] %v749
          %v751 = vld [vmem:[%s587 + $0x288] sm:$0xff]
          %752 = vst [vmem:[%s588 + $0x288] sm:$0xff] %v751
        $region148: #{two_inputs_forward.1} parent=142 // loop_footer
          %s586 = sadd.s32 1, %s582
        $region149: #{two_inputs_forward.1} parent=142 // loop_footer_branch
          %581 = sbr.rel target = $region145
        $region150: #{two_inputs_forward.1} parent=142 // loop_exit
          _
      $region143: #{two_inputs_forward.1} parent=127 // pred_fallthru
        _
      %p753 = pneg %p577
      // Predicated region
      $region151: #{two_inputs_forward.1} parent=127 // pred_check
        _
      $region152: #{two_inputs_forward.1} parent=127 // pred_check_branch
        %755 = sbr.rel (%p577) target = $region154
      $region153: #{two_inputs_forward.1} parent=127 // pred_region
        %s756 = sand.u32 656, 7
      $region154: #{two_inputs_forward.1} parent=127 // pred_fallthru
        _
    $region128: #{two_inputs_forward.1} parent=1 // pred_fallthru
      _
    // Predicated region
    $region129: #{two_inputs_forward.1} parent=1 // pred_check
      %p561 = pneg %p557
    $region130: #{two_inputs_forward.1} parent=1 // pred_check_branch
      %563 = sbr.rel (%p561) target = $region132
    $region131: #{two_inputs_forward.1} parent=1 // pred_region
      %s564 = sshll.u32 1, 656
      %s565 = ssub.s32 %s564, 1
      loop: start=0, step=1, limit=1
      $region133: #{two_inputs_forward.1} parent=131 // loop_pre_header
        _
      $region134: #{two_inputs_forward.1} parent=131 // loop_header
        %s567 = sphi 0, %s571
        %p568 = scmp.ge.s32.totalorder %s567, 1
        %s572 = sphi %s12, %s12
        %s573 = sphi [#allocation4], [#allocation4]
      $region135: #{two_inputs_forward.1} parent=131 // loop_header_branch
        %570 = sbr.rel (%p568) target = $region139
      $region136: #{two_inputs_forward.1} parent=131 // loop_body
        %v574 = vld [vmem:[%s572] sm:%s565]
        %575 = vst [vmem:[%s573] sm:%s565] %v574
      $region137: #{two_inputs_forward.1} parent=131 // loop_footer
        %s571 = sadd.s32 1, %s567
      $region138: #{two_inputs_forward.1} parent=131 // loop_footer_branch
        %566 = sbr.rel target = $region134
      $region139: #{two_inputs_forward.1} parent=131 // loop_exit
        _
    $region132: #{two_inputs_forward.1} parent=1 // pred_fallthru
      _
    // Predicated region
    $region155: #{two_inputs_forward.1} parent=1 // pred_check
      _
    $region156: #{two_inputs_forward.1} parent=1 // pred_check_branch
      %759 = sbr.rel (0) target = $region158
    $region157: #{two_inputs_forward.1} parent=1 // pred_region
      %760 = vsyncadd %s555, 10496
    $region158: #{two_inputs_forward.1} parent=1 // pred_fallthru
      _
    %v761 = vld [vmem:[%s2] sm:$0xff]
    %v762 = vld [vmem:[%s2 + $0x8] sm:$0xff]
    %v763 = vld [vmem:[%s0] sm:$0xff]
    %v764 = vld [vmem:[%s0 + $0x8] sm:$0xff]
    %v765 = vld [vmem:[%s0 + $0x10] sm:$0xff]
    %v766 = vld [vmem:[%s0 + $0x18] sm:$0xff]
    %v767 = vld [vmem:[%s0 + $0x20] sm:$0xff]
    %v768 = vld [vmem:[%s0 + $0x28] sm:$0xff]
    %v769 = vld [vmem:[%s0 + $0x30] sm:$0xf]
    %v770 = vld [vmem:[%s0 + $0x38] sm:$0xf]
    %v771 = vld [vmem:[%s0 + $0x40] sm:$0xf]
    %v772 = vld [vmem:[%s0 + $0x48] sm:$0xf]
    %v773 = vld [vmem:[%s0 + $0x50] sm:$0xf]
    %v774 = vld [vmem:[%s0 + $0x58] sm:$0xf]
    %vm775 = vcmask 97280
    %v777 = vsel %vm775, %v761, 0
    %v780 = vsel %vm775, %v762, 0
    %vm782 = vcmask 1043456
    %v784 = vsel %vm782, %v769, 0
    %v787 = vsel %vm782, %v770, 0
    %v790 = vsel %vm782, %v771, 0
    %v793 = vsel %vm782, %v772, 0
    %v796 = vsel %vm782, %v773, 0
    %v799 = vsel %vm782, %v774, 0
    %801 = vmatprep.subr.mxu0 0.0
    %802 = vmatpush1.msra.mxu0 0.0
    %803 = vmatprep.subr.mxu0 0.0
    %804 = vmatpush1.msra.mxu0 0.0
    %805 = vmatprep.subr.mxu0 0.0
    %806 = vmatpush1.msra.mxu0 0.0
    %807 = vmatprep.subr.mxu0 0.0
    %808 = vmatpush1.msra.mxu0 0.0
    %809 = vmatprep.subr.mxu0 0.0
    %810 = vmatpush1.msra.mxu0 0.0
    %811 = vmatprep.subr.mxu0 0.0
    %812 = vmatpush1.msra.mxu0 0.0
    %813 = vmatprep.subr.mxu0 0.0
    %814 = vmatpush1.msra.mxu0 0.0
    %815 = vmatprep.subr.mxu0 0.0
    %816 = vmatpush1.msra.mxu0 0.0
    %817 = vmatprep.subr.mxu0 0.0
    %818 = vmatpush1.msra.mxu0 0.0
    %819 = vmatprep.subr.mxu0 0.0
    %820 = vmatpush1.msra.mxu0 0.0
    %821 = vmatprep.subr.mxu0 0.0
    %822 = vmatpush1.msra.mxu0 0.0
    %823 = vmatprep.subr.mxu0 0.0
    %824 = vmatpush1.msra.mxu0 0.0
    %825 = vmatprep.subr.mxu0 0.0
    %826 = vmatpush1.msra.mxu0 0.0
    %827 = vmatprep.subr.mxu0 0.0
    %828 = vmatpush1.msra.mxu0 0.0
    %829 = vmatprep.subr.mxu0 %v787
    %830 = vmatpush1.msra.mxu0 %v784
    %831 = vmatprep.subr.mxu0 %v764
    %832 = vmatpush1.msra.mxu0 %v763
    %833 = vmatprep.subr.mxu0 0.0
    %834 = vmatpush2.msra.mxu0 0.0
    %835 = vmatprep.subr.mxu0 0.0
    %836 = vmatpush2.msra.mxu0 0.0
    %837 = vmatprep.subr.mxu0 0.0
    %838 = vmatpush2.msra.mxu0 0.0
    %839 = vmatprep.subr.mxu0 0.0
    %840 = vmatpush2.msra.mxu0 0.0
    %841 = vmatprep.subr.mxu0 0.0
    %842 = vmatpush2.msra.mxu0 0.0
    %843 = vmatprep.subr.mxu0 0.0
    %844 = vmatpush2.msra.mxu0 0.0
    %845 = vmatprep.subr.mxu0 0.0
    %846 = vmatpush2.msra.mxu0 0.0
    %847 = vmatprep.subr.mxu0 0.0
    %848 = vmatpush2.msra.mxu0 0.0
    %849 = vmatprep.subr.mxu0 0.0
    %850 = vmatpush2.msra.mxu0 0.0
    %851 = vmatprep.subr.mxu0 0.0
    %852 = vmatpush2.msra.mxu0 0.0
    %853 = vmatprep.subr.mxu0 0.0
    %854 = vmatpush2.msra.mxu0 0.0
    %855 = vmatprep.subr.mxu0 0.0
    %856 = vmatpush2.msra.mxu0 0.0
    %857 = vmatprep.subr.mxu0 0.0
    %858 = vmatpush2.msra.mxu0 0.0
    %859 = vmatprep.subr.mxu0 0.0
    %860 = vmatpush2.msra.mxu0 0.0
    %861 = vmatprep.subr.mxu0 0.0
    %862 = vmatpush2.msra.mxu0 0.0
    %863 = vmatprep.subr.mxu0 0.0
    %864 = vmatpush2.msra.mxu0 0.0
    %865 = vmatprep.mubr.f32.mxu0 0.0
    %866 = vmatmul.mubr.f32.gmra.mxu0 %v777
    %v867 = vpop.f32.mrf.mxu0
    %v868 = vadd.f32 0.0, %v867
    %v869 = vpop.f32.mrf.mxu0
    %v870 = vadd.f32 0.0, %v869
    %871 = vmatprep.mubr.f32.mxu0 0.0
    %872 = vmatmul.mubr.f32.gmra.mxu0 %v780
    %v873 = vpop.f32.mrf.mxu0
    %v874 = vadd.f32 0.0, %v873
    %v875 = vpop.f32.mrf.mxu0
    %v876 = vadd.f32 0.0, %v875
    %877 = vdwg.mxu0
    %878 = vmatprep.subr.mxu0 0.0
    %879 = vmatpush1.msra.mxu0 0.0
    %880 = vmatprep.subr.mxu0 0.0
    %881 = vmatpush1.msra.mxu0 0.0
    %882 = vmatprep.subr.mxu0 0.0
    %883 = vmatpush1.msra.mxu0 0.0
    %884 = vmatprep.subr.mxu0 0.0
    %885 = vmatpush1.msra.mxu0 0.0
    %886 = vmatprep.subr.mxu0 0.0
    %887 = vmatpush1.msra.mxu0 0.0
    %888 = vmatprep.subr.mxu0 0.0
    %889 = vmatpush1.msra.mxu0 0.0
    %890 = vmatprep.subr.mxu0 0.0
    %891 = vmatpush1.msra.mxu0 0.0
    %892 = vmatprep.subr.mxu0 0.0
    %893 = vmatpush1.msra.mxu0 0.0
    %894 = vmatprep.subr.mxu0 0.0
    %895 = vmatpush1.msra.mxu0 0.0
    %896 = vmatprep.subr.mxu0 0.0
    %897 = vmatpush1.msra.mxu0 0.0
    %898 = vmatprep.subr.mxu0 0.0
    %899 = vmatpush1.msra.mxu0 0.0
    %900 = vmatprep.subr.mxu0 0.0
    %901 = vmatpush1.msra.mxu0 0.0
    %902 = vmatprep.subr.mxu0 0.0
    %903 = vmatpush1.msra.mxu0 0.0
    %904 = vmatprep.subr.mxu0 0.0
    %905 = vmatpush1.msra.mxu0 0.0
    %906 = vmatprep.subr.mxu0 %v793
    %907 = vmatpush1.msra.mxu0 %v790
    %908 = vmatprep.subr.mxu0 %v766
    %909 = vmatpush1.msra.mxu0 %v765
    %910 = vmatprep.subr.mxu0 0.0
    %911 = vmatpush2.msra.mxu0 0.0
    %912 = vmatprep.subr.mxu0 0.0
    %913 = vmatpush2.msra.mxu0 0.0
    %914 = vmatprep.subr.mxu0 0.0
    %915 = vmatpush2.msra.mxu0 0.0
    %916 = vmatprep.subr.mxu0 0.0
    %917 = vmatpush2.msra.mxu0 0.0
    %918 = vmatprep.subr.mxu0 0.0
    %919 = vmatpush2.msra.mxu0 0.0
    %920 = vmatprep.subr.mxu0 0.0
    %921 = vmatpush2.msra.mxu0 0.0
    %922 = vmatprep.subr.mxu0 0.0
    %923 = vmatpush2.msra.mxu0 0.0
    %924 = vmatprep.subr.mxu0 0.0
    %925 = vmatpush2.msra.mxu0 0.0
    %926 = vmatprep.subr.mxu0 0.0
    %927 = vmatpush2.msra.mxu0 0.0
    %928 = vmatprep.subr.mxu0 0.0
    %929 = vmatpush2.msra.mxu0 0.0
    %930 = vmatprep.subr.mxu0 0.0
    %931 = vmatpush2.msra.mxu0 0.0
    %932 = vmatprep.subr.mxu0 0.0
    %933 = vmatpush2.msra.mxu0 0.0
    %934 = vmatprep.subr.mxu0 0.0
    %935 = vmatpush2.msra.mxu0 0.0
    %936 = vmatprep.subr.mxu0 0.0
    %937 = vmatpush2.msra.mxu0 0.0
    %938 = vmatprep.subr.mxu0 0.0
    %939 = vmatpush2.msra.mxu0 0.0
    %940 = vmatprep.subr.mxu0 0.0
    %941 = vmatpush2.msra.mxu0 0.0
    %942 = vmatprep.mubr.f32.mxu0 0.0
    %943 = vmatmul.mubr.f32.gmra.mxu0 %v777
    %v944 = vpop.f32.mrf.mxu0
    %v945 = vadd.f32 0.0, %v944
    %v946 = vpop.f32.mrf.mxu0
    %v947 = vadd.f32 0.0, %v946
    %948 = vmatprep.mubr.f32.mxu0 0.0
    %949 = vmatmul.mubr.f32.gmra.mxu0 %v780
    %v950 = vpop.f32.mrf.mxu0
    %v951 = vadd.f32 0.0, %v950
    %v952 = vpop.f32.mrf.mxu0
    %v953 = vadd.f32 0.0, %v952
    %954 = vdwg.mxu0
    %955 = vmatprep.subr.mxu0 0.0
    %956 = vmatpush1.msra.mxu0 0.0
    %957 = vmatprep.subr.mxu0 0.0
    %958 = vmatpush1.msra.mxu0 0.0
    %959 = vmatprep.subr.mxu0 0.0
    %960 = vmatpush1.msra.mxu0 0.0
    %961 = vmatprep.subr.mxu0 0.0
    %962 = vmatpush1.msra.mxu0 0.0
    %963 = vmatprep.subr.mxu0 0.0
    %964 = vmatpush1.msra.mxu0 0.0
    %965 = vmatprep.subr.mxu0 0.0
    %966 = vmatpush1.msra.mxu0 0.0
    %967 = vmatprep.subr.mxu0 0.0
    %968 = vmatpush1.msra.mxu0 0.0
    %969 = vmatprep.subr.mxu0 0.0
    %970 = vmatpush1.msra.mxu0 0.0
    %971 = vmatprep.subr.mxu0 0.0
    %972 = vmatpush1.msra.mxu0 0.0
    %973 = vmatprep.subr.mxu0 0.0
    %974 = vmatpush1.msra.mxu0 0.0
    %975 = vmatprep.subr.mxu0 0.0
    %976 = vmatpush1.msra.mxu0 0.0
    %977 = vmatprep.subr.mxu0 0.0
    %978 = vmatpush1.msra.mxu0 0.0
    %979 = vmatprep.subr.mxu0 0.0
    %980 = vmatpush1.msra.mxu0 0.0
    %981 = vmatprep.subr.mxu0 0.0
    %982 = vmatpush1.msra.mxu0 0.0
    %983 = vmatprep.subr.mxu0 %v799
    %984 = vmatpush1.msra.mxu0 %v796
    %985 = vmatprep.subr.mxu0 %v768
    %986 = vmatpush1.msra.mxu0 %v767
    %987 = vmatprep.subr.mxu0 0.0
    %988 = vmatpush2.msra.mxu0 0.0
    %989 = vmatprep.subr.mxu0 0.0
    %990 = vmatpush2.msra.mxu0 0.0
    %991 = vmatprep.subr.mxu0 0.0
    %992 = vmatpush2.msra.mxu0 0.0
    %993 = vmatprep.subr.mxu0 0.0
    %994 = vmatpush2.msra.mxu0 0.0
    %995 = vmatprep.subr.mxu0 0.0
    %996 = vmatpush2.msra.mxu0 0.0
    %997 = vmatprep.subr.mxu0 0.0
    %998 = vmatpush2.msra.mxu0 0.0
    %999 = vmatprep.subr.mxu0 0.0
    %1000 = vmatpush2.msra.mxu0 0.0
    %1001 = vmatprep.subr.mxu0 0.0
    %1002 = vmatpush2.msra.mxu0 0.0
    %1003 = vmatprep.subr.mxu0 0.0
    %1004 = vmatpush2.msra.mxu0 0.0
    %1005 = vmatprep.subr.mxu0 0.0
    %1006 = vmatpush2.msra.mxu0 0.0
    %1007 = vmatprep.subr.mxu0 0.0
    %1008 = vmatpush2.msra.mxu0 0.0
    %1009 = vmatprep.subr.mxu0 0.0
    %1010 = vmatpush2.msra.mxu0 0.0
    %1011 = vmatprep.subr.mxu0 0.0
    %1012 = vmatpush2.msra.mxu0 0.0
    %1013 = vmatprep.subr.mxu0 0.0
    %1014 = vmatpush2.msra.mxu0 0.0
    %1015 = vmatprep.subr.mxu0 0.0
    %1016 = vmatpush2.msra.mxu0 0.0
    %1017 = vmatprep.subr.mxu0 0.0
    %1018 = vmatpush2.msra.mxu0 0.0
    %1019 = vmatprep.mubr.f32.mxu0 0.0
    %1020 = vmatmul.mubr.f32.gmra.mxu0 %v777
    %v1021 = vpop.f32.mrf.mxu0
    %v1022 = vadd.f32 0.0, %v1021
    %v1023 = vpop.f32.mrf.mxu0
    %v1024 = vadd.f32 0.0, %v1023
    %1025 = vmatprep.mubr.f32.mxu0 0.0
    %1026 = vmatmul.mubr.f32.gmra.mxu0 %v780
    %v1027 = vpop.f32.mrf.mxu0
    %v1028 = vadd.f32 0.0, %v1027
    %v1029 = vpop.f32.mrf.mxu0
    %v1030 = vadd.f32 0.0, %v1029
    %1031 = vdwg.mxu0
    %v1032 = vld [vmem:[%s5] sm:$0xff]
    %v1033 = vld [vmem:[%s1] sm:$0xff]
    %v1034 = vld [vmem:[%s1 + $0x8] sm:$0xff]
    %v1035 = vld [vmem:[%s1 + $0x10] sm:$0xff]
    %v1036 = vld [vmem:[%s1 + $0x18] sm:$0xff]
    %v1037 = vld [vmem:[%s1 + $0x20] sm:$0xff]
    %v1038 = vld [vmem:[%s1 + $0x28] sm:$0xff]
    %v1039 = vld [vmem:[%s1 + $0x30] sm:$0xff]
    %v1040 = vld [vmem:[%s1 + $0x38] sm:$0xff]
    %v1041 = vld [vmem:[%s1 + $0x40] sm:$0xff]
    %v1042 = vld [vmem:[%s1 + $0x48] sm:$0xff]
    %v1043 = vld [vmem:[%s1 + $0x50] sm:$0xff]
    %v1044 = vld [vmem:[%s1 + $0x58] sm:$0xff]
    %v1045 = vld [vmem:[%s1 + $0x60] sm:$0xff]
    %v1046 = vld [vmem:[%s1 + $0x68] sm:$0xff]
    %v1047 = vld [vmem:[%s1 + $0x70] sm:$0xff]
    %v1048 = vld [vmem:[%s1 + $0x78] sm:$0x7]
    %v1049 = vld [vmem:[%s1 + $0x80] sm:$0x7]
    %v1050 = vld [vmem:[%s1 + $0x88] sm:$0x7]
    %v1051 = vld [vmem:[%s1 + $0x90] sm:$0x7]
    %v1052 = vld [vmem:[%s1 + $0x98] sm:$0x7]
    %vm1053 = vcmask 220160
    %v1055 = vsel %vm1053, %v1032, 0
    %vm1057 = vcmask 1042432
    %v1059 = vsel %vm1057, %v1048, 0
    %v1062 = vsel %vm1057, %v1049, 0
    %v1065 = vsel %vm1057, %v1050, 0
    %v1068 = vsel %vm1057, %v1051, 0
    %v1071 = vsel %vm1057, %v1052, 0
    %1073 = vmatprep.subr.mxu0 0.0
    %1074 = vmatpush1.msra.mxu0 0.0
    %1075 = vmatprep.subr.mxu0 0.0
    %1076 = vmatpush1.msra.mxu0 0.0
    %1077 = vmatprep.subr.mxu0 0.0
    %1078 = vmatpush1.msra.mxu0 0.0
    %1079 = vmatprep.subr.mxu0 0.0
    %1080 = vmatpush1.msra.mxu0 0.0
    %1081 = vmatprep.subr.mxu0 0.0
    %1082 = vmatpush1.msra.mxu0 0.0
    %1083 = vmatprep.subr.mxu0 0.0
    %1084 = vmatpush1.msra.mxu0 0.0
    %1085 = vmatprep.subr.mxu0 0.0
    %1086 = vmatpush1.msra.mxu0 0.0
    %1087 = vmatprep.subr.mxu0 0.0
    %1088 = vmatpush1.msra.mxu0 0.0
    %1089 = vmatprep.subr.mxu0 0.0
    %1090 = vmatpush1.msra.mxu0 0.0
    %1091 = vmatprep.subr.mxu0 0.0
    %1092 = vmatpush1.msra.mxu0 0.0
    %1093 = vmatprep.subr.mxu0 0.0
    %1094 = vmatpush1.msra.mxu0 0.0
    %1095 = vmatprep.subr.mxu0 0.0
    %1096 = vmatpush1.msra.mxu0 0.0
    %1097 = vmatprep.subr.mxu0 %v1062
    %1098 = vmatpush1.msra.mxu0 %v1059
    %1099 = vmatprep.subr.mxu0 %v1044
    %1100 = vmatpush1.msra.mxu0 %v1043
    %1101 = vmatprep.subr.mxu0 %v1039
    %1102 = vmatpush1.msra.mxu0 %v1038
    %1103 = vmatprep.subr.mxu0 %v1034
    %1104 = vmatpush1.msra.mxu0 %v1033
    %1105 = vmatprep.subr.mxu0 0.0
    %1106 = vmatpush2.msra.mxu0 0.0
    %1107 = vmatprep.subr.mxu0 0.0
    %1108 = vmatpush2.msra.mxu0 0.0
    %1109 = vmatprep.subr.mxu0 0.0
    %1110 = vmatpush2.msra.mxu0 0.0
    %1111 = vmatprep.subr.mxu0 0.0
    %1112 = vmatpush2.msra.mxu0 0.0
    %1113 = vmatprep.subr.mxu0 0.0
    %1114 = vmatpush2.msra.mxu0 0.0
    %1115 = vmatprep.subr.mxu0 0.0
    %1116 = vmatpush2.msra.mxu0 0.0
    %1117 = vmatprep.subr.mxu0 0.0
    %1118 = vmatpush2.msra.mxu0 0.0
    %1119 = vmatprep.subr.mxu0 0.0
    %1120 = vmatpush2.msra.mxu0 0.0
    %1121 = vmatprep.subr.mxu0 0.0
    %1122 = vmatpush2.msra.mxu0 0.0
    %1123 = vmatprep.subr.mxu0 0.0
    %1124 = vmatpush2.msra.mxu0 0.0
    %1125 = vmatprep.subr.mxu0 0.0
    %1126 = vmatpush2.msra.mxu0 0.0
    %1127 = vmatprep.subr.mxu0 0.0
    %1128 = vmatpush2.msra.mxu0 0.0
    %1129 = vmatprep.subr.mxu0 0.0
    %1130 = vmatpush2.msra.mxu0 0.0
    %1131 = vmatprep.subr.mxu0 0.0
    %1132 = vmatpush2.msra.mxu0 0.0
    %1133 = vmatprep.subr.mxu0 0.0
    %1134 = vmatpush2.msra.mxu0 0.0
    %1135 = vmatprep.subr.mxu0 0.0
    %1136 = vmatpush2.msra.mxu0 0.0
    %1137 = vmatprep.mubr.f32.mxu0 0.0
    %1138 = vmatmul.mubr.f32.gmra.mxu0 %v1055
    %v1139 = vpop.f32.mrf.mxu0
    %v1140 = vadd.f32 0.0, %v1139
    %v1141 = vpop.f32.mrf.mxu0
    %v1142 = vadd.f32 0.0, %v1141
    %1143 = vdwg.mxu0
    %1144 = vmatprep.subr.mxu0 0.0
    %1145 = vmatpush1.msra.mxu0 0.0
    %1146 = vmatprep.subr.mxu0 0.0
    %1147 = vmatpush1.msra.mxu0 0.0
    %1148 = vmatprep.subr.mxu0 0.0
    %1149 = vmatpush1.msra.mxu0 0.0
    %1150 = vmatprep.subr.mxu0 0.0
    %1151 = vmatpush1.msra.mxu0 0.0
    %1152 = vmatprep.subr.mxu0 0.0
    %1153 = vmatpush1.msra.mxu0 0.0
    %1154 = vmatprep.subr.mxu0 0.0
    %1155 = vmatpush1.msra.mxu0 0.0
    %1156 = vmatprep.subr.mxu0 0.0
    %1157 = vmatpush1.msra.mxu0 0.0
    %1158 = vmatprep.subr.mxu0 0.0
    %1159 = vmatpush1.msra.mxu0 0.0
    %1160 = vmatprep.subr.mxu0 0.0
    %1161 = vmatpush1.msra.mxu0 0.0
    %1162 = vmatprep.subr.mxu0 0.0
    %1163 = vmatpush1.msra.mxu0 0.0
    %1164 = vmatprep.subr.mxu0 0.0
    %1165 = vmatpush1.msra.mxu0 0.0
    %1166 = vmatprep.subr.mxu0 0.0
    %1167 = vmatpush1.msra.mxu0 0.0
    %1168 = vmatprep.subr.mxu0 %v1068
    %1169 = vmatpush1.msra.mxu0 %v1065
    %1170 = vmatprep.subr.mxu0 %v1046
    %1171 = vmatpush1.msra.mxu0 %v1045
    %1172 = vmatprep.subr.mxu0 %v1041
    %1173 = vmatpush1.msra.mxu0 %v1040
    %1174 = vmatprep.subr.mxu0 %v1036
    %1175 = vmatpush1.msra.mxu0 %v1035
    %1176 = vmatprep.subr.mxu0 0.0
    %1177 = vmatpush2.msra.mxu0 0.0
    %1178 = vmatprep.subr.mxu0 0.0
    %1179 = vmatpush2.msra.mxu0 0.0
    %1180 = vmatprep.subr.mxu0 0.0
    %1181 = vmatpush2.msra.mxu0 0.0
    %1182 = vmatprep.subr.mxu0 0.0
    %1183 = vmatpush2.msra.mxu0 0.0
    %1184 = vmatprep.subr.mxu0 0.0
    %1185 = vmatpush2.msra.mxu0 0.0
    %1186 = vmatprep.subr.mxu0 0.0
    %1187 = vmatpush2.msra.mxu0 0.0
    %1188 = vmatprep.subr.mxu0 0.0
    %1189 = vmatpush2.msra.mxu0 0.0
    %1190 = vmatprep.subr.mxu0 0.0
    %1191 = vmatpush2.msra.mxu0 0.0
    %1192 = vmatprep.subr.mxu0 0.0
    %1193 = vmatpush2.msra.mxu0 0.0
    %1194 = vmatprep.subr.mxu0 0.0
    %1195 = vmatpush2.msra.mxu0 0.0
    %1196 = vmatprep.subr.mxu0 0.0
    %1197 = vmatpush2.msra.mxu0 0.0
    %1198 = vmatprep.subr.mxu0 0.0
    %1199 = vmatpush2.msra.mxu0 0.0
    %1200 = vmatprep.subr.mxu0 0.0
    %1201 = vmatpush2.msra.mxu0 0.0
    %1202 = vmatprep.subr.mxu0 0.0
    %1203 = vmatpush2.msra.mxu0 0.0
    %1204 = vmatprep.subr.mxu0 0.0
    %1205 = vmatpush2.msra.mxu0 0.0
    %1206 = vmatprep.subr.mxu0 0.0
    %1207 = vmatpush2.msra.mxu0 0.0
    %1208 = vmatprep.mubr.f32.mxu0 0.0
    %1209 = vmatmul.mubr.f32.gmra.mxu0 %v1055
    %v1210 = vpop.f32.mrf.mxu0
    %v1211 = vadd.f32 0.0, %v1210
    %v1212 = vpop.f32.mrf.mxu0
    %v1213 = vadd.f32 0.0, %v1212
    %1214 = vdwg.mxu0
    %1215 = vmatprep.subr.mxu0 0.0
    %1216 = vmatpush1.msra.mxu0 0.0
    %1217 = vmatprep.subr.mxu0 0.0
    %1218 = vmatpush1.msra.mxu0 0.0
    %1219 = vmatprep.subr.mxu0 0.0
    %1220 = vmatpush1.msra.mxu0 0.0
    %1221 = vmatprep.subr.mxu0 0.0
    %1222 = vmatpush1.msra.mxu0 0.0
    %1223 = vmatprep.subr.mxu0 0.0
    %1224 = vmatpush1.msra.mxu0 0.0
    %1225 = vmatprep.subr.mxu0 0.0
    %1226 = vmatpush1.msra.mxu0 0.0
    %1227 = vmatprep.subr.mxu0 0.0
    %1228 = vmatpush1.msra.mxu0 0.0
    %1229 = vmatprep.subr.mxu0 0.0
    %1230 = vmatpush1.msra.mxu0 0.0
    %1231 = vmatprep.subr.mxu0 0.0
    %1232 = vmatpush1.msra.mxu0 0.0
    %1233 = vmatprep.subr.mxu0 0.0
    %1234 = vmatpush1.msra.mxu0 0.0
    %1235 = vmatprep.subr.mxu0 0.0
    %1236 = vmatpush1.msra.mxu0 0.0
    %1237 = vmatprep.subr.mxu0 0.0
    %1238 = vmatpush1.msra.mxu0 0.0
    %1239 = vmatprep.subr.mxu0 0.0
    %1240 = vmatpush1.msra.mxu0 %v1071
    %1241 = vmatprep.subr.mxu0 0.0
    %1242 = vmatpush1.msra.mxu0 %v1047
    %1243 = vmatprep.subr.mxu0 0.0
    %1244 = vmatpush1.msra.mxu0 %v1042
    %1245 = vmatprep.subr.mxu0 0.0
    %1246 = vmatpush1.msra.mxu0 %v1037
    %1247 = vmatprep.subr.mxu0 0.0
    %1248 = vmatpush2.msra.mxu0 0.0
    %1249 = vmatprep.subr.mxu0 0.0
    %1250 = vmatpush2.msra.mxu0 0.0
    %1251 = vmatprep.subr.mxu0 0.0
    %1252 = vmatpush2.msra.mxu0 0.0
    %1253 = vmatprep.subr.mxu0 0.0
    %1254 = vmatpush2.msra.mxu0 0.0
    %1255 = vmatprep.subr.mxu0 0.0
    %1256 = vmatpush2.msra.mxu0 0.0
    %1257 = vmatprep.subr.mxu0 0.0
    %1258 = vmatpush2.msra.mxu0 0.0
    %1259 = vmatprep.subr.mxu0 0.0
    %1260 = vmatpush2.msra.mxu0 0.0
    %1261 = vmatprep.subr.mxu0 0.0
    %1262 = vmatpush2.msra.mxu0 0.0
    %1263 = vmatprep.subr.mxu0 0.0
    %1264 = vmatpush2.msra.mxu0 0.0
    %1265 = vmatprep.subr.mxu0 0.0
    %1266 = vmatpush2.msra.mxu0 0.0
    %1267 = vmatprep.subr.mxu0 0.0
    %1268 = vmatpush2.msra.mxu0 0.0
    %1269 = vmatprep.subr.mxu0 0.0
    %1270 = vmatpush2.msra.mxu0 0.0
    %1271 = vmatprep.subr.mxu0 0.0
    %1272 = vmatpush2.msra.mxu0 0.0
    %1273 = vmatprep.subr.mxu0 0.0
    %1274 = vmatpush2.msra.mxu0 0.0
    %1275 = vmatprep.subr.mxu0 0.0
    %1276 = vmatpush2.msra.mxu0 0.0
    %1277 = vmatprep.subr.mxu0 0.0
    %1278 = vmatpush2.msra.mxu0 0.0
    %1279 = vmatprep.mubr.f32.mxu0 0.0
    %1280 = vmatmul.mubr.f32.gmra.mxu0 %v1055
    %v1281 = vpop.f32.mrf.mxu0
    %v1282 = vadd.f32 0.0, %v1281
    %v1283 = vpop.f32.mrf.mxu0
    %1284 = vdwg.mxu0
    %v1285 = vld [vmem:[%s3] sm:$0xff]
    %v1286 = vld [vmem:[%s3 + $0x8] sm:$0xff]
    %v1287 = vld [vmem:[%s4] sm:$0xff]
    %v1288 = vld [vmem:[%s4 + $0x8] sm:$0xff]
    %v1289 = vadd.f32 %v868, %v870
    %v1290 = vadd.f32 %v1289, %v945
    %v1291 = vadd.f32 %v1290, %v947
    %v1292 = vadd.f32 %v1291, %v1022
    %vm1293 = vcmask 64512
    %v1294 = vsel %vm1293, %v1024, 0.0
    %v1295 = vadd.f32 %v1292, %v1294
    %1296 = vadd.xlane.f32.xlu0 %v1295
    %v1297 = vpop.xlane.xlu0 %1296
    %v1298 = vadd.f32 %v874, %v876
    %v1299 = vadd.f32 %v1298, %v951
    %v1300 = vadd.f32 %v1299, %v953
    %v1301 = vadd.f32 %v1300, %v1028
    %v1302 = vsel %vm1293, %v1030, 0.0
    %v1303 = vadd.f32 %v1301, %v1302
    %1304 = vadd.xlane.f32.xlu0 %v1303
    %v1305 = vpop.xlane.xlu0 %1304
    %v1306 = vmul.f32 %v1297, 0.0015432099
    %v1307 = vmul.f32 %v1305, 0.0015432099
    %v1308 = vsub.f32 %v868, %v1306
    %v1309 = vsub.f32 %v870, %v1306
    %v1310 = vsub.f32 %v945, %v1306
    %v1311 = vsub.f32 %v947, %v1306
    %v1312 = vsub.f32 %v1022, %v1306
    %v1313 = vsub.f32 %v1024, %v1306
    %v1314 = vsub.f32 %v874, %v1307
    %v1315 = vsub.f32 %v876, %v1307
    %v1316 = vsub.f32 %v951, %v1307
    %v1317 = vsub.f32 %v953, %v1307
    %v1318 = vsub.f32 %v1028, %v1307
    %v1319 = vsub.f32 %v1030, %v1307
    %v1320 = vmul.f32 %v1308, %v1308
    %v1321 = vmul.f32 %v1309, %v1309
    %v1322 = vmul.f32 %v1310, %v1310
    %v1323 = vmul.f32 %v1311, %v1311
    %v1324 = vmul.f32 %v1312, %v1312
    %v1325 = vmul.f32 %v1313, %v1313
    %v1326 = vmul.f32 %v1314, %v1314
    %v1327 = vmul.f32 %v1315, %v1315
    %v1328 = vmul.f32 %v1316, %v1316
    %v1329 = vmul.f32 %v1317, %v1317
    %v1330 = vmul.f32 %v1318, %v1318
    %v1331 = vmul.f32 %v1319, %v1319
    %v1332 = vadd.f32 %v1320, %v1321
    %v1333 = vadd.f32 %v1332, %v1322
    %v1334 = vadd.f32 %v1333, %v1323
    %v1335 = vadd.f32 %v1334, %v1324
    %v1336 = vsel %vm1293, %v1325, 0.0
    %v1337 = vadd.f32 %v1335, %v1336
    %1338 = vadd.xlane.f32.xlu0 %v1337
    %v1339 = vpop.xlane.xlu0 %1338
    %v1340 = vadd.f32 %v1326, %v1327
    %v1341 = vadd.f32 %v1340, %v1328
    %v1342 = vadd.f32 %v1341, %v1329
    %v1343 = vadd.f32 %v1342, %v1330
    %v1344 = vsel %vm1293, %v1331, 0.0
    %v1345 = vadd.f32 %v1343, %v1344
    %1346 = vadd.xlane.f32.xlu0 %v1345
    %v1347 = vpop.xlane.xlu0 %1346
    %v1348 = vmul.f32 %v1339, 0.0015432099
    %v1349 = vmul.f32 %v1347, 0.0015432099
    %v1350 = vadd.f32 %v1348, 1e-05
    %v1351 = vadd.f32 %v1349, 1e-05
    %v1352 = vrsqrt.pop %v1350
    %v1353 = vrsqrt.pop %v1351
    %v1354 = vmul.f32 %v1352, %v1285
    %v1355 = vmul.f32 %v1353, %v1286
    %1357 = vset.pattern.permute.xlu0 0
    %1358 = vperm.xlu0 %1357, %v1354
    %v1359 = vpop.permute.xlu0 %1358
    %1362 = vset.pattern.permute.xlu0 0
    %1363 = vperm.xlu0 %1362, %v1355
    %v1364 = vpop.permute.xlu0 %1363
    %v1366 = vmul.f32 %v1308, %v1359
    %v1367 = vmul.f32 %v1309, %v1359
    %v1368 = vmul.f32 %v1310, %v1359
    %v1369 = vmul.f32 %v1311, %v1359
    %v1370 = vmul.f32 %v1312, %v1359
    %v1371 = vmul.f32 %v1313, %v1359
    %v1372 = vmul.f32 %v1314, %v1364
    %v1373 = vmul.f32 %v1315, %v1364
    %v1374 = vmul.f32 %v1316, %v1364
    %v1375 = vmul.f32 %v1317, %v1364
    %v1376 = vmul.f32 %v1318, %v1364
    %v1377 = vmul.f32 %v1319, %v1364
    %1379 = vset.pattern.permute.xlu0 0
    %1380 = vperm.xlu0 %1379, %v1287
    %v1381 = vpop.permute.xlu0 %1380
    %1384 = vset.pattern.permute.xlu0 0
    %1385 = vperm.xlu0 %1384, %v1288
    %v1386 = vpop.permute.xlu0 %1385
    %v1388 = vadd.f32 %v1366, %v1381
    %v1389 = vadd.f32 %v1367, %v1381
    %v1390 = vadd.f32 %v1368, %v1381
    %v1391 = vadd.f32 %v1369, %v1381
    %v1392 = vadd.f32 %v1370, %v1381
    %v1393 = vadd.f32 %v1371, %v1381
    %v1394 = vadd.f32 %v1372, %v1386
    %v1395 = vadd.f32 %v1373, %v1386
    %v1396 = vadd.f32 %v1374, %v1386
    %v1397 = vadd.f32 %v1375, %v1386
    %v1398 = vadd.f32 %v1376, %v1386
    %v1399 = vadd.f32 %v1377, %v1386
    %v1400 = vld [vmem:[%s6] sm:$0xff]
    %v1401 = vld [vmem:[%s7] sm:$0xff]
    %v1402 = vadd.f32 %v1140, %v1142
    %v1403 = vadd.f32 %v1402, %v1211
    %v1404 = vadd.f32 %v1403, %v1213
    %vm1405 = vcmask 539648
    %v1406 = vsel %vm1405, %v1282, 0.0
    %v1407 = vadd.f32 %v1404, %v1406
    %1408 = vadd.xlane.f32.xlu0 %v1407
    %v1409 = vpop.xlane.xlu0 %1408
    %v1410 = vmul.f32 %v1409, 0.0017301039
    %v1411 = vsub.f32 %v1140, %v1410
    %v1412 = vsub.f32 %v1142, %v1410
    %v1413 = vsub.f32 %v1211, %v1410
    %v1414 = vsub.f32 %v1213, %v1410
    %v1415 = vsub.f32 %v1282, %v1410
    %v1416 = vmul.f32 %v1411, %v1411
    %v1417 = vmul.f32 %v1412, %v1412
    %v1418 = vmul.f32 %v1413, %v1413
    %v1419 = vmul.f32 %v1414, %v1414
    %v1420 = vmul.f32 %v1415, %v1415
    %v1421 = vadd.f32 %v1416, %v1417
    %v1422 = vadd.f32 %v1421, %v1418
    %v1423 = vadd.f32 %v1422, %v1419
    %v1424 = vsel %vm1405, %v1420, 0.0
    %v1425 = vadd.f32 %v1423, %v1424
    %1426 = vadd.xlane.f32.xlu0 %v1425
    %v1427 = vpop.xlane.xlu0 %1426
    %v1428 = vmul.f32 %v1427, 0.0017301039
    %v1429 = vadd.f32 %v1428, 1e-05
    %v1430 = vrsqrt.pop %v1429
    %v1431 = vmul.f32 %v1430, %v1400
    %1433 = vset.pattern.permute.xlu0 0
    %1434 = vperm.xlu0 %1433, %v1431
    %v1435 = vpop.permute.xlu0 %1434
    %v1437 = vmul.f32 %v1411, %v1435
    %v1438 = vmul.f32 %v1412, %v1435
    %v1439 = vmul.f32 %v1413, %v1435
    %v1440 = vmul.f32 %v1414, %v1435
    %v1441 = vmul.f32 %v1415, %v1435
    %1443 = vset.pattern.permute.xlu0 0
    %1444 = vperm.xlu0 %1443, %v1401
    %v1445 = vpop.permute.xlu0 %1444
    %v1447 = vadd.f32 %v1437, %v1445
    %v1448 = vadd.f32 %v1438, %v1445
    %v1449 = vadd.f32 %v1439, %v1445
    %v1450 = vadd.f32 %v1440, %v1445
    %v1451 = vadd.f32 %v1441, %v1445
    %1460 = vrot.lane.b32.xlu0 %v1390, 60
    %v1461 = vpop.permute.xlu0 %1460
    %1462 = vrot.lane.b32.xlu0 %v1391, 60
    %v1463 = vpop.permute.xlu0 %1462
    %1464 = vrot.lane.b32.xlu0 %v1392, 60
    %v1465 = vpop.permute.xlu0 %1464
    %1466 = vrot.lane.b32.xlu0 %v1393, 60
    %v1467 = vpop.permute.xlu0 %1466
    %1468 = vrot.lane.b32.xlu0 %v1396, 60
    %v1469 = vpop.permute.xlu0 %1468
    %1470 = vrot.lane.b32.xlu0 %v1397, 60
    %v1471 = vpop.permute.xlu0 %1470
    %1472 = vrot.lane.b32.xlu0 %v1398, 60
    %v1473 = vpop.permute.xlu0 %1472
    %1474 = vrot.lane.b32.xlu0 %v1399, 60
    %v1475 = vpop.permute.xlu0 %1474
    %vm1476 = vcmask 490496
    %v1477 = vsel %vm1476, %v1461, %v1463
    %v1478 = vsel %vm1476, %v1463, %v1465
    %v1479 = vsel %vm1476, %v1465, %v1467
    %v1480 = vsel %vm1476, %v1469, %v1471
    %v1481 = vsel %vm1476, %v1471, %v1473
    %v1482 = vsel %vm1476, %v1473, %v1475
    %1492 = vrot.lane.b32.xlu0 %v1449, 95
    %v1493 = vpop.permute.xlu0 %1492
    %1494 = vrot.lane.b32.xlu0 %v1450, 95
    %v1495 = vpop.permute.xlu0 %1494
    %1496 = vrot.lane.b32.xlu0 %v1451, 95
    %v1497 = vpop.permute.xlu0 %1496
    %vm1498 = vcmask 777216
    %v1499 = vsel %vm1498, %v1493, %v1495
    %v1500 = vsel %vm1498, %v1495, %v1497
    %v1504 = vpack.c.bf16 %v1499, %v1447
    %v1505 = vpack.c.bf16 %v1500, %v1448
    %v1506 = vpack.c.bf16 %v1497, %v1449
    %s1507 = smul.u32 4, 9
    %s1508 = smul.u32 %s1507, 37
    %s1509 = smul.u32 %s1508, 1
    %s1510 = sshll.u32 %s1509, 4
    %1511 = dma.done [#allocation5], %s1510
    %v1512 = vld [vmem:[%s8] sm:$0xff]
    %v1513 = vld [vmem:[%s8 + $0x8] sm:$0xff]
    %v1514 = vld [vmem:[%s8 + $0x10] sm:$0xff]
    %v1515 = vld [vmem:[%s8 + $0x18] sm:$0xff]
    %v1516 = vld [vmem:[#allocation2] sm:$0xf]
    %v1517 = vld [vmem:[#allocation2 + $0x4] sm:$0xf]
    %v1518 = vld [vmem:[#allocation2 + $0x8] sm:$0xf]
    %v1519 = vld [vmem:[#allocation2 + $0xc] sm:$0xf]
    %v1520 = vld [vmem:[#allocation2 + $0x10] sm:$0xf]
    %v1521 = vld [vmem:[#allocation2 + $0x14] sm:$0xf]
    %v1522 = vld [vmem:[#allocation2 + $0x18] sm:$0xf]
    %v1523 = vld [vmem:[#allocation2 + $0x1c] sm:$0xf]
    %v1524 = vld [vmem:[#allocation2 + $0x20] sm:$0xf]
    %v1525 = vld [vmem:[#allocation2 + $0x24] sm:$0xf]
    %v1526 = vld [vmem:[#allocation2 + $0x28] sm:$0xf]
    %v1527 = vld [vmem:[#allocation2 + $0x2c] sm:$0xf]
    %v1528 = vld [vmem:[#allocation2 + $0x30] sm:$0xf]
    %v1529 = vld [vmem:[#allocation2 + $0x34] sm:$0xf]
    %v1530 = vld [vmem:[#allocation2 + $0x38] sm:$0xf]
    %v1531 = vld [vmem:[#allocation2 + $0x3c] sm:$0xf]
    %v1532 = vld [vmem:[#allocation2 + $0x40] sm:$0xf]
    %v1533 = vld [vmem:[#allocation2 + $0x44] sm:$0xf]
    %v1534 = vld [vmem:[#allocation2 + $0x48] sm:$0xf]
    %v1535 = vld [vmem:[#allocation2 + $0x4c] sm:$0xf]
    %v1536 = vld [vmem:[#allocation2 + $0x50] sm:$0xf]
    %v1537 = vld [vmem:[#allocation2 + $0x54] sm:$0xf]
    %v1538 = vld [vmem:[#allocation2 + $0x58] sm:$0xf]
    %v1539 = vld [vmem:[#allocation2 + $0x5c] sm:$0xf]
    %v1540 = vld [vmem:[#allocation2 + $0x60] sm:$0xf]
    %v1541 = vld [vmem:[#allocation2 + $0x64] sm:$0xf]
    %v1542 = vld [vmem:[#allocation2 + $0x68] sm:$0xf]
    %v1543 = vld [vmem:[#allocation2 + $0x6c] sm:$0xf]
    %v1544 = vld [vmem:[#allocation2 + $0x70] sm:$0xf]
    %v1545 = vld [vmem:[#allocation2 + $0x74] sm:$0xf]
    %v1546 = vld [vmem:[#allocation2 + $0x78] sm:$0xf]
    %v1547 = vld [vmem:[#allocation2 + $0x7c] sm:$0xf]
    %v1548 = vld [vmem:[#allocation2 + $0x80] sm:$0xf]
    %v1549 = vld [vmem:[#allocation2 + $0x84] sm:$0xf]
    %v1550 = vld [vmem:[#allocation2 + $0x88] sm:$0xf]
    %v1551 = vld [vmem:[#allocation2 + $0x8c] sm:$0xf]
    %v1552 = vld [vmem:[#allocation2 + $0x90] sm:$0x1]
    %v1590 = vunpack.c.l.b16 %v1516
    %v1591 = vunpack.c.l.b16 %v1517
    %v1592 = vunpack.c.l.b16 %v1518
    %v1593 = vunpack.c.l.b16 %v1519
    %v1594 = vunpack.c.l.b16 %v1520
    %v1595 = vunpack.c.l.b16 %v1521
    %v1596 = vunpack.c.l.b16 %v1522
    %v1597 = vunpack.c.l.b16 %v1523
    %v1598 = vunpack.c.l.b16 %v1524
    %v1599 = vunpack.c.l.b16 %v1525
    %v1600 = vunpack.c.l.b16 %v1526
    %v1601 = vunpack.c.l.b16 %v1527
    %v1602 = vunpack.c.l.b16 %v1528
    %v1603 = vunpack.c.l.b16 %v1529
    %v1604 = vunpack.c.l.b16 %v1530
    %v1605 = vunpack.c.l.b16 %v1531
    %v1606 = vunpack.c.l.b16 %v1532
    %v1607 = vunpack.c.l.b16 %v1533
    %v1608 = vunpack.c.l.b16 %v1534
    %v1609 = vunpack.c.l.b16 %v1535
    %v1610 = vunpack.c.l.b16 %v1536
    %v1611 = vunpack.c.l.b16 %v1537
    %v1612 = vunpack.c.l.b16 %v1538
    %v1613 = vunpack.c.l.b16 %v1539
    %v1614 = vunpack.c.l.b16 %v1540
    %v1615 = vunpack.c.l.b16 %v1541
    %v1616 = vunpack.c.l.b16 %v1542
    %v1617 = vunpack.c.l.b16 %v1543
    %v1618 = vunpack.c.l.b16 %v1544
    %v1619 = vunpack.c.l.b16 %v1545
    %v1620 = vunpack.c.l.b16 %v1546
    %v1621 = vunpack.c.l.b16 %v1547
    %v1622 = vunpack.c.l.b16 %v1548
    %v1623 = vunpack.c.l.b16 %v1549
    %v1624 = vunpack.c.l.b16 %v1550
    %v1625 = vunpack.c.l.b16 %v1551
    %v1626 = vunpack.c.l.b16 %v1552
    %v1627 = vpack.c.b16 %v1591, %v1590
    %v1628 = vpack.c.b16 %v1593, %v1592
    %v1629 = vpack.c.b16 %v1595, %v1594
    %v1630 = vpack.c.b16 %v1597, %v1596
    %v1631 = vpack.c.b16 %v1599, %v1598
    %v1632 = vpack.c.b16 %v1601, %v1600
    %v1633 = vpack.c.b16 %v1603, %v1602
    %v1634 = vpack.c.b16 %v1605, %v1604
    %v1635 = vpack.c.b16 %v1607, %v1606
    %v1636 = vpack.c.b16 %v1609, %v1608
    %v1637 = vpack.c.b16 %v1611, %v1610
    %v1638 = vpack.c.b16 %v1613, %v1612
    %v1639 = vpack.c.b16 %v1615, %v1614
    %v1640 = vpack.c.b16 %v1617, %v1616
    %v1641 = vpack.c.b16 %v1619, %v1618
    %v1642 = vpack.c.b16 %v1621, %v1620
    %v1643 = vpack.c.b16 %v1623, %v1622
    %v1644 = vpack.c.b16 %v1625, %v1624
    %v1645 = vpack.c.b16 %v1626, %v1626
    %vm1664 = vcmask 269312
    %v1666 = vsel %vm1664, %v1506, 0
    %vm1668 = vcmask 1040384
    %v1669 = vsel 0, 4294967295, 65535
    %v1670 = vsel %vm1668, %v1669, 0
    %v1672 = vand.u32 %v1645, %v1670
    %1674 = vmatprep.subr.bf16.mxu0 0
    %1675 = vmatpush1.bf16.msra.mxu0 %v1634
    %1676 = vmatprep.subr.bf16.mxu0 0
    %1677 = vmatpush1.bf16.msra.mxu0 %v1633
    %1678 = vmatprep.subr.bf16.mxu0 0
    %1679 = vmatpush1.bf16.msra.mxu0 %v1632
    %1680 = vmatprep.subr.bf16.mxu0 0
    %1681 = vmatpush1.bf16.msra.mxu0 %v1631
    %1682 = vmatprep.subr.bf16.mxu0 0
    %1683 = vmatpush1.bf16.msra.mxu0 %v1630
    %1684 = vmatprep.subr.bf16.mxu0 0
    %1685 = vmatpush1.bf16.msra.mxu0 %v1629
    %1686 = vmatprep.subr.bf16.mxu0 0
    %1687 = vmatpush1.bf16.msra.mxu0 %v1628
    %1688 = vmatprep.subr.bf16.mxu0 0
    %1689 = vmatpush1.bf16.msra.mxu0 %v1627
    %1690 = vmatprep.subr.bf16.mxu0 0
    %1691 = vmatpush2.bf16.msra.mxu0 %v1642
    %1692 = vmatprep.subr.bf16.mxu0 0
    %1693 = vmatpush2.bf16.msra.mxu0 %v1641
    %1694 = vmatprep.subr.bf16.mxu0 0
    %1695 = vmatpush2.bf16.msra.mxu0 %v1640
    %1696 = vmatprep.subr.bf16.mxu0 0
    %1697 = vmatpush2.bf16.msra.mxu0 %v1639
    %1698 = vmatprep.subr.bf16.mxu0 0
    %1699 = vmatpush2.bf16.msra.mxu0 %v1638
    %1700 = vmatprep.subr.bf16.mxu0 0
    %1701 = vmatpush2.bf16.msra.mxu0 %v1637
    %1702 = vmatprep.subr.bf16.mxu0 0
    %1703 = vmatpush2.bf16.msra.mxu0 %v1636
    %1704 = vmatprep.subr.bf16.mxu0 0
    %1705 = vmatpush2.bf16.msra.mxu0 %v1635
    %1706 = vmatprep.mubr.bf16.mxu0 %v1505
    %1707 = vmatmul.mubr.bf16.gmra.mxu0 %v1504
    %v1708 = vpop.f32.mrf.mxu0
    %v1709 = vadd.f32 0.0, %v1708
    %v1710 = vpop.f32.mrf.mxu0
    %v1711 = vpop.f32.mrf.mxu0
    %v1712 = vadd.f32 0.0, %v1711
    %v1713 = vpop.f32.mrf.mxu0
    %1714 = vdwg.mxu0
    %1715 = vmatprep.subr.bf16.mxu0 0
    %1716 = vmatpush1.bf16.msra.mxu0 0
    %1717 = vmatprep.subr.bf16.mxu0 0
    %1718 = vmatpush1.bf16.msra.mxu0 0
    %1719 = vmatprep.subr.bf16.mxu0 0
    %1720 = vmatpush1.bf16.msra.mxu0 0
    %1721 = vmatprep.subr.bf16.mxu0 0
    %1722 = vmatpush1.bf16.msra.mxu0 0
    %1723 = vmatprep.subr.bf16.mxu0 0
    %1724 = vmatpush1.bf16.msra.mxu0 0
    %1725 = vmatprep.subr.bf16.mxu0 0
    %1726 = vmatpush1.bf16.msra.mxu0 %v1672
    %1727 = vmatprep.subr.bf16.mxu0 0
    %1728 = vmatpush1.bf16.msra.mxu0 %v1644
    %1729 = vmatprep.subr.bf16.mxu0 0
    %1730 = vmatpush1.bf16.msra.mxu0 %v1643
    %1731 = vmatprep.subr.bf16.mxu0 0
    %1732 = vmatpush2.bf16.msra.mxu0 0
    %1733 = vmatprep.subr.bf16.mxu0 0
    %1734 = vmatpush2.bf16.msra.mxu0 0
    %1735 = vmatprep.subr.bf16.mxu0 0
    %1736 = vmatpush2.bf16.msra.mxu0 0
    %1737 = vmatprep.subr.bf16.mxu0 0
    %1738 = vmatpush2.bf16.msra.mxu0 0
    %1739 = vmatprep.subr.bf16.mxu0 0
    %1740 = vmatpush2.bf16.msra.mxu0 0
    %1741 = vmatprep.subr.bf16.mxu0 0
    %1742 = vmatpush2.bf16.msra.mxu0 0
    %1743 = vmatprep.subr.bf16.mxu0 0
    %1744 = vmatpush2.bf16.msra.mxu0 0
    %1745 = vmatprep.subr.bf16.mxu0 0
    %1746 = vmatpush2.bf16.msra.mxu0 0
    %1747 = vmatprep.mubr.bf16.mxu0 0
    %1748 = vmatmul.mubr.bf16.gmra.mxu0 %v1666
    %v1749 = vpop.f32.mrf.mxu0
    %v1750 = vadd.f32 %v1709, %v1749
    %v1751 = vpop.f32.mrf.mxu0
    %v1752 = vpop.f32.mrf.mxu0
    %v1753 = vadd.f32 %v1712, %v1752
    %v1754 = vpop.f32.mrf.mxu0
    %1755 = vdwg.mxu0
    %s1756 = scalar_lea.vmem %s8, 32
    %v1757 = vld [vmem:[%s1756] sm:$0xff]
    %v1758 = vld [vmem:[%s1756 + $0x8] sm:$0xff]
    %v1759 = vld [vmem:[%s1756 + $0x10] sm:$0xff]
    %v1760 = vld [vmem:[%s1756 + $0x18] sm:$0xff]
    %s1761 = scalar_lea.vmem [#allocation2], 148
    %v1762 = vld [vmem:[%s1761] sm:$0xf]
    %v1763 = vld [vmem:[%s1761 + $0x4] sm:$0xf]
    %v1764 = vld [vmem:[%s1761 + $0x8] sm:$0xf]
    %v1765 = vld [vmem:[%s1761 + $0xc] sm:$0xf]
    %v1766 = vld [vmem:[%s1761 + $0x10] sm:$0xf]
    %v1767 = vld [vmem:[%s1761 + $0x14] sm:$0xf]
    %v1768 = vld [vmem:[%s1761 + $0x18] sm:$0xf]
    %v1769 = vld [vmem:[%s1761 + $0x1c] sm:$0xf]
    %v1770 = vld [vmem:[%s1761 + $0x20] sm:$0xf]
    %v1771 = vld [vmem:[%s1761 + $0x24] sm:$0xf]
    %v1772 = vld [vmem:[%s1761 + $0x28] sm:$0xf]
    %v1773 = vld [vmem:[%s1761 + $0x2c] sm:$0xf]
    %v1774 = vld [vmem:[%s1761 + $0x30] sm:$0xf]
    %v1775 = vld [vmem:[%s1761 + $0x34] sm:$0xf]
    %v1776 = vld [vmem:[%s1761 + $0x38] sm:$0xf]
    %v1777 = vld [vmem:[%s1761 + $0x3c] sm:$0xf]
    %v1778 = vld [vmem:[%s1761 + $0x40] sm:$0xf]
    %v1779 = vld [vmem:[%s1761 + $0x44] sm:$0xf]
    %v1780 = vld [vmem:[%s1761 + $0x48] sm:$0xf]
    %v1781 = vld [vmem:[%s1761 + $0x4c] sm:$0xf]
    %v1782 = vld [vmem:[%s1761 + $0x50] sm:$0xf]
    %v1783 = vld [vmem:[%s1761 + $0x54] sm:$0xf]
    %v1784 = vld [vmem:[%s1761 + $0x58] sm:$0xf]
    %v1785 = vld [vmem:[%s1761 + $0x5c] sm:$0xf]
    %v1786 = vld [vmem:[%s1761 + $0x60] sm:$0xf]
    %v1787 = vld [vmem:[%s1761 + $0x64] sm:$0xf]
    %v1788 = vld [vmem:[%s1761 + $0x68] sm:$0xf]
    %v1789 = vld [vmem:[%s1761 + $0x6c] sm:$0xf]
    %v1790 = vld [vmem:[%s1761 + $0x70] sm:$0xf]
    %v1791 = vld [vmem:[%s1761 + $0x74] sm:$0xf]
    %v1792 = vld [vmem:[%s1761 + $0x78] sm:$0xf]
    %v1793 = vld [vmem:[%s1761 + $0x7c] sm:$0xf]
    %v1794 = vld [vmem:[%s1761 + $0x80] sm:$0xf]
    %v1795 = vld [vmem:[%s1761 + $0x84] sm:$0xf]
    %v1796 = vld [vmem:[%s1761 + $0x88] sm:$0xf]
    %v1797 = vld [vmem:[%s1761 + $0x8c] sm:$0xf]
    %v1798 = vld [vmem:[%s1761 + $0x90] sm:$0x1]
    %v1836 = vunpack.c.l.b16 %v1762
    %v1837 = vunpack.c.l.b16 %v1763
    %v1838 = vunpack.c.l.b16 %v1764
    %v1839 = vunpack.c.l.b16 %v1765
    %v1840 = vunpack.c.l.b16 %v1766
    %v1841 = vunpack.c.l.b16 %v1767
    %v1842 = vunpack.c.l.b16 %v1768
    %v1843 = vunpack.c.l.b16 %v1769
    %v1844 = vunpack.c.l.b16 %v1770
    %v1845 = vunpack.c.l.b16 %v1771
    %v1846 = vunpack.c.l.b16 %v1772
    %v1847 = vunpack.c.l.b16 %v1773
    %v1848 = vunpack.c.l.b16 %v1774
    %v1849 = vunpack.c.l.b16 %v1775
    %v1850 = vunpack.c.l.b16 %v1776
    %v1851 = vunpack.c.l.b16 %v1777
    %v1852 = vunpack.c.l.b16 %v1778
    %v1853 = vunpack.c.l.b16 %v1779
    %v1854 = vunpack.c.l.b16 %v1780
    %v1855 = vunpack.c.l.b16 %v1781
    %v1856 = vunpack.c.l.b16 %v1782
    %v1857 = vunpack.c.l.b16 %v1783
    %v1858 = vunpack.c.l.b16 %v1784
    %v1859 = vunpack.c.l.b16 %v1785
    %v1860 = vunpack.c.l.b16 %v1786
    %v1861 = vunpack.c.l.b16 %v1787
    %v1862 = vunpack.c.l.b16 %v1788
    %v1863 = vunpack.c.l.b16 %v1789
    %v1864 = vunpack.c.l.b16 %v1790
    %v1865 = vunpack.c.l.b16 %v1791
    %v1866 = vunpack.c.l.b16 %v1792
    %v1867 = vunpack.c.l.b16 %v1793
    %v1868 = vunpack.c.l.b16 %v1794
    %v1869 = vunpack.c.l.b16 %v1795
    %v1870 = vunpack.c.l.b16 %v1796
    %v1871 = vunpack.c.l.b16 %v1797
    %v1872 = vunpack.c.l.b16 %v1798
    %v1873 = vpack.c.b16 %v1837, %v1836
    %v1874 = vpack.c.b16 %v1839, %v1838
    %v1875 = vpack.c.b16 %v1841, %v1840
    %v1876 = vpack.c.b16 %v1843, %v1842
    %v1877 = vpack.c.b16 %v1845, %v1844
    %v1878 = vpack.c.b16 %v1847, %v1846
    %v1879 = vpack.c.b16 %v1849, %v1848
    %v1880 = vpack.c.b16 %v1851, %v1850
    %v1881 = vpack.c.b16 %v1853, %v1852
    %v1882 = vpack.c.b16 %v1855, %v1854
    %v1883 = vpack.c.b16 %v1857, %v1856
    %v1884 = vpack.c.b16 %v1859, %v1858
    %v1885 = vpack.c.b16 %v1861, %v1860
    %v1886 = vpack.c.b16 %v1863, %v1862
    %v1887 = vpack.c.b16 %v1865, %v1864
    %v1888 = vpack.c.b16 %v1867, %v1866
    %v1889 = vpack.c.b16 %v1869, %v1868
    %v1890 = vpack.c.b16 %v1871, %v1870
    %v1891 = vpack.c.b16 %v1872, %v1872
    %v1911 = vand.u32 %v1891, %v1670
    %1913 = vmatprep.subr.bf16.mxu0 0
    %1914 = vmatpush1.bf16.msra.mxu0 %v1880
    %1915 = vmatprep.subr.bf16.mxu0 0
    %1916 = vmatpush1.bf16.msra.mxu0 %v1879
    %1917 = vmatprep.subr.bf16.mxu0 0
    %1918 = vmatpush1.bf16.msra.mxu0 %v1878
    %1919 = vmatprep.subr.bf16.mxu0 0
    %1920 = vmatpush1.bf16.msra.mxu0 %v1877
    %1921 = vmatprep.subr.bf16.mxu0 0
    %1922 = vmatpush1.bf16.msra.mxu0 %v1876
    %1923 = vmatprep.subr.bf16.mxu0 0
    %1924 = vmatpush1.bf16.msra.mxu0 %v1875
    %1925 = vmatprep.subr.bf16.mxu0 0
    %1926 = vmatpush1.bf16.msra.mxu0 %v1874
    %1927 = vmatprep.subr.bf16.mxu0 0
    %1928 = vmatpush1.bf16.msra.mxu0 %v1873
    %1929 = vmatprep.subr.bf16.mxu0 0
    %1930 = vmatpush2.bf16.msra.mxu0 %v1888
    %1931 = vmatprep.subr.bf16.mxu0 0
    %1932 = vmatpush2.bf16.msra.mxu0 %v1887
    %1933 = vmatprep.subr.bf16.mxu0 0
    %1934 = vmatpush2.bf16.msra.mxu0 %v1886
    %1935 = vmatprep.subr.bf16.mxu0 0
    %1936 = vmatpush2.bf16.msra.mxu0 %v1885
    %1937 = vmatprep.subr.bf16.mxu0 0
    %1938 = vmatpush2.bf16.msra.mxu0 %v1884
    %1939 = vmatprep.subr.bf16.mxu0 0
    %1940 = vmatpush2.bf16.msra.mxu0 %v1883
    %1941 = vmatprep.subr.bf16.mxu0 0
    %1942 = vmatpush2.bf16.msra.mxu0 %v1882
    %1943 = vmatprep.subr.bf16.mxu0 0
    %1944 = vmatpush2.bf16.msra.mxu0 %v1881
    %1945 = vmatprep.mubr.bf16.mxu0 %v1505
    %1946 = vmatmul.mubr.bf16.gmra.mxu0 %v1504
    %v1947 = vpop.f32.mrf.mxu0
    %v1948 = vadd.f32 0.0, %v1947
    %v1949 = vpop.f32.mrf.mxu0
    %v1950 = vpop.f32.mrf.mxu0
    %v1951 = vadd.f32 0.0, %v1950
    %v1952 = vpop.f32.mrf.mxu0
    %1953 = vdwg.mxu0
    %1954 = vmatprep.subr.bf16.mxu0 0
    %1955 = vmatpush1.bf16.msra.mxu0 0
    %1956 = vmatprep.subr.bf16.mxu0 0
    %1957 = vmatpush1.bf16.msra.mxu0 0
    %1958 = vmatprep.subr.bf16.mxu0 0
    %1959 = vmatpush1.bf16.msra.mxu0 0
    %1960 = vmatprep.subr.bf16.mxu0 0
    %1961 = vmatpush1.bf16.msra.mxu0 0
    %1962 = vmatprep.subr.bf16.mxu0 0
    %1963 = vmatpush1.bf16.msra.mxu0 0
    %1964 = vmatprep.subr.bf16.mxu0 0
    %1965 = vmatpush1.bf16.msra.mxu0 %v1911
    %1966 = vmatprep.subr.bf16.mxu0 0
    %1967 = vmatpush1.bf16.msra.mxu0 %v1890
    %1968 = vmatprep.subr.bf16.mxu0 0
    %1969 = vmatpush1.bf16.msra.mxu0 %v1889
    %1970 = vmatprep.subr.bf16.mxu0 0
    %1971 = vmatpush2.bf16.msra.mxu0 0
    %1972 = vmatprep.subr.bf16.mxu0 0
    %1973 = vmatpush2.bf16.msra.mxu0 0
    %1974 = vmatprep.subr.bf16.mxu0 0
    %1975 = vmatpush2.bf16.msra.mxu0 0
    %1976 = vmatprep.subr.bf16.mxu0 0
    %1977 = vmatpush2.bf16.msra.mxu0 0
    %1978 = vmatprep.subr.bf16.mxu0 0
    %1979 = vmatpush2.bf16.msra.mxu0 0
    %1980 = vmatprep.subr.bf16.mxu0 0
    %1981 = vmatpush2.bf16.msra.mxu0 0
    %1982 = vmatprep.subr.bf16.mxu0 0
    %1983 = vmatpush2.bf16.msra.mxu0 0
    %1984 = vmatprep.subr.bf16.mxu0 0
    %1985 = vmatpush2.bf16.msra.mxu0 0
    %1986 = vmatprep.mubr.bf16.mxu0 0
    %1987 = vmatmul.mubr.bf16.gmra.mxu0 %v1666
    %v1988 = vpop.f32.mrf.mxu0
    %v1989 = vadd.f32 %v1948, %v1988
    %v1990 = vpop.f32.mrf.mxu0
    %v1991 = vpop.f32.mrf.mxu0
    %v1992 = vadd.f32 %v1951, %v1991
    %v1993 = vpop.f32.mrf.mxu0
    %1994 = vdwg.mxu0
    %vm1995 = vcmask 130048
    %v1997 = vsel %vm1995, %v1757, 0
    %v2000 = vsel %vm1995, %v1758, 0
    %v2003 = vsel %vm1995, %v1759, 0
    %v2006 = vsel %vm1995, %v1760, 0
    %2008 = vmatprep.subr.mxu0 0.0
    %2009 = vmatpush1.msra.mxu0 0.0
    %2010 = vmatprep.subr.mxu0 0.0
    %2011 = vmatpush1.msra.mxu0 0.0
    %2012 = vmatprep.subr.mxu0 0.0
    %2013 = vmatpush1.msra.mxu0 0.0
    %2014 = vmatprep.subr.mxu0 0.0
    %2015 = vmatpush1.msra.mxu0 0.0
    %2016 = vmatprep.subr.mxu0 0.0
    %2017 = vmatpush1.msra.mxu0 0.0
    %2018 = vmatprep.subr.mxu0 0.0
    %2019 = vmatpush1.msra.mxu0 0.0
    %2020 = vmatprep.subr.mxu0 0.0
    %2021 = vmatpush1.msra.mxu0 0.0
    %2022 = vmatprep.subr.mxu0 0.0
    %2023 = vmatpush1.msra.mxu0 0.0
    %2024 = vmatprep.subr.mxu0 0.0
    %2025 = vmatpush1.msra.mxu0 0.0
    %2026 = vmatprep.subr.mxu0 0.0
    %2027 = vmatpush1.msra.mxu0 0.0
    %2028 = vmatprep.subr.mxu0 0.0
    %2029 = vmatpush1.msra.mxu0 0.0
    %2030 = vmatprep.subr.mxu0 0.0
    %2031 = vmatpush1.msra.mxu0 0.0
    %2032 = vmatprep.subr.mxu0 0.0
    %2033 = vmatpush1.msra.mxu0 0.0
    %2034 = vmatprep.subr.mxu0 0.0
    %2035 = vmatpush1.msra.mxu0 0.0
    %2036 = vmatprep.subr.mxu0 0.0
    %2037 = vmatpush1.msra.mxu0 %v1992
    %2038 = vmatprep.subr.mxu0 0.0
    %2039 = vmatpush1.msra.mxu0 %v1989
    %2040 = vmatprep.subr.mxu0 0.0
    %2041 = vmatpush2.msra.mxu0 0.0
    %2042 = vmatprep.subr.mxu0 0.0
    %2043 = vmatpush2.msra.mxu0 0.0
    %2044 = vmatprep.subr.mxu0 0.0
    %2045 = vmatpush2.msra.mxu0 0.0
    %2046 = vmatprep.subr.mxu0 0.0
    %2047 = vmatpush2.msra.mxu0 0.0
    %2048 = vmatprep.subr.mxu0 0.0
    %2049 = vmatpush2.msra.mxu0 0.0
    %2050 = vmatprep.subr.mxu0 0.0
    %2051 = vmatpush2.msra.mxu0 0.0
    %2052 = vmatprep.subr.mxu0 0.0
    %2053 = vmatpush2.msra.mxu0 0.0
    %2054 = vmatprep.subr.mxu0 0.0
    %2055 = vmatpush2.msra.mxu0 0.0
    %2056 = vmatprep.subr.mxu0 0.0
    %2057 = vmatpush2.msra.mxu0 0.0
    %2058 = vmatprep.subr.mxu0 0.0
    %2059 = vmatpush2.msra.mxu0 0.0
    %2060 = vmatprep.subr.mxu0 0.0
    %2061 = vmatpush2.msra.mxu0 0.0
    %2062 = vmatprep.subr.mxu0 0.0
    %2063 = vmatpush2.msra.mxu0 0.0
    %2064 = vmatprep.subr.mxu0 0.0
    %2065 = vmatpush2.msra.mxu0 0.0
    %2066 = vmatprep.subr.mxu0 0.0
    %2067 = vmatpush2.msra.mxu0 0.0
    %2068 = vmatprep.subr.mxu0 0.0
    %2069 = vmatpush2.msra.mxu0 0.0
    %2070 = vmatprep.subr.mxu0 0.0
    %2071 = vmatpush2.msra.mxu0 0.0
    %2072 = vmatprep.mubr.f32.mxu0 0.0
    %2073 = vmatmul.mubr.f32.gmra.mxu0 %v1997
    %v2074 = vpop.f32.mrf.mxu0
    %v2075 = vadd.f32 0.0, %v2074
    %v2076 = vpop.f32.mrf.mxu0
    %2077 = vmatprep.mubr.f32.mxu0 0.0
    %2078 = vmatmul.mubr.f32.gmra.mxu0 %v2000
    %v2079 = vpop.f32.mrf.mxu0
    %v2080 = vadd.f32 0.0, %v2079
    %v2081 = vpop.f32.mrf.mxu0
    %2082 = vmatprep.mubr.f32.mxu0 0.0
    %2083 = vmatmul.mubr.f32.gmra.mxu0 %v2003
    %v2084 = vpop.f32.mrf.mxu0
    %v2085 = vadd.f32 0.0, %v2084
    %v2086 = vpop.f32.mrf.mxu0
    %2087 = vmatprep.mubr.f32.mxu0 0.0
    %2088 = vmatmul.mubr.f32.gmra.mxu0 %v2006
    %v2089 = vpop.f32.mrf.mxu0
    %v2090 = vadd.f32 0.0, %v2089
    %v2091 = vpop.f32.mrf.mxu0
    %2092 = vdwg.mxu0
    %v2094 = vsel %vm1995, %v1512, 0
    %v2097 = vsel %vm1995, %v1513, 0
    %v2100 = vsel %vm1995, %v1514, 0
    %v2103 = vsel %vm1995, %v1515, 0
    %2105 = vmatprep.subr.mxu0 0.0
    %2106 = vmatpush1.msra.mxu0 0.0
    %2107 = vmatprep.subr.mxu0 0.0
    %2108 = vmatpush1.msra.mxu0 0.0
    %2109 = vmatprep.subr.mxu0 0.0
    %2110 = vmatpush1.msra.mxu0 0.0
    %2111 = vmatprep.subr.mxu0 0.0
    %2112 = vmatpush1.msra.mxu0 0.0
    %2113 = vmatprep.subr.mxu0 0.0
    %2114 = vmatpush1.msra.mxu0 0.0
    %2115 = vmatprep.subr.mxu0 0.0
    %2116 = vmatpush1.msra.mxu0 0.0
    %2117 = vmatprep.subr.mxu0 0.0
    %2118 = vmatpush1.msra.mxu0 0.0
    %2119 = vmatprep.subr.mxu0 0.0
    %2120 = vmatpush1.msra.mxu0 0.0
    %2121 = vmatprep.subr.mxu0 0.0
    %2122 = vmatpush1.msra.mxu0 0.0
    %2123 = vmatprep.subr.mxu0 0.0
    %2124 = vmatpush1.msra.mxu0 0.0
    %2125 = vmatprep.subr.mxu0 0.0
    %2126 = vmatpush1.msra.mxu0 0.0
    %2127 = vmatprep.subr.mxu0 0.0
    %2128 = vmatpush1.msra.mxu0 0.0
    %2129 = vmatprep.subr.mxu0 0.0
    %2130 = vmatpush1.msra.mxu0 0.0
    %2131 = vmatprep.subr.mxu0 0.0
    %2132 = vmatpush1.msra.mxu0 0.0
    %2133 = vmatprep.subr.mxu0 0.0
    %2134 = vmatpush1.msra.mxu0 %v1753
    %2135 = vmatprep.subr.mxu0 0.0
    %2136 = vmatpush1.msra.mxu0 %v1750
    %2137 = vmatprep.subr.mxu0 0.0
    %2138 = vmatpush2.msra.mxu0 0.0
    %2139 = vmatprep.subr.mxu0 0.0
    %2140 = vmatpush2.msra.mxu0 0.0
    %2141 = vmatprep.subr.mxu0 0.0
    %2142 = vmatpush2.msra.mxu0 0.0
    %2143 = vmatprep.subr.mxu0 0.0
    %2144 = vmatpush2.msra.mxu0 0.0
    %2145 = vmatprep.subr.mxu0 0.0
    %2146 = vmatpush2.msra.mxu0 0.0
    %2147 = vmatprep.subr.mxu0 0.0
    %2148 = vmatpush2.msra.mxu0 0.0
    %2149 = vmatprep.subr.mxu0 0.0
    %2150 = vmatpush2.msra.mxu0 0.0
    %2151 = vmatprep.subr.mxu0 0.0
    %2152 = vmatpush2.msra.mxu0 0.0
    %2153 = vmatprep.subr.mxu0 0.0
    %2154 = vmatpush2.msra.mxu0 0.0
    %2155 = vmatprep.subr.mxu0 0.0
    %2156 = vmatpush2.msra.mxu0 0.0
    %2157 = vmatprep.subr.mxu0 0.0
    %2158 = vmatpush2.msra.mxu0 0.0
    %2159 = vmatprep.subr.mxu0 0.0
    %2160 = vmatpush2.msra.mxu0 0.0
    %2161 = vmatprep.subr.mxu0 0.0
    %2162 = vmatpush2.msra.mxu0 0.0
    %2163 = vmatprep.subr.mxu0 0.0
    %2164 = vmatpush2.msra.mxu0 0.0
    %2165 = vmatprep.subr.mxu0 0.0
    %2166 = vmatpush2.msra.mxu0 0.0
    %2167 = vmatprep.subr.mxu0 0.0
    %2168 = vmatpush2.msra.mxu0 0.0
    %2169 = vmatprep.mubr.f32.mxu0 0.0
    %2170 = vmatmul.mubr.f32.gmra.mxu0 %v2094
    %v2171 = vpop.f32.mrf.mxu0
    %v2172 = vadd.f32 %v2075, %v2171
    %v2173 = vpop.f32.mrf.mxu0
    %2174 = vmatprep.mubr.f32.mxu0 0.0
    %2175 = vmatmul.mubr.f32.gmra.mxu0 %v2097
    %v2176 = vpop.f32.mrf.mxu0
    %v2177 = vadd.f32 %v2080, %v2176
    %v2178 = vpop.f32.mrf.mxu0
    %2179 = vmatprep.mubr.f32.mxu0 0.0
    %2180 = vmatmul.mubr.f32.gmra.mxu0 %v2100
    %v2181 = vpop.f32.mrf.mxu0
    %v2182 = vadd.f32 %v2085, %v2181
    %v2183 = vpop.f32.mrf.mxu0
    %2184 = vmatprep.mubr.f32.mxu0 0.0
    %2185 = vmatmul.mubr.f32.gmra.mxu0 %v2103
    %v2186 = vpop.f32.mrf.mxu0
    %v2187 = vadd.f32 %v2090, %v2186
    %v2188 = vpop.f32.mrf.mxu0
    %2189 = vdwg.mxu0
    %s2190 = scalar_lea.vmem %s8, 64
    %v2191 = vld [vmem:[%s2190] sm:$0xff]
    %v2192 = vld [vmem:[%s2190 + $0x8] sm:$0xff]
    %v2193 = vld [vmem:[%s2190 + $0x10] sm:$0xff]
    %v2194 = vld [vmem:[%s2190 + $0x18] sm:$0xff]
    %s2195 = scalar_lea.vmem [#allocation2], 296
    %v2196 = vld [vmem:[%s2195] sm:$0xf]
    %v2197 = vld [vmem:[%s2195 + $0x4] sm:$0xf]
    %v2198 = vld [vmem:[%s2195 + $0x8] sm:$0xf]
    %v2199 = vld [vmem:[%s2195 + $0xc] sm:$0xf]
    %v2200 = vld [vmem:[%s2195 + $0x10] sm:$0xf]
    %v2201 = vld [vmem:[%s2195 + $0x14] sm:$0xf]
    %v2202 = vld [vmem:[%s2195 + $0x18] sm:$0xf]
    %v2203 = vld [vmem:[%s2195 + $0x1c] sm:$0xf]
    %v2204 = vld [vmem:[%s2195 + $0x20] sm:$0xf]
    %v2205 = vld [vmem:[%s2195 + $0x24] sm:$0xf]
    %v2206 = vld [vmem:[%s2195 + $0x28] sm:$0xf]
    %v2207 = vld [vmem:[%s2195 + $0x2c] sm:$0xf]
    %v2208 = vld [vmem:[%s2195 + $0x30] sm:$0xf]
    %v2209 = vld [vmem:[%s2195 + $0x34] sm:$0xf]
    %v2210 = vld [vmem:[%s2195 + $0x38] sm:$0xf]
    %v2211 = vld [vmem:[%s2195 + $0x3c] sm:$0xf]
    %v2212 = vld [vmem:[%s2195 + $0x40] sm:$0xf]
    %v2213 = vld [vmem:[%s2195 + $0x44] sm:$0xf]
    %v2214 = vld [vmem:[%s2195 + $0x48] sm:$0xf]
    %v2215 = vld [vmem:[%s2195 + $0x4c] sm:$0xf]
    %v2216 = vld [vmem:[%s2195 + $0x50] sm:$0xf]
    %v2217 = vld [vmem:[%s2195 + $0x54] sm:$0xf]
    %v2218 = vld [vmem:[%s2195 + $0x58] sm:$0xf]
    %v2219 = vld [vmem:[%s2195 + $0x5c] sm:$0xf]
    %v2220 = vld [vmem:[%s2195 + $0x60] sm:$0xf]
    %v2221 = vld [vmem:[%s2195 + $0x64] sm:$0xf]
    %v2222 = vld [vmem:[%s2195 + $0x68] sm:$0xf]
    %v2223 = vld [vmem:[%s2195 + $0x6c] sm:$0xf]
    %v2224 = vld [vmem:[%s2195 + $0x70] sm:$0xf]
    %v2225 = vld [vmem:[%s2195 + $0x74] sm:$0xf]
    %v2226 = vld [vmem:[%s2195 + $0x78] sm:$0xf]
    %v2227 = vld [vmem:[%s2195 + $0x7c] sm:$0xf]
    %v2228 = vld [vmem:[%s2195 + $0x80] sm:$0xf]
    %v2229 = vld [vmem:[%s2195 + $0x84] sm:$0xf]
    %v2230 = vld [vmem:[%s2195 + $0x88] sm:$0xf]
    %v2231 = vld [vmem:[%s2195 + $0x8c] sm:$0xf]
    %v2232 = vld [vmem:[%s2195 + $0x90] sm:$0x1]
    %v2270 = vunpack.c.l.b16 %v2196
    %v2271 = vunpack.c.l.b16 %v2197
    %v2272 = vunpack.c.l.b16 %v2198
    %v2273 = vunpack.c.l.b16 %v2199
    %v2274 = vunpack.c.l.b16 %v2200
    %v2275 = vunpack.c.l.b16 %v2201
    %v2276 = vunpack.c.l.b16 %v2202
    %v2277 = vunpack.c.l.b16 %v2203
    %v2278 = vunpack.c.l.b16 %v2204
    %v2279 = vunpack.c.l.b16 %v2205
    %v2280 = vunpack.c.l.b16 %v2206
    %v2281 = vunpack.c.l.b16 %v2207
    %v2282 = vunpack.c.l.b16 %v2208
    %v2283 = vunpack.c.l.b16 %v2209
    %v2284 = vunpack.c.l.b16 %v2210
    %v2285 = vunpack.c.l.b16 %v2211
    %v2286 = vunpack.c.l.b16 %v2212
    %v2287 = vunpack.c.l.b16 %v2213
    %v2288 = vunpack.c.l.b16 %v2214
    %v2289 = vunpack.c.l.b16 %v2215
    %v2290 = vunpack.c.l.b16 %v2216
    %v2291 = vunpack.c.l.b16 %v2217
    %v2292 = vunpack.c.l.b16 %v2218
    %v2293 = vunpack.c.l.b16 %v2219
    %v2294 = vunpack.c.l.b16 %v2220
    %v2295 = vunpack.c.l.b16 %v2221
    %v2296 = vunpack.c.l.b16 %v2222
    %v2297 = vunpack.c.l.b16 %v2223
    %v2298 = vunpack.c.l.b16 %v2224
    %v2299 = vunpack.c.l.b16 %v2225
    %v2300 = vunpack.c.l.b16 %v2226
    %v2301 = vunpack.c.l.b16 %v2227
    %v2302 = vunpack.c.l.b16 %v2228
    %v2303 = vunpack.c.l.b16 %v2229
    %v2304 = vunpack.c.l.b16 %v2230
    %v2305 = vunpack.c.l.b16 %v2231
    %v2306 = vunpack.c.l.b16 %v2232
    %v2307 = vpack.c.b16 %v2271, %v2270
    %v2308 = vpack.c.b16 %v2273, %v2272
    %v2309 = vpack.c.b16 %v2275, %v2274
    %v2310 = vpack.c.b16 %v2277, %v2276
    %v2311 = vpack.c.b16 %v2279, %v2278
    %v2312 = vpack.c.b16 %v2281, %v2280
    %v2313 = vpack.c.b16 %v2283, %v2282
    %v2314 = vpack.c.b16 %v2285, %v2284
    %v2315 = vpack.c.b16 %v2287, %v2286
    %v2316 = vpack.c.b16 %v2289, %v2288
    %v2317 = vpack.c.b16 %v2291, %v2290
    %v2318 = vpack.c.b16 %v2293, %v2292
    %v2319 = vpack.c.b16 %v2295, %v2294
    %v2320 = vpack.c.b16 %v2297, %v2296
    %v2321 = vpack.c.b16 %v2299, %v2298
    %v2322 = vpack.c.b16 %v2301, %v2300
    %v2323 = vpack.c.b16 %v2303, %v2302
    %v2324 = vpack.c.b16 %v2305, %v2304
    %v2325 = vpack.c.b16 %v2306, %v2306
    %v2345 = vand.u32 %v2325, %v1670
    %2347 = vmatprep.subr.bf16.mxu0 0
    %2348 = vmatpush1.bf16.msra.mxu0 %v2314
    %2349 = vmatprep.subr.bf16.mxu0 0
    %2350 = vmatpush1.bf16.msra.mxu0 %v2313
    %2351 = vmatprep.subr.bf16.mxu0 0
    %2352 = vmatpush1.bf16.msra.mxu0 %v2312
    %2353 = vmatprep.subr.bf16.mxu0 0
    %2354 = vmatpush1.bf16.msra.mxu0 %v2311
    %2355 = vmatprep.subr.bf16.mxu0 0
    %2356 = vmatpush1.bf16.msra.mxu0 %v2310
    %2357 = vmatprep.subr.bf16.mxu0 0
    %2358 = vmatpush1.bf16.msra.mxu0 %v2309
    %2359 = vmatprep.subr.bf16.mxu0 0
    %2360 = vmatpush1.bf16.msra.mxu0 %v2308
    %2361 = vmatprep.subr.bf16.mxu0 0
    %2362 = vmatpush1.bf16.msra.mxu0 %v2307
    %2363 = vmatprep.subr.bf16.mxu0 0
    %2364 = vmatpush2.bf16.msra.mxu0 %v2322
    %2365 = vmatprep.subr.bf16.mxu0 0
    %2366 = vmatpush2.bf16.msra.mxu0 %v2321
    %2367 = vmatprep.subr.bf16.mxu0 0
    %2368 = vmatpush2.bf16.msra.mxu0 %v2320
    %2369 = vmatprep.subr.bf16.mxu0 0
    %2370 = vmatpush2.bf16.msra.mxu0 %v2319
    %2371 = vmatprep.subr.bf16.mxu0 0
    %2372 = vmatpush2.bf16.msra.mxu0 %v2318
    %2373 = vmatprep.subr.bf16.mxu0 0
    %2374 = vmatpush2.bf16.msra.mxu0 %v2317
    %2375 = vmatprep.subr.bf16.mxu0 0
    %2376 = vmatpush2.bf16.msra.mxu0 %v2316
    %2377 = vmatprep.subr.bf16.mxu0 0
    %2378 = vmatpush2.bf16.msra.mxu0 %v2315
    %2379 = vmatprep.mubr.bf16.mxu0 %v1505
    %2380 = vmatmul.mubr.bf16.gmra.mxu0 %v1504
    %v2381 = vpop.f32.mrf.mxu0
    %v2382 = vadd.f32 0.0, %v2381
    %v2383 = vpop.f32.mrf.mxu0
    %v2384 = vpop.f32.mrf.mxu0
    %v2385 = vadd.f32 0.0, %v2384
    %v2386 = vpop.f32.mrf.mxu0
    %2387 = vdwg.mxu0
    %2388 = vmatprep.subr.bf16.mxu0 0
    %2389 = vmatpush1.bf16.msra.mxu0 0
    %2390 = vmatprep.subr.bf16.mxu0 0
    %2391 = vmatpush1.bf16.msra.mxu0 0
    %2392 = vmatprep.subr.bf16.mxu0 0
    %2393 = vmatpush1.bf16.msra.mxu0 0
    %2394 = vmatprep.subr.bf16.mxu0 0
    %2395 = vmatpush1.bf16.msra.mxu0 0
    %2396 = vmatprep.subr.bf16.mxu0 0
    %2397 = vmatpush1.bf16.msra.mxu0 0
    %2398 = vmatprep.subr.bf16.mxu0 0
    %2399 = vmatpush1.bf16.msra.mxu0 %v2345
    %2400 = vmatprep.subr.bf16.mxu0 0
    %2401 = vmatpush1.bf16.msra.mxu0 %v2324
    %2402 = vmatprep.subr.bf16.mxu0 0
    %2403 = vmatpush1.bf16.msra.mxu0 %v2323
    %2404 = vmatprep.subr.bf16.mxu0 0
    %2405 = vmatpush2.bf16.msra.mxu0 0
    %2406 = vmatprep.subr.bf16.mxu0 0
    %2407 = vmatpush2.bf16.msra.mxu0 0
    %2408 = vmatprep.subr.bf16.mxu0 0
    %2409 = vmatpush2.bf16.msra.mxu0 0
    %2410 = vmatprep.subr.bf16.mxu0 0
    %2411 = vmatpush2.bf16.msra.mxu0 0
    %2412 = vmatprep.subr.bf16.mxu0 0
    %2413 = vmatpush2.bf16.msra.mxu0 0
    %2414 = vmatprep.subr.bf16.mxu0 0
    %2415 = vmatpush2.bf16.msra.mxu0 0
    %2416 = vmatprep.subr.bf16.mxu0 0
    %2417 = vmatpush2.bf16.msra.mxu0 0
    %2418 = vmatprep.subr.bf16.mxu0 0
    %2419 = vmatpush2.bf16.msra.mxu0 0
    %2420 = vmatprep.mubr.bf16.mxu0 0
    %2421 = vmatmul.mubr.bf16.gmra.mxu0 %v1666
    %v2422 = vpop.f32.mrf.mxu0
    %v2423 = vadd.f32 %v2382, %v2422
    %v2424 = vpop.f32.mrf.mxu0
    %v2425 = vpop.f32.mrf.mxu0
    %v2426 = vadd.f32 %v2385, %v2425
    %v2427 = vpop.f32.mrf.mxu0
    %2428 = vdwg.mxu0
    %v2430 = vsel %vm1995, %v2191, 0
    %v2433 = vsel %vm1995, %v2192, 0
    %v2436 = vsel %vm1995, %v2193, 0
    %v2439 = vsel %vm1995, %v2194, 0
    %2441 = vmatprep.subr.mxu0 0.0
    %2442 = vmatpush1.msra.mxu0 0.0
    %2443 = vmatprep.subr.mxu0 0.0
    %2444 = vmatpush1.msra.mxu0 0.0
    %2445 = vmatprep.subr.mxu0 0.0
    %2446 = vmatpush1.msra.mxu0 0.0
    %2447 = vmatprep.subr.mxu0 0.0
    %2448 = vmatpush1.msra.mxu0 0.0
    %2449 = vmatprep.subr.mxu0 0.0
    %2450 = vmatpush1.msra.mxu0 0.0
    %2451 = vmatprep.subr.mxu0 0.0
    %2452 = vmatpush1.msra.mxu0 0.0
    %2453 = vmatprep.subr.mxu0 0.0
    %2454 = vmatpush1.msra.mxu0 0.0
    %2455 = vmatprep.subr.mxu0 0.0
    %2456 = vmatpush1.msra.mxu0 0.0
    %2457 = vmatprep.subr.mxu0 0.0
    %2458 = vmatpush1.msra.mxu0 0.0
    %2459 = vmatprep.subr.mxu0 0.0
    %2460 = vmatpush1.msra.mxu0 0.0
    %2461 = vmatprep.subr.mxu0 0.0
    %2462 = vmatpush1.msra.mxu0 0.0
    %2463 = vmatprep.subr.mxu0 0.0
    %2464 = vmatpush1.msra.mxu0 0.0
    %2465 = vmatprep.subr.mxu0 0.0
    %2466 = vmatpush1.msra.mxu0 0.0
    %2467 = vmatprep.subr.mxu0 0.0
    %2468 = vmatpush1.msra.mxu0 0.0
    %2469 = vmatprep.subr.mxu0 0.0
    %2470 = vmatpush1.msra.mxu0 %v2426
    %2471 = vmatprep.subr.mxu0 0.0
    %2472 = vmatpush1.msra.mxu0 %v2423
    %2473 = vmatprep.subr.mxu0 0.0
    %2474 = vmatpush2.msra.mxu0 0.0
    %2475 = vmatprep.subr.mxu0 0.0
    %2476 = vmatpush2.msra.mxu0 0.0
    %2477 = vmatprep.subr.mxu0 0.0
    %2478 = vmatpush2.msra.mxu0 0.0
    %2479 = vmatprep.subr.mxu0 0.0
    %2480 = vmatpush2.msra.mxu0 0.0
    %2481 = vmatprep.subr.mxu0 0.0
    %2482 = vmatpush2.msra.mxu0 0.0
    %2483 = vmatprep.subr.mxu0 0.0
    %2484 = vmatpush2.msra.mxu0 0.0
    %2485 = vmatprep.subr.mxu0 0.0
    %2486 = vmatpush2.msra.mxu0 0.0
    %2487 = vmatprep.subr.mxu0 0.0
    %2488 = vmatpush2.msra.mxu0 0.0
    %2489 = vmatprep.subr.mxu0 0.0
    %2490 = vmatpush2.msra.mxu0 0.0
    %2491 = vmatprep.subr.mxu0 0.0
    %2492 = vmatpush2.msra.mxu0 0.0
    %2493 = vmatprep.subr.mxu0 0.0
    %2494 = vmatpush2.msra.mxu0 0.0
    %2495 = vmatprep.subr.mxu0 0.0
    %2496 = vmatpush2.msra.mxu0 0.0
    %2497 = vmatprep.subr.mxu0 0.0
    %2498 = vmatpush2.msra.mxu0 0.0
    %2499 = vmatprep.subr.mxu0 0.0
    %2500 = vmatpush2.msra.mxu0 0.0
    %2501 = vmatprep.subr.mxu0 0.0
    %2502 = vmatpush2.msra.mxu0 0.0
    %2503 = vmatprep.subr.mxu0 0.0
    %2504 = vmatpush2.msra.mxu0 0.0
    %2505 = vmatprep.mubr.f32.mxu0 0.0
    %2506 = vmatmul.mubr.f32.gmra.mxu0 %v2430
    %v2507 = vpop.f32.mrf.mxu0
    %v2508 = vadd.f32 0.0, %v2507
    %v2509 = vpop.f32.mrf.mxu0
    %2510 = vmatprep.mubr.f32.mxu0 0.0
    %2511 = vmatmul.mubr.f32.gmra.mxu0 %v2433
    %v2512 = vpop.f32.mrf.mxu0
    %v2513 = vadd.f32 0.0, %v2512
    %v2514 = vpop.f32.mrf.mxu0
    %2515 = vmatprep.mubr.f32.mxu0 0.0
    %2516 = vmatmul.mubr.f32.gmra.mxu0 %v2436
    %v2517 = vpop.f32.mrf.mxu0
    %v2518 = vadd.f32 0.0, %v2517
    %v2519 = vpop.f32.mrf.mxu0
    %2520 = vmatprep.mubr.f32.mxu0 0.0
    %2521 = vmatmul.mubr.f32.gmra.mxu0 %v2439
    %v2522 = vpop.f32.mrf.mxu0
    %v2523 = vadd.f32 0.0, %v2522
    %v2524 = vpop.f32.mrf.mxu0
    %2525 = vdwg.mxu0
    %v2526 = vadd.f32 %v2172, %v2508
    %v2527 = vadd.f32 %v2177, %v2513
    %v2528 = vadd.f32 %v2182, %v2518
    %v2529 = vadd.f32 %v2187, %v2523
    %s2530 = scalar_lea.vmem %s8, 96
    %v2531 = vld [vmem:[%s2530] sm:$0xff]
    %v2532 = vld [vmem:[%s2530 + $0x8] sm:$0xff]
    %v2533 = vld [vmem:[%s2530 + $0x10] sm:$0xff]
    %v2534 = vld [vmem:[%s2530 + $0x18] sm:$0xff]
    %s2535 = scalar_lea.vmem [#allocation2], 444
    %v2536 = vld [vmem:[%s2535] sm:$0xf]
    %v2537 = vld [vmem:[%s2535 + $0x4] sm:$0xf]
    %v2538 = vld [vmem:[%s2535 + $0x8] sm:$0xf]
    %v2539 = vld [vmem:[%s2535 + $0xc] sm:$0xf]
    %v2540 = vld [vmem:[%s2535 + $0x10] sm:$0xf]
    %v2541 = vld [vmem:[%s2535 + $0x14] sm:$0xf]
    %v2542 = vld [vmem:[%s2535 + $0x18] sm:$0xf]
    %v2543 = vld [vmem:[%s2535 + $0x1c] sm:$0xf]
    %v2544 = vld [vmem:[%s2535 + $0x20] sm:$0xf]
    %v2545 = vld [vmem:[%s2535 + $0x24] sm:$0xf]
    %v2546 = vld [vmem:[%s2535 + $0x28] sm:$0xf]
    %v2547 = vld [vmem:[%s2535 + $0x2c] sm:$0xf]
    %v2548 = vld [vmem:[%s2535 + $0x30] sm:$0xf]
    %v2549 = vld [vmem:[%s2535 + $0x34] sm:$0xf]
    %v2550 = vld [vmem:[%s2535 + $0x38] sm:$0xf]
    %v2551 = vld [vmem:[%s2535 + $0x3c] sm:$0xf]
    %v2552 = vld [vmem:[%s2535 + $0x40] sm:$0xf]
    %v2553 = vld [vmem:[%s2535 + $0x44] sm:$0xf]
    %v2554 = vld [vmem:[%s2535 + $0x48] sm:$0xf]
    %v2555 = vld [vmem:[%s2535 + $0x4c] sm:$0xf]
    %v2556 = vld [vmem:[%s2535 + $0x50] sm:$0xf]
    %v2557 = vld [vmem:[%s2535 + $0x54] sm:$0xf]
    %v2558 = vld [vmem:[%s2535 + $0x58] sm:$0xf]
    %v2559 = vld [vmem:[%s2535 + $0x5c] sm:$0xf]
    %v2560 = vld [vmem:[%s2535 + $0x60] sm:$0xf]
    %v2561 = vld [vmem:[%s2535 + $0x64] sm:$0xf]
    %v2562 = vld [vmem:[%s2535 + $0x68] sm:$0xf]
    %v2563 = vld [vmem:[%s2535 + $0x6c] sm:$0xf]
    %v2564 = vld [vmem:[%s2535 + $0x70] sm:$0xf]
    %v2565 = vld [vmem:[%s2535 + $0x74] sm:$0xf]
    %v2566 = vld [vmem:[%s2535 + $0x78] sm:$0xf]
    %v2567 = vld [vmem:[%s2535 + $0x7c] sm:$0xf]
    %v2568 = vld [vmem:[%s2535 + $0x80] sm:$0xf]
    %v2569 = vld [vmem:[%s2535 + $0x84] sm:$0xf]
    %v2570 = vld [vmem:[%s2535 + $0x88] sm:$0xf]
    %v2571 = vld [vmem:[%s2535 + $0x8c] sm:$0xf]
    %v2572 = vld [vmem:[%s2535 + $0x90] sm:$0x1]
    %v2610 = vunpack.c.l.b16 %v2536
    %v2611 = vunpack.c.l.b16 %v2537
    %v2612 = vunpack.c.l.b16 %v2538
    %v2613 = vunpack.c.l.b16 %v2539
    %v2614 = vunpack.c.l.b16 %v2540
    %v2615 = vunpack.c.l.b16 %v2541
    %v2616 = vunpack.c.l.b16 %v2542
    %v2617 = vunpack.c.l.b16 %v2543
    %v2618 = vunpack.c.l.b16 %v2544
    %v2619 = vunpack.c.l.b16 %v2545
    %v2620 = vunpack.c.l.b16 %v2546
    %v2621 = vunpack.c.l.b16 %v2547
    %v2622 = vunpack.c.l.b16 %v2548
    %v2623 = vunpack.c.l.b16 %v2549
    %v2624 = vunpack.c.l.b16 %v2550
    %v2625 = vunpack.c.l.b16 %v2551
    %v2626 = vunpack.c.l.b16 %v2552
    %v2627 = vunpack.c.l.b16 %v2553
    %v2628 = vunpack.c.l.b16 %v2554
    %v2629 = vunpack.c.l.b16 %v2555
    %v2630 = vunpack.c.l.b16 %v2556
    %v2631 = vunpack.c.l.b16 %v2557
    %v2632 = vunpack.c.l.b16 %v2558
    %v2633 = vunpack.c.l.b16 %v2559
    %v2634 = vunpack.c.l.b16 %v2560
    %v2635 = vunpack.c.l.b16 %v2561
    %v2636 = vunpack.c.l.b16 %v2562
    %v2637 = vunpack.c.l.b16 %v2563
    %v2638 = vunpack.c.l.b16 %v2564
    %v2639 = vunpack.c.l.b16 %v2565
    %v2640 = vunpack.c.l.b16 %v2566
    %v2641 = vunpack.c.l.b16 %v2567
    %v2642 = vunpack.c.l.b16 %v2568
    %v2643 = vunpack.c.l.b16 %v2569
    %v2644 = vunpack.c.l.b16 %v2570
    %v2645 = vunpack.c.l.b16 %v2571
    %v2646 = vunpack.c.l.b16 %v2572
    %v2647 = vpack.c.b16 %v2611, %v2610
    %v2648 = vpack.c.b16 %v2613, %v2612
    %v2649 = vpack.c.b16 %v2615, %v2614
    %v2650 = vpack.c.b16 %v2617, %v2616
    %v2651 = vpack.c.b16 %v2619, %v2618
    %v2652 = vpack.c.b16 %v2621, %v2620
    %v2653 = vpack.c.b16 %v2623, %v2622
    %v2654 = vpack.c.b16 %v2625, %v2624
    %v2655 = vpack.c.b16 %v2627, %v2626
    %v2656 = vpack.c.b16 %v2629, %v2628
    %v2657 = vpack.c.b16 %v2631, %v2630
    %v2658 = vpack.c.b16 %v2633, %v2632
    %v2659 = vpack.c.b16 %v2635, %v2634
    %v2660 = vpack.c.b16 %v2637, %v2636
    %v2661 = vpack.c.b16 %v2639, %v2638
    %v2662 = vpack.c.b16 %v2641, %v2640
    %v2663 = vpack.c.b16 %v2643, %v2642
    %v2664 = vpack.c.b16 %v2645, %v2644
    %v2665 = vpack.c.b16 %v2646, %v2646
    %v2685 = vand.u32 %v2665, %v1670
    %2687 = vmatprep.subr.bf16.mxu0 0
    %2688 = vmatpush1.bf16.msra.mxu0 %v2654
    %2689 = vmatprep.subr.bf16.mxu0 0
    %2690 = vmatpush1.bf16.msra.mxu0 %v2653
    %2691 = vmatprep.subr.bf16.mxu0 0
    %2692 = vmatpush1.bf16.msra.mxu0 %v2652
    %2693 = vmatprep.subr.bf16.mxu0 0
    %2694 = vmatpush1.bf16.msra.mxu0 %v2651
    %2695 = vmatprep.subr.bf16.mxu0 0
    %2696 = vmatpush1.bf16.msra.mxu0 %v2650
    %2697 = vmatprep.subr.bf16.mxu0 0
    %2698 = vmatpush1.bf16.msra.mxu0 %v2649
    %2699 = vmatprep.subr.bf16.mxu0 0
    %2700 = vmatpush1.bf16.msra.mxu0 %v2648
    %2701 = vmatprep.subr.bf16.mxu0 0
    %2702 = vmatpush1.bf16.msra.mxu0 %v2647
    %2703 = vmatprep.subr.bf16.mxu0 0
    %2704 = vmatpush2.bf16.msra.mxu0 %v2662
    %2705 = vmatprep.subr.bf16.mxu0 0
    %2706 = vmatpush2.bf16.msra.mxu0 %v2661
    %2707 = vmatprep.subr.bf16.mxu0 0
    %2708 = vmatpush2.bf16.msra.mxu0 %v2660
    %2709 = vmatprep.subr.bf16.mxu0 0
    %2710 = vmatpush2.bf16.msra.mxu0 %v2659
    %2711 = vmatprep.subr.bf16.mxu0 0
    %2712 = vmatpush2.bf16.msra.mxu0 %v2658
    %2713 = vmatprep.subr.bf16.mxu0 0
    %2714 = vmatpush2.bf16.msra.mxu0 %v2657
    %2715 = vmatprep.subr.bf16.mxu0 0
    %2716 = vmatpush2.bf16.msra.mxu0 %v2656
    %2717 = vmatprep.subr.bf16.mxu0 0
    %2718 = vmatpush2.bf16.msra.mxu0 %v2655
    %2719 = vmatprep.mubr.bf16.mxu0 %v1505
    %2720 = vmatmul.mubr.bf16.gmra.mxu0 %v1504
    %v2721 = vpop.f32.mrf.mxu0
    %v2722 = vadd.f32 0.0, %v2721
    %v2723 = vpop.f32.mrf.mxu0
    %v2724 = vpop.f32.mrf.mxu0
    %v2725 = vadd.f32 0.0, %v2724
    %v2726 = vpop.f32.mrf.mxu0
    %2727 = vdwg.mxu0
    %2728 = vmatprep.subr.bf16.mxu0 0
    %2729 = vmatpush1.bf16.msra.mxu0 0
    %2730 = vmatprep.subr.bf16.mxu0 0
    %2731 = vmatpush1.bf16.msra.mxu0 0
    %2732 = vmatprep.subr.bf16.mxu0 0
    %2733 = vmatpush1.bf16.msra.mxu0 0
    %2734 = vmatprep.subr.bf16.mxu0 0
    %2735 = vmatpush1.bf16.msra.mxu0 0
    %2736 = vmatprep.subr.bf16.mxu0 0
    %2737 = vmatpush1.bf16.msra.mxu0 0
    %2738 = vmatprep.subr.bf16.mxu0 0
    %2739 = vmatpush1.bf16.msra.mxu0 %v2685
    %2740 = vmatprep.subr.bf16.mxu0 0
    %2741 = vmatpush1.bf16.msra.mxu0 %v2664
    %2742 = vmatprep.subr.bf16.mxu0 0
    %2743 = vmatpush1.bf16.msra.mxu0 %v2663
    %2744 = vmatprep.subr.bf16.mxu0 0
    %2745 = vmatpush2.bf16.msra.mxu0 0
    %2746 = vmatprep.subr.bf16.mxu0 0
    %2747 = vmatpush2.bf16.msra.mxu0 0
    %2748 = vmatprep.subr.bf16.mxu0 0
    %2749 = vmatpush2.bf16.msra.mxu0 0
    %2750 = vmatprep.subr.bf16.mxu0 0
    %2751 = vmatpush2.bf16.msra.mxu0 0
    %2752 = vmatprep.subr.bf16.mxu0 0
    %2753 = vmatpush2.bf16.msra.mxu0 0
    %2754 = vmatprep.subr.bf16.mxu0 0
    %2755 = vmatpush2.bf16.msra.mxu0 0
    %2756 = vmatprep.subr.bf16.mxu0 0
    %2757 = vmatpush2.bf16.msra.mxu0 0
    %2758 = vmatprep.subr.bf16.mxu0 0
    %2759 = vmatpush2.bf16.msra.mxu0 0
    %2760 = vmatprep.mubr.bf16.mxu0 0
    %2761 = vmatmul.mubr.bf16.gmra.mxu0 %v1666
    %v2762 = vpop.f32.mrf.mxu0
    %v2763 = vadd.f32 %v2722, %v2762
    %v2764 = vpop.f32.mrf.mxu0
    %v2765 = vpop.f32.mrf.mxu0
    %v2766 = vadd.f32 %v2725, %v2765
    %v2767 = vpop.f32.mrf.mxu0
    %2768 = vdwg.mxu0
    %v2770 = vsel %vm1995, %v2531, 0
    %v2773 = vsel %vm1995, %v2532, 0
    %v2776 = vsel %vm1995, %v2533, 0
    %v2779 = vsel %vm1995, %v2534, 0
    %2781 = vmatprep.subr.mxu0 0.0
    %2782 = vmatpush1.msra.mxu0 0.0
    %2783 = vmatprep.subr.mxu0 0.0
    %2784 = vmatpush1.msra.mxu0 0.0
    %2785 = vmatprep.subr.mxu0 0.0
    %2786 = vmatpush1.msra.mxu0 0.0
    %2787 = vmatprep.subr.mxu0 0.0
    %2788 = vmatpush1.msra.mxu0 0.0
    %2789 = vmatprep.subr.mxu0 0.0
    %2790 = vmatpush1.msra.mxu0 0.0
    %2791 = vmatprep.subr.mxu0 0.0
    %2792 = vmatpush1.msra.mxu0 0.0
    %2793 = vmatprep.subr.mxu0 0.0
    %2794 = vmatpush1.msra.mxu0 0.0
    %2795 = vmatprep.subr.mxu0 0.0
    %2796 = vmatpush1.msra.mxu0 0.0
    %2797 = vmatprep.subr.mxu0 0.0
    %2798 = vmatpush1.msra.mxu0 0.0
    %2799 = vmatprep.subr.mxu0 0.0
    %2800 = vmatpush1.msra.mxu0 0.0
    %2801 = vmatprep.subr.mxu0 0.0
    %2802 = vmatpush1.msra.mxu0 0.0
    %2803 = vmatprep.subr.mxu0 0.0
    %2804 = vmatpush1.msra.mxu0 0.0
    %2805 = vmatprep.subr.mxu0 0.0
    %2806 = vmatpush1.msra.mxu0 0.0
    %2807 = vmatprep.subr.mxu0 0.0
    %2808 = vmatpush1.msra.mxu0 0.0
    %2809 = vmatprep.subr.mxu0 0.0
    %2810 = vmatpush1.msra.mxu0 %v2766
    %2811 = vmatprep.subr.mxu0 0.0
    %2812 = vmatpush1.msra.mxu0 %v2763
    %2813 = vmatprep.subr.mxu0 0.0
    %2814 = vmatpush2.msra.mxu0 0.0
    %2815 = vmatprep.subr.mxu0 0.0
    %2816 = vmatpush2.msra.mxu0 0.0
    %2817 = vmatprep.subr.mxu0 0.0
    %2818 = vmatpush2.msra.mxu0 0.0
    %2819 = vmatprep.subr.mxu0 0.0
    %2820 = vmatpush2.msra.mxu0 0.0
    %2821 = vmatprep.subr.mxu0 0.0
    %2822 = vmatpush2.msra.mxu0 0.0
    %2823 = vmatprep.subr.mxu0 0.0
    %2824 = vmatpush2.msra.mxu0 0.0
    %2825 = vmatprep.subr.mxu0 0.0
    %2826 = vmatpush2.msra.mxu0 0.0
    %2827 = vmatprep.subr.mxu0 0.0
    %2828 = vmatpush2.msra.mxu0 0.0
    %2829 = vmatprep.subr.mxu0 0.0
    %2830 = vmatpush2.msra.mxu0 0.0
    %2831 = vmatprep.subr.mxu0 0.0
    %2832 = vmatpush2.msra.mxu0 0.0
    %2833 = vmatprep.subr.mxu0 0.0
    %2834 = vmatpush2.msra.mxu0 0.0
    %2835 = vmatprep.subr.mxu0 0.0
    %2836 = vmatpush2.msra.mxu0 0.0
    %2837 = vmatprep.subr.mxu0 0.0
    %2838 = vmatpush2.msra.mxu0 0.0
    %2839 = vmatprep.subr.mxu0 0.0
    %2840 = vmatpush2.msra.mxu0 0.0
    %2841 = vmatprep.subr.mxu0 0.0
    %2842 = vmatpush2.msra.mxu0 0.0
    %2843 = vmatprep.subr.mxu0 0.0
    %2844 = vmatpush2.msra.mxu0 0.0
    %2845 = vmatprep.mubr.f32.mxu0 0.0
    %2846 = vmatmul.mubr.f32.gmra.mxu0 %v2770
    %v2847 = vpop.f32.mrf.mxu0
    %v2848 = vadd.f32 0.0, %v2847
    %v2849 = vpop.f32.mrf.mxu0
    %2850 = vmatprep.mubr.f32.mxu0 0.0
    %2851 = vmatmul.mubr.f32.gmra.mxu0 %v2773
    %v2852 = vpop.f32.mrf.mxu0
    %v2853 = vadd.f32 0.0, %v2852
    %v2854 = vpop.f32.mrf.mxu0
    %2855 = vmatprep.mubr.f32.mxu0 0.0
    %2856 = vmatmul.mubr.f32.gmra.mxu0 %v2776
    %v2857 = vpop.f32.mrf.mxu0
    %v2858 = vadd.f32 0.0, %v2857
    %v2859 = vpop.f32.mrf.mxu0
    %2860 = vmatprep.mubr.f32.mxu0 0.0
    %2861 = vmatmul.mubr.f32.gmra.mxu0 %v2779
    %v2862 = vpop.f32.mrf.mxu0
    %v2863 = vadd.f32 0.0, %v2862
    %v2864 = vpop.f32.mrf.mxu0
    %2865 = vdwg.mxu0
    %v2866 = vadd.f32 %v2526, %v2848
    %v2867 = vadd.f32 %v2527, %v2853
    %v2868 = vadd.f32 %v2528, %v2858
    %v2869 = vadd.f32 %v2529, %v2863
    %s2870 = scalar_lea.vmem %s8, 128
    %v2871 = vld [vmem:[%s2870] sm:$0xff]
    %v2872 = vld [vmem:[%s2870 + $0x8] sm:$0xff]
    %v2873 = vld [vmem:[%s2870 + $0x10] sm:$0xff]
    %v2874 = vld [vmem:[%s2870 + $0x18] sm:$0xff]
    %s2875 = scalar_lea.vmem [#allocation2], 592
    %v2876 = vld [vmem:[%s2875] sm:$0xf]
    %v2877 = vld [vmem:[%s2875 + $0x4] sm:$0xf]
    %v2878 = vld [vmem:[%s2875 + $0x8] sm:$0xf]
    %v2879 = vld [vmem:[%s2875 + $0xc] sm:$0xf]
    %v2880 = vld [vmem:[%s2875 + $0x10] sm:$0xf]
    %v2881 = vld [vmem:[%s2875 + $0x14] sm:$0xf]
    %v2882 = vld [vmem:[%s2875 + $0x18] sm:$0xf]
    %v2883 = vld [vmem:[%s2875 + $0x1c] sm:$0xf]
    %v2884 = vld [vmem:[%s2875 + $0x20] sm:$0xf]
    %v2885 = vld [vmem:[%s2875 + $0x24] sm:$0xf]
    %v2886 = vld [vmem:[%s2875 + $0x28] sm:$0xf]
    %v2887 = vld [vmem:[%s2875 + $0x2c] sm:$0xf]
    %v2888 = vld [vmem:[%s2875 + $0x30] sm:$0xf]
    %v2889 = vld [vmem:[%s2875 + $0x34] sm:$0xf]
    %v2890 = vld [vmem:[%s2875 + $0x38] sm:$0xf]
    %v2891 = vld [vmem:[%s2875 + $0x3c] sm:$0xf]
    %v2892 = vld [vmem:[%s2875 + $0x40] sm:$0xf]
    %v2893 = vld [vmem:[%s2875 + $0x44] sm:$0xf]
    %v2894 = vld [vmem:[%s2875 + $0x48] sm:$0xf]
    %v2895 = vld [vmem:[%s2875 + $0x4c] sm:$0xf]
    %v2896 = vld [vmem:[%s2875 + $0x50] sm:$0xf]
    %v2897 = vld [vmem:[%s2875 + $0x54] sm:$0xf]
    %v2898 = vld [vmem:[%s2875 + $0x58] sm:$0xf]
    %v2899 = vld [vmem:[%s2875 + $0x5c] sm:$0xf]
    %v2900 = vld [vmem:[%s2875 + $0x60] sm:$0xf]
    %v2901 = vld [vmem:[%s2875 + $0x64] sm:$0xf]
    %v2902 = vld [vmem:[%s2875 + $0x68] sm:$0xf]
    %v2903 = vld [vmem:[%s2875 + $0x6c] sm:$0xf]
    %v2904 = vld [vmem:[%s2875 + $0x70] sm:$0xf]
    %v2905 = vld [vmem:[%s2875 + $0x74] sm:$0xf]
    %v2906 = vld [vmem:[%s2875 + $0x78] sm:$0xf]
    %v2907 = vld [vmem:[%s2875 + $0x7c] sm:$0xf]
    %v2908 = vld [vmem:[%s2875 + $0x80] sm:$0xf]
    %v2909 = vld [vmem:[%s2875 + $0x84] sm:$0xf]
    %v2910 = vld [vmem:[%s2875 + $0x88] sm:$0xf]
    %v2911 = vld [vmem:[%s2875 + $0x8c] sm:$0xf]
    %v2912 = vld [vmem:[%s2875 + $0x90] sm:$0x1]
    %v2950 = vunpack.c.l.b16 %v2876
    %v2951 = vunpack.c.l.b16 %v2877
    %v2952 = vunpack.c.l.b16 %v2878
    %v2953 = vunpack.c.l.b16 %v2879
    %v2954 = vunpack.c.l.b16 %v2880
    %v2955 = vunpack.c.l.b16 %v2881
    %v2956 = vunpack.c.l.b16 %v2882
    %v2957 = vunpack.c.l.b16 %v2883
    %v2958 = vunpack.c.l.b16 %v2884
    %v2959 = vunpack.c.l.b16 %v2885
    %v2960 = vunpack.c.l.b16 %v2886
    %v2961 = vunpack.c.l.b16 %v2887
    %v2962 = vunpack.c.l.b16 %v2888
    %v2963 = vunpack.c.l.b16 %v2889
    %v2964 = vunpack.c.l.b16 %v2890
    %v2965 = vunpack.c.l.b16 %v2891
    %v2966 = vunpack.c.l.b16 %v2892
    %v2967 = vunpack.c.l.b16 %v2893
    %v2968 = vunpack.c.l.b16 %v2894
    %v2969 = vunpack.c.l.b16 %v2895
    %v2970 = vunpack.c.l.b16 %v2896
    %v2971 = vunpack.c.l.b16 %v2897
    %v2972 = vunpack.c.l.b16 %v2898
    %v2973 = vunpack.c.l.b16 %v2899
    %v2974 = vunpack.c.l.b16 %v2900
    %v2975 = vunpack.c.l.b16 %v2901
    %v2976 = vunpack.c.l.b16 %v2902
    %v2977 = vunpack.c.l.b16 %v2903
    %v2978 = vunpack.c.l.b16 %v2904
    %v2979 = vunpack.c.l.b16 %v2905
    %v2980 = vunpack.c.l.b16 %v2906
    %v2981 = vunpack.c.l.b16 %v2907
    %v2982 = vunpack.c.l.b16 %v2908
    %v2983 = vunpack.c.l.b16 %v2909
    %v2984 = vunpack.c.l.b16 %v2910
    %v2985 = vunpack.c.l.b16 %v2911
    %v2986 = vunpack.c.l.b16 %v2912
    %v2987 = vpack.c.b16 %v2951, %v2950
    %v2988 = vpack.c.b16 %v2953, %v2952
    %v2989 = vpack.c.b16 %v2955, %v2954
    %v2990 = vpack.c.b16 %v2957, %v2956
    %v2991 = vpack.c.b16 %v2959, %v2958
    %v2992 = vpack.c.b16 %v2961, %v2960
    %v2993 = vpack.c.b16 %v2963, %v2962
    %v2994 = vpack.c.b16 %v2965, %v2964
    %v2995 = vpack.c.b16 %v2967, %v2966
    %v2996 = vpack.c.b16 %v2969, %v2968
    %v2997 = vpack.c.b16 %v2971, %v2970
    %v2998 = vpack.c.b16 %v2973, %v2972
    %v2999 = vpack.c.b16 %v2975, %v2974
    %v3000 = vpack.c.b16 %v2977, %v2976
    %v3001 = vpack.c.b16 %v2979, %v2978
    %v3002 = vpack.c.b16 %v2981, %v2980
    %v3003 = vpack.c.b16 %v2983, %v2982
    %v3004 = vpack.c.b16 %v2985, %v2984
    %v3005 = vpack.c.b16 %v2986, %v2986
    %v3025 = vand.u32 %v3005, %v1670
    %3027 = vmatprep.subr.bf16.mxu0 0
    %3028 = vmatpush1.bf16.msra.mxu0 %v2994
    %3029 = vmatprep.subr.bf16.mxu0 0
    %3030 = vmatpush1.bf16.msra.mxu0 %v2993
    %3031 = vmatprep.subr.bf16.mxu0 0
    %3032 = vmatpush1.bf16.msra.mxu0 %v2992
    %3033 = vmatprep.subr.bf16.mxu0 0
    %3034 = vmatpush1.bf16.msra.mxu0 %v2991
    %3035 = vmatprep.subr.bf16.mxu0 0
    %3036 = vmatpush1.bf16.msra.mxu0 %v2990
    %3037 = vmatprep.subr.bf16.mxu0 0
    %3038 = vmatpush1.bf16.msra.mxu0 %v2989
    %3039 = vmatprep.subr.bf16.mxu0 0
    %3040 = vmatpush1.bf16.msra.mxu0 %v2988
    %3041 = vmatprep.subr.bf16.mxu0 0
    %3042 = vmatpush1.bf16.msra.mxu0 %v2987
    %3043 = vmatprep.subr.bf16.mxu0 0
    %3044 = vmatpush2.bf16.msra.mxu0 %v3002
    %3045 = vmatprep.subr.bf16.mxu0 0
    %3046 = vmatpush2.bf16.msra.mxu0 %v3001
    %3047 = vmatprep.subr.bf16.mxu0 0
    %3048 = vmatpush2.bf16.msra.mxu0 %v3000
    %3049 = vmatprep.subr.bf16.mxu0 0
    %3050 = vmatpush2.bf16.msra.mxu0 %v2999
    %3051 = vmatprep.subr.bf16.mxu0 0
    %3052 = vmatpush2.bf16.msra.mxu0 %v2998
    %3053 = vmatprep.subr.bf16.mxu0 0
    %3054 = vmatpush2.bf16.msra.mxu0 %v2997
    %3055 = vmatprep.subr.bf16.mxu0 0
    %3056 = vmatpush2.bf16.msra.mxu0 %v2996
    %3057 = vmatprep.subr.bf16.mxu0 0
    %3058 = vmatpush2.bf16.msra.mxu0 %v2995
    %3059 = vmatprep.mubr.bf16.mxu0 %v1505
    %3060 = vmatmul.mubr.bf16.gmra.mxu0 %v1504
    %v3061 = vpop.f32.mrf.mxu0
    %v3062 = vadd.f32 0.0, %v3061
    %v3063 = vpop.f32.mrf.mxu0
    %v3064 = vpop.f32.mrf.mxu0
    %v3065 = vadd.f32 0.0, %v3064
    %v3066 = vpop.f32.mrf.mxu0
    %3067 = vdwg.mxu0
    %3068 = vmatprep.subr.bf16.mxu0 0
    %3069 = vmatpush1.bf16.msra.mxu0 0
    %3070 = vmatprep.subr.bf16.mxu0 0
    %3071 = vmatpush1.bf16.msra.mxu0 0
    %3072 = vmatprep.subr.bf16.mxu0 0
    %3073 = vmatpush1.bf16.msra.mxu0 0
    %3074 = vmatprep.subr.bf16.mxu0 0
    %3075 = vmatpush1.bf16.msra.mxu0 0
    %3076 = vmatprep.subr.bf16.mxu0 0
    %3077 = vmatpush1.bf16.msra.mxu0 0
    %3078 = vmatprep.subr.bf16.mxu0 0
    %3079 = vmatpush1.bf16.msra.mxu0 %v3025
    %3080 = vmatprep.subr.bf16.mxu0 0
    %3081 = vmatpush1.bf16.msra.mxu0 %v3004
    %3082 = vmatprep.subr.bf16.mxu0 0
    %3083 = vmatpush1.bf16.msra.mxu0 %v3003
    %3084 = vmatprep.subr.bf16.mxu0 0
    %3085 = vmatpush2.bf16.msra.mxu0 0
    %3086 = vmatprep.subr.bf16.mxu0 0
    %3087 = vmatpush2.bf16.msra.mxu0 0
    %3088 = vmatprep.subr.bf16.mxu0 0
    %3089 = vmatpush2.bf16.msra.mxu0 0
    %3090 = vmatprep.subr.bf16.mxu0 0
    %3091 = vmatpush2.bf16.msra.mxu0 0
    %3092 = vmatprep.subr.bf16.mxu0 0
    %3093 = vmatpush2.bf16.msra.mxu0 0
    %3094 = vmatprep.subr.bf16.mxu0 0
    %3095 = vmatpush2.bf16.msra.mxu0 0
    %3096 = vmatprep.subr.bf16.mxu0 0
    %3097 = vmatpush2.bf16.msra.mxu0 0
    %3098 = vmatprep.subr.bf16.mxu0 0
    %3099 = vmatpush2.bf16.msra.mxu0 0
    %3100 = vmatprep.mubr.bf16.mxu0 0
    %3101 = vmatmul.mubr.bf16.gmra.mxu0 %v1666
    %v3102 = vpop.f32.mrf.mxu0
    %v3103 = vadd.f32 %v3062, %v3102
    %v3104 = vpop.f32.mrf.mxu0
    %v3105 = vpop.f32.mrf.mxu0
    %v3106 = vadd.f32 %v3065, %v3105
    %v3107 = vpop.f32.mrf.mxu0
    %3108 = vdwg.mxu0
    %v3110 = vsel %vm1995, %v2871, 0
    %v3113 = vsel %vm1995, %v2872, 0
    %v3116 = vsel %vm1995, %v2873, 0
    %v3119 = vsel %vm1995, %v2874, 0
    %3121 = vmatprep.subr.mxu0 0.0
    %3122 = vmatpush1.msra.mxu0 0.0
    %3123 = vmatprep.subr.mxu0 0.0
    %3124 = vmatpush1.msra.mxu0 0.0
    %3125 = vmatprep.subr.mxu0 0.0
    %3126 = vmatpush1.msra.mxu0 0.0
    %3127 = vmatprep.subr.mxu0 0.0
    %3128 = vmatpush1.msra.mxu0 0.0
    %3129 = vmatprep.subr.mxu0 0.0
    %3130 = vmatpush1.msra.mxu0 0.0
    %3131 = vmatprep.subr.mxu0 0.0
    %3132 = vmatpush1.msra.mxu0 0.0
    %3133 = vmatprep.subr.mxu0 0.0
    %3134 = vmatpush1.msra.mxu0 0.0
    %3135 = vmatprep.subr.mxu0 0.0
    %3136 = vmatpush1.msra.mxu0 0.0
    %3137 = vmatprep.subr.mxu0 0.0
    %3138 = vmatpush1.msra.mxu0 0.0
    %3139 = vmatprep.subr.mxu0 0.0
    %3140 = vmatpush1.msra.mxu0 0.0
    %3141 = vmatprep.subr.mxu0 0.0
    %3142 = vmatpush1.msra.mxu0 0.0
    %3143 = vmatprep.subr.mxu0 0.0
    %3144 = vmatpush1.msra.mxu0 0.0
    %3145 = vmatprep.subr.mxu0 0.0
    %3146 = vmatpush1.msra.mxu0 0.0
    %3147 = vmatprep.subr.mxu0 0.0
    %3148 = vmatpush1.msra.mxu0 0.0
    %3149 = vmatprep.subr.mxu0 0.0
    %3150 = vmatpush1.msra.mxu0 %v3106
    %3151 = vmatprep.subr.mxu0 0.0
    %3152 = vmatpush1.msra.mxu0 %v3103
    %3153 = vmatprep.subr.mxu0 0.0
    %3154 = vmatpush2.msra.mxu0 0.0
    %3155 = vmatprep.subr.mxu0 0.0
    %3156 = vmatpush2.msra.mxu0 0.0
    %3157 = vmatprep.subr.mxu0 0.0
    %3158 = vmatpush2.msra.mxu0 0.0
    %3159 = vmatprep.subr.mxu0 0.0
    %3160 = vmatpush2.msra.mxu0 0.0
    %3161 = vmatprep.subr.mxu0 0.0
    %3162 = vmatpush2.msra.mxu0 0.0
    %3163 = vmatprep.subr.mxu0 0.0
    %3164 = vmatpush2.msra.mxu0 0.0
    %3165 = vmatprep.subr.mxu0 0.0
    %3166 = vmatpush2.msra.mxu0 0.0
    %3167 = vmatprep.subr.mxu0 0.0
    %3168 = vmatpush2.msra.mxu0 0.0
    %3169 = vmatprep.subr.mxu0 0.0
    %3170 = vmatpush2.msra.mxu0 0.0
    %3171 = vmatprep.subr.mxu0 0.0
    %3172 = vmatpush2.msra.mxu0 0.0
    %3173 = vmatprep.subr.mxu0 0.0
    %3174 = vmatpush2.msra.mxu0 0.0
    %3175 = vmatprep.subr.mxu0 0.0
    %3176 = vmatpush2.msra.mxu0 0.0
    %3177 = vmatprep.subr.mxu0 0.0
    %3178 = vmatpush2.msra.mxu0 0.0
    %3179 = vmatprep.subr.mxu0 0.0
    %3180 = vmatpush2.msra.mxu0 0.0
    %3181 = vmatprep.subr.mxu0 0.0
    %3182 = vmatpush2.msra.mxu0 0.0
    %3183 = vmatprep.subr.mxu0 0.0
    %3184 = vmatpush2.msra.mxu0 0.0
    %3185 = vmatprep.mubr.f32.mxu0 0.0
    %3186 = vmatmul.mubr.f32.gmra.mxu0 %v3110
    %v3187 = vpop.f32.mrf.mxu0
    %v3188 = vadd.f32 0.0, %v3187
    %v3189 = vpop.f32.mrf.mxu0
    %3190 = vmatprep.mubr.f32.mxu0 0.0
    %3191 = vmatmul.mubr.f32.gmra.mxu0 %v3113
    %v3192 = vpop.f32.mrf.mxu0
    %v3193 = vadd.f32 0.0, %v3192
    %v3194 = vpop.f32.mrf.mxu0
    %3195 = vmatprep.mubr.f32.mxu0 0.0
    %3196 = vmatmul.mubr.f32.gmra.mxu0 %v3116
    %v3197 = vpop.f32.mrf.mxu0
    %v3198 = vadd.f32 0.0, %v3197
    %v3199 = vpop.f32.mrf.mxu0
    %3200 = vmatprep.mubr.f32.mxu0 0.0
    %3201 = vmatmul.mubr.f32.gmra.mxu0 %v3119
    %v3202 = vpop.f32.mrf.mxu0
    %v3203 = vadd.f32 0.0, %v3202
    %v3204 = vpop.f32.mrf.mxu0
    %3205 = vdwg.mxu0
    %v3206 = vadd.f32 %v2866, %v3188
    %v3207 = vadd.f32 %v2867, %v3193
    %v3208 = vadd.f32 %v2868, %v3198
    %v3209 = vadd.f32 %v2869, %v3203
    %s3210 = scalar_lea.vmem %s8, 160
    %v3211 = vld [vmem:[%s3210] sm:$0xff]
    %v3212 = vld [vmem:[%s3210 + $0x8] sm:$0xff]
    %v3213 = vld [vmem:[%s3210 + $0x10] sm:$0xff]
    %v3214 = vld [vmem:[%s3210 + $0x18] sm:$0xff]
    %s3215 = scalar_lea.vmem [#allocation2], 740
    %v3216 = vld [vmem:[%s3215] sm:$0xf]
    %v3217 = vld [vmem:[%s3215 + $0x4] sm:$0xf]
    %v3218 = vld [vmem:[%s3215 + $0x8] sm:$0xf]
    %v3219 = vld [vmem:[%s3215 + $0xc] sm:$0xf]
    %v3220 = vld [vmem:[%s3215 + $0x10] sm:$0xf]
    %v3221 = vld [vmem:[%s3215 + $0x14] sm:$0xf]
    %v3222 = vld [vmem:[%s3215 + $0x18] sm:$0xf]
    %v3223 = vld [vmem:[%s3215 + $0x1c] sm:$0xf]
    %v3224 = vld [vmem:[%s3215 + $0x20] sm:$0xf]
    %v3225 = vld [vmem:[%s3215 + $0x24] sm:$0xf]
    %v3226 = vld [vmem:[%s3215 + $0x28] sm:$0xf]
    %v3227 = vld [vmem:[%s3215 + $0x2c] sm:$0xf]
    %v3228 = vld [vmem:[%s3215 + $0x30] sm:$0xf]
    %v3229 = vld [vmem:[%s3215 + $0x34] sm:$0xf]
    %v3230 = vld [vmem:[%s3215 + $0x38] sm:$0xf]
    %v3231 = vld [vmem:[%s3215 + $0x3c] sm:$0xf]
    %v3232 = vld [vmem:[%s3215 + $0x40] sm:$0xf]
    %v3233 = vld [vmem:[%s3215 + $0x44] sm:$0xf]
    %v3234 = vld [vmem:[%s3215 + $0x48] sm:$0xf]
    %v3235 = vld [vmem:[%s3215 + $0x4c] sm:$0xf]
    %v3236 = vld [vmem:[%s3215 + $0x50] sm:$0xf]
    %v3237 = vld [vmem:[%s3215 + $0x54] sm:$0xf]
    %v3238 = vld [vmem:[%s3215 + $0x58] sm:$0xf]
    %v3239 = vld [vmem:[%s3215 + $0x5c] sm:$0xf]
    %v3240 = vld [vmem:[%s3215 + $0x60] sm:$0xf]
    %v3241 = vld [vmem:[%s3215 + $0x64] sm:$0xf]
    %v3242 = vld [vmem:[%s3215 + $0x68] sm:$0xf]
    %v3243 = vld [vmem:[%s3215 + $0x6c] sm:$0xf]
    %v3244 = vld [vmem:[%s3215 + $0x70] sm:$0xf]
    %v3245 = vld [vmem:[%s3215 + $0x74] sm:$0xf]
    %v3246 = vld [vmem:[%s3215 + $0x78] sm:$0xf]
    %v3247 = vld [vmem:[%s3215 + $0x7c] sm:$0xf]
    %v3248 = vld [vmem:[%s3215 + $0x80] sm:$0xf]
    %v3249 = vld [vmem:[%s3215 + $0x84] sm:$0xf]
    %v3250 = vld [vmem:[%s3215 + $0x88] sm:$0xf]
    %v3251 = vld [vmem:[%s3215 + $0x8c] sm:$0xf]
    %v3252 = vld [vmem:[%s3215 + $0x90] sm:$0x1]
    %v3290 = vunpack.c.l.b16 %v3216
    %v3291 = vunpack.c.l.b16 %v3217
    %v3292 = vunpack.c.l.b16 %v3218
    %v3293 = vunpack.c.l.b16 %v3219
    %v3294 = vunpack.c.l.b16 %v3220
    %v3295 = vunpack.c.l.b16 %v3221
    %v3296 = vunpack.c.l.b16 %v3222
    %v3297 = vunpack.c.l.b16 %v3223
    %v3298 = vunpack.c.l.b16 %v3224
    %v3299 = vunpack.c.l.b16 %v3225
    %v3300 = vunpack.c.l.b16 %v3226
    %v3301 = vunpack.c.l.b16 %v3227
    %v3302 = vunpack.c.l.b16 %v3228
    %v3303 = vunpack.c.l.b16 %v3229
    %v3304 = vunpack.c.l.b16 %v3230
    %v3305 = vunpack.c.l.b16 %v3231
    %v3306 = vunpack.c.l.b16 %v3232
    %v3307 = vunpack.c.l.b16 %v3233
    %v3308 = vunpack.c.l.b16 %v3234
    %v3309 = vunpack.c.l.b16 %v3235
    %v3310 = vunpack.c.l.b16 %v3236
    %v3311 = vunpack.c.l.b16 %v3237
    %v3312 = vunpack.c.l.b16 %v3238
    %v3313 = vunpack.c.l.b16 %v3239
    %v3314 = vunpack.c.l.b16 %v3240
    %v3315 = vunpack.c.l.b16 %v3241
    %v3316 = vunpack.c.l.b16 %v3242
    %v3317 = vunpack.c.l.b16 %v3243
    %v3318 = vunpack.c.l.b16 %v3244
    %v3319 = vunpack.c.l.b16 %v3245
    %v3320 = vunpack.c.l.b16 %v3246
    %v3321 = vunpack.c.l.b16 %v3247
    %v3322 = vunpack.c.l.b16 %v3248
    %v3323 = vunpack.c.l.b16 %v3249
    %v3324 = vunpack.c.l.b16 %v3250
    %v3325 = vunpack.c.l.b16 %v3251
    %v3326 = vunpack.c.l.b16 %v3252
    %v3327 = vpack.c.b16 %v3291, %v3290
    %v3328 = vpack.c.b16 %v3293, %v3292
    %v3329 = vpack.c.b16 %v3295, %v3294
    %v3330 = vpack.c.b16 %v3297, %v3296
    %v3331 = vpack.c.b16 %v3299, %v3298
    %v3332 = vpack.c.b16 %v3301, %v3300
    %v3333 = vpack.c.b16 %v3303, %v3302
    %v3334 = vpack.c.b16 %v3305, %v3304
    %v3335 = vpack.c.b16 %v3307, %v3306
    %v3336 = vpack.c.b16 %v3309, %v3308
    %v3337 = vpack.c.b16 %v3311, %v3310
    %v3338 = vpack.c.b16 %v3313, %v3312
    %v3339 = vpack.c.b16 %v3315, %v3314
    %v3340 = vpack.c.b16 %v3317, %v3316
    %v3341 = vpack.c.b16 %v3319, %v3318
    %v3342 = vpack.c.b16 %v3321, %v3320
    %v3343 = vpack.c.b16 %v3323, %v3322
    %v3344 = vpack.c.b16 %v3325, %v3324
    %v3345 = vpack.c.b16 %v3326, %v3326
    %v3365 = vand.u32 %v3345, %v1670
    %3367 = vmatprep.subr.bf16.mxu0 0
    %3368 = vmatpush1.bf16.msra.mxu0 %v3334
    %3369 = vmatprep.subr.bf16.mxu0 0
    %3370 = vmatpush1.bf16.msra.mxu0 %v3333
    %3371 = vmatprep.subr.bf16.mxu0 0
    %3372 = vmatpush1.bf16.msra.mxu0 %v3332
    %3373 = vmatprep.subr.bf16.mxu0 0
    %3374 = vmatpush1.bf16.msra.mxu0 %v3331
    %3375 = vmatprep.subr.bf16.mxu0 0
    %3376 = vmatpush1.bf16.msra.mxu0 %v3330
    %3377 = vmatprep.subr.bf16.mxu0 0
    %3378 = vmatpush1.bf16.msra.mxu0 %v3329
    %3379 = vmatprep.subr.bf16.mxu0 0
    %3380 = vmatpush1.bf16.msra.mxu0 %v3328
    %3381 = vmatprep.subr.bf16.mxu0 0
    %3382 = vmatpush1.bf16.msra.mxu0 %v3327
    %3383 = vmatprep.subr.bf16.mxu0 0
    %3384 = vmatpush2.bf16.msra.mxu0 %v3342
    %3385 = vmatprep.subr.bf16.mxu0 0
    %3386 = vmatpush2.bf16.msra.mxu0 %v3341
    %3387 = vmatprep.subr.bf16.mxu0 0
    %3388 = vmatpush2.bf16.msra.mxu0 %v3340
    %3389 = vmatprep.subr.bf16.mxu0 0
    %3390 = vmatpush2.bf16.msra.mxu0 %v3339
    %3391 = vmatprep.subr.bf16.mxu0 0
    %3392 = vmatpush2.bf16.msra.mxu0 %v3338
    %3393 = vmatprep.subr.bf16.mxu0 0
    %3394 = vmatpush2.bf16.msra.mxu0 %v3337
    %3395 = vmatprep.subr.bf16.mxu0 0
    %3396 = vmatpush2.bf16.msra.mxu0 %v3336
    %3397 = vmatprep.subr.bf16.mxu0 0
    %3398 = vmatpush2.bf16.msra.mxu0 %v3335
    %3399 = vmatprep.mubr.bf16.mxu0 %v1505
    %3400 = vmatmul.mubr.bf16.gmra.mxu0 %v1504
    %v3401 = vpop.f32.mrf.mxu0
    %v3402 = vadd.f32 0.0, %v3401
    %v3403 = vpop.f32.mrf.mxu0
    %v3404 = vpop.f32.mrf.mxu0
    %v3405 = vadd.f32 0.0, %v3404
    %v3406 = vpop.f32.mrf.mxu0
    %3407 = vdwg.mxu0
    %3408 = vmatprep.subr.bf16.mxu0 0
    %3409 = vmatpush1.bf16.msra.mxu0 0
    %3410 = vmatprep.subr.bf16.mxu0 0
    %3411 = vmatpush1.bf16.msra.mxu0 0
    %3412 = vmatprep.subr.bf16.mxu0 0
    %3413 = vmatpush1.bf16.msra.mxu0 0
    %3414 = vmatprep.subr.bf16.mxu0 0
    %3415 = vmatpush1.bf16.msra.mxu0 0
    %3416 = vmatprep.subr.bf16.mxu0 0
    %3417 = vmatpush1.bf16.msra.mxu0 0
    %3418 = vmatprep.subr.bf16.mxu0 0
    %3419 = vmatpush1.bf16.msra.mxu0 %v3365
    %3420 = vmatprep.subr.bf16.mxu0 0
    %3421 = vmatpush1.bf16.msra.mxu0 %v3344
    %3422 = vmatprep.subr.bf16.mxu0 0
    %3423 = vmatpush1.bf16.msra.mxu0 %v3343
    %3424 = vmatprep.subr.bf16.mxu0 0
    %3425 = vmatpush2.bf16.msra.mxu0 0
    %3426 = vmatprep.subr.bf16.mxu0 0
    %3427 = vmatpush2.bf16.msra.mxu0 0
    %3428 = vmatprep.subr.bf16.mxu0 0
    %3429 = vmatpush2.bf16.msra.mxu0 0
    %3430 = vmatprep.subr.bf16.mxu0 0
    %3431 = vmatpush2.bf16.msra.mxu0 0
    %3432 = vmatprep.subr.bf16.mxu0 0
    %3433 = vmatpush2.bf16.msra.mxu0 0
    %3434 = vmatprep.subr.bf16.mxu0 0
    %3435 = vmatpush2.bf16.msra.mxu0 0
    %3436 = vmatprep.subr.bf16.mxu0 0
    %3437 = vmatpush2.bf16.msra.mxu0 0
    %3438 = vmatprep.subr.bf16.mxu0 0
    %3439 = vmatpush2.bf16.msra.mxu0 0
    %3440 = vmatprep.mubr.bf16.mxu0 0
    %3441 = vmatmul.mubr.bf16.gmra.mxu0 %v1666
    %v3442 = vpop.f32.mrf.mxu0
    %v3443 = vadd.f32 %v3402, %v3442
    %v3444 = vpop.f32.mrf.mxu0
    %v3445 = vpop.f32.mrf.mxu0
    %v3446 = vadd.f32 %v3405, %v3445
    %v3447 = vpop.f32.mrf.mxu0
    %3448 = vdwg.mxu0
    %v3450 = vsel %vm1995, %v3211, 0
    %v3453 = vsel %vm1995, %v3212, 0
    %v3456 = vsel %vm1995, %v3213, 0
    %v3459 = vsel %vm1995, %v3214, 0
    %3461 = vmatprep.subr.mxu0 0.0
    %3462 = vmatpush1.msra.mxu0 0.0
    %3463 = vmatprep.subr.mxu0 0.0
    %3464 = vmatpush1.msra.mxu0 0.0
    %3465 = vmatprep.subr.mxu0 0.0
    %3466 = vmatpush1.msra.mxu0 0.0
    %3467 = vmatprep.subr.mxu0 0.0
    %3468 = vmatpush1.msra.mxu0 0.0
    %3469 = vmatprep.subr.mxu0 0.0
    %3470 = vmatpush1.msra.mxu0 0.0
    %3471 = vmatprep.subr.mxu0 0.0
    %3472 = vmatpush1.msra.mxu0 0.0
    %3473 = vmatprep.subr.mxu0 0.0
    %3474 = vmatpush1.msra.mxu0 0.0
    %3475 = vmatprep.subr.mxu0 0.0
    %3476 = vmatpush1.msra.mxu0 0.0
    %3477 = vmatprep.subr.mxu0 0.0
    %3478 = vmatpush1.msra.mxu0 0.0
    %3479 = vmatprep.subr.mxu0 0.0
    %3480 = vmatpush1.msra.mxu0 0.0
    %3481 = vmatprep.subr.mxu0 0.0
    %3482 = vmatpush1.msra.mxu0 0.0
    %3483 = vmatprep.subr.mxu0 0.0
    %3484 = vmatpush1.msra.mxu0 0.0
    %3485 = vmatprep.subr.mxu0 0.0
    %3486 = vmatpush1.msra.mxu0 0.0
    %3487 = vmatprep.subr.mxu0 0.0
    %3488 = vmatpush1.msra.mxu0 0.0
    %3489 = vmatprep.subr.mxu0 0.0
    %3490 = vmatpush1.msra.mxu0 %v3446
    %3491 = vmatprep.subr.mxu0 0.0
    %3492 = vmatpush1.msra.mxu0 %v3443
    %3493 = vmatprep.subr.mxu0 0.0
    %3494 = vmatpush2.msra.mxu0 0.0
    %3495 = vmatprep.subr.mxu0 0.0
    %3496 = vmatpush2.msra.mxu0 0.0
    %3497 = vmatprep.subr.mxu0 0.0
    %3498 = vmatpush2.msra.mxu0 0.0
    %3499 = vmatprep.subr.mxu0 0.0
    %3500 = vmatpush2.msra.mxu0 0.0
    %3501 = vmatprep.subr.mxu0 0.0
    %3502 = vmatpush2.msra.mxu0 0.0
    %3503 = vmatprep.subr.mxu0 0.0
    %3504 = vmatpush2.msra.mxu0 0.0
    %3505 = vmatprep.subr.mxu0 0.0
    %3506 = vmatpush2.msra.mxu0 0.0
    %3507 = vmatprep.subr.mxu0 0.0
    %3508 = vmatpush2.msra.mxu0 0.0
    %3509 = vmatprep.subr.mxu0 0.0
    %3510 = vmatpush2.msra.mxu0 0.0
    %3511 = vmatprep.subr.mxu0 0.0
    %3512 = vmatpush2.msra.mxu0 0.0
    %3513 = vmatprep.subr.mxu0 0.0
    %3514 = vmatpush2.msra.mxu0 0.0
    %3515 = vmatprep.subr.mxu0 0.0
    %3516 = vmatpush2.msra.mxu0 0.0
    %3517 = vmatprep.subr.mxu0 0.0
    %3518 = vmatpush2.msra.mxu0 0.0
    %3519 = vmatprep.subr.mxu0 0.0
    %3520 = vmatpush2.msra.mxu0 0.0
    %3521 = vmatprep.subr.mxu0 0.0
    %3522 = vmatpush2.msra.mxu0 0.0
    %3523 = vmatprep.subr.mxu0 0.0
    %3524 = vmatpush2.msra.mxu0 0.0
    %3525 = vmatprep.mubr.f32.mxu0 0.0
    %3526 = vmatmul.mubr.f32.gmra.mxu0 %v3450
    %v3527 = vpop.f32.mrf.mxu0
    %v3528 = vadd.f32 0.0, %v3527
    %v3529 = vpop.f32.mrf.mxu0
    %3530 = vmatprep.mubr.f32.mxu0 0.0
    %3531 = vmatmul.mubr.f32.gmra.mxu0 %v3453
    %v3532 = vpop.f32.mrf.mxu0
    %v3533 = vadd.f32 0.0, %v3532
    %v3534 = vpop.f32.mrf.mxu0
    %3535 = vmatprep.mubr.f32.mxu0 0.0
    %3536 = vmatmul.mubr.f32.gmra.mxu0 %v3456
    %v3537 = vpop.f32.mrf.mxu0
    %v3538 = vadd.f32 0.0, %v3537
    %v3539 = vpop.f32.mrf.mxu0
    %3540 = vmatprep.mubr.f32.mxu0 0.0
    %3541 = vmatmul.mubr.f32.gmra.mxu0 %v3459
    %v3542 = vpop.f32.mrf.mxu0
    %v3543 = vadd.f32 0.0, %v3542
    %v3544 = vpop.f32.mrf.mxu0
    %3545 = vdwg.mxu0
    %v3546 = vadd.f32 %v3206, %v3528
    %v3547 = vadd.f32 %v3207, %v3533
    %v3548 = vadd.f32 %v3208, %v3538
    %v3549 = vadd.f32 %v3209, %v3543
    %s3550 = scalar_lea.vmem %s8, 192
    %v3551 = vld [vmem:[%s3550] sm:$0xff]
    %v3552 = vld [vmem:[%s3550 + $0x8] sm:$0xff]
    %v3553 = vld [vmem:[%s3550 + $0x10] sm:$0xff]
    %v3554 = vld [vmem:[%s3550 + $0x18] sm:$0xff]
    %s3555 = scalar_lea.vmem [#allocation2], 888
    %v3556 = vld [vmem:[%s3555] sm:$0xf]
    %v3557 = vld [vmem:[%s3555 + $0x4] sm:$0xf]
    %v3558 = vld [vmem:[%s3555 + $0x8] sm:$0xf]
    %v3559 = vld [vmem:[%s3555 + $0xc] sm:$0xf]
    %v3560 = vld [vmem:[%s3555 + $0x10] sm:$0xf]
    %v3561 = vld [vmem:[%s3555 + $0x14] sm:$0xf]
    %v3562 = vld [vmem:[%s3555 + $0x18] sm:$0xf]
    %v3563 = vld [vmem:[%s3555 + $0x1c] sm:$0xf]
    %v3564 = vld [vmem:[%s3555 + $0x20] sm:$0xf]
    %v3565 = vld [vmem:[%s3555 + $0x24] sm:$0xf]
    %v3566 = vld [vmem:[%s3555 + $0x28] sm:$0xf]
    %v3567 = vld [vmem:[%s3555 + $0x2c] sm:$0xf]
    %v3568 = vld [vmem:[%s3555 + $0x30] sm:$0xf]
    %v3569 = vld [vmem:[%s3555 + $0x34] sm:$0xf]
    %v3570 = vld [vmem:[%s3555 + $0x38] sm:$0xf]
    %v3571 = vld [vmem:[%s3555 + $0x3c] sm:$0xf]
    %v3572 = vld [vmem:[%s3555 + $0x40] sm:$0xf]
    %v3573 = vld [vmem:[%s3555 + $0x44] sm:$0xf]
    %v3574 = vld [vmem:[%s3555 + $0x48] sm:$0xf]
    %v3575 = vld [vmem:[%s3555 + $0x4c] sm:$0xf]
    %v3576 = vld [vmem:[%s3555 + $0x50] sm:$0xf]
    %v3577 = vld [vmem:[%s3555 + $0x54] sm:$0xf]
    %v3578 = vld [vmem:[%s3555 + $0x58] sm:$0xf]
    %v3579 = vld [vmem:[%s3555 + $0x5c] sm:$0xf]
    %v3580 = vld [vmem:[%s3555 + $0x60] sm:$0xf]
    %v3581 = vld [vmem:[%s3555 + $0x64] sm:$0xf]
    %v3582 = vld [vmem:[%s3555 + $0x68] sm:$0xf]
    %v3583 = vld [vmem:[%s3555 + $0x6c] sm:$0xf]
    %v3584 = vld [vmem:[%s3555 + $0x70] sm:$0xf]
    %v3585 = vld [vmem:[%s3555 + $0x74] sm:$0xf]
    %v3586 = vld [vmem:[%s3555 + $0x78] sm:$0xf]
    %v3587 = vld [vmem:[%s3555 + $0x7c] sm:$0xf]
    %v3588 = vld [vmem:[%s3555 + $0x80] sm:$0xf]
    %v3589 = vld [vmem:[%s3555 + $0x84] sm:$0xf]
    %v3590 = vld [vmem:[%s3555 + $0x88] sm:$0xf]
    %v3591 = vld [vmem:[%s3555 + $0x8c] sm:$0xf]
    %v3592 = vld [vmem:[%s3555 + $0x90] sm:$0x1]
    %v3630 = vunpack.c.l.b16 %v3556
    %v3631 = vunpack.c.l.b16 %v3557
    %v3632 = vunpack.c.l.b16 %v3558
    %v3633 = vunpack.c.l.b16 %v3559
    %v3634 = vunpack.c.l.b16 %v3560
    %v3635 = vunpack.c.l.b16 %v3561
    %v3636 = vunpack.c.l.b16 %v3562
    %v3637 = vunpack.c.l.b16 %v3563
    %v3638 = vunpack.c.l.b16 %v3564
    %v3639 = vunpack.c.l.b16 %v3565
    %v3640 = vunpack.c.l.b16 %v3566
    %v3641 = vunpack.c.l.b16 %v3567
    %v3642 = vunpack.c.l.b16 %v3568
    %v3643 = vunpack.c.l.b16 %v3569
    %v3644 = vunpack.c.l.b16 %v3570
    %v3645 = vunpack.c.l.b16 %v3571
    %v3646 = vunpack.c.l.b16 %v3572
    %v3647 = vunpack.c.l.b16 %v3573
    %v3648 = vunpack.c.l.b16 %v3574
    %v3649 = vunpack.c.l.b16 %v3575
    %v3650 = vunpack.c.l.b16 %v3576
    %v3651 = vunpack.c.l.b16 %v3577
    %v3652 = vunpack.c.l.b16 %v3578
    %v3653 = vunpack.c.l.b16 %v3579
    %v3654 = vunpack.c.l.b16 %v3580
    %v3655 = vunpack.c.l.b16 %v3581
    %v3656 = vunpack.c.l.b16 %v3582
    %v3657 = vunpack.c.l.b16 %v3583
    %v3658 = vunpack.c.l.b16 %v3584
    %v3659 = vunpack.c.l.b16 %v3585
    %v3660 = vunpack.c.l.b16 %v3586
    %v3661 = vunpack.c.l.b16 %v3587
    %v3662 = vunpack.c.l.b16 %v3588
    %v3663 = vunpack.c.l.b16 %v3589
    %v3664 = vunpack.c.l.b16 %v3590
    %v3665 = vunpack.c.l.b16 %v3591
    %v3666 = vunpack.c.l.b16 %v3592
    %v3667 = vpack.c.b16 %v3631, %v3630
    %v3668 = vpack.c.b16 %v3633, %v3632
    %v3669 = vpack.c.b16 %v3635, %v3634
    %v3670 = vpack.c.b16 %v3637, %v3636
    %v3671 = vpack.c.b16 %v3639, %v3638
    %v3672 = vpack.c.b16 %v3641, %v3640
    %v3673 = vpack.c.b16 %v3643, %v3642
    %v3674 = vpack.c.b16 %v3645, %v3644
    %v3675 = vpack.c.b16 %v3647, %v3646
    %v3676 = vpack.c.b16 %v3649, %v3648
    %v3677 = vpack.c.b16 %v3651, %v3650
    %v3678 = vpack.c.b16 %v3653, %v3652
    %v3679 = vpack.c.b16 %v3655, %v3654
    %v3680 = vpack.c.b16 %v3657, %v3656
    %v3681 = vpack.c.b16 %v3659, %v3658
    %v3682 = vpack.c.b16 %v3661, %v3660
    %v3683 = vpack.c.b16 %v3663, %v3662
    %v3684 = vpack.c.b16 %v3665, %v3664
    %v3685 = vpack.c.b16 %v3666, %v3666
    %v3705 = vand.u32 %v3685, %v1670
    %3707 = vmatprep.subr.bf16.mxu0 0
    %3708 = vmatpush1.bf16.msra.mxu0 %v3674
    %3709 = vmatprep.subr.bf16.mxu0 0
    %3710 = vmatpush1.bf16.msra.mxu0 %v3673
    %3711 = vmatprep.subr.bf16.mxu0 0
    %3712 = vmatpush1.bf16.msra.mxu0 %v3672
    %3713 = vmatprep.subr.bf16.mxu0 0
    %3714 = vmatpush1.bf16.msra.mxu0 %v3671
    %3715 = vmatprep.subr.bf16.mxu0 0
    %3716 = vmatpush1.bf16.msra.mxu0 %v3670
    %3717 = vmatprep.subr.bf16.mxu0 0
    %3718 = vmatpush1.bf16.msra.mxu0 %v3669
    %3719 = vmatprep.subr.bf16.mxu0 0
    %3720 = vmatpush1.bf16.msra.mxu0 %v3668
    %3721 = vmatprep.subr.bf16.mxu0 0
    %3722 = vmatpush1.bf16.msra.mxu0 %v3667
    %3723 = vmatprep.subr.bf16.mxu0 0
    %3724 = vmatpush2.bf16.msra.mxu0 %v3682
    %3725 = vmatprep.subr.bf16.mxu0 0
    %3726 = vmatpush2.bf16.msra.mxu0 %v3681
    %3727 = vmatprep.subr.bf16.mxu0 0
    %3728 = vmatpush2.bf16.msra.mxu0 %v3680
    %3729 = vmatprep.subr.bf16.mxu0 0
    %3730 = vmatpush2.bf16.msra.mxu0 %v3679
    %3731 = vmatprep.subr.bf16.mxu0 0
    %3732 = vmatpush2.bf16.msra.mxu0 %v3678
    %3733 = vmatprep.subr.bf16.mxu0 0
    %3734 = vmatpush2.bf16.msra.mxu0 %v3677
    %3735 = vmatprep.subr.bf16.mxu0 0
    %3736 = vmatpush2.bf16.msra.mxu0 %v3676
    %3737 = vmatprep.subr.bf16.mxu0 0
    %3738 = vmatpush2.bf16.msra.mxu0 %v3675
    %3739 = vmatprep.mubr.bf16.mxu0 %v1505
    %3740 = vmatmul.mubr.bf16.gmra.mxu0 %v1504
    %v3741 = vpop.f32.mrf.mxu0
    %v3742 = vadd.f32 0.0, %v3741
    %v3743 = vpop.f32.mrf.mxu0
    %v3744 = vpop.f32.mrf.mxu0
    %v3745 = vadd.f32 0.0, %v3744
    %v3746 = vpop.f32.mrf.mxu0
    %3747 = vdwg.mxu0
    %3748 = vmatprep.subr.bf16.mxu0 0
    %3749 = vmatpush1.bf16.msra.mxu0 0
    %3750 = vmatprep.subr.bf16.mxu0 0
    %3751 = vmatpush1.bf16.msra.mxu0 0
    %3752 = vmatprep.subr.bf16.mxu0 0
    %3753 = vmatpush1.bf16.msra.mxu0 0
    %3754 = vmatprep.subr.bf16.mxu0 0
    %3755 = vmatpush1.bf16.msra.mxu0 0
    %3756 = vmatprep.subr.bf16.mxu0 0
    %3757 = vmatpush1.bf16.msra.mxu0 0
    %3758 = vmatprep.subr.bf16.mxu0 0
    %3759 = vmatpush1.bf16.msra.mxu0 %v3705
    %3760 = vmatprep.subr.bf16.mxu0 0
    %3761 = vmatpush1.bf16.msra.mxu0 %v3684
    %3762 = vmatprep.subr.bf16.mxu0 0
    %3763 = vmatpush1.bf16.msra.mxu0 %v3683
    %3764 = vmatprep.subr.bf16.mxu0 0
    %3765 = vmatpush2.bf16.msra.mxu0 0
    %3766 = vmatprep.subr.bf16.mxu0 0
    %3767 = vmatpush2.bf16.msra.mxu0 0
    %3768 = vmatprep.subr.bf16.mxu0 0
    %3769 = vmatpush2.bf16.msra.mxu0 0
    %3770 = vmatprep.subr.bf16.mxu0 0
    %3771 = vmatpush2.bf16.msra.mxu0 0
    %3772 = vmatprep.subr.bf16.mxu0 0
    %3773 = vmatpush2.bf16.msra.mxu0 0
    %3774 = vmatprep.subr.bf16.mxu0 0
    %3775 = vmatpush2.bf16.msra.mxu0 0
    %3776 = vmatprep.subr.bf16.mxu0 0
    %3777 = vmatpush2.bf16.msra.mxu0 0
    %3778 = vmatprep.subr.bf16.mxu0 0
    %3779 = vmatpush2.bf16.msra.mxu0 0
    %3780 = vmatprep.mubr.bf16.mxu0 0
    %3781 = vmatmul.mubr.bf16.gmra.mxu0 %v1666
    %v3782 = vpop.f32.mrf.mxu0
    %v3783 = vadd.f32 %v3742, %v3782
    %v3784 = vpop.f32.mrf.mxu0
    %v3785 = vpop.f32.mrf.mxu0
    %v3786 = vadd.f32 %v3745, %v3785
    %v3787 = vpop.f32.mrf.mxu0
    %3788 = vdwg.mxu0
    %v3790 = vsel %vm1995, %v3551, 0
    %v3793 = vsel %vm1995, %v3552, 0
    %v3796 = vsel %vm1995, %v3553, 0
    %v3799 = vsel %vm1995, %v3554, 0
    %3801 = vmatprep.subr.mxu0 0.0
    %3802 = vmatpush1.msra.mxu0 0.0
    %3803 = vmatprep.subr.mxu0 0.0
    %3804 = vmatpush1.msra.mxu0 0.0
    %3805 = vmatprep.subr.mxu0 0.0
    %3806 = vmatpush1.msra.mxu0 0.0
    %3807 = vmatprep.subr.mxu0 0.0
    %3808 = vmatpush1.msra.mxu0 0.0
    %3809 = vmatprep.subr.mxu0 0.0
    %3810 = vmatpush1.msra.mxu0 0.0
    %3811 = vmatprep.subr.mxu0 0.0
    %3812 = vmatpush1.msra.mxu0 0.0
    %3813 = vmatprep.subr.mxu0 0.0
    %3814 = vmatpush1.msra.mxu0 0.0
    %3815 = vmatprep.subr.mxu0 0.0
    %3816 = vmatpush1.msra.mxu0 0.0
    %3817 = vmatprep.subr.mxu0 0.0
    %3818 = vmatpush1.msra.mxu0 0.0
    %3819 = vmatprep.subr.mxu0 0.0
    %3820 = vmatpush1.msra.mxu0 0.0
    %3821 = vmatprep.subr.mxu0 0.0
    %3822 = vmatpush1.msra.mxu0 0.0
    %3823 = vmatprep.subr.mxu0 0.0
    %3824 = vmatpush1.msra.mxu0 0.0
    %3825 = vmatprep.subr.mxu0 0.0
    %3826 = vmatpush1.msra.mxu0 0.0
    %3827 = vmatprep.subr.mxu0 0.0
    %3828 = vmatpush1.msra.mxu0 0.0
    %3829 = vmatprep.subr.mxu0 0.0
    %3830 = vmatpush1.msra.mxu0 %v3786
    %3831 = vmatprep.subr.mxu0 0.0
    %3832 = vmatpush1.msra.mxu0 %v3783
    %3833 = vmatprep.subr.mxu0 0.0
    %3834 = vmatpush2.msra.mxu0 0.0
    %3835 = vmatprep.subr.mxu0 0.0
    %3836 = vmatpush2.msra.mxu0 0.0
    %3837 = vmatprep.subr.mxu0 0.0
    %3838 = vmatpush2.msra.mxu0 0.0
    %3839 = vmatprep.subr.mxu0 0.0
    %3840 = vmatpush2.msra.mxu0 0.0
    %3841 = vmatprep.subr.mxu0 0.0
    %3842 = vmatpush2.msra.mxu0 0.0
    %3843 = vmatprep.subr.mxu0 0.0
    %3844 = vmatpush2.msra.mxu0 0.0
    %3845 = vmatprep.subr.mxu0 0.0
    %3846 = vmatpush2.msra.mxu0 0.0
    %3847 = vmatprep.subr.mxu0 0.0
    %3848 = vmatpush2.msra.mxu0 0.0
    %3849 = vmatprep.subr.mxu0 0.0
    %3850 = vmatpush2.msra.mxu0 0.0
    %3851 = vmatprep.subr.mxu0 0.0
    %3852 = vmatpush2.msra.mxu0 0.0
    %3853 = vmatprep.subr.mxu0 0.0
    %3854 = vmatpush2.msra.mxu0 0.0
    %3855 = vmatprep.subr.mxu0 0.0
    %3856 = vmatpush2.msra.mxu0 0.0
    %3857 = vmatprep.subr.mxu0 0.0
    %3858 = vmatpush2.msra.mxu0 0.0
    %3859 = vmatprep.subr.mxu0 0.0
    %3860 = vmatpush2.msra.mxu0 0.0
    %3861 = vmatprep.subr.mxu0 0.0
    %3862 = vmatpush2.msra.mxu0 0.0
    %3863 = vmatprep.subr.mxu0 0.0
    %3864 = vmatpush2.msra.mxu0 0.0
    %3865 = vmatprep.mubr.f32.mxu0 0.0
    %3866 = vmatmul.mubr.f32.gmra.mxu0 %v3790
    %v3867 = vpop.f32.mrf.mxu0
    %v3868 = vadd.f32 0.0, %v3867
    %v3869 = vpop.f32.mrf.mxu0
    %3870 = vmatprep.mubr.f32.mxu0 0.0
    %3871 = vmatmul.mubr.f32.gmra.mxu0 %v3793
    %v3872 = vpop.f32.mrf.mxu0
    %v3873 = vadd.f32 0.0, %v3872
    %v3874 = vpop.f32.mrf.mxu0
    %3875 = vmatprep.mubr.f32.mxu0 0.0
    %3876 = vmatmul.mubr.f32.gmra.mxu0 %v3796
    %v3877 = vpop.f32.mrf.mxu0
    %v3878 = vadd.f32 0.0, %v3877
    %v3879 = vpop.f32.mrf.mxu0
    %3880 = vmatprep.mubr.f32.mxu0 0.0
    %3881 = vmatmul.mubr.f32.gmra.mxu0 %v3799
    %v3882 = vpop.f32.mrf.mxu0
    %v3883 = vadd.f32 0.0, %v3882
    %v3884 = vpop.f32.mrf.mxu0
    %3885 = vdwg.mxu0
    %v3886 = vadd.f32 %v3546, %v3868
    %v3887 = vadd.f32 %v3547, %v3873
    %v3888 = vadd.f32 %v3548, %v3878
    %v3889 = vadd.f32 %v3549, %v3883
    %s3890 = scalar_lea.vmem %s8, 224
    %v3891 = vld [vmem:[%s3890] sm:$0xff]
    %v3892 = vld [vmem:[%s3890 + $0x8] sm:$0xff]
    %v3893 = vld [vmem:[%s3890 + $0x10] sm:$0xff]
    %v3894 = vld [vmem:[%s3890 + $0x18] sm:$0xff]
    %s3895 = scalar_lea.vmem [#allocation2], 1036
    %v3896 = vld [vmem:[%s3895] sm:$0xf]
    %v3897 = vld [vmem:[%s3895 + $0x4] sm:$0xf]
    %v3898 = vld [vmem:[%s3895 + $0x8] sm:$0xf]
    %v3899 = vld [vmem:[%s3895 + $0xc] sm:$0xf]
    %v3900 = vld [vmem:[%s3895 + $0x10] sm:$0xf]
    %v3901 = vld [vmem:[%s3895 + $0x14] sm:$0xf]
    %v3902 = vld [vmem:[%s3895 + $0x18] sm:$0xf]
    %v3903 = vld [vmem:[%s3895 + $0x1c] sm:$0xf]
    %v3904 = vld [vmem:[%s3895 + $0x20] sm:$0xf]
    %v3905 = vld [vmem:[%s3895 + $0x24] sm:$0xf]
    %v3906 = vld [vmem:[%s3895 + $0x28] sm:$0xf]
    %v3907 = vld [vmem:[%s3895 + $0x2c] sm:$0xf]
    %v3908 = vld [vmem:[%s3895 + $0x30] sm:$0xf]
    %v3909 = vld [vmem:[%s3895 + $0x34] sm:$0xf]
    %v3910 = vld [vmem:[%s3895 + $0x38] sm:$0xf]
    %v3911 = vld [vmem:[%s3895 + $0x3c] sm:$0xf]
    %v3912 = vld [vmem:[%s3895 + $0x40] sm:$0xf]
    %v3913 = vld [vmem:[%s3895 + $0x44] sm:$0xf]
    %v3914 = vld [vmem:[%s3895 + $0x48] sm:$0xf]
    %v3915 = vld [vmem:[%s3895 + $0x4c] sm:$0xf]
    %v3916 = vld [vmem:[%s3895 + $0x50] sm:$0xf]
    %v3917 = vld [vmem:[%s3895 + $0x54] sm:$0xf]
    %v3918 = vld [vmem:[%s3895 + $0x58] sm:$0xf]
    %v3919 = vld [vmem:[%s3895 + $0x5c] sm:$0xf]
    %v3920 = vld [vmem:[%s3895 + $0x60] sm:$0xf]
    %v3921 = vld [vmem:[%s3895 + $0x64] sm:$0xf]
    %v3922 = vld [vmem:[%s3895 + $0x68] sm:$0xf]
    %v3923 = vld [vmem:[%s3895 + $0x6c] sm:$0xf]
    %v3924 = vld [vmem:[%s3895 + $0x70] sm:$0xf]
    %v3925 = vld [vmem:[%s3895 + $0x74] sm:$0xf]
    %v3926 = vld [vmem:[%s3895 + $0x78] sm:$0xf]
    %v3927 = vld [vmem:[%s3895 + $0x7c] sm:$0xf]
    %v3928 = vld [vmem:[%s3895 + $0x80] sm:$0xf]
    %v3929 = vld [vmem:[%s3895 + $0x84] sm:$0xf]
    %v3930 = vld [vmem:[%s3895 + $0x88] sm:$0xf]
    %v3931 = vld [vmem:[%s3895 + $0x8c] sm:$0xf]
    %v3932 = vld [vmem:[%s3895 + $0x90] sm:$0x1]
    %v3970 = vunpack.c.l.b16 %v3896
    %v3971 = vunpack.c.l.b16 %v3897
    %v3972 = vunpack.c.l.b16 %v3898
    %v3973 = vunpack.c.l.b16 %v3899
    %v3974 = vunpack.c.l.b16 %v3900
    %v3975 = vunpack.c.l.b16 %v3901
    %v3976 = vunpack.c.l.b16 %v3902
    %v3977 = vunpack.c.l.b16 %v3903
    %v3978 = vunpack.c.l.b16 %v3904
    %v3979 = vunpack.c.l.b16 %v3905
    %v3980 = vunpack.c.l.b16 %v3906
    %v3981 = vunpack.c.l.b16 %v3907
    %v3982 = vunpack.c.l.b16 %v3908
    %v3983 = vunpack.c.l.b16 %v3909
    %v3984 = vunpack.c.l.b16 %v3910
    %v3985 = vunpack.c.l.b16 %v3911
    %v3986 = vunpack.c.l.b16 %v3912
    %v3987 = vunpack.c.l.b16 %v3913
    %v3988 = vunpack.c.l.b16 %v3914
    %v3989 = vunpack.c.l.b16 %v3915
    %v3990 = vunpack.c.l.b16 %v3916
    %v3991 = vunpack.c.l.b16 %v3917
    %v3992 = vunpack.c.l.b16 %v3918
    %v3993 = vunpack.c.l.b16 %v3919
    %v3994 = vunpack.c.l.b16 %v3920
    %v3995 = vunpack.c.l.b16 %v3921
    %v3996 = vunpack.c.l.b16 %v3922
    %v3997 = vunpack.c.l.b16 %v3923
    %v3998 = vunpack.c.l.b16 %v3924
    %v3999 = vunpack.c.l.b16 %v3925
    %v4000 = vunpack.c.l.b16 %v3926
    %v4001 = vunpack.c.l.b16 %v3927
    %v4002 = vunpack.c.l.b16 %v3928
    %v4003 = vunpack.c.l.b16 %v3929
    %v4004 = vunpack.c.l.b16 %v3930
    %v4005 = vunpack.c.l.b16 %v3931
    %v4006 = vunpack.c.l.b16 %v3932
    %v4007 = vpack.c.b16 %v3971, %v3970
    %v4008 = vpack.c.b16 %v3973, %v3972
    %v4009 = vpack.c.b16 %v3975, %v3974
    %v4010 = vpack.c.b16 %v3977, %v3976
    %v4011 = vpack.c.b16 %v3979, %v3978
    %v4012 = vpack.c.b16 %v3981, %v3980
    %v4013 = vpack.c.b16 %v3983, %v3982
    %v4014 = vpack.c.b16 %v3985, %v3984
    %v4015 = vpack.c.b16 %v3987, %v3986
    %v4016 = vpack.c.b16 %v3989, %v3988
    %v4017 = vpack.c.b16 %v3991, %v3990
    %v4018 = vpack.c.b16 %v3993, %v3992
    %v4019 = vpack.c.b16 %v3995, %v3994
    %v4020 = vpack.c.b16 %v3997, %v3996
    %v4021 = vpack.c.b16 %v3999, %v3998
    %v4022 = vpack.c.b16 %v4001, %v4000
    %v4023 = vpack.c.b16 %v4003, %v4002
    %v4024 = vpack.c.b16 %v4005, %v4004
    %v4025 = vpack.c.b16 %v4006, %v4006
    %v4045 = vand.u32 %v4025, %v1670
    %4047 = vmatprep.subr.bf16.mxu0 0
    %4048 = vmatpush1.bf16.msra.mxu0 %v4014
    %4049 = vmatprep.subr.bf16.mxu0 0
    %4050 = vmatpush1.bf16.msra.mxu0 %v4013
    %4051 = vmatprep.subr.bf16.mxu0 0
    %4052 = vmatpush1.bf16.msra.mxu0 %v4012
    %4053 = vmatprep.subr.bf16.mxu0 0
    %4054 = vmatpush1.bf16.msra.mxu0 %v4011
    %4055 = vmatprep.subr.bf16.mxu0 0
    %4056 = vmatpush1.bf16.msra.mxu0 %v4010
    %4057 = vmatprep.subr.bf16.mxu0 0
    %4058 = vmatpush1.bf16.msra.mxu0 %v4009
    %4059 = vmatprep.subr.bf16.mxu0 0
    %4060 = vmatpush1.bf16.msra.mxu0 %v4008
    %4061 = vmatprep.subr.bf16.mxu0 0
    %4062 = vmatpush1.bf16.msra.mxu0 %v4007
    %4063 = vmatprep.subr.bf16.mxu0 0
    %4064 = vmatpush2.bf16.msra.mxu0 %v4022
    %4065 = vmatprep.subr.bf16.mxu0 0
    %4066 = vmatpush2.bf16.msra.mxu0 %v4021
    %4067 = vmatprep.subr.bf16.mxu0 0
    %4068 = vmatpush2.bf16.msra.mxu0 %v4020
    %4069 = vmatprep.subr.bf16.mxu0 0
    %4070 = vmatpush2.bf16.msra.mxu0 %v4019
    %4071 = vmatprep.subr.bf16.mxu0 0
    %4072 = vmatpush2.bf16.msra.mxu0 %v4018
    %4073 = vmatprep.subr.bf16.mxu0 0
    %4074 = vmatpush2.bf16.msra.mxu0 %v4017
    %4075 = vmatprep.subr.bf16.mxu0 0
    %4076 = vmatpush2.bf16.msra.mxu0 %v4016
    %4077 = vmatprep.subr.bf16.mxu0 0
    %4078 = vmatpush2.bf16.msra.mxu0 %v4015
    %4079 = vmatprep.mubr.bf16.mxu0 %v1505
    %4080 = vmatmul.mubr.bf16.gmra.mxu0 %v1504
    %v4081 = vpop.f32.mrf.mxu0
    %v4082 = vadd.f32 0.0, %v4081
    %v4083 = vpop.f32.mrf.mxu0
    %v4084 = vpop.f32.mrf.mxu0
    %v4085 = vadd.f32 0.0, %v4084
    %v4086 = vpop.f32.mrf.mxu0
    %4087 = vdwg.mxu0
    %4088 = vmatprep.subr.bf16.mxu0 0
    %4089 = vmatpush1.bf16.msra.mxu0 0
    %4090 = vmatprep.subr.bf16.mxu0 0
    %4091 = vmatpush1.bf16.msra.mxu0 0
    %4092 = vmatprep.subr.bf16.mxu0 0
    %4093 = vmatpush1.bf16.msra.mxu0 0
    %4094 = vmatprep.subr.bf16.mxu0 0
    %4095 = vmatpush1.bf16.msra.mxu0 0
    %4096 = vmatprep.subr.bf16.mxu0 0
    %4097 = vmatpush1.bf16.msra.mxu0 0
    %4098 = vmatprep.subr.bf16.mxu0 0
    %4099 = vmatpush1.bf16.msra.mxu0 %v4045
    %4100 = vmatprep.subr.bf16.mxu0 0
    %4101 = vmatpush1.bf16.msra.mxu0 %v4024
    %4102 = vmatprep.subr.bf16.mxu0 0
    %4103 = vmatpush1.bf16.msra.mxu0 %v4023
    %4104 = vmatprep.subr.bf16.mxu0 0
    %4105 = vmatpush2.bf16.msra.mxu0 0
    %4106 = vmatprep.subr.bf16.mxu0 0
    %4107 = vmatpush2.bf16.msra.mxu0 0
    %4108 = vmatprep.subr.bf16.mxu0 0
    %4109 = vmatpush2.bf16.msra.mxu0 0
    %4110 = vmatprep.subr.bf16.mxu0 0
    %4111 = vmatpush2.bf16.msra.mxu0 0
    %4112 = vmatprep.subr.bf16.mxu0 0
    %4113 = vmatpush2.bf16.msra.mxu0 0
    %4114 = vmatprep.subr.bf16.mxu0 0
    %4115 = vmatpush2.bf16.msra.mxu0 0
    %4116 = vmatprep.subr.bf16.mxu0 0
    %4117 = vmatpush2.bf16.msra.mxu0 0
    %4118 = vmatprep.subr.bf16.mxu0 0
    %4119 = vmatpush2.bf16.msra.mxu0 0
    %4120 = vmatprep.mubr.bf16.mxu0 0
    %4121 = vmatmul.mubr.bf16.gmra.mxu0 %v1666
    %v4122 = vpop.f32.mrf.mxu0
    %v4123 = vadd.f32 %v4082, %v4122
    %v4124 = vpop.f32.mrf.mxu0
    %v4125 = vpop.f32.mrf.mxu0
    %v4126 = vadd.f32 %v4085, %v4125
    %v4127 = vpop.f32.mrf.mxu0
    %4128 = vdwg.mxu0
    %v4130 = vsel %vm1995, %v3891, 0
    %v4133 = vsel %vm1995, %v3892, 0
    %v4136 = vsel %vm1995, %v3893, 0
    %v4139 = vsel %vm1995, %v3894, 0
    %4141 = vmatprep.subr.mxu0 0.0
    %4142 = vmatpush1.msra.mxu0 0.0
    %4143 = vmatprep.subr.mxu0 0.0
    %4144 = vmatpush1.msra.mxu0 0.0
    %4145 = vmatprep.subr.mxu0 0.0
    %4146 = vmatpush1.msra.mxu0 0.0
    %4147 = vmatprep.subr.mxu0 0.0
    %4148 = vmatpush1.msra.mxu0 0.0
    %4149 = vmatprep.subr.mxu0 0.0
    %4150 = vmatpush1.msra.mxu0 0.0
    %4151 = vmatprep.subr.mxu0 0.0
    %4152 = vmatpush1.msra.mxu0 0.0
    %4153 = vmatprep.subr.mxu0 0.0
    %4154 = vmatpush1.msra.mxu0 0.0
    %4155 = vmatprep.subr.mxu0 0.0
    %4156 = vmatpush1.msra.mxu0 0.0
    %4157 = vmatprep.subr.mxu0 0.0
    %4158 = vmatpush1.msra.mxu0 0.0
    %4159 = vmatprep.subr.mxu0 0.0
    %4160 = vmatpush1.msra.mxu0 0.0
    %4161 = vmatprep.subr.mxu0 0.0
    %4162 = vmatpush1.msra.mxu0 0.0
    %4163 = vmatprep.subr.mxu0 0.0
    %4164 = vmatpush1.msra.mxu0 0.0
    %4165 = vmatprep.subr.mxu0 0.0
    %4166 = vmatpush1.msra.mxu0 0.0
    %4167 = vmatprep.subr.mxu0 0.0
    %4168 = vmatpush1.msra.mxu0 0.0
    %4169 = vmatprep.subr.mxu0 0.0
    %4170 = vmatpush1.msra.mxu0 %v4126
    %4171 = vmatprep.subr.mxu0 0.0
    %4172 = vmatpush1.msra.mxu0 %v4123
    %4173 = vmatprep.subr.mxu0 0.0
    %4174 = vmatpush2.msra.mxu0 0.0
    %4175 = vmatprep.subr.mxu0 0.0
    %4176 = vmatpush2.msra.mxu0 0.0
    %4177 = vmatprep.subr.mxu0 0.0
    %4178 = vmatpush2.msra.mxu0 0.0
    %4179 = vmatprep.subr.mxu0 0.0
    %4180 = vmatpush2.msra.mxu0 0.0
    %4181 = vmatprep.subr.mxu0 0.0
    %4182 = vmatpush2.msra.mxu0 0.0
    %4183 = vmatprep.subr.mxu0 0.0
    %4184 = vmatpush2.msra.mxu0 0.0
    %4185 = vmatprep.subr.mxu0 0.0
    %4186 = vmatpush2.msra.mxu0 0.0
    %4187 = vmatprep.subr.mxu0 0.0
    %4188 = vmatpush2.msra.mxu0 0.0
    %4189 = vmatprep.subr.mxu0 0.0
    %4190 = vmatpush2.msra.mxu0 0.0
    %4191 = vmatprep.subr.mxu0 0.0
    %4192 = vmatpush2.msra.mxu0 0.0
    %4193 = vmatprep.subr.mxu0 0.0
    %4194 = vmatpush2.msra.mxu0 0.0
    %4195 = vmatprep.subr.mxu0 0.0
    %4196 = vmatpush2.msra.mxu0 0.0
    %4197 = vmatprep.subr.mxu0 0.0
    %4198 = vmatpush2.msra.mxu0 0.0
    %4199 = vmatprep.subr.mxu0 0.0
    %4200 = vmatpush2.msra.mxu0 0.0
    %4201 = vmatprep.subr.mxu0 0.0
    %4202 = vmatpush2.msra.mxu0 0.0
    %4203 = vmatprep.subr.mxu0 0.0
    %4204 = vmatpush2.msra.mxu0 0.0
    %4205 = vmatprep.mubr.f32.mxu0 0.0
    %4206 = vmatmul.mubr.f32.gmra.mxu0 %v4130
    %v4207 = vpop.f32.mrf.mxu0
    %v4208 = vadd.f32 0.0, %v4207
    %v4209 = vpop.f32.mrf.mxu0
    %4210 = vmatprep.mubr.f32.mxu0 0.0
    %4211 = vmatmul.mubr.f32.gmra.mxu0 %v4133
    %v4212 = vpop.f32.mrf.mxu0
    %v4213 = vadd.f32 0.0, %v4212
    %v4214 = vpop.f32.mrf.mxu0
    %4215 = vmatprep.mubr.f32.mxu0 0.0
    %4216 = vmatmul.mubr.f32.gmra.mxu0 %v4136
    %v4217 = vpop.f32.mrf.mxu0
    %v4218 = vadd.f32 0.0, %v4217
    %v4219 = vpop.f32.mrf.mxu0
    %4220 = vmatprep.mubr.f32.mxu0 0.0
    %4221 = vmatmul.mubr.f32.gmra.mxu0 %v4139
    %v4222 = vpop.f32.mrf.mxu0
    %v4223 = vadd.f32 0.0, %v4222
    %v4224 = vpop.f32.mrf.mxu0
    %4225 = vdwg.mxu0
    %v4226 = vadd.f32 %v3886, %v4208
    %v4227 = vadd.f32 %v3887, %v4213
    %v4228 = vadd.f32 %v3888, %v4218
    %v4229 = vadd.f32 %v3889, %v4223
    %s4230 = scalar_lea.vmem %s8, 256
    %v4231 = vld [vmem:[%s4230] sm:$0xff]
    %v4232 = vld [vmem:[%s4230 + $0x8] sm:$0xff]
    %v4233 = vld [vmem:[%s4230 + $0x10] sm:$0xff]
    %v4234 = vld [vmem:[%s4230 + $0x18] sm:$0xff]
    %s4235 = scalar_lea.vmem [#allocation2], 1184
    %v4236 = vld [vmem:[%s4235] sm:$0xf]
    %v4237 = vld [vmem:[%s4235 + $0x4] sm:$0xf]
    %v4238 = vld [vmem:[%s4235 + $0x8] sm:$0xf]
    %v4239 = vld [vmem:[%s4235 + $0xc] sm:$0xf]
    %v4240 = vld [vmem:[%s4235 + $0x10] sm:$0xf]
    %v4241 = vld [vmem:[%s4235 + $0x14] sm:$0xf]
    %v4242 = vld [vmem:[%s4235 + $0x18] sm:$0xf]
    %v4243 = vld [vmem:[%s4235 + $0x1c] sm:$0xf]
    %v4244 = vld [vmem:[%s4235 + $0x20] sm:$0xf]
    %v4245 = vld [vmem:[%s4235 + $0x24] sm:$0xf]
    %v4246 = vld [vmem:[%s4235 + $0x28] sm:$0xf]
    %v4247 = vld [vmem:[%s4235 + $0x2c] sm:$0xf]
    %v4248 = vld [vmem:[%s4235 + $0x30] sm:$0xf]
    %v4249 = vld [vmem:[%s4235 + $0x34] sm:$0xf]
    %v4250 = vld [vmem:[%s4235 + $0x38] sm:$0xf]
    %v4251 = vld [vmem:[%s4235 + $0x3c] sm:$0xf]
    %v4252 = vld [vmem:[%s4235 + $0x40] sm:$0xf]
    %v4253 = vld [vmem:[%s4235 + $0x44] sm:$0xf]
    %v4254 = vld [vmem:[%s4235 + $0x48] sm:$0xf]
    %v4255 = vld [vmem:[%s4235 + $0x4c] sm:$0xf]
    %v4256 = vld [vmem:[%s4235 + $0x50] sm:$0xf]
    %v4257 = vld [vmem:[%s4235 + $0x54] sm:$0xf]
    %v4258 = vld [vmem:[%s4235 + $0x58] sm:$0xf]
    %v4259 = vld [vmem:[%s4235 + $0x5c] sm:$0xf]
    %v4260 = vld [vmem:[%s4235 + $0x60] sm:$0xf]
    %v4261 = vld [vmem:[%s4235 + $0x64] sm:$0xf]
    %v4262 = vld [vmem:[%s4235 + $0x68] sm:$0xf]
    %v4263 = vld [vmem:[%s4235 + $0x6c] sm:$0xf]
    %v4264 = vld [vmem:[%s4235 + $0x70] sm:$0xf]
    %v4265 = vld [vmem:[%s4235 + $0x74] sm:$0xf]
    %v4266 = vld [vmem:[%s4235 + $0x78] sm:$0xf]
    %v4267 = vld [vmem:[%s4235 + $0x7c] sm:$0xf]
    %v4268 = vld [vmem:[%s4235 + $0x80] sm:$0xf]
    %v4269 = vld [vmem:[%s4235 + $0x84] sm:$0xf]
    %v4270 = vld [vmem:[%s4235 + $0x88] sm:$0xf]
    %v4271 = vld [vmem:[%s4235 + $0x8c] sm:$0xf]
    %v4272 = vld [vmem:[%s4235 + $0x90] sm:$0x1]
    %v4310 = vunpack.c.l.b16 %v4236
    %v4311 = vunpack.c.l.b16 %v4237
    %v4312 = vunpack.c.l.b16 %v4238
    %v4313 = vunpack.c.l.b16 %v4239
    %v4314 = vunpack.c.l.b16 %v4240
    %v4315 = vunpack.c.l.b16 %v4241
    %v4316 = vunpack.c.l.b16 %v4242
    %v4317 = vunpack.c.l.b16 %v4243
    %v4318 = vunpack.c.l.b16 %v4244
    %v4319 = vunpack.c.l.b16 %v4245
    %v4320 = vunpack.c.l.b16 %v4246
    %v4321 = vunpack.c.l.b16 %v4247
    %v4322 = vunpack.c.l.b16 %v4248
    %v4323 = vunpack.c.l.b16 %v4249
    %v4324 = vunpack.c.l.b16 %v4250
    %v4325 = vunpack.c.l.b16 %v4251
    %v4326 = vunpack.c.l.b16 %v4252
    %v4327 = vunpack.c.l.b16 %v4253
    %v4328 = vunpack.c.l.b16 %v4254
    %v4329 = vunpack.c.l.b16 %v4255
    %v4330 = vunpack.c.l.b16 %v4256
    %v4331 = vunpack.c.l.b16 %v4257
    %v4332 = vunpack.c.l.b16 %v4258
    %v4333 = vunpack.c.l.b16 %v4259
    %v4334 = vunpack.c.l.b16 %v4260
    %v4335 = vunpack.c.l.b16 %v4261
    %v4336 = vunpack.c.l.b16 %v4262
    %v4337 = vunpack.c.l.b16 %v4263
    %v4338 = vunpack.c.l.b16 %v4264
    %v4339 = vunpack.c.l.b16 %v4265
    %v4340 = vunpack.c.l.b16 %v4266
    %v4341 = vunpack.c.l.b16 %v4267
    %v4342 = vunpack.c.l.b16 %v4268
    %v4343 = vunpack.c.l.b16 %v4269
    %v4344 = vunpack.c.l.b16 %v4270
    %v4345 = vunpack.c.l.b16 %v4271
    %v4346 = vunpack.c.l.b16 %v4272
    %v4347 = vpack.c.b16 %v4311, %v4310
    %v4348 = vpack.c.b16 %v4313, %v4312
    %v4349 = vpack.c.b16 %v4315, %v4314
    %v4350 = vpack.c.b16 %v4317, %v4316
    %v4351 = vpack.c.b16 %v4319, %v4318
    %v4352 = vpack.c.b16 %v4321, %v4320
    %v4353 = vpack.c.b16 %v4323, %v4322
    %v4354 = vpack.c.b16 %v4325, %v4324
    %v4355 = vpack.c.b16 %v4327, %v4326
    %v4356 = vpack.c.b16 %v4329, %v4328
    %v4357 = vpack.c.b16 %v4331, %v4330
    %v4358 = vpack.c.b16 %v4333, %v4332
    %v4359 = vpack.c.b16 %v4335, %v4334
    %v4360 = vpack.c.b16 %v4337, %v4336
    %v4361 = vpack.c.b16 %v4339, %v4338
    %v4362 = vpack.c.b16 %v4341, %v4340
    %v4363 = vpack.c.b16 %v4343, %v4342
    %v4364 = vpack.c.b16 %v4345, %v4344
    %v4365 = vpack.c.b16 %v4346, %v4346
    %v4385 = vand.u32 %v4365, %v1670
    %4387 = vmatprep.subr.bf16.mxu0 0
    %4388 = vmatpush1.bf16.msra.mxu0 %v4354
    %4389 = vmatprep.subr.bf16.mxu0 0
    %4390 = vmatpush1.bf16.msra.mxu0 %v4353
    %4391 = vmatprep.subr.bf16.mxu0 0
    %4392 = vmatpush1.bf16.msra.mxu0 %v4352
    %4393 = vmatprep.subr.bf16.mxu0 0
    %4394 = vmatpush1.bf16.msra.mxu0 %v4351
    %4395 = vmatprep.subr.bf16.mxu0 0
    %4396 = vmatpush1.bf16.msra.mxu0 %v4350
    %4397 = vmatprep.subr.bf16.mxu0 0
    %4398 = vmatpush1.bf16.msra.mxu0 %v4349
    %4399 = vmatprep.subr.bf16.mxu0 0
    %4400 = vmatpush1.bf16.msra.mxu0 %v4348
    %4401 = vmatprep.subr.bf16.mxu0 0
    %4402 = vmatpush1.bf16.msra.mxu0 %v4347
    %4403 = vmatprep.subr.bf16.mxu0 0
    %4404 = vmatpush2.bf16.msra.mxu0 %v4362
    %4405 = vmatprep.subr.bf16.mxu0 0
    %4406 = vmatpush2.bf16.msra.mxu0 %v4361
    %4407 = vmatprep.subr.bf16.mxu0 0
    %4408 = vmatpush2.bf16.msra.mxu0 %v4360
    %4409 = vmatprep.subr.bf16.mxu0 0
    %4410 = vmatpush2.bf16.msra.mxu0 %v4359
    %4411 = vmatprep.subr.bf16.mxu0 0
    %4412 = vmatpush2.bf16.msra.mxu0 %v4358
    %4413 = vmatprep.subr.bf16.mxu0 0
    %4414 = vmatpush2.bf16.msra.mxu0 %v4357
    %4415 = vmatprep.subr.bf16.mxu0 0
    %4416 = vmatpush2.bf16.msra.mxu0 %v4356
    %4417 = vmatprep.subr.bf16.mxu0 0
    %4418 = vmatpush2.bf16.msra.mxu0 %v4355
    %4419 = vmatprep.mubr.bf16.mxu0 %v1505
    %4420 = vmatmul.mubr.bf16.gmra.mxu0 %v1504
    %v4421 = vpop.f32.mrf.mxu0
    %v4422 = vadd.f32 0.0, %v4421
    %v4423 = vpop.f32.mrf.mxu0
    %v4424 = vpop.f32.mrf.mxu0
    %v4425 = vadd.f32 0.0, %v4424
    %v4426 = vpop.f32.mrf.mxu0
    %4427 = vdwg.mxu0
    %4428 = vmatprep.subr.bf16.mxu0 0
    %4429 = vmatpush1.bf16.msra.mxu0 0
    %4430 = vmatprep.subr.bf16.mxu0 0
    %4431 = vmatpush1.bf16.msra.mxu0 0
    %4432 = vmatprep.subr.bf16.mxu0 0
    %4433 = vmatpush1.bf16.msra.mxu0 0
    %4434 = vmatprep.subr.bf16.mxu0 0
    %4435 = vmatpush1.bf16.msra.mxu0 0
    %4436 = vmatprep.subr.bf16.mxu0 0
    %4437 = vmatpush1.bf16.msra.mxu0 0
    %4438 = vmatprep.subr.bf16.mxu0 0
    %4439 = vmatpush1.bf16.msra.mxu0 %v4385
    %4440 = vmatprep.subr.bf16.mxu0 0
    %4441 = vmatpush1.bf16.msra.mxu0 %v4364
    %4442 = vmatprep.subr.bf16.mxu0 0
    %4443 = vmatpush1.bf16.msra.mxu0 %v4363
    %4444 = vmatprep.subr.bf16.mxu0 0
    %4445 = vmatpush2.bf16.msra.mxu0 0
    %4446 = vmatprep.subr.bf16.mxu0 0
    %4447 = vmatpush2.bf16.msra.mxu0 0
    %4448 = vmatprep.subr.bf16.mxu0 0
    %4449 = vmatpush2.bf16.msra.mxu0 0
    %4450 = vmatprep.subr.bf16.mxu0 0
    %4451 = vmatpush2.bf16.msra.mxu0 0
    %4452 = vmatprep.subr.bf16.mxu0 0
    %4453 = vmatpush2.bf16.msra.mxu0 0
    %4454 = vmatprep.subr.bf16.mxu0 0
    %4455 = vmatpush2.bf16.msra.mxu0 0
    %4456 = vmatprep.subr.bf16.mxu0 0
    %4457 = vmatpush2.bf16.msra.mxu0 0
    %4458 = vmatprep.subr.bf16.mxu0 0
    %4459 = vmatpush2.bf16.msra.mxu0 0
    %4460 = vmatprep.mubr.bf16.mxu0 0
    %4461 = vmatmul.mubr.bf16.gmra.mxu0 %v1666
    %v4462 = vpop.f32.mrf.mxu0
    %v4463 = vadd.f32 %v4422, %v4462
    %v4464 = vpop.f32.mrf.mxu0
    %v4465 = vpop.f32.mrf.mxu0
    %v4466 = vadd.f32 %v4425, %v4465
    %v4467 = vpop.f32.mrf.mxu0
    %4468 = vdwg.mxu0
    %v4470 = vsel %vm1995, %v4231, 0
    %v4473 = vsel %vm1995, %v4232, 0
    %v4476 = vsel %vm1995, %v4233, 0
    %v4479 = vsel %vm1995, %v4234, 0
    %4481 = vmatprep.subr.mxu0 0.0
    %4482 = vmatpush1.msra.mxu0 0.0
    %4483 = vmatprep.subr.mxu0 0.0
    %4484 = vmatpush1.msra.mxu0 0.0
    %4485 = vmatprep.subr.mxu0 0.0
    %4486 = vmatpush1.msra.mxu0 0.0
    %4487 = vmatprep.subr.mxu0 0.0
    %4488 = vmatpush1.msra.mxu0 0.0
    %4489 = vmatprep.subr.mxu0 0.0
    %4490 = vmatpush1.msra.mxu0 0.0
    %4491 = vmatprep.subr.mxu0 0.0
    %4492 = vmatpush1.msra.mxu0 0.0
    %4493 = vmatprep.subr.mxu0 0.0
    %4494 = vmatpush1.msra.mxu0 0.0
    %4495 = vmatprep.subr.mxu0 0.0
    %4496 = vmatpush1.msra.mxu0 0.0
    %4497 = vmatprep.subr.mxu0 0.0
    %4498 = vmatpush1.msra.mxu0 0.0
    %4499 = vmatprep.subr.mxu0 0.0
    %4500 = vmatpush1.msra.mxu0 0.0
    %4501 = vmatprep.subr.mxu0 0.0
    %4502 = vmatpush1.msra.mxu0 0.0
    %4503 = vmatprep.subr.mxu0 0.0
    %4504 = vmatpush1.msra.mxu0 0.0
    %4505 = vmatprep.subr.mxu0 0.0
    %4506 = vmatpush1.msra.mxu0 0.0
    %4507 = vmatprep.subr.mxu0 0.0
    %4508 = vmatpush1.msra.mxu0 0.0
    %4509 = vmatprep.subr.mxu0 0.0
    %4510 = vmatpush1.msra.mxu0 %v4466
    %4511 = vmatprep.subr.mxu0 0.0
    %4512 = vmatpush1.msra.mxu0 %v4463
    %4513 = vmatprep.subr.mxu0 0.0
    %4514 = vmatpush2.msra.mxu0 0.0
    %4515 = vmatprep.subr.mxu0 0.0
    %4516 = vmatpush2.msra.mxu0 0.0
    %4517 = vmatprep.subr.mxu0 0.0
    %4518 = vmatpush2.msra.mxu0 0.0
    %4519 = vmatprep.subr.mxu0 0.0
    %4520 = vmatpush2.msra.mxu0 0.0
    %4521 = vmatprep.subr.mxu0 0.0
    %4522 = vmatpush2.msra.mxu0 0.0
    %4523 = vmatprep.subr.mxu0 0.0
    %4524 = vmatpush2.msra.mxu0 0.0
    %4525 = vmatprep.subr.mxu0 0.0
    %4526 = vmatpush2.msra.mxu0 0.0
    %4527 = vmatprep.subr.mxu0 0.0
    %4528 = vmatpush2.msra.mxu0 0.0
    %4529 = vmatprep.subr.mxu0 0.0
    %4530 = vmatpush2.msra.mxu0 0.0
    %4531 = vmatprep.subr.mxu0 0.0
    %4532 = vmatpush2.msra.mxu0 0.0
    %4533 = vmatprep.subr.mxu0 0.0
    %4534 = vmatpush2.msra.mxu0 0.0
    %4535 = vmatprep.subr.mxu0 0.0
    %4536 = vmatpush2.msra.mxu0 0.0
    %4537 = vmatprep.subr.mxu0 0.0
    %4538 = vmatpush2.msra.mxu0 0.0
    %4539 = vmatprep.subr.mxu0 0.0
    %4540 = vmatpush2.msra.mxu0 0.0
    %4541 = vmatprep.subr.mxu0 0.0
    %4542 = vmatpush2.msra.mxu0 0.0
    %4543 = vmatprep.subr.mxu0 0.0
    %4544 = vmatpush2.msra.mxu0 0.0
    %4545 = vmatprep.mubr.f32.mxu0 0.0
    %4546 = vmatmul.mubr.f32.gmra.mxu0 %v4470
    %v4547 = vpop.f32.mrf.mxu0
    %v4548 = vadd.f32 0.0, %v4547
    %v4549 = vpop.f32.mrf.mxu0
    %4550 = vmatprep.mubr.f32.mxu0 0.0
    %4551 = vmatmul.mubr.f32.gmra.mxu0 %v4473
    %v4552 = vpop.f32.mrf.mxu0
    %v4553 = vadd.f32 0.0, %v4552
    %v4554 = vpop.f32.mrf.mxu0
    %4555 = vmatprep.mubr.f32.mxu0 0.0
    %4556 = vmatmul.mubr.f32.gmra.mxu0 %v4476
    %v4557 = vpop.f32.mrf.mxu0
    %v4558 = vadd.f32 0.0, %v4557
    %v4559 = vpop.f32.mrf.mxu0
    %4560 = vmatprep.mubr.f32.mxu0 0.0
    %4561 = vmatmul.mubr.f32.gmra.mxu0 %v4479
    %v4562 = vpop.f32.mrf.mxu0
    %v4563 = vadd.f32 0.0, %v4562
    %v4564 = vpop.f32.mrf.mxu0
    %4565 = vdwg.mxu0
    %v4566 = vadd.f32 %v4226, %v4548
    %v4567 = vadd.f32 %v4227, %v4553
    %v4568 = vadd.f32 %v4228, %v4558
    %v4569 = vadd.f32 %v4229, %v4563
    %v4570 = vld [vmem:[%s9] sm:$0xff]
    %v4571 = vld [vmem:[%s9 + $0x8] sm:$0xff]
    %v4572 = vld [vmem:[%s9 + $0x10] sm:$0xff]
    %v4573 = vld [vmem:[%s9 + $0x18] sm:$0xff]
    %4575 = vset.pattern.permute.xlu0 0
    %4576 = vperm.xlu0 %4575, %v4570
    %v4577 = vpop.permute.xlu0 %4576
    %4580 = vset.pattern.permute.xlu0 0
    %4581 = vperm.xlu0 %4580, %v4571
    %v4582 = vpop.permute.xlu0 %4581
    %4585 = vset.pattern.permute.xlu0 0
    %4586 = vperm.xlu0 %4585, %v4572
    %v4587 = vpop.permute.xlu0 %4586
    %4590 = vset.pattern.permute.xlu0 0
    %4591 = vperm.xlu0 %4590, %v4573
    %v4592 = vpop.permute.xlu0 %4591
    %v4594 = vadd.f32 %v4566, %v4577
    %v4595 = vadd.f32 %v4567, %v4582
    %v4596 = vadd.f32 %v4568, %v4587
    %v4597 = vadd.f32 %v4569, %v4592
    %s4598 = smul.u32 8, 13
    %s4599 = smul.u32 %s4598, 3
    %s4600 = sshll.u32 %s4599, 4
    %4601 = dma.done %s435, %s4600
    %v4602 = vld [vmem:[#allocation3] sm:$0xff]
    %v4603 = vld [vmem:[#allocation3 + $0x8] sm:$0xff]
    %v4604 = vld [vmem:[#allocation3 + $0x10] sm:$0xff]
    %v4605 = vld [vmem:[#allocation3 + $0x18] sm:$0xff]
    %v4606 = vld [vmem:[#allocation3 + $0x20] sm:$0xff]
    %v4607 = vld [vmem:[#allocation3 + $0x28] sm:$0xff]
    %v4608 = vld [vmem:[#allocation3 + $0x30] sm:$0xff]
    %v4609 = vld [vmem:[#allocation3 + $0x38] sm:$0xff]
    %v4610 = vld [vmem:[#allocation3 + $0x40] sm:$0xff]
    %v4611 = vld [vmem:[#allocation3 + $0x48] sm:$0xff]
    %v4612 = vld [vmem:[#allocation3 + $0x50] sm:$0xff]
    %v4613 = vld [vmem:[#allocation3 + $0x58] sm:$0xff]
    %v4614 = vld [vmem:[#allocation3 + $0x60] sm:$0xff]
    %v4615 = vld [vmem:[#allocation3 + $0x68] sm:$0xff]
    %v4616 = vld [vmem:[#allocation3 + $0x70] sm:$0xff]
    %v4617 = vld [vmem:[#allocation3 + $0x78] sm:$0xff]
    %v4618 = vld [vmem:[#allocation3 + $0x80] sm:$0xff]
    %v4619 = vld [vmem:[#allocation3 + $0x88] sm:$0xff]
    %v4620 = vld [vmem:[#allocation3 + $0x90] sm:$0xff]
    %v4621 = vld [vmem:[#allocation3 + $0x98] sm:$0xff]
    %v4622 = vld [vmem:[#allocation3 + $0xa0] sm:$0xff]
    %v4623 = vld [vmem:[#allocation3 + $0xa8] sm:$0xff]
    %v4624 = vld [vmem:[#allocation3 + $0xb0] sm:$0xff]
    %v4625 = vld [vmem:[#allocation3 + $0xb8] sm:$0xff]
    %v4626 = vld [vmem:[#allocation3 + $0xc0] sm:$0xff]
    %v4627 = vld [vmem:[#allocation3 + $0xc8] sm:$0xff]
    %v4628 = vld [vmem:[#allocation3 + $0xd0] sm:$0xff]
    %v4629 = vld [vmem:[#allocation3 + $0xd8] sm:$0xff]
    %v4630 = vld [vmem:[#allocation3 + $0xe0] sm:$0xff]
    %v4631 = vld [vmem:[#allocation3 + $0xe8] sm:$0xff]
    %v4632 = vld [vmem:[#allocation3 + $0xf0] sm:$0xff]
    %v4633 = vld [vmem:[#allocation3 + $0xf8] sm:$0xff]
    %v4634 = vld [vmem:[#allocation3 + $0x100] sm:$0xff]
    %v4635 = vld [vmem:[#allocation3 + $0x108] sm:$0xff]
    %v4636 = vld [vmem:[#allocation3 + $0x110] sm:$0xff]
    %v4637 = vld [vmem:[#allocation3 + $0x118] sm:$0xff]
    %v4638 = vld [vmem:[#allocation3 + $0x120] sm:$0xf]
    %v4639 = vld [vmem:[#allocation3 + $0x128] sm:$0xf]
    %v4640 = vld [vmem:[#allocation3 + $0x130] sm:$0xf]
    %vm4641 = vcmask 818176
    %v4643 = vsel %vm4641, %v4594, 0
    %v4646 = vsel %vm4641, %v4595, 0
    %v4649 = vsel %vm4641, %v4596, 0
    %v4652 = vsel %vm4641, %v4597, 0
    %v4655 = vsel %vm782, %v4638, 0
    %v4658 = vsel %vm782, %v4639, 0
    %v4661 = vsel %vm782, %v4640, 0
    %4663 = vmatprep.subr.mxu0 0.0
    %4664 = vmatpush1.msra.mxu0 0.0
    %4665 = vmatprep.subr.mxu0 0.0
    %4666 = vmatpush1.msra.mxu0 0.0
    %4667 = vmatprep.subr.mxu0 0.0
    %4668 = vmatpush1.msra.mxu0 0.0
    %4669 = vmatprep.subr.mxu0 %v4658
    %4670 = vmatpush1.msra.mxu0 %v4655
    %4671 = vmatprep.subr.mxu0 %v4636
    %4672 = vmatpush1.msra.mxu0 %v4635
    %4673 = vmatprep.subr.mxu0 %v4633
    %4674 = vmatpush1.msra.mxu0 %v4632
    %4675 = vmatprep.subr.mxu0 %v4630
    %4676 = vmatpush1.msra.mxu0 %v4629
    %4677 = vmatprep.subr.mxu0 %v4627
    %4678 = vmatpush1.msra.mxu0 %v4626
    %4679 = vmatprep.subr.mxu0 %v4624
    %4680 = vmatpush1.msra.mxu0 %v4623
    %4681 = vmatprep.subr.mxu0 %v4621
    %4682 = vmatpush1.msra.mxu0 %v4620
    %4683 = vmatprep.subr.mxu0 %v4618
    %4684 = vmatpush1.msra.mxu0 %v4617
    %4685 = vmatprep.subr.mxu0 %v4615
    %4686 = vmatpush1.msra.mxu0 %v4614
    %4687 = vmatprep.subr.mxu0 %v4612
    %4688 = vmatpush1.msra.mxu0 %v4611
    %4689 = vmatprep.subr.mxu0 %v4609
    %4690 = vmatpush1.msra.mxu0 %v4608
    %4691 = vmatprep.subr.mxu0 %v4606
    %4692 = vmatpush1.msra.mxu0 %v4605
    %4693 = vmatprep.subr.mxu0 %v4603
    %4694 = vmatpush1.msra.mxu0 %v4602
    %4695 = vmatprep.subr.mxu0 0.0
    %4696 = vmatpush2.msra.mxu0 0.0
    %4697 = vmatprep.subr.mxu0 0.0
    %4698 = vmatpush2.msra.mxu0 0.0
    %4699 = vmatprep.subr.mxu0 0.0
    %4700 = vmatpush2.msra.mxu0 0.0
    %4701 = vmatprep.subr.mxu0 0.0
    %4702 = vmatpush2.msra.mxu0 0.0
    %4703 = vmatprep.subr.mxu0 0.0
    %4704 = vmatpush2.msra.mxu0 0.0
    %4705 = vmatprep.subr.mxu0 0.0
    %4706 = vmatpush2.msra.mxu0 0.0
    %4707 = vmatprep.subr.mxu0 0.0
    %4708 = vmatpush2.msra.mxu0 0.0
    %4709 = vmatprep.subr.mxu0 0.0
    %4710 = vmatpush2.msra.mxu0 0.0
    %4711 = vmatprep.subr.mxu0 0.0
    %4712 = vmatpush2.msra.mxu0 0.0
    %4713 = vmatprep.subr.mxu0 0.0
    %4714 = vmatpush2.msra.mxu0 0.0
    %4715 = vmatprep.subr.mxu0 0.0
    %4716 = vmatpush2.msra.mxu0 0.0
    %4717 = vmatprep.subr.mxu0 0.0
    %4718 = vmatpush2.msra.mxu0 0.0
    %4719 = vmatprep.subr.mxu0 0.0
    %4720 = vmatpush2.msra.mxu0 0.0
    %4721 = vmatprep.subr.mxu0 0.0
    %4722 = vmatpush2.msra.mxu0 0.0
    %4723 = vmatprep.subr.mxu0 0.0
    %4724 = vmatpush2.msra.mxu0 0.0
    %4725 = vmatprep.subr.mxu0 0.0
    %4726 = vmatpush2.msra.mxu0 0.0
    %4727 = vmatprep.mubr.f32.mxu0 0.0
    %4728 = vmatmul.mubr.f32.gmra.mxu0 %v4643
    %v4729 = vpop.f32.mrf.mxu0
    %v4730 = vadd.f32 0.0, %v4729
    %v4731 = vpop.f32.mrf.mxu0
    %v4732 = vadd.f32 0.0, %v4731
    %4733 = vmatprep.mubr.f32.mxu0 0.0
    %4734 = vmatmul.mubr.f32.gmra.mxu0 %v4646
    %v4735 = vpop.f32.mrf.mxu0
    %v4736 = vadd.f32 0.0, %v4735
    %v4737 = vpop.f32.mrf.mxu0
    %v4738 = vadd.f32 0.0, %v4737
    %4739 = vmatprep.mubr.f32.mxu0 0.0
    %4740 = vmatmul.mubr.f32.gmra.mxu0 %v4649
    %v4741 = vpop.f32.mrf.mxu0
    %v4742 = vadd.f32 0.0, %v4741
    %v4743 = vpop.f32.mrf.mxu0
    %v4744 = vadd.f32 0.0, %v4743
    %4745 = vmatprep.mubr.f32.mxu0 0.0
    %4746 = vmatmul.mubr.f32.gmra.mxu0 %v4652
    %v4747 = vpop.f32.mrf.mxu0
    %v4748 = vadd.f32 0.0, %v4747
    %v4749 = vpop.f32.mrf.mxu0
    %v4750 = vadd.f32 0.0, %v4749
    %4751 = vdwg.mxu0
    %4752 = vmatprep.subr.mxu0 0.0
    %4753 = vmatpush1.msra.mxu0 0.0
    %4754 = vmatprep.subr.mxu0 0.0
    %4755 = vmatpush1.msra.mxu0 0.0
    %4756 = vmatprep.subr.mxu0 0.0
    %4757 = vmatpush1.msra.mxu0 0.0
    %4758 = vmatprep.subr.mxu0 0.0
    %4759 = vmatpush1.msra.mxu0 %v4661
    %4760 = vmatprep.subr.mxu0 0.0
    %4761 = vmatpush1.msra.mxu0 %v4637
    %4762 = vmatprep.subr.mxu0 0.0
    %4763 = vmatpush1.msra.mxu0 %v4634
    %4764 = vmatprep.subr.mxu0 0.0
    %4765 = vmatpush1.msra.mxu0 %v4631
    %4766 = vmatprep.subr.mxu0 0.0
    %4767 = vmatpush1.msra.mxu0 %v4628
    %4768 = vmatprep.subr.mxu0 0.0
    %4769 = vmatpush1.msra.mxu0 %v4625
    %4770 = vmatprep.subr.mxu0 0.0
    %4771 = vmatpush1.msra.mxu0 %v4622
    %4772 = vmatprep.subr.mxu0 0.0
    %4773 = vmatpush1.msra.mxu0 %v4619
    %4774 = vmatprep.subr.mxu0 0.0
    %4775 = vmatpush1.msra.mxu0 %v4616
    %4776 = vmatprep.subr.mxu0 0.0
    %4777 = vmatpush1.msra.mxu0 %v4613
    %4778 = vmatprep.subr.mxu0 0.0
    %4779 = vmatpush1.msra.mxu0 %v4610
    %4780 = vmatprep.subr.mxu0 0.0
    %4781 = vmatpush1.msra.mxu0 %v4607
    %4782 = vmatprep.subr.mxu0 0.0
    %4783 = vmatpush1.msra.mxu0 %v4604
    %4784 = vmatprep.subr.mxu0 0.0
    %4785 = vmatpush2.msra.mxu0 0.0
    %4786 = vmatprep.subr.mxu0 0.0
    %4787 = vmatpush2.msra.mxu0 0.0
    %4788 = vmatprep.subr.mxu0 0.0
    %4789 = vmatpush2.msra.mxu0 0.0
    %4790 = vmatprep.subr.mxu0 0.0
    %4791 = vmatpush2.msra.mxu0 0.0
    %4792 = vmatprep.subr.mxu0 0.0
    %4793 = vmatpush2.msra.mxu0 0.0
    %4794 = vmatprep.subr.mxu0 0.0
    %4795 = vmatpush2.msra.mxu0 0.0
    %4796 = vmatprep.subr.mxu0 0.0
    %4797 = vmatpush2.msra.mxu0 0.0
    %4798 = vmatprep.subr.mxu0 0.0
    %4799 = vmatpush2.msra.mxu0 0.0
    %4800 = vmatprep.subr.mxu0 0.0
    %4801 = vmatpush2.msra.mxu0 0.0
    %4802 = vmatprep.subr.mxu0 0.0
    %4803 = vmatpush2.msra.mxu0 0.0
    %4804 = vmatprep.subr.mxu0 0.0
    %4805 = vmatpush2.msra.mxu0 0.0
    %4806 = vmatprep.subr.mxu0 0.0
    %4807 = vmatpush2.msra.mxu0 0.0
    %4808 = vmatprep.subr.mxu0 0.0
    %4809 = vmatpush2.msra.mxu0 0.0
    %4810 = vmatprep.subr.mxu0 0.0
    %4811 = vmatpush2.msra.mxu0 0.0
    %4812 = vmatprep.subr.mxu0 0.0
    %4813 = vmatpush2.msra.mxu0 0.0
    %4814 = vmatprep.subr.mxu0 0.0
    %4815 = vmatpush2.msra.mxu0 0.0
    %4816 = vmatprep.mubr.f32.mxu0 0.0
    %4817 = vmatmul.mubr.f32.gmra.mxu0 %v4643
    %v4818 = vpop.f32.mrf.mxu0
    %v4819 = vadd.f32 0.0, %v4818
    %v4820 = vpop.f32.mrf.mxu0
    %4821 = vmatprep.mubr.f32.mxu0 0.0
    %4822 = vmatmul.mubr.f32.gmra.mxu0 %v4646
    %v4823 = vpop.f32.mrf.mxu0
    %v4824 = vadd.f32 0.0, %v4823
    %v4825 = vpop.f32.mrf.mxu0
    %4826 = vmatprep.mubr.f32.mxu0 0.0
    %4827 = vmatmul.mubr.f32.gmra.mxu0 %v4649
    %v4828 = vpop.f32.mrf.mxu0
    %v4829 = vadd.f32 0.0, %v4828
    %v4830 = vpop.f32.mrf.mxu0
    %4831 = vmatprep.mubr.f32.mxu0 0.0
    %4832 = vmatmul.mubr.f32.gmra.mxu0 %v4652
    %v4833 = vpop.f32.mrf.mxu0
    %v4834 = vadd.f32 0.0, %v4833
    %v4835 = vpop.f32.mrf.mxu0
    %4836 = vdwg.mxu0
    %v4837 = vadd.f32 %v1388, %v4730
    %v4838 = vadd.f32 %v1389, %v4732
    %v4839 = vadd.f32 %v1390, %v4819
    %v4840 = vadd.f32 %v1394, %v4736
    %v4841 = vadd.f32 %v1395, %v4738
    %v4842 = vadd.f32 %v1396, %v4824
    %v4843 = vadd.f32 %v1477, %v4742
    %v4844 = vadd.f32 %v1478, %v4744
    %v4845 = vadd.f32 %v1479, %v4829
    %v4846 = vadd.f32 %v1480, %v4748
    %v4847 = vadd.f32 %v1481, %v4750
    %v4848 = vadd.f32 %v1482, %v4834
    %v4849 = vmax.f32 %v4837, 0.0
    %v4850 = vmax.f32 %v4838, 0.0
    %v4851 = vmax.f32 %v4839, 0.0
    %v4852 = vmax.f32 %v4840, 0.0
    %v4853 = vmax.f32 %v4841, 0.0
    %v4854 = vmax.f32 %v4842, 0.0
    %v4855 = vmax.f32 %v4843, 0.0
    %v4856 = vmax.f32 %v4844, 0.0
    %v4857 = vmax.f32 %v4845, 0.0
    %v4858 = vmax.f32 %v4846, 0.0
    %v4859 = vmax.f32 %v4847, 0.0
    %v4860 = vmax.f32 %v4848, 0.0
    %s4861 = smul.u32 4, 4
    %s4862 = smul.u32 %s4861, 41
    %s4863 = smul.u32 %s4862, 1
    %s4864 = sshll.u32 %s4863, 4
    %4865 = dma.done %s555, %s4864
    %v4866 = vpack.c.bf16 %v4852, %v4849
    %v4867 = vpack.c.bf16 %v4853, %v4850
    %v4868 = vpack.c.bf16 %v4854, %v4851
    %v4869 = vpack.c.bf16 %v4858, %v4855
    %v4870 = vpack.c.bf16 %v4859, %v4856
    %v4871 = vpack.c.bf16 %v4860, %v4857
    %v4872 = vld [vmem:[#allocation4] sm:$0xf]
    %v4873 = vld [vmem:[#allocation4 + $0x4] sm:$0xf]
    %v4874 = vld [vmem:[#allocation4 + $0x8] sm:$0xf]
    %v4875 = vld [vmem:[#allocation4 + $0xc] sm:$0xf]
    %v4876 = vld [vmem:[#allocation4 + $0x10] sm:$0xf]
    %v4877 = vld [vmem:[#allocation4 + $0x14] sm:$0xf]
    %v4878 = vld [vmem:[#allocation4 + $0x18] sm:$0xf]
    %v4879 = vld [vmem:[#allocation4 + $0x1c] sm:$0xf]
    %v4880 = vld [vmem:[#allocation4 + $0x20] sm:$0xf]
    %v4881 = vld [vmem:[#allocation4 + $0x24] sm:$0xf]
    %v4882 = vld [vmem:[#allocation4 + $0x28] sm:$0xf]
    %v4883 = vld [vmem:[#allocation4 + $0x2c] sm:$0xf]
    %v4884 = vld [vmem:[#allocation4 + $0x30] sm:$0xf]
    %v4885 = vld [vmem:[#allocation4 + $0x34] sm:$0xf]
    %v4886 = vld [vmem:[#allocation4 + $0x38] sm:$0xf]
    %v4887 = vld [vmem:[#allocation4 + $0x3c] sm:$0xf]
    %v4888 = vld [vmem:[#allocation4 + $0x40] sm:$0xf]
    %v4889 = vld [vmem:[#allocation4 + $0x44] sm:$0xf]
    %v4890 = vld [vmem:[#allocation4 + $0x48] sm:$0xf]
    %v4891 = vld [vmem:[#allocation4 + $0x4c] sm:$0xf]
    %v4892 = vld [vmem:[#allocation4 + $0x50] sm:$0xf]
    %v4893 = vld [vmem:[#allocation4 + $0x54] sm:$0xf]
    %v4894 = vld [vmem:[#allocation4 + $0x58] sm:$0xf]
    %v4895 = vld [vmem:[#allocation4 + $0x5c] sm:$0xf]
    %v4896 = vld [vmem:[#allocation4 + $0x60] sm:$0xf]
    %v4897 = vld [vmem:[#allocation4 + $0x64] sm:$0xf]
    %v4898 = vld [vmem:[#allocation4 + $0x68] sm:$0xf]
    %v4899 = vld [vmem:[#allocation4 + $0x6c] sm:$0xf]
    %v4900 = vld [vmem:[#allocation4 + $0x70] sm:$0xf]
    %v4901 = vld [vmem:[#allocation4 + $0x74] sm:$0xf]
    %v4902 = vld [vmem:[#allocation4 + $0x78] sm:$0xf]
    %v4903 = vld [vmem:[#allocation4 + $0x7c] sm:$0xf]
    %v4904 = vld [vmem:[#allocation4 + $0x80] sm:$0xf]
    %v4905 = vld [vmem:[#allocation4 + $0x84] sm:$0xf]
    %v4906 = vld [vmem:[#allocation4 + $0x88] sm:$0xf]
    %v4907 = vld [vmem:[#allocation4 + $0x8c] sm:$0xf]
    %v4908 = vld [vmem:[#allocation4 + $0x90] sm:$0xf]
    %v4909 = vld [vmem:[#allocation4 + $0x94] sm:$0xf]
    %v4910 = vld [vmem:[#allocation4 + $0x98] sm:$0xf]
    %v4911 = vld [vmem:[#allocation4 + $0x9c] sm:$0xf]
    %v4912 = vld [vmem:[#allocation4 + $0xa0] sm:$0x3]
    %v4954 = vunpack.c.l.b16 %v4872
    %v4955 = vunpack.c.l.b16 %v4873
    %v4956 = vunpack.c.l.b16 %v4874
    %v4957 = vunpack.c.l.b16 %v4875
    %v4958 = vunpack.c.l.b16 %v4876
    %v4959 = vunpack.c.l.b16 %v4877
    %v4960 = vunpack.c.l.b16 %v4878
    %v4961 = vunpack.c.l.b16 %v4879
    %v4962 = vunpack.c.l.b16 %v4880
    %v4963 = vunpack.c.l.b16 %v4881
    %v4964 = vunpack.c.l.b16 %v4882
    %v4965 = vunpack.c.l.b16 %v4883
    %v4966 = vunpack.c.l.b16 %v4884
    %v4967 = vunpack.c.l.b16 %v4885
    %v4968 = vunpack.c.l.b16 %v4886
    %v4969 = vunpack.c.l.b16 %v4887
    %v4970 = vunpack.c.l.b16 %v4888
    %v4971 = vunpack.c.l.b16 %v4889
    %v4972 = vunpack.c.l.b16 %v4890
    %v4973 = vunpack.c.l.b16 %v4891
    %v4974 = vunpack.c.l.b16 %v4892
    %v4975 = vunpack.c.l.b16 %v4893
    %v4976 = vunpack.c.l.b16 %v4894
    %v4977 = vunpack.c.l.b16 %v4895
    %v4978 = vunpack.c.l.b16 %v4896
    %v4979 = vunpack.c.l.b16 %v4897
    %v4980 = vunpack.c.l.b16 %v4898
    %v4981 = vunpack.c.l.b16 %v4899
    %v4982 = vunpack.c.l.b16 %v4900
    %v4983 = vunpack.c.l.b16 %v4901
    %v4984 = vunpack.c.l.b16 %v4902
    %v4985 = vunpack.c.l.b16 %v4903
    %v4986 = vunpack.c.l.b16 %v4904
    %v4987 = vunpack.c.l.b16 %v4905
    %v4988 = vunpack.c.l.b16 %v4906
    %v4989 = vunpack.c.l.b16 %v4907
    %v4990 = vunpack.c.l.b16 %v4908
    %v4991 = vunpack.c.l.b16 %v4909
    %v4992 = vunpack.c.l.b16 %v4910
    %v4993 = vunpack.c.l.b16 %v4911
    %v4994 = vunpack.c.l.b16 %v4912
    %v4995 = vpack.c.b16 %v4955, %v4954
    %v4996 = vpack.c.b16 %v4957, %v4956
    %v4997 = vpack.c.b16 %v4959, %v4958
    %v4998 = vpack.c.b16 %v4961, %v4960
    %v4999 = vpack.c.b16 %v4963, %v4962
    %v5000 = vpack.c.b16 %v4965, %v4964
    %v5001 = vpack.c.b16 %v4967, %v4966
    %v5002 = vpack.c.b16 %v4969, %v4968
    %v5003 = vpack.c.b16 %v4971, %v4970
    %v5004 = vpack.c.b16 %v4973, %v4972
    %v5005 = vpack.c.b16 %v4975, %v4974
    %v5006 = vpack.c.b16 %v4977, %v4976
    %v5007 = vpack.c.b16 %v4979, %v4978
    %v5008 = vpack.c.b16 %v4981, %v4980
    %v5009 = vpack.c.b16 %v4983, %v4982
    %v5010 = vpack.c.b16 %v4985, %v4984
    %v5011 = vpack.c.b16 %v4987, %v4986
    %v5012 = vpack.c.b16 %v4989, %v4988
    %v5013 = vpack.c.b16 %v4991, %v4990
    %v5014 = vpack.c.b16 %v4993, %v4992
    %v5015 = vpack.c.b16 %v4994, %v4994
    %vm5036 = vcmask 556032
    %v5038 = vsel %vm5036, %v4868, 0
    %v5041 = vsel %vm5036, %v4871, 0
    %vm5043 = vcmask 1041408
    %v5045 = vsel %vm5043, %v5015, 0
    %5047 = vmatprep.subr.bf16.mxu0 0
    %5048 = vmatpush1.bf16.msra.mxu0 %v5002
    %5049 = vmatprep.subr.bf16.mxu0 0
    %5050 = vmatpush1.bf16.msra.mxu0 %v5001
    %5051 = vmatprep.subr.bf16.mxu0 0
    %5052 = vmatpush1.bf16.msra.mxu0 %v5000
    %5053 = vmatprep.subr.bf16.mxu0 0
    %5054 = vmatpush1.bf16.msra.mxu0 %v4999
    %5055 = vmatprep.subr.bf16.mxu0 0
    %5056 = vmatpush1.bf16.msra.mxu0 %v4998
    %5057 = vmatprep.subr.bf16.mxu0 0
    %5058 = vmatpush1.bf16.msra.mxu0 %v4997
    %5059 = vmatprep.subr.bf16.mxu0 0
    %5060 = vmatpush1.bf16.msra.mxu0 %v4996
    %5061 = vmatprep.subr.bf16.mxu0 0
    %5062 = vmatpush1.bf16.msra.mxu0 %v4995
    %5063 = vmatprep.subr.bf16.mxu0 0
    %5064 = vmatpush2.bf16.msra.mxu0 %v5010
    %5065 = vmatprep.subr.bf16.mxu0 0
    %5066 = vmatpush2.bf16.msra.mxu0 %v5009
    %5067 = vmatprep.subr.bf16.mxu0 0
    %5068 = vmatpush2.bf16.msra.mxu0 %v5008
    %5069 = vmatprep.subr.bf16.mxu0 0
    %5070 = vmatpush2.bf16.msra.mxu0 %v5007
    %5071 = vmatprep.subr.bf16.mxu0 0
    %5072 = vmatpush2.bf16.msra.mxu0 %v5006
    %5073 = vmatprep.subr.bf16.mxu0 0
    %5074 = vmatpush2.bf16.msra.mxu0 %v5005
    %5075 = vmatprep.subr.bf16.mxu0 0
    %5076 = vmatpush2.bf16.msra.mxu0 %v5004
    %5077 = vmatprep.subr.bf16.mxu0 0
    %5078 = vmatpush2.bf16.msra.mxu0 %v5003
    %5079 = vmatprep.mubr.bf16.mxu0 %v4867
    %5080 = vmatmul.mubr.bf16.gmra.mxu0 %v4866
    %v5081 = vpop.f32.mrf.mxu0
    %v5082 = vadd.f32 0.0, %v5081
    %v5083 = vpop.f32.mrf.mxu0
    %v5084 = vpop.f32.mrf.mxu0
    %v5085 = vadd.f32 0.0, %v5084
    %v5086 = vpop.f32.mrf.mxu0
    %5087 = vmatprep.mubr.bf16.mxu0 %v4870
    %5088 = vmatmul.mubr.bf16.gmra.mxu0 %v4869
    %v5089 = vpop.f32.mrf.mxu0
    %v5090 = vadd.f32 0.0, %v5089
    %v5091 = vpop.f32.mrf.mxu0
    %v5092 = vpop.f32.mrf.mxu0
    %v5093 = vadd.f32 0.0, %v5092
    %v5094 = vpop.f32.mrf.mxu0
    %5095 = vdwg.mxu0
    %5096 = vmatprep.subr.bf16.mxu0 0
    %5097 = vmatpush1.bf16.msra.mxu0 0
    %5098 = vmatprep.subr.bf16.mxu0 0
    %5099 = vmatpush1.bf16.msra.mxu0 0
    %5100 = vmatprep.subr.bf16.mxu0 0
    %5101 = vmatpush1.bf16.msra.mxu0 0
    %5102 = vmatprep.subr.bf16.mxu0 0
    %5103 = vmatpush1.bf16.msra.mxu0 %v5045
    %5104 = vmatprep.subr.bf16.mxu0 0
    %5105 = vmatpush1.bf16.msra.mxu0 %v5014
    %5106 = vmatprep.subr.bf16.mxu0 0
    %5107 = vmatpush1.bf16.msra.mxu0 %v5013
    %5108 = vmatprep.subr.bf16.mxu0 0
    %5109 = vmatpush1.bf16.msra.mxu0 %v5012
    %5110 = vmatprep.subr.bf16.mxu0 0
    %5111 = vmatpush1.bf16.msra.mxu0 %v5011
    %5112 = vmatprep.subr.bf16.mxu0 0
    %5113 = vmatpush2.bf16.msra.mxu0 0
    %5114 = vmatprep.subr.bf16.mxu0 0
    %5115 = vmatpush2.bf16.msra.mxu0 0
    %5116 = vmatprep.subr.bf16.mxu0 0
    %5117 = vmatpush2.bf16.msra.mxu0 0
    %5118 = vmatprep.subr.bf16.mxu0 0
    %5119 = vmatpush2.bf16.msra.mxu0 0
    %5120 = vmatprep.subr.bf16.mxu0 0
    %5121 = vmatpush2.bf16.msra.mxu0 0
    %5122 = vmatprep.subr.bf16.mxu0 0
    %5123 = vmatpush2.bf16.msra.mxu0 0
    %5124 = vmatprep.subr.bf16.mxu0 0
    %5125 = vmatpush2.bf16.msra.mxu0 0
    %5126 = vmatprep.subr.bf16.mxu0 0
    %5127 = vmatpush2.bf16.msra.mxu0 0
    %5128 = vmatprep.mubr.bf16.mxu0 0
    %5129 = vmatmul.mubr.bf16.gmra.mxu0 %v5038
    %v5130 = vpop.f32.mrf.mxu0
    %v5131 = vadd.f32 %v5082, %v5130
    %v5132 = vpop.f32.mrf.mxu0
    %v5133 = vpop.f32.mrf.mxu0
    %v5134 = vadd.f32 %v5085, %v5133
    %v5135 = vpop.f32.mrf.mxu0
    %5136 = vmatprep.mubr.bf16.mxu0 0
    %5137 = vmatmul.mubr.bf16.gmra.mxu0 %v5041
    %v5138 = vpop.f32.mrf.mxu0
    %v5139 = vadd.f32 %v5090, %v5138
    %v5140 = vpop.f32.mrf.mxu0
    %v5141 = vpop.f32.mrf.mxu0
    %v5142 = vadd.f32 %v5093, %v5141
    %v5143 = vpop.f32.mrf.mxu0
    %5144 = vdwg.mxu0
    %s5145 = scalar_lea.vmem [#allocation4], 164
    %v5146 = vld [vmem:[%s5145] sm:$0xf]
    %v5147 = vld [vmem:[%s5145 + $0x4] sm:$0xf]
    %v5148 = vld [vmem:[%s5145 + $0x8] sm:$0xf]
    %v5149 = vld [vmem:[%s5145 + $0xc] sm:$0xf]
    %v5150 = vld [vmem:[%s5145 + $0x10] sm:$0xf]
    %v5151 = vld [vmem:[%s5145 + $0x14] sm:$0xf]
    %v5152 = vld [vmem:[%s5145 + $0x18] sm:$0xf]
    %v5153 = vld [vmem:[%s5145 + $0x1c] sm:$0xf]
    %v5154 = vld [vmem:[%s5145 + $0x20] sm:$0xf]
    %v5155 = vld [vmem:[%s5145 + $0x24] sm:$0xf]
    %v5156 = vld [vmem:[%s5145 + $0x28] sm:$0xf]
    %v5157 = vld [vmem:[%s5145 + $0x2c] sm:$0xf]
    %v5158 = vld [vmem:[%s5145 + $0x30] sm:$0xf]
    %v5159 = vld [vmem:[%s5145 + $0x34] sm:$0xf]
    %v5160 = vld [vmem:[%s5145 + $0x38] sm:$0xf]
    %v5161 = vld [vmem:[%s5145 + $0x3c] sm:$0xf]
    %v5162 = vld [vmem:[%s5145 + $0x40] sm:$0xf]
    %v5163 = vld [vmem:[%s5145 + $0x44] sm:$0xf]
    %v5164 = vld [vmem:[%s5145 + $0x48] sm:$0xf]
    %v5165 = vld [vmem:[%s5145 + $0x4c] sm:$0xf]
    %v5166 = vld [vmem:[%s5145 + $0x50] sm:$0xf]
    %v5167 = vld [vmem:[%s5145 + $0x54] sm:$0xf]
    %v5168 = vld [vmem:[%s5145 + $0x58] sm:$0xf]
    %v5169 = vld [vmem:[%s5145 + $0x5c] sm:$0xf]
    %v5170 = vld [vmem:[%s5145 + $0x60] sm:$0xf]
    %v5171 = vld [vmem:[%s5145 + $0x64] sm:$0xf]
    %v5172 = vld [vmem:[%s5145 + $0x68] sm:$0xf]
    %v5173 = vld [vmem:[%s5145 + $0x6c] sm:$0xf]
    %v5174 = vld [vmem:[%s5145 + $0x70] sm:$0xf]
    %v5175 = vld [vmem:[%s5145 + $0x74] sm:$0xf]
    %v5176 = vld [vmem:[%s5145 + $0x78] sm:$0xf]
    %v5177 = vld [vmem:[%s5145 + $0x7c] sm:$0xf]
    %v5178 = vld [vmem:[%s5145 + $0x80] sm:$0xf]
    %v5179 = vld [vmem:[%s5145 + $0x84] sm:$0xf]
    %v5180 = vld [vmem:[%s5145 + $0x88] sm:$0xf]
    %v5181 = vld [vmem:[%s5145 + $0x8c] sm:$0xf]
    %v5182 = vld [vmem:[%s5145 + $0x90] sm:$0xf]
    %v5183 = vld [vmem:[%s5145 + $0x94] sm:$0xf]
    %v5184 = vld [vmem:[%s5145 + $0x98] sm:$0xf]
    %v5185 = vld [vmem:[%s5145 + $0x9c] sm:$0xf]
    %v5186 = vld [vmem:[%s5145 + $0xa0] sm:$0x3]
    %v5228 = vunpack.c.l.b16 %v5146
    %v5229 = vunpack.c.l.b16 %v5147
    %v5230 = vunpack.c.l.b16 %v5148
    %v5231 = vunpack.c.l.b16 %v5149
    %v5232 = vunpack.c.l.b16 %v5150
    %v5233 = vunpack.c.l.b16 %v5151
    %v5234 = vunpack.c.l.b16 %v5152
    %v5235 = vunpack.c.l.b16 %v5153
    %v5236 = vunpack.c.l.b16 %v5154
    %v5237 = vunpack.c.l.b16 %v5155
    %v5238 = vunpack.c.l.b16 %v5156
    %v5239 = vunpack.c.l.b16 %v5157
    %v5240 = vunpack.c.l.b16 %v5158
    %v5241 = vunpack.c.l.b16 %v5159
    %v5242 = vunpack.c.l.b16 %v5160
    %v5243 = vunpack.c.l.b16 %v5161
    %v5244 = vunpack.c.l.b16 %v5162
    %v5245 = vunpack.c.l.b16 %v5163
    %v5246 = vunpack.c.l.b16 %v5164
    %v5247 = vunpack.c.l.b16 %v5165
    %v5248 = vunpack.c.l.b16 %v5166
    %v5249 = vunpack.c.l.b16 %v5167
    %v5250 = vunpack.c.l.b16 %v5168
    %v5251 = vunpack.c.l.b16 %v5169
    %v5252 = vunpack.c.l.b16 %v5170
    %v5253 = vunpack.c.l.b16 %v5171
    %v5254 = vunpack.c.l.b16 %v5172
    %v5255 = vunpack.c.l.b16 %v5173
    %v5256 = vunpack.c.l.b16 %v5174
    %v5257 = vunpack.c.l.b16 %v5175
    %v5258 = vunpack.c.l.b16 %v5176
    %v5259 = vunpack.c.l.b16 %v5177
    %v5260 = vunpack.c.l.b16 %v5178
    %v5261 = vunpack.c.l.b16 %v5179
    %v5262 = vunpack.c.l.b16 %v5180
    %v5263 = vunpack.c.l.b16 %v5181
    %v5264 = vunpack.c.l.b16 %v5182
    %v5265 = vunpack.c.l.b16 %v5183
    %v5266 = vunpack.c.l.b16 %v5184
    %v5267 = vunpack.c.l.b16 %v5185
    %v5268 = vunpack.c.l.b16 %v5186
    %v5269 = vpack.c.b16 %v5229, %v5228
    %v5270 = vpack.c.b16 %v5231, %v5230
    %v5271 = vpack.c.b16 %v5233, %v5232
    %v5272 = vpack.c.b16 %v5235, %v5234
    %v5273 = vpack.c.b16 %v5237, %v5236
    %v5274 = vpack.c.b16 %v5239, %v5238
    %v5275 = vpack.c.b16 %v5241, %v5240
    %v5276 = vpack.c.b16 %v5243, %v5242
    %v5277 = vpack.c.b16 %v5245, %v5244
    %v5278 = vpack.c.b16 %v5247, %v5246
    %v5279 = vpack.c.b16 %v5249, %v5248
    %v5280 = vpack.c.b16 %v5251, %v5250
    %v5281 = vpack.c.b16 %v5253, %v5252
    %v5282 = vpack.c.b16 %v5255, %v5254
    %v5283 = vpack.c.b16 %v5257, %v5256
    %v5284 = vpack.c.b16 %v5259, %v5258
    %v5285 = vpack.c.b16 %v5261, %v5260
    %v5286 = vpack.c.b16 %v5263, %v5262
    %v5287 = vpack.c.b16 %v5265, %v5264
    %v5288 = vpack.c.b16 %v5267, %v5266
    %v5289 = vpack.c.b16 %v5268, %v5268
    %v5311 = vsel %vm5043, %v5289, 0
    %5313 = vmatprep.subr.bf16.mxu0 0
    %5314 = vmatpush1.bf16.msra.mxu0 %v5276
    %5315 = vmatprep.subr.bf16.mxu0 0
    %5316 = vmatpush1.bf16.msra.mxu0 %v5275
    %5317 = vmatprep.subr.bf16.mxu0 0
    %5318 = vmatpush1.bf16.msra.mxu0 %v5274
    %5319 = vmatprep.subr.bf16.mxu0 0
    %5320 = vmatpush1.bf16.msra.mxu0 %v5273
    %5321 = vmatprep.subr.bf16.mxu0 0
    %5322 = vmatpush1.bf16.msra.mxu0 %v5272
    %5323 = vmatprep.subr.bf16.mxu0 0
    %5324 = vmatpush1.bf16.msra.mxu0 %v5271
    %5325 = vmatprep.subr.bf16.mxu0 0
    %5326 = vmatpush1.bf16.msra.mxu0 %v5270
    %5327 = vmatprep.subr.bf16.mxu0 0
    %5328 = vmatpush1.bf16.msra.mxu0 %v5269
    %5329 = vmatprep.subr.bf16.mxu0 0
    %5330 = vmatpush2.bf16.msra.mxu0 %v5284
    %5331 = vmatprep.subr.bf16.mxu0 0
    %5332 = vmatpush2.bf16.msra.mxu0 %v5283
    %5333 = vmatprep.subr.bf16.mxu0 0
    %5334 = vmatpush2.bf16.msra.mxu0 %v5282
    %5335 = vmatprep.subr.bf16.mxu0 0
    %5336 = vmatpush2.bf16.msra.mxu0 %v5281
    %5337 = vmatprep.subr.bf16.mxu0 0
    %5338 = vmatpush2.bf16.msra.mxu0 %v5280
    %5339 = vmatprep.subr.bf16.mxu0 0
    %5340 = vmatpush2.bf16.msra.mxu0 %v5279
    %5341 = vmatprep.subr.bf16.mxu0 0
    %5342 = vmatpush2.bf16.msra.mxu0 %v5278
    %5343 = vmatprep.subr.bf16.mxu0 0
    %5344 = vmatpush2.bf16.msra.mxu0 %v5277
    %5345 = vmatprep.mubr.bf16.mxu0 %v4867
    %5346 = vmatmul.mubr.bf16.gmra.mxu0 %v4866
    %v5347 = vpop.f32.mrf.mxu0
    %v5348 = vadd.f32 0.0, %v5347
    %v5349 = vpop.f32.mrf.mxu0
    %v5350 = vpop.f32.mrf.mxu0
    %v5351 = vadd.f32 0.0, %v5350
    %v5352 = vpop.f32.mrf.mxu0
    %5353 = vmatprep.mubr.bf16.mxu0 %v4870
    %5354 = vmatmul.mubr.bf16.gmra.mxu0 %v4869
    %v5355 = vpop.f32.mrf.mxu0
    %v5356 = vadd.f32 0.0, %v5355
    %v5357 = vpop.f32.mrf.mxu0
    %v5358 = vpop.f32.mrf.mxu0
    %v5359 = vadd.f32 0.0, %v5358
    %v5360 = vpop.f32.mrf.mxu0
    %5361 = vdwg.mxu0
    %5362 = vmatprep.subr.bf16.mxu0 0
    %5363 = vmatpush1.bf16.msra.mxu0 0
    %5364 = vmatprep.subr.bf16.mxu0 0
    %5365 = vmatpush1.bf16.msra.mxu0 0
    %5366 = vmatprep.subr.bf16.mxu0 0
    %5367 = vmatpush1.bf16.msra.mxu0 0
    %5368 = vmatprep.subr.bf16.mxu0 0
    %5369 = vmatpush1.bf16.msra.mxu0 %v5311
    %5370 = vmatprep.subr.bf16.mxu0 0
    %5371 = vmatpush1.bf16.msra.mxu0 %v5288
    %5372 = vmatprep.subr.bf16.mxu0 0
    %5373 = vmatpush1.bf16.msra.mxu0 %v5287
    %5374 = vmatprep.subr.bf16.mxu0 0
    %5375 = vmatpush1.bf16.msra.mxu0 %v5286
    %5376 = vmatprep.subr.bf16.mxu0 0
    %5377 = vmatpush1.bf16.msra.mxu0 %v5285
    %5378 = vmatprep.subr.bf16.mxu0 0
    %5379 = vmatpush2.bf16.msra.mxu0 0
    %5380 = vmatprep.subr.bf16.mxu0 0
    %5381 = vmatpush2.bf16.msra.mxu0 0
    %5382 = vmatprep.subr.bf16.mxu0 0
    %5383 = vmatpush2.bf16.msra.mxu0 0
    %5384 = vmatprep.subr.bf16.mxu0 0
    %5385 = vmatpush2.bf16.msra.mxu0 0
    %5386 = vmatprep.subr.bf16.mxu0 0
    %5387 = vmatpush2.bf16.msra.mxu0 0
    %5388 = vmatprep.subr.bf16.mxu0 0
    %5389 = vmatpush2.bf16.msra.mxu0 0
    %5390 = vmatprep.subr.bf16.mxu0 0
    %5391 = vmatpush2.bf16.msra.mxu0 0
    %5392 = vmatprep.subr.bf16.mxu0 0
    %5393 = vmatpush2.bf16.msra.mxu0 0
    %5394 = vmatprep.mubr.bf16.mxu0 0
    %5395 = vmatmul.mubr.bf16.gmra.mxu0 %v5038
    %v5396 = vpop.f32.mrf.mxu0
    %v5397 = vadd.f32 %v5348, %v5396
    %v5398 = vpop.f32.mrf.mxu0
    %v5399 = vpop.f32.mrf.mxu0
    %v5400 = vadd.f32 %v5351, %v5399
    %v5401 = vpop.f32.mrf.mxu0
    %5402 = vmatprep.mubr.bf16.mxu0 0
    %5403 = vmatmul.mubr.bf16.gmra.mxu0 %v5041
    %v5404 = vpop.f32.mrf.mxu0
    %v5405 = vadd.f32 %v5356, %v5404
    %v5406 = vpop.f32.mrf.mxu0
    %v5407 = vpop.f32.mrf.mxu0
    %v5408 = vadd.f32 %v5359, %v5407
    %v5409 = vpop.f32.mrf.mxu0
    %5410 = vdwg.mxu0
    %v5411 = vmax.f32 %v5131, %v5397
    %v5412 = vmax.f32 %v5134, %v5400
    %v5413 = vmax.f32 %v5139, %v5405
    %v5414 = vmax.f32 %v5142, %v5408
    %s5415 = scalar_lea.vmem [#allocation4], 328
    %v5416 = vld [vmem:[%s5415] sm:$0xf]
    %v5417 = vld [vmem:[%s5415 + $0x4] sm:$0xf]
    %v5418 = vld [vmem:[%s5415 + $0x8] sm:$0xf]
    %v5419 = vld [vmem:[%s5415 + $0xc] sm:$0xf]
    %v5420 = vld [vmem:[%s5415 + $0x10] sm:$0xf]
    %v5421 = vld [vmem:[%s5415 + $0x14] sm:$0xf]
    %v5422 = vld [vmem:[%s5415 + $0x18] sm:$0xf]
    %v5423 = vld [vmem:[%s5415 + $0x1c] sm:$0xf]
    %v5424 = vld [vmem:[%s5415 + $0x20] sm:$0xf]
    %v5425 = vld [vmem:[%s5415 + $0x24] sm:$0xf]
    %v5426 = vld [vmem:[%s5415 + $0x28] sm:$0xf]
    %v5427 = vld [vmem:[%s5415 + $0x2c] sm:$0xf]
    %v5428 = vld [vmem:[%s5415 + $0x30] sm:$0xf]
    %v5429 = vld [vmem:[%s5415 + $0x34] sm:$0xf]
    %v5430 = vld [vmem:[%s5415 + $0x38] sm:$0xf]
    %v5431 = vld [vmem:[%s5415 + $0x3c] sm:$0xf]
    %v5432 = vld [vmem:[%s5415 + $0x40] sm:$0xf]
    %v5433 = vld [vmem:[%s5415 + $0x44] sm:$0xf]
    %v5434 = vld [vmem:[%s5415 + $0x48] sm:$0xf]
    %v5435 = vld [vmem:[%s5415 + $0x4c] sm:$0xf]
    %v5436 = vld [vmem:[%s5415 + $0x50] sm:$0xf]
    %v5437 = vld [vmem:[%s5415 + $0x54] sm:$0xf]
    %v5438 = vld [vmem:[%s5415 + $0x58] sm:$0xf]
    %v5439 = vld [vmem:[%s5415 + $0x5c] sm:$0xf]
    %v5440 = vld [vmem:[%s5415 + $0x60] sm:$0xf]
    %v5441 = vld [vmem:[%s5415 + $0x64] sm:$0xf]
    %v5442 = vld [vmem:[%s5415 + $0x68] sm:$0xf]
    %v5443 = vld [vmem:[%s5415 + $0x6c] sm:$0xf]
    %v5444 = vld [vmem:[%s5415 + $0x70] sm:$0xf]
    %v5445 = vld [vmem:[%s5415 + $0x74] sm:$0xf]
    %v5446 = vld [vmem:[%s5415 + $0x78] sm:$0xf]
    %v5447 = vld [vmem:[%s5415 + $0x7c] sm:$0xf]
    %v5448 = vld [vmem:[%s5415 + $0x80] sm:$0xf]
    %v5449 = vld [vmem:[%s5415 + $0x84] sm:$0xf]
    %v5450 = vld [vmem:[%s5415 + $0x88] sm:$0xf]
    %v5451 = vld [vmem:[%s5415 + $0x8c] sm:$0xf]
    %v5452 = vld [vmem:[%s5415 + $0x90] sm:$0xf]
    %v5453 = vld [vmem:[%s5415 + $0x94] sm:$0xf]
    %v5454 = vld [vmem:[%s5415 + $0x98] sm:$0xf]
    %v5455 = vld [vmem:[%s5415 + $0x9c] sm:$0xf]
    %v5456 = vld [vmem:[%s5415 + $0xa0] sm:$0x3]
    %v5498 = vunpack.c.l.b16 %v5416
    %v5499 = vunpack.c.l.b16 %v5417
    %v5500 = vunpack.c.l.b16 %v5418
    %v5501 = vunpack.c.l.b16 %v5419
    %v5502 = vunpack.c.l.b16 %v5420
    %v5503 = vunpack.c.l.b16 %v5421
    %v5504 = vunpack.c.l.b16 %v5422
    %v5505 = vunpack.c.l.b16 %v5423
    %v5506 = vunpack.c.l.b16 %v5424
    %v5507 = vunpack.c.l.b16 %v5425
    %v5508 = vunpack.c.l.b16 %v5426
    %v5509 = vunpack.c.l.b16 %v5427
    %v5510 = vunpack.c.l.b16 %v5428
    %v5511 = vunpack.c.l.b16 %v5429
    %v5512 = vunpack.c.l.b16 %v5430
    %v5513 = vunpack.c.l.b16 %v5431
    %v5514 = vunpack.c.l.b16 %v5432
    %v5515 = vunpack.c.l.b16 %v5433
    %v5516 = vunpack.c.l.b16 %v5434
    %v5517 = vunpack.c.l.b16 %v5435
    %v5518 = vunpack.c.l.b16 %v5436
    %v5519 = vunpack.c.l.b16 %v5437
    %v5520 = vunpack.c.l.b16 %v5438
    %v5521 = vunpack.c.l.b16 %v5439
    %v5522 = vunpack.c.l.b16 %v5440
    %v5523 = vunpack.c.l.b16 %v5441
    %v5524 = vunpack.c.l.b16 %v5442
    %v5525 = vunpack.c.l.b16 %v5443
    %v5526 = vunpack.c.l.b16 %v5444
    %v5527 = vunpack.c.l.b16 %v5445
    %v5528 = vunpack.c.l.b16 %v5446
    %v5529 = vunpack.c.l.b16 %v5447
    %v5530 = vunpack.c.l.b16 %v5448
    %v5531 = vunpack.c.l.b16 %v5449
    %v5532 = vunpack.c.l.b16 %v5450
    %v5533 = vunpack.c.l.b16 %v5451
    %v5534 = vunpack.c.l.b16 %v5452
    %v5535 = vunpack.c.l.b16 %v5453
    %v5536 = vunpack.c.l.b16 %v5454
    %v5537 = vunpack.c.l.b16 %v5455
    %v5538 = vunpack.c.l.b16 %v5456
    %v5539 = vpack.c.b16 %v5499, %v5498
    %v5540 = vpack.c.b16 %v5501, %v5500
    %v5541 = vpack.c.b16 %v5503, %v5502
    %v5542 = vpack.c.b16 %v5505, %v5504
    %v5543 = vpack.c.b16 %v5507, %v5506
    %v5544 = vpack.c.b16 %v5509, %v5508
    %v5545 = vpack.c.b16 %v5511, %v5510
    %v5546 = vpack.c.b16 %v5513, %v5512
    %v5547 = vpack.c.b16 %v5515, %v5514
    %v5548 = vpack.c.b16 %v5517, %v5516
    %v5549 = vpack.c.b16 %v5519, %v5518
    %v5550 = vpack.c.b16 %v5521, %v5520
    %v5551 = vpack.c.b16 %v5523, %v5522
    %v5552 = vpack.c.b16 %v5525, %v5524
    %v5553 = vpack.c.b16 %v5527, %v5526
    %v5554 = vpack.c.b16 %v5529, %v5528
    %v5555 = vpack.c.b16 %v5531, %v5530
    %v5556 = vpack.c.b16 %v5533, %v5532
    %v5557 = vpack.c.b16 %v5535, %v5534
    %v5558 = vpack.c.b16 %v5537, %v5536
    %v5559 = vpack.c.b16 %v5538, %v5538
    %v5581 = vsel %vm5043, %v5559, 0
    %5583 = vmatprep.subr.bf16.mxu0 0
    %5584 = vmatpush1.bf16.msra.mxu0 %v5546
    %5585 = vmatprep.subr.bf16.mxu0 0
    %5586 = vmatpush1.bf16.msra.mxu0 %v5545
    %5587 = vmatprep.subr.bf16.mxu0 0
    %5588 = vmatpush1.bf16.msra.mxu0 %v5544
    %5589 = vmatprep.subr.bf16.mxu0 0
    %5590 = vmatpush1.bf16.msra.mxu0 %v5543
    %5591 = vmatprep.subr.bf16.mxu0 0
    %5592 = vmatpush1.bf16.msra.mxu0 %v5542
    %5593 = vmatprep.subr.bf16.mxu0 0
    %5594 = vmatpush1.bf16.msra.mxu0 %v5541
    %5595 = vmatprep.subr.bf16.mxu0 0
    %5596 = vmatpush1.bf16.msra.mxu0 %v5540
    %5597 = vmatprep.subr.bf16.mxu0 0
    %5598 = vmatpush1.bf16.msra.mxu0 %v5539
    %5599 = vmatprep.subr.bf16.mxu0 0
    %5600 = vmatpush2.bf16.msra.mxu0 %v5554
    %5601 = vmatprep.subr.bf16.mxu0 0
    %5602 = vmatpush2.bf16.msra.mxu0 %v5553
    %5603 = vmatprep.subr.bf16.mxu0 0
    %5604 = vmatpush2.bf16.msra.mxu0 %v5552
    %5605 = vmatprep.subr.bf16.mxu0 0
    %5606 = vmatpush2.bf16.msra.mxu0 %v5551
    %5607 = vmatprep.subr.bf16.mxu0 0
    %5608 = vmatpush2.bf16.msra.mxu0 %v5550
    %5609 = vmatprep.subr.bf16.mxu0 0
    %5610 = vmatpush2.bf16.msra.mxu0 %v5549
    %5611 = vmatprep.subr.bf16.mxu0 0
    %5612 = vmatpush2.bf16.msra.mxu0 %v5548
    %5613 = vmatprep.subr.bf16.mxu0 0
    %5614 = vmatpush2.bf16.msra.mxu0 %v5547
    %5615 = vmatprep.mubr.bf16.mxu0 %v4867
    %5616 = vmatmul.mubr.bf16.gmra.mxu0 %v4866
    %v5617 = vpop.f32.mrf.mxu0
    %v5618 = vadd.f32 0.0, %v5617
    %v5619 = vpop.f32.mrf.mxu0
    %v5620 = vpop.f32.mrf.mxu0
    %v5621 = vadd.f32 0.0, %v5620
    %v5622 = vpop.f32.mrf.mxu0
    %5623 = vmatprep.mubr.bf16.mxu0 %v4870
    %5624 = vmatmul.mubr.bf16.gmra.mxu0 %v4869
    %v5625 = vpop.f32.mrf.mxu0
    %v5626 = vadd.f32 0.0, %v5625
    %v5627 = vpop.f32.mrf.mxu0
    %v5628 = vpop.f32.mrf.mxu0
    %v5629 = vadd.f32 0.0, %v5628
    %v5630 = vpop.f32.mrf.mxu0
    %5631 = vdwg.mxu0
    %5632 = vmatprep.subr.bf16.mxu0 0
    %5633 = vmatpush1.bf16.msra.mxu0 0
    %5634 = vmatprep.subr.bf16.mxu0 0
    %5635 = vmatpush1.bf16.msra.mxu0 0
    %5636 = vmatprep.subr.bf16.mxu0 0
    %5637 = vmatpush1.bf16.msra.mxu0 0
    %5638 = vmatprep.subr.bf16.mxu0 0
    %5639 = vmatpush1.bf16.msra.mxu0 %v5581
    %5640 = vmatprep.subr.bf16.mxu0 0
    %5641 = vmatpush1.bf16.msra.mxu0 %v5558
    %5642 = vmatprep.subr.bf16.mxu0 0
    %5643 = vmatpush1.bf16.msra.mxu0 %v5557
    %5644 = vmatprep.subr.bf16.mxu0 0
    %5645 = vmatpush1.bf16.msra.mxu0 %v5556
    %5646 = vmatprep.subr.bf16.mxu0 0
    %5647 = vmatpush1.bf16.msra.mxu0 %v5555
    %5648 = vmatprep.subr.bf16.mxu0 0
    %5649 = vmatpush2.bf16.msra.mxu0 0
    %5650 = vmatprep.subr.bf16.mxu0 0
    %5651 = vmatpush2.bf16.msra.mxu0 0
    %5652 = vmatprep.subr.bf16.mxu0 0
    %5653 = vmatpush2.bf16.msra.mxu0 0
    %5654 = vmatprep.subr.bf16.mxu0 0
    %5655 = vmatpush2.bf16.msra.mxu0 0
    %5656 = vmatprep.subr.bf16.mxu0 0
    %5657 = vmatpush2.bf16.msra.mxu0 0
    %5658 = vmatprep.subr.bf16.mxu0 0
    %5659 = vmatpush2.bf16.msra.mxu0 0
    %5660 = vmatprep.subr.bf16.mxu0 0
    %5661 = vmatpush2.bf16.msra.mxu0 0
    %5662 = vmatprep.subr.bf16.mxu0 0
    %5663 = vmatpush2.bf16.msra.mxu0 0
    %5664 = vmatprep.mubr.bf16.mxu0 0
    %5665 = vmatmul.mubr.bf16.gmra.mxu0 %v5038
    %v5666 = vpop.f32.mrf.mxu0
    %v5667 = vadd.f32 %v5618, %v5666
    %v5668 = vpop.f32.mrf.mxu0
    %v5669 = vpop.f32.mrf.mxu0
    %v5670 = vadd.f32 %v5621, %v5669
    %v5671 = vpop.f32.mrf.mxu0
    %5672 = vmatprep.mubr.bf16.mxu0 0
    %5673 = vmatmul.mubr.bf16.gmra.mxu0 %v5041
    %v5674 = vpop.f32.mrf.mxu0
    %v5675 = vadd.f32 %v5626, %v5674
    %v5676 = vpop.f32.mrf.mxu0
    %v5677 = vpop.f32.mrf.mxu0
    %v5678 = vadd.f32 %v5629, %v5677
    %v5679 = vpop.f32.mrf.mxu0
    %5680 = vdwg.mxu0
    %v5681 = vmax.f32 %v5411, %v5667
    %v5682 = vmax.f32 %v5412, %v5670
    %v5683 = vmax.f32 %v5413, %v5675
    %v5684 = vmax.f32 %v5414, %v5678
    %s5685 = scalar_lea.vmem [#allocation4], 492
    %v5686 = vld [vmem:[%s5685] sm:$0xf]
    %v5687 = vld [vmem:[%s5685 + $0x4] sm:$0xf]
    %v5688 = vld [vmem:[%s5685 + $0x8] sm:$0xf]
    %v5689 = vld [vmem:[%s5685 + $0xc] sm:$0xf]
    %v5690 = vld [vmem:[%s5685 + $0x10] sm:$0xf]
    %v5691 = vld [vmem:[%s5685 + $0x14] sm:$0xf]
    %v5692 = vld [vmem:[%s5685 + $0x18] sm:$0xf]
    %v5693 = vld [vmem:[%s5685 + $0x1c] sm:$0xf]
    %v5694 = vld [vmem:[%s5685 + $0x20] sm:$0xf]
    %v5695 = vld [vmem:[%s5685 + $0x24] sm:$0xf]
    %v5696 = vld [vmem:[%s5685 + $0x28] sm:$0xf]
    %v5697 = vld [vmem:[%s5685 + $0x2c] sm:$0xf]
    %v5698 = vld [vmem:[%s5685 + $0x30] sm:$0xf]
    %v5699 = vld [vmem:[%s5685 + $0x34] sm:$0xf]
    %v5700 = vld [vmem:[%s5685 + $0x38] sm:$0xf]
    %v5701 = vld [vmem:[%s5685 + $0x3c] sm:$0xf]
    %v5702 = vld [vmem:[%s5685 + $0x40] sm:$0xf]
    %v5703 = vld [vmem:[%s5685 + $0x44] sm:$0xf]
    %v5704 = vld [vmem:[%s5685 + $0x48] sm:$0xf]
    %v5705 = vld [vmem:[%s5685 + $0x4c] sm:$0xf]
    %v5706 = vld [vmem:[%s5685 + $0x50] sm:$0xf]
    %v5707 = vld [vmem:[%s5685 + $0x54] sm:$0xf]
    %v5708 = vld [vmem:[%s5685 + $0x58] sm:$0xf]
    %v5709 = vld [vmem:[%s5685 + $0x5c] sm:$0xf]
    %v5710 = vld [vmem:[%s5685 + $0x60] sm:$0xf]
    %v5711 = vld [vmem:[%s5685 + $0x64] sm:$0xf]
    %v5712 = vld [vmem:[%s5685 + $0x68] sm:$0xf]
    %v5713 = vld [vmem:[%s5685 + $0x6c] sm:$0xf]
    %v5714 = vld [vmem:[%s5685 + $0x70] sm:$0xf]
    %v5715 = vld [vmem:[%s5685 + $0x74] sm:$0xf]
    %v5716 = vld [vmem:[%s5685 + $0x78] sm:$0xf]
    %v5717 = vld [vmem:[%s5685 + $0x7c] sm:$0xf]
    %v5718 = vld [vmem:[%s5685 + $0x80] sm:$0xf]
    %v5719 = vld [vmem:[%s5685 + $0x84] sm:$0xf]
    %v5720 = vld [vmem:[%s5685 + $0x88] sm:$0xf]
    %v5721 = vld [vmem:[%s5685 + $0x8c] sm:$0xf]
    %v5722 = vld [vmem:[%s5685 + $0x90] sm:$0xf]
    %v5723 = vld [vmem:[%s5685 + $0x94] sm:$0xf]
    %v5724 = vld [vmem:[%s5685 + $0x98] sm:$0xf]
    %v5725 = vld [vmem:[%s5685 + $0x9c] sm:$0xf]
    %v5726 = vld [vmem:[%s5685 + $0xa0] sm:$0x3]
    %v5768 = vunpack.c.l.b16 %v5686
    %v5769 = vunpack.c.l.b16 %v5687
    %v5770 = vunpack.c.l.b16 %v5688
    %v5771 = vunpack.c.l.b16 %v5689
    %v5772 = vunpack.c.l.b16 %v5690
    %v5773 = vunpack.c.l.b16 %v5691
    %v5774 = vunpack.c.l.b16 %v5692
    %v5775 = vunpack.c.l.b16 %v5693
    %v5776 = vunpack.c.l.b16 %v5694
    %v5777 = vunpack.c.l.b16 %v5695
    %v5778 = vunpack.c.l.b16 %v5696
    %v5779 = vunpack.c.l.b16 %v5697
    %v5780 = vunpack.c.l.b16 %v5698
    %v5781 = vunpack.c.l.b16 %v5699
    %v5782 = vunpack.c.l.b16 %v5700
    %v5783 = vunpack.c.l.b16 %v5701
    %v5784 = vunpack.c.l.b16 %v5702
    %v5785 = vunpack.c.l.b16 %v5703
    %v5786 = vunpack.c.l.b16 %v5704
    %v5787 = vunpack.c.l.b16 %v5705
    %v5788 = vunpack.c.l.b16 %v5706
    %v5789 = vunpack.c.l.b16 %v5707
    %v5790 = vunpack.c.l.b16 %v5708
    %v5791 = vunpack.c.l.b16 %v5709
    %v5792 = vunpack.c.l.b16 %v5710
    %v5793 = vunpack.c.l.b16 %v5711
    %v5794 = vunpack.c.l.b16 %v5712
    %v5795 = vunpack.c.l.b16 %v5713
    %v5796 = vunpack.c.l.b16 %v5714
    %v5797 = vunpack.c.l.b16 %v5715
    %v5798 = vunpack.c.l.b16 %v5716
    %v5799 = vunpack.c.l.b16 %v5717
    %v5800 = vunpack.c.l.b16 %v5718
    %v5801 = vunpack.c.l.b16 %v5719
    %v5802 = vunpack.c.l.b16 %v5720
    %v5803 = vunpack.c.l.b16 %v5721
    %v5804 = vunpack.c.l.b16 %v5722
    %v5805 = vunpack.c.l.b16 %v5723
    %v5806 = vunpack.c.l.b16 %v5724
    %v5807 = vunpack.c.l.b16 %v5725
    %v5808 = vunpack.c.l.b16 %v5726
    %v5809 = vpack.c.b16 %v5769, %v5768
    %v5810 = vpack.c.b16 %v5771, %v5770
    %v5811 = vpack.c.b16 %v5773, %v5772
    %v5812 = vpack.c.b16 %v5775, %v5774
    %v5813 = vpack.c.b16 %v5777, %v5776
    %v5814 = vpack.c.b16 %v5779, %v5778
    %v5815 = vpack.c.b16 %v5781, %v5780
    %v5816 = vpack.c.b16 %v5783, %v5782
    %v5817 = vpack.c.b16 %v5785, %v5784
    %v5818 = vpack.c.b16 %v5787, %v5786
    %v5819 = vpack.c.b16 %v5789, %v5788
    %v5820 = vpack.c.b16 %v5791, %v5790
    %v5821 = vpack.c.b16 %v5793, %v5792
    %v5822 = vpack.c.b16 %v5795, %v5794
    %v5823 = vpack.c.b16 %v5797, %v5796
    %v5824 = vpack.c.b16 %v5799, %v5798
    %v5825 = vpack.c.b16 %v5801, %v5800
    %v5826 = vpack.c.b16 %v5803, %v5802
    %v5827 = vpack.c.b16 %v5805, %v5804
    %v5828 = vpack.c.b16 %v5807, %v5806
    %v5829 = vpack.c.b16 %v5808, %v5808
    %v5851 = vsel %vm5043, %v5829, 0
    %5853 = vmatprep.subr.bf16.mxu0 0
    %5854 = vmatpush1.bf16.msra.mxu0 %v5816
    %5855 = vmatprep.subr.bf16.mxu0 0
    %5856 = vmatpush1.bf16.msra.mxu0 %v5815
    %5857 = vmatprep.subr.bf16.mxu0 0
    %5858 = vmatpush1.bf16.msra.mxu0 %v5814
    %5859 = vmatprep.subr.bf16.mxu0 0
    %5860 = vmatpush1.bf16.msra.mxu0 %v5813
    %5861 = vmatprep.subr.bf16.mxu0 0
    %5862 = vmatpush1.bf16.msra.mxu0 %v5812
    %5863 = vmatprep.subr.bf16.mxu0 0
    %5864 = vmatpush1.bf16.msra.mxu0 %v5811
    %5865 = vmatprep.subr.bf16.mxu0 0
    %5866 = vmatpush1.bf16.msra.mxu0 %v5810
    %5867 = vmatprep.subr.bf16.mxu0 0
    %5868 = vmatpush1.bf16.msra.mxu0 %v5809
    %5869 = vmatprep.subr.bf16.mxu0 0
    %5870 = vmatpush2.bf16.msra.mxu0 %v5824
    %5871 = vmatprep.subr.bf16.mxu0 0
    %5872 = vmatpush2.bf16.msra.mxu0 %v5823
    %5873 = vmatprep.subr.bf16.mxu0 0
    %5874 = vmatpush2.bf16.msra.mxu0 %v5822
    %5875 = vmatprep.subr.bf16.mxu0 0
    %5876 = vmatpush2.bf16.msra.mxu0 %v5821
    %5877 = vmatprep.subr.bf16.mxu0 0
    %5878 = vmatpush2.bf16.msra.mxu0 %v5820
    %5879 = vmatprep.subr.bf16.mxu0 0
    %5880 = vmatpush2.bf16.msra.mxu0 %v5819
    %5881 = vmatprep.subr.bf16.mxu0 0
    %5882 = vmatpush2.bf16.msra.mxu0 %v5818
    %5883 = vmatprep.subr.bf16.mxu0 0
    %5884 = vmatpush2.bf16.msra.mxu0 %v5817
    %5885 = vmatprep.mubr.bf16.mxu0 %v4867
    %5886 = vmatmul.mubr.bf16.gmra.mxu0 %v4866
    %v5887 = vpop.f32.mrf.mxu0
    %v5888 = vadd.f32 0.0, %v5887
    %v5889 = vpop.f32.mrf.mxu0
    %v5890 = vpop.f32.mrf.mxu0
    %v5891 = vadd.f32 0.0, %v5890
    %v5892 = vpop.f32.mrf.mxu0
    %5893 = vmatprep.mubr.bf16.mxu0 %v4870
    %5894 = vmatmul.mubr.bf16.gmra.mxu0 %v4869
    %v5895 = vpop.f32.mrf.mxu0
    %v5896 = vadd.f32 0.0, %v5895
    %v5897 = vpop.f32.mrf.mxu0
    %v5898 = vpop.f32.mrf.mxu0
    %v5899 = vadd.f32 0.0, %v5898
    %v5900 = vpop.f32.mrf.mxu0
    %5901 = vdwg.mxu0
    %5902 = vmatprep.subr.bf16.mxu0 0
    %5903 = vmatpush1.bf16.msra.mxu0 0
    %5904 = vmatprep.subr.bf16.mxu0 0
    %5905 = vmatpush1.bf16.msra.mxu0 0
    %5906 = vmatprep.subr.bf16.mxu0 0
    %5907 = vmatpush1.bf16.msra.mxu0 0
    %5908 = vmatprep.subr.bf16.mxu0 0
    %5909 = vmatpush1.bf16.msra.mxu0 %v5851
    %5910 = vmatprep.subr.bf16.mxu0 0
    %5911 = vmatpush1.bf16.msra.mxu0 %v5828
    %5912 = vmatprep.subr.bf16.mxu0 0
    %5913 = vmatpush1.bf16.msra.mxu0 %v5827
    %5914 = vmatprep.subr.bf16.mxu0 0
    %5915 = vmatpush1.bf16.msra.mxu0 %v5826
    %5916 = vmatprep.subr.bf16.mxu0 0
    %5917 = vmatpush1.bf16.msra.mxu0 %v5825
    %5918 = vmatprep.subr.bf16.mxu0 0
    %5919 = vmatpush2.bf16.msra.mxu0 0
    %5920 = vmatprep.subr.bf16.mxu0 0
    %5921 = vmatpush2.bf16.msra.mxu0 0
    %5922 = vmatprep.subr.bf16.mxu0 0
    %5923 = vmatpush2.bf16.msra.mxu0 0
    %5924 = vmatprep.subr.bf16.mxu0 0
    %5925 = vmatpush2.bf16.msra.mxu0 0
    %5926 = vmatprep.subr.bf16.mxu0 0
    %5927 = vmatpush2.bf16.msra.mxu0 0
    %5928 = vmatprep.subr.bf16.mxu0 0
    %5929 = vmatpush2.bf16.msra.mxu0 0
    %5930 = vmatprep.subr.bf16.mxu0 0
    %5931 = vmatpush2.bf16.msra.mxu0 0
    %5932 = vmatprep.subr.bf16.mxu0 0
    %5933 = vmatpush2.bf16.msra.mxu0 0
    %5934 = vmatprep.mubr.bf16.mxu0 0
    %5935 = vmatmul.mubr.bf16.gmra.mxu0 %v5038
    %v5936 = vpop.f32.mrf.mxu0
    %v5937 = vadd.f32 %v5888, %v5936
    %v5938 = vpop.f32.mrf.mxu0
    %v5939 = vpop.f32.mrf.mxu0
    %v5940 = vadd.f32 %v5891, %v5939
    %v5941 = vpop.f32.mrf.mxu0
    %5942 = vmatprep.mubr.bf16.mxu0 0
    %5943 = vmatmul.mubr.bf16.gmra.mxu0 %v5041
    %v5944 = vpop.f32.mrf.mxu0
    %v5945 = vadd.f32 %v5896, %v5944
    %v5946 = vpop.f32.mrf.mxu0
    %v5947 = vpop.f32.mrf.mxu0
    %v5948 = vadd.f32 %v5899, %v5947
    %v5949 = vpop.f32.mrf.mxu0
    %5950 = vdwg.mxu0
    %v5951 = vmax.f32 %v5681, %v5937
    %v5952 = vmax.f32 %v5682, %v5940
    %v5953 = vmax.f32 %v5683, %v5945
    %v5954 = vmax.f32 %v5684, %v5948
    %v5955 = vld [vmem:[%s13] sm:$0xff]
    %v5956 = vld [vmem:[%s13 + $0x8] sm:$0xff]
    %v5957 = vld [vmem:[%s13 + $0x10] sm:$0xff]
    %v5958 = vld [vmem:[%s13 + $0x18] sm:$0xff]
    %v5959 = vmul.f32 %v5955, %v5951
    %v5960 = vmul.f32 %v5956, %v5952
    %v5961 = vmul.f32 %v5957, %v5953
    %v5962 = vmul.f32 %v5958, %v5954
    %v5963 = vsel %vm4641, %v5959, 0.0
    %5964 = vadd.xlane.f32.xlu0 %v5963
    %v5965 = vpop.xlane.xlu0 %5964
    %v5966 = vsel %vm4641, %v5960, 0.0
    %5967 = vadd.xlane.f32.xlu0 %v5966
    %v5968 = vpop.xlane.xlu0 %5967
    %v5969 = vsel %vm4641, %v5961, 0.0
    %5970 = vadd.xlane.f32.xlu0 %v5969
    %v5971 = vpop.xlane.xlu0 %5970
    %v5972 = vsel %vm4641, %v5962, 0.0
    %5973 = vadd.xlane.f32.xlu0 %v5972
    %v5974 = vpop.xlane.xlu0 %5973
    %s5975 = scalar_lea.vmem %s13, 32
    %v5976 = vld [vmem:[%s5975] sm:$0xff]
    %v5977 = vld [vmem:[%s5975 + $0x8] sm:$0xff]
    %v5978 = vld [vmem:[%s5975 + $0x10] sm:$0xff]
    %v5979 = vld [vmem:[%s5975 + $0x18] sm:$0xff]
    %v5980 = vmul.f32 %v5976, %v5951
    %v5981 = vmul.f32 %v5977, %v5952
    %v5982 = vmul.f32 %v5978, %v5953
    %v5983 = vmul.f32 %v5979, %v5954
    %v5984 = vsel %vm4641, %v5980, 0.0
    %5985 = vadd.xlane.f32.xlu0 %v5984
    %v5986 = vpop.xlane.xlu0 %5985
    %v5987 = vsel %vm4641, %v5981, 0.0
    %5988 = vadd.xlane.f32.xlu0 %v5987
    %v5989 = vpop.xlane.xlu0 %5988
    %v5990 = vsel %vm4641, %v5982, 0.0
    %5991 = vadd.xlane.f32.xlu0 %v5990
    %v5992 = vpop.xlane.xlu0 %5991
    %v5993 = vsel %vm4641, %v5983, 0.0
    %5994 = vadd.xlane.f32.xlu0 %v5993
    %v5995 = vpop.xlane.xlu0 %5994
    %s5996 = scalar_lea.vmem %s13, 64
    %v5997 = vld [vmem:[%s5996] sm:$0xff]
    %v5998 = vld [vmem:[%s5996 + $0x8] sm:$0xff]
    %v5999 = vld [vmem:[%s5996 + $0x10] sm:$0xff]
    %v6000 = vld [vmem:[%s5996 + $0x18] sm:$0xff]
    %v6001 = vmul.f32 %v5997, %v5951
    %v6002 = vmul.f32 %v5998, %v5952
    %v6003 = vmul.f32 %v5999, %v5953
    %v6004 = vmul.f32 %v6000, %v5954
    %v6005 = vsel %vm4641, %v6001, 0.0
    %6006 = vadd.xlane.f32.xlu0 %v6005
    %v6007 = vpop.xlane.xlu0 %6006
    %v6008 = vsel %vm4641, %v6002, 0.0
    %6009 = vadd.xlane.f32.xlu0 %v6008
    %v6010 = vpop.xlane.xlu0 %6009
    %v6011 = vsel %vm4641, %v6003, 0.0
    %6012 = vadd.xlane.f32.xlu0 %v6011
    %v6013 = vpop.xlane.xlu0 %6012
    %v6014 = vsel %vm4641, %v6004, 0.0
    %6015 = vadd.xlane.f32.xlu0 %v6014
    %v6016 = vpop.xlane.xlu0 %6015
    %vm6017 = vcmask 7168
    %v6018 = vsel %vm6017, %v5965, %v5986
    %v6019 = vsel %vm6017, %v5968, %v5989
    %v6020 = vsel %vm6017, %v5971, %v5992
    %v6021 = vsel %vm6017, %v5974, %v5995
    %vm6022 = vcmask 15360
    %v6023 = vsel %vm6022, %v6018, %v6007
    %v6024 = vsel %vm6022, %v6019, %v6010
    %v6025 = vsel %vm6022, %v6020, %v6013
    %v6026 = vsel %vm6022, %v6021, %v6016
    %v6027 = vld [vmem:[%s14] sm:$0x3]
    %v6028 = vld [vmem:[%s15] sm:$0x1]
    %v6030 = vlaneseq
    %v6031 = vshrl.u32 %v6030, 7
    %v6032 = vsub.s32 0, %v6031
    %v6033 = vrot.slane %v6028, %v6032
    %vm6035 = vcmask 261120
    %v6037 = vsel %vm6035, %v6027, 0
    %6039 = vmatprep.subr.mxu0 0.0
    %6040 = vmatpush1.msra.mxu0 0.0
    %6041 = vmatprep.subr.mxu0 0.0
    %6042 = vmatpush1.msra.mxu0 0.0
    %6043 = vmatprep.subr.mxu0 0.0
    %6044 = vmatpush1.msra.mxu0 0.0
    %6045 = vmatprep.subr.mxu0 0.0
    %6046 = vmatpush1.msra.mxu0 0.0
    %6047 = vmatprep.subr.mxu0 0.0
    %6048 = vmatpush1.msra.mxu0 0.0
    %6049 = vmatprep.subr.mxu0 0.0
    %6050 = vmatpush1.msra.mxu0 0.0
    %6051 = vmatprep.subr.mxu0 0.0
    %6052 = vmatpush1.msra.mxu0 0.0
    %6053 = vmatprep.subr.mxu0 0.0
    %6054 = vmatpush1.msra.mxu0 0.0
    %6055 = vmatprep.subr.mxu0 0.0
    %6056 = vmatpush1.msra.mxu0 0.0
    %6057 = vmatprep.subr.mxu0 0.0
    %6058 = vmatpush1.msra.mxu0 0.0
    %6059 = vmatprep.subr.mxu0 0.0
    %6060 = vmatpush1.msra.mxu0 0.0
    %6061 = vmatprep.subr.mxu0 0.0
    %6062 = vmatpush1.msra.mxu0 0.0
    %6063 = vmatprep.subr.mxu0 0.0
    %6064 = vmatpush1.msra.mxu0 %v6026
    %6065 = vmatprep.subr.mxu0 0.0
    %6066 = vmatpush1.msra.mxu0 %v6025
    %6067 = vmatprep.subr.mxu0 0.0
    %6068 = vmatpush1.msra.mxu0 %v6024
    %6069 = vmatprep.subr.mxu0 0.0
    %6070 = vmatpush1.msra.mxu0 %v6023
    %6071 = vmatprep.subr.mxu0 0.0
    %6072 = vmatpush2.msra.mxu0 0.0
    %6073 = vmatprep.subr.mxu0 0.0
    %6074 = vmatpush2.msra.mxu0 0.0
    %6075 = vmatprep.subr.mxu0 0.0
    %6076 = vmatpush2.msra.mxu0 0.0
    %6077 = vmatprep.subr.mxu0 0.0
    %6078 = vmatpush2.msra.mxu0 0.0
    %6079 = vmatprep.subr.mxu0 0.0
    %6080 = vmatpush2.msra.mxu0 0.0
    %6081 = vmatprep.subr.mxu0 0.0
    %6082 = vmatpush2.msra.mxu0 0.0
    %6083 = vmatprep.subr.mxu0 0.0
    %6084 = vmatpush2.msra.mxu0 0.0
    %6085 = vmatprep.subr.mxu0 0.0
    %6086 = vmatpush2.msra.mxu0 0.0
    %6087 = vmatprep.subr.mxu0 0.0
    %6088 = vmatpush2.msra.mxu0 0.0
    %6089 = vmatprep.subr.mxu0 0.0
    %6090 = vmatpush2.msra.mxu0 0.0
    %6091 = vmatprep.subr.mxu0 0.0
    %6092 = vmatpush2.msra.mxu0 0.0
    %6093 = vmatprep.subr.mxu0 0.0
    %6094 = vmatpush2.msra.mxu0 0.0
    %6095 = vmatprep.subr.mxu0 0.0
    %6096 = vmatpush2.msra.mxu0 0.0
    %6097 = vmatprep.subr.mxu0 0.0
    %6098 = vmatpush2.msra.mxu0 0.0
    %6099 = vmatprep.subr.mxu0 0.0
    %6100 = vmatpush2.msra.mxu0 0.0
    %6101 = vmatprep.subr.mxu0 0.0
    %6102 = vmatpush2.msra.mxu0 0.0
    %6103 = vmatprep.mubr.f32.mxu0 0.0
    %6104 = vmatmul.mubr.f32.gmra.mxu0 %v6037
    %v6105 = vpop.f32.mrf.mxu0
    %v6106 = vadd.f32 %v6033, %v6105
    %v6107 = vpop.f32.mrf.mxu0
    %6108 = vdwg.mxu0
    %vm6109 = vcmask 17408
    %6110 = vst.msk [vmem:[#allocation6] sm:$0x3] %vm6109, %v6106
    // Predicated region
    $region159: #{two_inputs_forward.1} parent=1 // pred_check
      _
    $region160: #{two_inputs_forward.1} parent=1 // pred_check_branch
      %6112 = sbr.rel (0) target = $region162
    $region161: #{two_inputs_forward.1} parent=1 // pred_region
      %s6114 = ssub.s32 32, 32
      %6115 = vsyncadd [#allocation7], %s6114
      %s6117 = sshll.u32 [#allocation6], 4
      %s6118 = int_to_ptr.vmem [resolvable:$true] %s6117
      %6120 = dma.vmem_to_hbm [thread:$0]  %s6118, 32, %s16, [#allocation7]
    $region162: #{two_inputs_forward.1} parent=1 // pred_fallthru
      _
    // Predicated region
    $region163: #{two_inputs_forward.1} parent=1 // pred_check
      _
    $region164: #{two_inputs_forward.1} parent=1 // pred_check_branch
      %6122 = sbr.rel (0) target = $region166
    $region165: #{two_inputs_forward.1} parent=1 // pred_region
      %6123 = dma.done [#allocation7], 32
    $region166: #{two_inputs_forward.1} parent=1 // pred_fallthru
      _
    %6124 = vsyncpa [#allocation7], 1
  %6125 = vsyncmov [#allocation5]
  %s6126 = vpop.sfrf %6125
  %p6127 = scmp.eq.s32.totalorder %s6126, 0
  %p6128 = pneg %p6127
  %6130 = shalt.err (%p6128)
  %s6131 = scalar_lea.sflag [#allocation5], 1
  %6132 = vsyncmov %s6131
  %s6133 = vpop.sfrf %6132
  %p6134 = scmp.eq.s32.totalorder %s6133, 0
  %p6135 = pneg %p6134
  %6137 = shalt.err (%p6135)
  %s6138 = scalar_lea.sflag [#allocation5], 2
  %6139 = vsyncmov %s6138
  %s6140 = vpop.sfrf %6139
  %p6141 = scmp.eq.s32.totalorder %s6140, 0
  %p6142 = pneg %p6141
  %6144 = shalt.err (%p6142)

</llo_original>
